<compile_context>
chip_gen: v7x
topology: tpu7x:2x2x1
jax: 0.10.0
libtpu: 0.0.40
codegen_flags: <defaults>
</compile_context>

<pallas_src>
import functools

import numpy as np

import jax
import jax.numpy as jnp
from jax.experimental import pallas as pl
from jax.experimental.pallas import tpu as pltpu


# ----------------------------------------------------------------------------
# Pallas kernel: multi-stream 3x3-tap conv as fused matmul-accumulate
#   out = [relu]( sum_{dy,dx,stream} window(stream,dy,dx) @ W[stream,dy,dx] + bias )
# ----------------------------------------------------------------------------
def _conv_taps_kernel(*refs, n_in, oh, ow, relu):
    x_refs = refs[0:2 * n_in:2]     # each: (3, 1, Hp, ow, C)  (W-shift stack, bf16)
    w_refs = refs[1:2 * n_in:2]     # each: (3, 3, C, N)       (bf16)
    b_ref = refs[2 * n_in]          # (1, N) f32
    o_ref = refs[2 * n_in + 1]      # (oh*ow, N)

    n_out = o_ref.shape[-1]
    acc = jnp.zeros((oh * ow, n_out), jnp.float32)
    for dy in range(3):
        for dx in range(3):
            for x_ref, w_ref in zip(x_refs, w_refs):
                c = x_ref.shape[-1]
                # slices only touch leading/major dims -> no unaligned tiled slicing
                win = x_ref[dx, 0, dy:dy + oh, :, :]            # (oh, ow, c) bf16
                acc = acc + jnp.dot(win.reshape(oh * ow, c),
                                    w_ref[dy, dx, :, :],
                                    preferred_element_type=jnp.float32)
    out = acc + b_ref[...]
    if relu:
        out = jnp.maximum(out, 0.0)
    o_ref[...] = out.astype(o_ref.dtype)


def _conv_taps(xs, ws, bias, *, oh, ow, relu, out_dtype):
    """xs[i]: (3, B, Hp, ow, C_i) bf16; ws[i]: (3, 3, C_i, N) bf16; bias: (1, N) f32.
    Returns (B*oh*ow, N) in out_dtype."""
    n_in = len(xs)
    B = xs[0].shape[1]
    n_out = ws[0].shape[-1]

    args, in_specs = [], []
    for x, w in zip(xs, ws):
        args.append(x)
        in_specs.append(pl.BlockSpec((3, 1) + x.shape[2:],
                                     lambda b: (0, b, 0, 0, 0)))
        args.append(w)
        in_specs.append(pl.BlockSpec(w.shape, lambda b: (0, 0, 0, 0)))
    args.append(bias)
    in_specs.append(pl.BlockSpec(bias.shape, lambda b: (0, 0)))

    kernel = functools.partial(_conv_taps_kernel,
                               n_in=n_in, oh=oh, ow=ow, relu=relu)
    return pl.pallas_call(
        kernel,
        grid=(B,),
        in_specs=in_specs,
        out_specs=pl.BlockSpec((oh * ow, n_out), lambda b: (b, 0)),
        out_shape=jax.ShapeDtypeStruct((B * oh * ow, n_out), out_dtype),
        compiler_params=pltpu.CompilerParams(
            dimension_semantics=("parallel",)),
    )(*args)


def _wshift3(xp, ow):
    """xp: (B, Hp, ow+2, C) (already W-padded by 1).  Returns (3, B, Hp, ow, C) with
    [dx] = xp[:, :, dx:dx+ow, :]; keeps all in-kernel slicing on major dims."""
    return jnp.stack([xp[:, :, dx:dx + ow, :] for dx in range(3)], axis=0)


# ----------------------------------------------------------------------------
# One-time parameter preparation (outside the jitted forward)
# ----------------------------------------------------------------------------
def prepare_decoder_params(raw):
    wt = np.asarray(raw["wt"], np.float32)      # (Cin, Cout, 4, 4)  ConvTranspose2d
    b_up = np.asarray(raw["b_up"], np.float32)  # (Cout,)
    wc = np.asarray(raw["wc"], np.float32)      # (Cout, Cmid, 3, 3) Conv2d
    bc = np.asarray(raw["bc"], np.float32)      # (Cout,)
    cin, cout = wt.shape[0], wt.shape[1]

    # 4-phase decomposition of ConvTranspose2d(k=4, s=2, p=1):
    # out[2m+py, 2j+px] = sum_{dy,dx} x_pad[m+dy, j+dx] @ wt[:, :, ky(dy,py), kx(dx,px)]
    k_of = {(0, 0): 3, (1, 0): 1, (1, 1): 2, (2, 1): 0}  # (window offset, parity) -> tap
    wt_m = np.zeros((3, 3, cin, 2, 2, cout), np.float32)
    for dy in range(3):
        for dx in range(3):
            for py in range(2):
                for px in range(2):
                    if (dy, py) in k_of and (dx, px) in k_of:
                        wt_m[dy, dx, :, py, px, :] = wt[:, :, k_of[(dy, py)], k_of[(dx, px)]]
    wt_m = wt_m.reshape(3, 3, cin, 4 * cout)

    # 3x3 conv weights split by the (up, x2) concat order (up channels come first).
    wc_t = np.transpose(wc, (2, 3, 1, 0))        # (3, 3, Cmid, Cout)
    return {
        "wt_m": jnp.asarray(wt_m, jnp.bfloat16),
        "bt": jnp.asarray(np.tile(b_up, 4).reshape(1, 4 * cout), jnp.float32),
        "wc_up": jnp.asarray(wc_t[:, :, :cout, :], jnp.bfloat16),
        "wc_x2": jnp.asarray(wc_t[:, :, cout:, :], jnp.bfloat16),
        "bc": jnp.asarray(bc.reshape(1, cout), jnp.float32),
    }


# ----------------------------------------------------------------------------
# Decoder forward (NCHW in / NCHW out)
# ----------------------------------------------------------------------------
def decoder_forward(x1_nchw, x2_nchw, prep):
    b16 = jnp.bfloat16
    x1 = jnp.transpose(x1_nchw, (0, 2, 3, 1)).astype(b16)    # NHWC
    x2 = jnp.transpose(x2_nchw, (0, 2, 3, 1)).astype(b16)
    B, H, W, _ = x1.shape
    H2, W2 = x2.shape[1], x2.shape[2]                        # = 2H, 2W
    cout = prep["wc_up"].shape[-1]

    # stage 1: ConvTranspose2d(k4,s2,p1) as lane-dense phase-major matmul (N=4*Cout)
    x1s = _wshift3(jnp.pad(x1, ((0, 0), (1, 1), (1, 1), (0, 0))), W)
    up_ph = _conv_taps([x1s], [prep["wt_m"]], prep["bt"],
                       oh=H, ow=W, relu=False, out_dtype=b16)
    up = (up_ph.reshape(B, H, W, 2, 2, cout)                 # (.., py, px, co)
                .transpose(0, 1, 3, 2, 4, 5)
                .reshape(B, 2 * H, 2 * W, cout))             # interleave phases

    # stage 2: Conv2d(3x3, pad=1) over cat(up, x2) + bias + ReLU, concat-free split-K
    ups = _wshift3(jnp.pad(up, ((0, 0), (1, 1), (1, 1), (0, 0))), W2)
    x2s = _wshift3(jnp.pad(x2, ((0, 0), (1, 1), (1, 1), (0, 0))), W2)
    out = _conv_taps([ups, x2s], [prep["wc_up"], prep["wc_x2"]], prep["bc"],
                     oh=H2, ow=W2, relu=True, out_dtype=jnp.float32)
    return out.reshape(B, H2, W2, cout).transpose(0, 3, 1, 2)  # -> NCHW


# ----------------------------------------------------------------------------
# Pure-JAX reference (same bf16 quantization of operands, f32 math)
# ----------------------------------------------------------------------------
def reference_decoder(x1, x2, raw):
    q = lambda a: a.astype(jnp.bfloat16).astype(jnp.float32)
    hp = jax.lax.Precision.HIGHEST
    x1q, x2q = q(x1), q(x2)
    # ConvTranspose2d(k4,s2,p1) == lhs-dilated conv (dil=2, pad=2, flipped kernel)
    w_flip = jnp.transpose(q(raw["wt"])[:, :, ::-1, ::-1], (1, 0, 2, 3))
    up = jax.lax.conv_general_dilated(
        x1q, w_flip, window_strides=(1, 1), padding=((2, 2), (2, 2)),
        lhs_dilation=(2, 2), dimension_numbers=("NCHW", "OIHW", "NCHW"),
        precision=hp)
    up = q(up + raw["b_up"].reshape(1, -1, 1, 1))
    cat = jnp.concatenate([up, x2q], axis=1)
    out = jax.lax.conv_general_dilated(
        cat, q(raw["wc"]), window_strides=(1, 1), padding=((1, 1), (1, 1)),
        dimension_numbers=("NCHW", "OIHW", "NCHW"), precision=hp)
    return jnp.maximum(out + raw["bc"].reshape(1, -1, 1, 1), 0.0)


# ----------------------------------------------------------------------------
def init_raw_params(key, in_ch, mid_ch, out_ch):
    k1, k2, k3, k4 = jax.random.split(key, 4)
    wt = jax.random.normal(k1, (in_ch, out_ch, 4, 4), jnp.float32) * (2.0 / (in_ch * 16)) ** 0.5
    b_up = 0.1 * jax.random.normal(k2, (out_ch,), jnp.float32)
    wc = jax.random.normal(k3, (out_ch, mid_ch, 3, 3), jnp.float32) * (2.0 / (mid_ch * 9)) ** 0.5
    bc = 0.1 * jax.random.normal(k4, (out_ch,), jnp.float32)
    return {"wt": wt, "b_up": b_up, "wc": wc, "bc": bc}


if __name__ == "__main__":
    key = jax.random.PRNGKey(0)
    kp, kx1, kx2 = jax.random.split(key, 3)

    B = 2
    in_ch, mid_ch, out_ch = 64, 96, 32        # Decoder(64, 96, 32); x2 has 64 channels
    H1 = W1 = 8                               # x1 spatial; output spatial = 16x16

    raw = init_raw_params(kp, in_ch, mid_ch, out_ch)
    prep = prepare_decoder_params(raw)        # one-time prep (bf16, phase-merged, split)

    x1 = jax.random.normal(kx1, (B, in_ch, H1, W1), jnp.float32)
    x2 = jax.random.normal(kx2, (B, mid_ch - out_ch, 2 * H1, 2 * W1), jnp.float32)

    fwd = jax.jit(decoder_forward)
    out = jax.block_until_ready(fwd(x1, x2, prep))

    assert out.shape == (B, out_ch, 2 * H1, 2 * W1), out.shape
    assert bool(jnp.all(jnp.isfinite(out)))

    ref = jax.block_until_ready(reference_decoder(x1, x2, raw))
    err = float(jnp.max(jnp.abs(out - ref)))
    assert err < 5e-2, f"mismatch vs reference: max abs err = {err}"

    print("KERNEL_OK")
</pallas_src>

<mosaic_0001>
module attributes {stable_mosaic.version = 11 : i64} {
  func.func @_conv_taps_kernel(%arg0: i32, %arg1: memref<3x1x10x8x64xbf16, #tpu.memory_space<vmem>>, %arg2: memref<3x3x64x128xbf16, #tpu.memory_space<vmem>>, %arg3: memref<1x128xf32, #tpu.memory_space<vmem>>, %arg4: memref<64x128xbf16, #tpu.memory_space<vmem>>) attributes {dimension_semantics = [#tpu.dimension_semantics<parallel>], iteration_bounds = array<i64: 2>, scalar_prefetch = 0 : i64, scratch_operands = 0 : i64, tpu.core_type = #tpu.core_type<tc>, window_params = [{transform_indices = @transform_0, window_bounds = array<i64: 3, 1, 10, 8, 64>}, {pipeline_mode = #tpu.pipeline_mode<synchronous>, transform_indices = @transform_1, window_bounds = array<i64: 3, 3, 64, 128>}, {pipeline_mode = #tpu.pipeline_mode<synchronous>, transform_indices = @transform_2, window_bounds = array<i64: 1, 128>}, {transform_indices = @transform_3, window_bounds = array<i64: 64, 128>}]} {
    %cst = arith.constant 0.000000e+00 : f32
    %0 = vector.broadcast %cst : f32 to vector<64x128xf32>
    %c0 = arith.constant 0 : index
    %c0_0 = arith.constant 0 : index
    %c0_1 = arith.constant 0 : index
    %c0_2 = arith.constant 0 : index
    %c0_3 = arith.constant 0 : index
    %1 = vector.load %arg1[%c0, %c0_0, %c0_1, %c0_2, %c0_3] : memref<3x1x10x8x64xbf16, #tpu.memory_space<vmem>>, vector<1x1x8x8x64xbf16>
    %2 = vector.shape_cast %1 : vector<1x1x8x8x64xbf16> to vector<8x8x64xbf16>
    %3 = vector.shape_cast %2 : vector<8x8x64xbf16> to vector<64x64xbf16>
    %c0_4 = arith.constant 0 : index
    %c0_5 = arith.constant 0 : index
    %c0_6 = arith.constant 0 : index
    %c0_7 = arith.constant 0 : index
    %4 = vector.load %arg2[%c0_4, %c0_5, %c0_6, %c0_7] : memref<3x3x64x128xbf16, #tpu.memory_space<vmem>>, vector<1x1x64x128xbf16>
    %5 = vector.shape_cast %4 : vector<1x1x64x128xbf16> to vector<64x128xbf16>
    %cst_8 = arith.constant dense<0.000000e+00> : vector<64x128xf32>
    %6 = tpu.matmul %3, %5, %cst_8 {dimension_numbers = #tpu.dot_dimension_numbers<[1], [0], [0], [1], [0, 0, 1, 1], [], []>} : vector<64x64xbf16>, vector<64x128xbf16>, vector<64x128xf32> -> vector<64x128xf32>
    %7 = arith.addf %0, %6 : vector<64x128xf32>
    %c1 = arith.constant 1 : index
    %c0_9 = arith.constant 0 : index
    %c0_10 = arith.constant 0 : index
    %c0_11 = arith.constant 0 : index
    %c0_12 = arith.constant 0 : index
    %8 = vector.load %arg1[%c1, %c0_9, %c0_10, %c0_11, %c0_12] : memref<3x1x10x8x64xbf16, #tpu.memory_space<vmem>>, vector<1x1x8x8x64xbf16>
    %9 = vector.shape_cast %8 : vector<1x1x8x8x64xbf16> to vector<8x8x64xbf16>
    %10 = vector.shape_cast %9 : vector<8x8x64xbf16> to vector<64x64xbf16>
    %c0_13 = arith.constant 0 : index
    %c1_14 = arith.constant 1 : index
    %c0_15 = arith.constant 0 : index
    %c0_16 = arith.constant 0 : index
    %11 = vector.load %arg2[%c0_13, %c1_14, %c0_15, %c0_16] : memref<3x3x64x128xbf16, #tpu.memory_space<vmem>>, vector<1x1x64x128xbf16>
    %12 = vector.shape_cast %11 : vector<1x1x64x128xbf16> to vector<64x128xbf16>
    %cst_17 = arith.constant dense<0.000000e+00> : vector<64x128xf32>
    %13 = tpu.matmul %10, %12, %cst_17 {dimension_numbers = #tpu.dot_dimension_numbers<[1], [0], [0], [1], [0, 0, 1, 1], [], []>} : vector<64x64xbf16>, vector<64x128xbf16>, vector<64x128xf32> -> vector<64x128xf32>
    %14 = arith.addf %7, %13 : vector<64x128xf32>
    %c2 = arith.constant 2 : index
    %c0_18 = arith.constant 0 : index
    %c0_19 = arith.constant 0 : index
    %c0_20 = arith.constant 0 : index
    %c0_21 = arith.constant 0 : index
    %15 = vector.load %arg1[%c2, %c0_18, %c0_19, %c0_20, %c0_21] : memref<3x1x10x8x64xbf16, #tpu.memory_space<vmem>>, vector<1x1x8x8x64xbf16>
    %16 = vector.shape_cast %15 : vector<1x1x8x8x64xbf16> to vector<8x8x64xbf16>
    %17 = vector.shape_cast %16 : vector<8x8x64xbf16> to vector<64x64xbf16>
    %c0_22 = arith.constant 0 : index
    %c2_23 = arith.constant 2 : index
    %c0_24 = arith.constant 0 : index
    %c0_25 = arith.constant 0 : index
    %18 = vector.load %arg2[%c0_22, %c2_23, %c0_24, %c0_25] : memref<3x3x64x128xbf16, #tpu.memory_space<vmem>>, vector<1x1x64x128xbf16>
    %19 = vector.shape_cast %18 : vector<1x1x64x128xbf16> to vector<64x128xbf16>
    %cst_26 = arith.constant dense<0.000000e+00> : vector<64x128xf32>
    %20 = tpu.matmul %17, %19, %cst_26 {dimension_numbers = #tpu.dot_dimension_numbers<[1], [0], [0], [1], [0, 0, 1, 1], [], []>} : vector<64x64xbf16>, vector<64x128xbf16>, vector<64x128xf32> -> vector<64x128xf32>
    %21 = arith.addf %14, %20 : vector<64x128xf32>
    %c0_27 = arith.constant 0 : index
    %c0_28 = arith.constant 0 : index
    %c1_29 = arith.constant 1 : index
    %c0_30 = arith.constant 0 : index
    %c0_31 = arith.constant 0 : index
    %22 = vector.load %arg1[%c0_27, %c0_28, %c1_29, %c0_30, %c0_31] : memref<3x1x10x8x64xbf16, #tpu.memory_space<vmem>>, vector<1x1x8x8x64xbf16>
    %23 = vector.shape_cast %22 : vector<1x1x8x8x64xbf16> to vector<8x8x64xbf16>
    %24 = vector.shape_cast %23 : vector<8x8x64xbf16> to vector<64x64xbf16>
    %c1_32 = arith.constant 1 : index
    %c0_33 = arith.constant 0 : index
    %c0_34 = arith.constant 0 : index
    %c0_35 = arith.constant 0 : index
    %25 = vector.load %arg2[%c1_32, %c0_33, %c0_34, %c0_35] : memref<3x3x64x128xbf16, #tpu.memory_space<vmem>>, vector<1x1x64x128xbf16>
    %26 = vector.shape_cast %25 : vector<1x1x64x128xbf16> to vector<64x128xbf16>
    %cst_36 = arith.constant dense<0.000000e+00> : vector<64x128xf32>
    %27 = tpu.matmul %24, %26, %cst_36 {dimension_numbers = #tpu.dot_dimension_numbers<[1], [0], [0], [1], [0, 0, 1, 1], [], []>} : vector<64x64xbf16>, vector<64x128xbf16>, vector<64x128xf32> -> vector<64x128xf32>
    %28 = arith.addf %21, %27 : vector<64x128xf32>
    %c1_37 = arith.constant 1 : index
    %c0_38 = arith.constant 0 : index
    %c1_39 = arith.constant 1 : index
    %c0_40 = arith.constant 0 : index
    %c0_41 = arith.constant 0 : index
    %29 = vector.load %arg1[%c1_37, %c0_38, %c1_39, %c0_40, %c0_41] : memref<3x1x10x8x64xbf16, #tpu.memory_space<vmem>>, vector<1x1x8x8x64xbf16>
    %30 = vector.shape_cast %29 : vector<1x1x8x8x64xbf16> to vector<8x8x64xbf16>
    %31 = vector.shape_cast %30 : vector<8x8x64xbf16> to vector<64x64xbf16>
    %c1_42 = arith.constant 1 : index
    %c1_43 = arith.constant 1 : index
    %c0_44 = arith.constant 0 : index
    %c0_45 = arith.constant 0 : index
    %32 = vector.load %arg2[%c1_42, %c1_43, %c0_44, %c0_45] : memref<3x3x64x128xbf16, #tpu.memory_space<vmem>>, vector<1x1x64x128xbf16>
    %33 = vector.shape_cast %32 : vector<1x1x64x128xbf16> to vector<64x128xbf16>
    %cst_46 = arith.constant dense<0.000000e+00> : vector<64x128xf32>
    %34 = tpu.matmul %31, %33, %cst_46 {dimension_numbers = #tpu.dot_dimension_numbers<[1], [0], [0], [1], [0, 0, 1, 1], [], []>} : vector<64x64xbf16>, vector<64x128xbf16>, vector<64x128xf32> -> vector<64x128xf32>
    %35 = arith.addf %28, %34 : vector<64x128xf32>
    %c2_47 = arith.constant 2 : index
    %c0_48 = arith.constant 0 : index
    %c1_49 = arith.constant 1 : index
    %c0_50 = arith.constant 0 : index
    %c0_51 = arith.constant 0 : index
    %36 = vector.load %arg1[%c2_47, %c0_48, %c1_49, %c0_50, %c0_51] : memref<3x1x10x8x64xbf16, #tpu.memory_space<vmem>>, vector<1x1x8x8x64xbf16>
    %37 = vector.shape_cast %36 : vector<1x1x8x8x64xbf16> to vector<8x8x64xbf16>
    %38 = vector.shape_cast %37 : vector<8x8x64xbf16> to vector<64x64xbf16>
    %c1_52 = arith.constant 1 : index
    %c2_53 = arith.constant 2 : index
    %c0_54 = arith.constant 0 : index
    %c0_55 = arith.constant 0 : index
    %39 = vector.load %arg2[%c1_52, %c2_53, %c0_54, %c0_55] : memref<3x3x64x128xbf16, #tpu.memory_space<vmem>>, vector<1x1x64x128xbf16>
    %40 = vector.shape_cast %39 : vector<1x1x64x128xbf16> to vector<64x128xbf16>
    %cst_56 = arith.constant dense<0.000000e+00> : vector<64x128xf32>
    %41 = tpu.matmul %38, %40, %cst_56 {dimension_numbers = #tpu.dot_dimension_numbers<[1], [0], [0], [1], [0, 0, 1, 1], [], []>} : vector<64x64xbf16>, vector<64x128xbf16>, vector<64x128xf32> -> vector<64x128xf32>
    %42 = arith.addf %35, %41 : vector<64x128xf32>
    %c0_57 = arith.constant 0 : index
    %c0_58 = arith.constant 0 : index
    %c2_59 = arith.constant 2 : index
    %c0_60 = arith.constant 0 : index
    %c0_61 = arith.constant 0 : index
    %43 = vector.load %arg1[%c0_57, %c0_58, %c2_59, %c0_60, %c0_61] : memref<3x1x10x8x64xbf16, #tpu.memory_space<vmem>>, vector<1x1x8x8x64xbf16>
    %44 = vector.shape_cast %43 : vector<1x1x8x8x64xbf16> to vector<8x8x64xbf16>
    %45 = vector.shape_cast %44 : vector<8x8x64xbf16> to vector<64x64xbf16>
    %c2_62 = arith.constant 2 : index
    %c0_63 = arith.constant 0 : index
    %c0_64 = arith.constant 0 : index
    %c0_65 = arith.constant 0 : index
    %46 = vector.load %arg2[%c2_62, %c0_63, %c0_64, %c0_65] : memref<3x3x64x128xbf16, #tpu.memory_space<vmem>>, vector<1x1x64x128xbf16>
    %47 = vector.shape_cast %46 : vector<1x1x64x128xbf16> to vector<64x128xbf16>
    %cst_66 = arith.constant dense<0.000000e+00> : vector<64x128xf32>
    %48 = tpu.matmul %45, %47, %cst_66 {dimension_numbers = #tpu.dot_dimension_numbers<[1], [0], [0], [1], [0, 0, 1, 1], [], []>} : vector<64x64xbf16>, vector<64x128xbf16>, vector<64x128xf32> -> vector<64x128xf32>
    %49 = arith.addf %42, %48 : vector<64x128xf32>
    %c1_67 = arith.constant 1 : index
    %c0_68 = arith.constant 0 : index
    %c2_69 = arith.constant 2 : index
    %c0_70 = arith.constant 0 : index
    %c0_71 = arith.constant 0 : index
    %50 = vector.load %arg1[%c1_67, %c0_68, %c2_69, %c0_70, %c0_71] : memref<3x1x10x8x64xbf16, #tpu.memory_space<vmem>>, vector<1x1x8x8x64xbf16>
    %51 = vector.shape_cast %50 : vector<1x1x8x8x64xbf16> to vector<8x8x64xbf16>
    %52 = vector.shape_cast %51 : vector<8x8x64xbf16> to vector<64x64xbf16>
    %c2_72 = arith.constant 2 : index
    %c1_73 = arith.constant 1 : index
    %c0_74 = arith.constant 0 : index
    %c0_75 = arith.constant 0 : index
    %53 = vector.load %arg2[%c2_72, %c1_73, %c0_74, %c0_75] : memref<3x3x64x128xbf16, #tpu.memory_space<vmem>>, vector<1x1x64x128xbf16>
    %54 = vector.shape_cast %53 : vector<1x1x64x128xbf16> to vector<64x128xbf16>
    %cst_76 = arith.constant dense<0.000000e+00> : vector<64x128xf32>
    %55 = tpu.matmul %52, %54, %cst_76 {dimension_numbers = #tpu.dot_dimension_numbers<[1], [0], [0], [1], [0, 0, 1, 1], [], []>} : vector<64x64xbf16>, vector<64x128xbf16>, vector<64x128xf32> -> vector<64x128xf32>
    %56 = arith.addf %49, %55 : vector<64x128xf32>
    %c2_77 = arith.constant 2 : index
    %c0_78 = arith.constant 0 : index
    %c2_79 = arith.constant 2 : index
    %c0_80 = arith.constant 0 : index
    %c0_81 = arith.constant 0 : index
    %57 = vector.load %arg1[%c2_77, %c0_78, %c2_79, %c0_80, %c0_81] : memref<3x1x10x8x64xbf16, #tpu.memory_space<vmem>>, vector<1x1x8x8x64xbf16>
    %58 = vector.shape_cast %57 : vector<1x1x8x8x64xbf16> to vector<8x8x64xbf16>
    %59 = vector.shape_cast %58 : vector<8x8x64xbf16> to vector<64x64xbf16>
    %c2_82 = arith.constant 2 : index
    %c2_83 = arith.constant 2 : index
    %c0_84 = arith.constant 0 : index
    %c0_85 = arith.constant 0 : index
    %60 = vector.load %arg2[%c2_82, %c2_83, %c0_84, %c0_85] : memref<3x3x64x128xbf16, #tpu.memory_space<vmem>>, vector<1x1x64x128xbf16>
    %61 = vector.shape_cast %60 : vector<1x1x64x128xbf16> to vector<64x128xbf16>
    %cst_86 = arith.constant dense<0.000000e+00> : vector<64x128xf32>
    %62 = tpu.matmul %59, %61, %cst_86 {dimension_numbers = #tpu.dot_dimension_numbers<[1], [0], [0], [1], [0, 0, 1, 1], [], []>} : vector<64x64xbf16>, vector<64x128xbf16>, vector<64x128xf32> -> vector<64x128xf32>
    %63 = arith.addf %56, %62 : vector<64x128xf32>
    %c0_87 = arith.constant 0 : index
    %c0_88 = arith.constant 0 : index
    %64 = vector.load %arg3[%c0_87, %c0_88] : memref<1x128xf32, #tpu.memory_space<vmem>>, vector<1x128xf32>
    %65 = vector.broadcast %64 : vector<1x128xf32> to vector<64x128xf32>
    %66 = arith.addf %63, %65 : vector<64x128xf32>
    %67 = arith.truncf %66 : vector<64x128xf32> to vector<64x128xbf16>
    %c0_89 = arith.constant 0 : index
    %c0_90 = arith.constant 0 : index
    %68 = vector.load %arg4[%c0_89, %c0_90] : memref<64x128xbf16, #tpu.memory_space<vmem>>, vector<64x128xbf16>
    tpu.vector_store %arg4[%c0_89, %c0_90], %67 {strides = array<i32>} : memref<64x128xbf16, #tpu.memory_space<vmem>>, vector<64x128xbf16>,
    return
  }
  func.func @transform_0(%arg0: i32) -> (i32, i32, i32, i32, i32) {
    %c0_i32 = arith.constant 0 : i32
    %c0_i32_0 = arith.constant 0 : i32
    %c0_i32_1 = arith.constant 0 : i32
    %c0_i32_2 = arith.constant 0 : i32
    %c0_i32_3 = arith.constant 0 : i32
    return %c0_i32, %arg0, %c0_i32_0, %c0_i32_1, %c0_i32_2 : i32, i32, i32, i32, i32
  }
  func.func @transform_1(%arg0: i32) -> (i32, i32, i32, i32) {
    %c0_i32 = arith.constant 0 : i32
    %c0_i32_0 = arith.constant 0 : i32
    %c0_i32_1 = arith.constant 0 : i32
    %c0_i32_2 = arith.constant 0 : i32
    %c0_i32_3 = arith.constant 0 : i32
    return %c0_i32, %c0_i32_0, %c0_i32_1, %c0_i32_2 : i32, i32, i32, i32
  }
  func.func @transform_2(%arg0: i32) -> (i32, i32) {
    %c0_i32 = arith.constant 0 : i32
    %c0_i32_0 = arith.constant 0 : i32
    %c0_i32_1 = arith.constant 0 : i32
    return %c0_i32, %c0_i32_0 : i32, i32
  }
  func.func @transform_3(%arg0: i32) -> (i32, i32) {
    %c0_i32 = arith.constant 0 : i32
    %c0_i32_0 = arith.constant 0 : i32
    return %arg0, %c0_i32 : i32, i32
  }
}

module attributes {stable_mosaic.version = 11 : i64} {
  func.func @_conv_taps_kernel(%arg0: i32, %arg1: memref<3x1x18x16x32xbf16, #tpu.memory_space<vmem>>, %arg2: memref<3x3x32x32xbf16, #tpu.memory_space<vmem>>, %arg3: memref<3x1x18x16x64xbf16, #tpu.memory_space<vmem>>, %arg4: memref<3x3x64x32xbf16, #tpu.memory_space<vmem>>, %arg5: memref<1x32xf32, #tpu.memory_space<vmem>>, %arg6: memref<256x32xf32, #tpu.memory_space<vmem>>) attributes {dimension_semantics = [#tpu.dimension_semantics<parallel>], iteration_bounds = array<i64: 2>, scalar_prefetch = 0 : i64, scratch_operands = 0 : i64, tpu.core_type = #tpu.core_type<tc>, window_params = [{transform_indices = @transform_0, window_bounds = array<i64: 3, 1, 18, 16, 32>}, {pipeline_mode = #tpu.pipeline_mode<synchronous>, transform_indices = @transform_1, window_bounds = array<i64: 3, 3, 32, 32>}, {transform_indices = @transform_2, window_bounds = array<i64: 3, 1, 18, 16, 64>}, {pipeline_mode = #tpu.pipeline_mode<synchronous>, transform_indices = @transform_3, window_bounds = array<i64: 3, 3, 64, 32>}, {pipeline_mode = #tpu.pipeline_mode<synchronous>, transform_indices = @transform_4, window_bounds = array<i64: 1, 32>}, {transform_indices = @transform_5, window_bounds = array<i64: 256, 32>}]} {
    %cst = arith.constant 0.000000e+00 : f32
    %0 = vector.broadcast %cst : f32 to vector<256x32xf32>
    %c0 = arith.constant 0 : index
    %c0_0 = arith.constant 0 : index
    %c0_1 = arith.constant 0 : index
    %c0_2 = arith.constant 0 : index
    %c0_3 = arith.constant 0 : index
    %1 = vector.load %arg1[%c0, %c0_0, %c0_1, %c0_2, %c0_3] : memref<3x1x18x16x32xbf16, #tpu.memory_space<vmem>>, vector<1x1x16x16x32xbf16>
    %2 = vector.shape_cast %1 : vector<1x1x16x16x32xbf16> to vector<16x16x32xbf16>
    %3 = vector.shape_cast %2 : vector<16x16x32xbf16> to vector<256x32xbf16>
    %c0_4 = arith.constant 0 : index
    %c0_5 = arith.constant 0 : index
    %c0_6 = arith.constant 0 : index
    %c0_7 = arith.constant 0 : index
    %4 = vector.load %arg2[%c0_4, %c0_5, %c0_6, %c0_7] : memref<3x3x32x32xbf16, #tpu.memory_space<vmem>>, vector<1x1x32x32xbf16>
    %5 = vector.shape_cast %4 : vector<1x1x32x32xbf16> to vector<32x32xbf16>
    %cst_8 = arith.constant dense<0.000000e+00> : vector<256x32xf32>
    %6 = tpu.matmul %3, %5, %cst_8 {dimension_numbers = #tpu.dot_dimension_numbers<[1], [0], [0], [1], [0, 0, 1, 1], [], []>} : vector<256x32xbf16>, vector<32x32xbf16>, vector<256x32xf32> -> vector<256x32xf32>
    %7 = arith.addf %0, %6 : vector<256x32xf32>
    %c0_9 = arith.constant 0 : index
    %c0_10 = arith.constant 0 : index
    %c0_11 = arith.constant 0 : index
    %c0_12 = arith.constant 0 : index
    %c0_13 = arith.constant 0 : index
    %8 = vector.load %arg3[%c0_9, %c0_10, %c0_11, %c0_12, %c0_13] : memref<3x1x18x16x64xbf16, #tpu.memory_space<vmem>>, vector<1x1x16x16x64xbf16>
    %9 = vector.shape_cast %8 : vector<1x1x16x16x64xbf16> to vector<16x16x64xbf16>
    %10 = vector.shape_cast %9 : vector<16x16x64xbf16> to vector<256x64xbf16>
    %c0_14 = arith.constant 0 : index
    %c0_15 = arith.constant 0 : index
    %c0_16 = arith.constant 0 : index
    %c0_17 = arith.constant 0 : index
    %11 = vector.load %arg4[%c0_14, %c0_15, %c0_16, %c0_17] : memref<3x3x64x32xbf16, #tpu.memory_space<vmem>>, vector<1x1x64x32xbf16>
    %12 = vector.shape_cast %11 : vector<1x1x64x32xbf16> to vector<64x32xbf16>
    %cst_18 = arith.constant dense<0.000000e+00> : vector<256x32xf32>
    %13 = tpu.matmul %10, %12, %cst_18 {dimension_numbers = #tpu.dot_dimension_numbers<[1], [0], [0], [1], [0, 0, 1, 1], [], []>} : vector<256x64xbf16>, vector<64x32xbf16>, vector<256x32xf32> -> vector<256x32xf32>
    %14 = arith.addf %7, %13 : vector<256x32xf32>
    %c1 = arith.constant 1 : index
    %c0_19 = arith.constant 0 : index
    %c0_20 = arith.constant 0 : index
    %c0_21 = arith.constant 0 : index
    %c0_22 = arith.constant 0 : index
    %15 = vector.load %arg1[%c1, %c0_19, %c0_20, %c0_21, %c0_22] : memref<3x1x18x16x32xbf16, #tpu.memory_space<vmem>>, vector<1x1x16x16x32xbf16>
    %16 = vector.shape_cast %15 : vector<1x1x16x16x32xbf16> to vector<16x16x32xbf16>
    %17 = vector.shape_cast %16 : vector<16x16x32xbf16> to vector<256x32xbf16>
    %c0_23 = arith.constant 0 : index
    %c1_24 = arith.constant 1 : index
    %c0_25 = arith.constant 0 : index
    %c0_26 = arith.constant 0 : index
    %18 = vector.load %arg2[%c0_23, %c1_24, %c0_25, %c0_26] : memref<3x3x32x32xbf16, #tpu.memory_space<vmem>>, vector<1x1x32x32xbf16>
    %19 = vector.shape_cast %18 : vector<1x1x32x32xbf16> to vector<32x32xbf16>
    %cst_27 = arith.constant dense<0.000000e+00> : vector<256x32xf32>
    %20 = tpu.matmul %17, %19, %cst_27 {dimension_numbers = #tpu.dot_dimension_numbers<[1], [0], [0], [1], [0, 0, 1, 1], [], []>} : vector<256x32xbf16>, vector<32x32xbf16>, vector<256x32xf32> -> vector<256x32xf32>
    %21 = arith.addf %14, %20 : vector<256x32xf32>
    %c1_28 = arith.constant 1 : index
    %c0_29 = arith.constant 0 : index
    %c0_30 = arith.constant 0 : index
    %c0_31 = arith.constant 0 : index
    %c0_32 = arith.constant 0 : index
    %22 = vector.load %arg3[%c1_28, %c0_29, %c0_30, %c0_31, %c0_32] : memref<3x1x18x16x64xbf16, #tpu.memory_space<vmem>>, vector<1x1x16x16x64xbf16>
    %23 = vector.shape_cast %22 : vector<1x1x16x16x64xbf16> to vector<16x16x64xbf16>
    %24 = vector.shape_cast %23 : vector<16x16x64xbf16> to vector<256x64xbf16>
    %c0_33 = arith.constant 0 : index
    %c1_34 = arith.constant 1 : index
    %c0_35 = arith.constant 0 : index
    %c0_36 = arith.constant 0 : index
    %25 = vector.load %arg4[%c0_33, %c1_34, %c0_35, %c0_36] : memref<3x3x64x32xbf16, #tpu.memory_space<vmem>>, vector<1x1x64x32xbf16>
    %26 = vector.shape_cast %25 : vector<1x1x64x32xbf16> to vector<64x32xbf16>
    %cst_37 = arith.constant dense<0.000000e+00> : vector<256x32xf32>
    %27 = tpu.matmul %24, %26, %cst_37 {dimension_numbers = #tpu.dot_dimension_numbers<[1], [0], [0], [1], [0, 0, 1, 1], [], []>} : vector<256x64xbf16>, vector<64x32xbf16>, vector<256x32xf32> -> vector<256x32xf32>
    %28 = arith.addf %21, %27 : vector<256x32xf32>
    %c2 = arith.constant 2 : index
    %c0_38 = arith.constant 0 : index
    %c0_39 = arith.constant 0 : index
    %c0_40 = arith.constant 0 : index
    %c0_41 = arith.constant 0 : index
    %29 = vector.load %arg1[%c2, %c0_38, %c0_39, %c0_40, %c0_41] : memref<3x1x18x16x32xbf16, #tpu.memory_space<vmem>>, vector<1x1x16x16x32xbf16>
    %30 = vector.shape_cast %29 : vector<1x1x16x16x32xbf16> to vector<16x16x32xbf16>
    %31 = vector.shape_cast %30 : vector<16x16x32xbf16> to vector<256x32xbf16>
    %c0_42 = arith.constant 0 : index
    %c2_43 = arith.constant 2 : index
    %c0_44 = arith.constant 0 : index
    %c0_45 = arith.constant 0 : index
    %32 = vector.load %arg2[%c0_42, %c2_43, %c0_44, %c0_45] : memref<3x3x32x32xbf16, #tpu.memory_space<vmem>>, vector<1x1x32x32xbf16>
    %33 = vector.shape_cast %32 : vector<1x1x32x32xbf16> to vector<32x32xbf16>
    %cst_46 = arith.constant dense<0.000000e+00> : vector<256x32xf32>
    %34 = tpu.matmul %31, %33, %cst_46 {dimension_numbers = #tpu.dot_dimension_numbers<[1], [0], [0], [1], [0, 0, 1, 1], [], []>} : vector<256x32xbf16>, vector<32x32xbf16>, vector<256x32xf32> -> vector<256x32xf32>
    %35 = arith.addf %28, %34 : vector<256x32xf32>
    %c2_47 = arith.constant 2 : index
    %c0_48 = arith.constant 0 : index
    %c0_49 = arith.constant 0 : index
    %c0_50 = arith.constant 0 : index
    %c0_51 = arith.constant 0 : index
    %36 = vector.load %arg3[%c2_47, %c0_48, %c0_49, %c0_50, %c0_51] : memref<3x1x18x16x64xbf16, #tpu.memory_space<vmem>>, vector<1x1x16x16x64xbf16>
    %37 = vector.shape_cast %36 : vector<1x1x16x16x64xbf16> to vector<16x16x64xbf16>
    %38 = vector.shape_cast %37 : vector<16x16x64xbf16> to vector<256x64xbf16>
    %c0_52 = arith.constant 0 : index
    %c2_53 = arith.constant 2 : index
    %c0_54 = arith.constant 0 : index
    %c0_55 = arith.constant 0 : index
    %39 = vector.load %arg4[%c0_52, %c2_53, %c0_54, %c0_55] : memref<3x3x64x32xbf16, #tpu.memory_space<vmem>>, vector<1x1x64x32xbf16>
    %40 = vector.shape_cast %39 : vector<1x1x64x32xbf16> to vector<64x32xbf16>
    %cst_56 = arith.constant dense<0.000000e+00> : vector<256x32xf32>
    %41 = tpu.matmul %38, %40, %cst_56 {dimension_numbers = #tpu.dot_dimension_numbers<[1], [0], [0], [1], [0, 0, 1, 1], [], []>} : vector<256x64xbf16>, vector<64x32xbf16>, vector<256x32xf32> -> vector<256x32xf32>
    %42 = arith.addf %35, %41 : vector<256x32xf32>
    %c0_57 = arith.constant 0 : index
    %c0_58 = arith.constant 0 : index
    %c1_59 = arith.constant 1 : index
    %c0_60 = arith.constant 0 : index
    %c0_61 = arith.constant 0 : index
    %43 = vector.load %arg1[%c0_57, %c0_58, %c1_59, %c0_60, %c0_61] : memref<3x1x18x16x32xbf16, #tpu.memory_space<vmem>>, vector<1x1x16x16x32xbf16>
    %44 = vector.shape_cast %43 : vector<1x1x16x16x32xbf16> to vector<16x16x32xbf16>
    %45 = vector.shape_cast %44 : vector<16x16x32xbf16> to vector<256x32xbf16>
    %c1_62 = arith.constant 1 : index
    %c0_63 = arith.constant 0 : index
    %c0_64 = arith.constant 0 : index
    %c0_65 = arith.constant 0 : index
    %46 = vector.load %arg2[%c1_62, %c0_63, %c0_64, %c0_65] : memref<3x3x32x32xbf16, #tpu.memory_space<vmem>>, vector<1x1x32x32xbf16>
    %47 = vector.shape_cast %46 : vector<1x1x32x32xbf16> to vector<32x32xbf16>
    %cst_66 = arith.constant dense<0.000000e+00> : vector<256x32xf32>
    %48 = tpu.matmul %45, %47, %cst_66 {dimension_numbers = #tpu.dot_dimension_numbers<[1], [0], [0], [1], [0, 0, 1, 1], [], []>} : vector<256x32xbf16>, vector<32x32xbf16>, vector<256x32xf32> -> vector<256x32xf32>
    %49 = arith.addf %42, %48 : vector<256x32xf32>
    %c0_67 = arith.constant 0 : index
    %c0_68 = arith.constant 0 : index
    %c1_69 = arith.constant 1 : index
    %c0_70 = arith.constant 0 : index
    %c0_71 = arith.constant 0 : index
    %50 = vector.load %arg3[%c0_67, %c0_68, %c1_69, %c0_70, %c0_71] : memref<3x1x18x16x64xbf16, #tpu.memory_space<vmem>>, vector<1x1x16x16x64xbf16>
    %51 = vector.shape_cast %50 : vector<1x1x16x16x64xbf16> to vector<16x16x64xbf16>
    %52 = vector.shape_cast %51 : vector<16x16x64xbf16> to vector<256x64xbf16>
    %c1_72 = arith.constant 1 : index
    %c0_73 = arith.constant 0 : index
    %c0_74 = arith.constant 0 : index
    %c0_75 = arith.constant 0 : index
    %53 = vector.load %arg4[%c1_72, %c0_73, %c0_74, %c0_75] : memref<3x3x64x32xbf16, #tpu.memory_space<vmem>>, vector<1x1x64x32xbf16>
    %54 = vector.shape_cast %53 : vector<1x1x64x32xbf16> to vector<64x32xbf16>
    %cst_76 = arith.constant dense<0.000000e+00> : vector<256x32xf32>
    %55 = tpu.matmul %52, %54, %cst_76 {dimension_numbers = #tpu.dot_dimension_numbers<[1], [0], [0], [1], [0, 0, 1, 1], [], []>} : vector<256x64xbf16>, vector<64x32xbf16>, vector<256x32xf32> -> vector<256x32xf32>
    %56 = arith.addf %49, %55 : vector<256x32xf32>
    %c1_77 = arith.constant 1 : index
    %c0_78 = arith.constant 0 : index
    %c1_79 = arith.constant 1 : index
    %c0_80 = arith.constant 0 : index
    %c0_81 = arith.constant 0 : index
    %57 = vector.load %arg1[%c1_77, %c0_78, %c1_79, %c0_80, %c0_81] : memref<3x1x18x16x32xbf16, #tpu.memory_space<vmem>>, vector<1x1x16x16x32xbf16>
    %58 = vector.shape_cast %57 : vector<1x1x16x16x32xbf16> to vector<16x16x32xbf16>
    %59 = vector.shape_cast %58 : vector<16x16x32xbf16> to vector<256x32xbf16>
    %c1_82 = arith.constant 1 : index
    %c1_83 = arith.constant 1 : index
    %c0_84 = arith.constant 0 : index
    %c0_85 = arith.constant 0 : index
    %60 = vector.load %arg2[%c1_82, %c1_83, %c0_84, %c0_85] : memref<3x3x32x32xbf16, #tpu.memory_space<vmem>>, vector<1x1x32x32xbf16>
    %61 = vector.shape_cast %60 : vector<1x1x32x32xbf16> to vector<32x32xbf16>
    %cst_86 = arith.constant dense<0.000000e+00> : vector<256x32xf32>
    %62 = tpu.matmul %59, %61, %cst_86 {dimension_numbers = #tpu.dot_dimension_numbers<[1], [0], [0], [1], [0, 0, 1, 1], [], []>} : vector<256x32xbf16>, vector<32x32xbf16>, vector<256x32xf32> -> vector<256x32xf32>
    %63 = arith.addf %56, %62 : vector<256x32xf32>
    %c1_87 = arith.constant 1 : index
    %c0_88 = arith.constant 0 : index
    %c1_89 = arith.constant 1 : index
    %c0_90 = arith.constant 0 : index
    %c0_91 = arith.constant 0 : index
    %64 = vector.load %arg3[%c1_87, %c0_88, %c1_89, %c0_90, %c0_91] : memref<3x1x18x16x64xbf16, #tpu.memory_space<vmem>>, vector<1x1x16x16x64xbf16>
    %65 = vector.shape_cast %64 : vector<1x1x16x16x64xbf16> to vector<16x16x64xbf16>
    %66 = vector.shape_cast %65 : vector<16x16x64xbf16> to vector<256x64xbf16>
    %c1_92 = arith.constant 1 : index
    %c1_93 = arith.constant 1 : index
    %c0_94 = arith.constant 0 : index
    %c0_95 = arith.constant 0 : index
    %67 = vector.load %arg4[%c1_92, %c1_93, %c0_94, %c0_95] : memref<3x3x64x32xbf16, #tpu.memory_space<vmem>>, vector<1x1x64x32xbf16>
    %68 = vector.shape_cast %67 : vector<1x1x64x32xbf16> to vector<64x32xbf16>
    %cst_96 = arith.constant dense<0.000000e+00> : vector<256x32xf32>
    %69 = tpu.matmul %66, %68, %cst_96 {dimension_numbers = #tpu.dot_dimension_numbers<[1], [0], [0], [1], [0, 0, 1, 1], [], []>} : vector<256x64xbf16>, vector<64x32xbf16>, vector<256x32xf32> -> vector<256x32xf32>
    %70 = arith.addf %63, %69 : vector<256x32xf32>
    %c2_97 = arith.constant 2 : index
    %c0_98 = arith.constant 0 : index
    %c1_99 = arith.constant 1 : index
    %c0_100 = arith.constant 0 : index
    %c0_101 = arith.constant 0 : index
    %71 = vector.load %arg1[%c2_97, %c0_98, %c1_99, %c0_100, %c0_101] : memref<3x1x18x16x32xbf16, #tpu.memory_space<vmem>>, vector<1x1x16x16x32xbf16>
    %72 = vector.shape_cast %71 : vector<1x1x16x16x32xbf16> to vector<16x16x32xbf16>
    %73 = vector.shape_cast %72 : vector<16x16x32xbf16> to vector<256x32xbf16>
    %c1_102 = arith.constant 1 : index
    %c2_103 = arith.constant 2 : index
    %c0_104 = arith.constant 0 : index
    %c0_105 = arith.constant 0 : index
    %74 = vector.load %arg2[%c1_102, %c2_103, %c0_104, %c0_105] : memref<3x3x32x32xbf16, #tpu.memory_space<vmem>>, vector<1x1x32x32xbf16>
    %75 = vector.shape_cast %74 : vector<1x1x32x32xbf16> to vector<32x32xbf16>
    %cst_106 = arith.constant dense<0.000000e+00> : vector<256x32xf32>
    %76 = tpu.matmul %73, %75, %cst_106 {dimension_numbers = #tpu.dot_dimension_numbers<[1], [0], [0], [1], [0, 0, 1, 1], [], []>} : vector<256x32xbf16>, vector<32x32xbf16>, vector<256x32xf32> -> vector<256x32xf32>
    %77 = arith.addf %70, %76 : vector<256x32xf32>
    %c2_107 = arith.constant 2 : index
    %c0_108 = arith.constant 0 : index
    %c1_109 = arith.constant 1 : index
    %c0_110 = arith.constant 0 : index
    %c0_111 = arith.constant 0 : index
    %78 = vector.load %arg3[%c2_107, %c0_108, %c1_109, %c0_110, %c0_111] : memref<3x1x18x16x64xbf16, #tpu.memory_space<vmem>>, vector<1x1x16x16x64xbf16>
    %79 = vector.shape_cast %78 : vector<1x1x16x16x64xbf16> to vector<16x16x64xbf16>
    %80 = vector.shape_cast %79 : vector<16x16x64xbf16> to vector<256x64xbf16>
    %c1_112 = arith.constant 1 : index
    %c2_113 = arith.constant 2 : index
    %c0_114 = arith.constant 0 : index
    %c0_115 = arith.constant 0 : index
    %81 = vector.load %arg4[%c1_112, %c2_113, %c0_114, %c0_115] : memref<3x3x64x32xbf16, #tpu.memory_space<vmem>>, vector<1x1x64x32xbf16>
    %82 = vector.shape_cast %81 : vector<1x1x64x32xbf16> to vector<64x32xbf16>
    %cst_116 = arith.constant dense<0.000000e+00> : vector<256x32xf32>
    %83 = tpu.matmul %80, %82, %cst_116 {dimension_numbers = #tpu.dot_dimension_numbers<[1], [0], [0], [1], [0, 0, 1, 1], [], []>} : vector<256x64xbf16>, vector<64x32xbf16>, vector<256x32xf32> -> vector<256x32xf32>
    %84 = arith.addf %77, %83 : vector<256x32xf32>
    %c0_117 = arith.constant 0 : index
    %c0_118 = arith.constant 0 : index
    %c2_119 = arith.constant 2 : index
    %c0_120 = arith.constant 0 : index
    %c0_121 = arith.constant 0 : index
    %85 = vector.load %arg1[%c0_117, %c0_118, %c2_119, %c0_120, %c0_121] : memref<3x1x18x16x32xbf16, #tpu.memory_space<vmem>>, vector<1x1x16x16x32xbf16>
    %86 = vector.shape_cast %85 : vector<1x1x16x16x32xbf16> to vector<16x16x32xbf16>
    %87 = vector.shape_cast %86 : vector<16x16x32xbf16> to vector<256x32xbf16>
    %c2_122 = arith.constant 2 : index
    %c0_123 = arith.constant 0 : index
    %c0_124 = arith.constant 0 : index
    %c0_125 = arith.constant 0 : index
    %88 = vector.load %arg2[%c2_122, %c0_123, %c0_124, %c0_125] : memref<3x3x32x32xbf16, #tpu.memory_space<vmem>>, vector<1x1x32x32xbf16>
    %89 = vector.shape_cast %88 : vector<1x1x32x32xbf16> to vector<32x32xbf16>
    %cst_126 = arith.constant dense<0.000000e+00> : vector<256x32xf32>
    %90 = tpu.matmul %87, %89, %cst_126 {dimension_numbers = #tpu.dot_dimension_numbers<[1], [0], [0], [1], [0, 0, 1, 1], [], []>} : vector<256x32xbf16>, vector<32x32xbf16>, vector<256x32xf32> -> vector<256x32xf32>
    %91 = arith.addf %84, %90 : vector<256x32xf32>
    %c0_127 = arith.constant 0 : index
    %c0_128 = arith.constant 0 : index
    %c2_129 = arith.constant 2 : index
    %c0_130 = arith.constant 0 : index
    %c0_131 = arith.constant 0 : index
    %92 = vector.load %arg3[%c0_127, %c0_128, %c2_129, %c0_130, %c0_131] : memref<3x1x18x16x64xbf16, #tpu.memory_space<vmem>>, vector<1x1x16x16x64xbf16>
    %93 = vector.shape_cast %92 : vector<1x1x16x16x64xbf16> to vector<16x16x64xbf16>
    %94 = vector.shape_cast %93 : vector<16x16x64xbf16> to vector<256x64xbf16>
    %c2_132 = arith.constant 2 : index
    %c0_133 = arith.constant 0 : index
    %c0_134 = arith.constant 0 : index
    %c0_135 = arith.constant 0 : index
    %95 = vector.load %arg4[%c2_132, %c0_133, %c0_134, %c0_135] : memref<3x3x64x32xbf16, #tpu.memory_space<vmem>>, vector<1x1x64x32xbf16>
    %96 = vector.shape_cast %95 : vector<1x1x64x32xbf16> to vector<64x32xbf16>
    %cst_136 = arith.constant dense<0.000000e+00> : vector<256x32xf32>
    %97 = tpu.matmul %94, %96, %cst_136 {dimension_numbers = #tpu.dot_dimension_numbers<[1], [0], [0], [1], [0, 0, 1, 1], [], []>} : vector<256x64xbf16>, vector<64x32xbf16>, vector<256x32xf32> -> vector<256x32xf32>
    %98 = arith.addf %91, %97 : vector<256x32xf32>
    %c1_137 = arith.constant 1 : index
    %c0_138 = arith.constant 0 : index
    %c2_139 = arith.constant 2 : index
    %c0_140 = arith.constant 0 : index
    %c0_141 = arith.constant 0 : index
    %99 = vector.load %arg1[%c1_137, %c0_138, %c2_139, %c0_140, %c0_141] : memref<3x1x18x16x32xbf16, #tpu.memory_space<vmem>>, vector<1x1x16x16x32xbf16>
    %100 = vector.shape_cast %99 : vector<1x1x16x16x32xbf16> to vector<16x16x32xbf16>
    %101 = vector.shape_cast %100 : vector<16x16x32xbf16> to vector<256x32xbf16>
    %c2_142 = arith.constant 2 : index
    %c1_143 = arith.constant 1 : index
    %c0_144 = arith.constant 0 : index
    %c0_145 = arith.constant 0 : index
    %102 = vector.load %arg2[%c2_142, %c1_143, %c0_144, %c0_145] : memref<3x3x32x32xbf16, #tpu.memory_space<vmem>>, vector<1x1x32x32xbf16>
    %103 = vector.shape_cast %102 : vector<1x1x32x32xbf16> to vector<32x32xbf16>
    %cst_146 = arith.constant dense<0.000000e+00> : vector<256x32xf32>
    %104 = tpu.matmul %101, %103, %cst_146 {dimension_numbers = #tpu.dot_dimension_numbers<[1], [0], [0], [1], [0, 0, 1, 1], [], []>} : vector<256x32xbf16>, vector<32x32xbf16>, vector<256x32xf32> -> vector<256x32xf32>
    %105 = arith.addf %98, %104 : vector<256x32xf32>
    %c1_147 = arith.constant 1 : index
    %c0_148 = arith.constant 0 : index
    %c2_149 = arith.constant 2 : index
    %c0_150 = arith.constant 0 : index
    %c0_151 = arith.constant 0 : index
    %106 = vector.load %arg3[%c1_147, %c0_148, %c2_149, %c0_150, %c0_151] : memref<3x1x18x16x64xbf16, #tpu.memory_space<vmem>>, vector<1x1x16x16x64xbf16>
    %107 = vector.shape_cast %106 : vector<1x1x16x16x64xbf16> to vector<16x16x64xbf16>
    %108 = vector.shape_cast %107 : vector<16x16x64xbf16> to vector<256x64xbf16>
    %c2_152 = arith.constant 2 : index
    %c1_153 = arith.constant 1 : index
    %c0_154 = arith.constant 0 : index
    %c0_155 = arith.constant 0 : index
    %109 = vector.load %arg4[%c2_152, %c1_153, %c0_154, %c0_155] : memref<3x3x64x32xbf16, #tpu.memory_space<vmem>>, vector<1x1x64x32xbf16>
    %110 = vector.shape_cast %109 : vector<1x1x64x32xbf16> to vector<64x32xbf16>
    %cst_156 = arith.constant dense<0.000000e+00> : vector<256x32xf32>
    %111 = tpu.matmul %108, %110, %cst_156 {dimension_numbers = #tpu.dot_dimension_numbers<[1], [0], [0], [1], [0, 0, 1, 1], [], []>} : vector<256x64xbf16>, vector<64x32xbf16>, vector<256x32xf32> -> vector<256x32xf32>
    %112 = arith.addf %105, %111 : vector<256x32xf32>
    %c2_157 = arith.constant 2 : index
    %c0_158 = arith.constant 0 : index
    %c2_159 = arith.constant 2 : index
    %c0_160 = arith.constant 0 : index
    %c0_161 = arith.constant 0 : index
    %113 = vector.load %arg1[%c2_157, %c0_158, %c2_159, %c0_160, %c0_161] : memref<3x1x18x16x32xbf16, #tpu.memory_space<vmem>>, vector<1x1x16x16x32xbf16>
    %114 = vector.shape_cast %113 : vector<1x1x16x16x32xbf16> to vector<16x16x32xbf16>
    %115 = vector.shape_cast %114 : vector<16x16x32xbf16> to vector<256x32xbf16>
    %c2_162 = arith.constant 2 : index
    %c2_163 = arith.constant 2 : index
    %c0_164 = arith.constant 0 : index
    %c0_165 = arith.constant 0 : index
    %116 = vector.load %arg2[%c2_162, %c2_163, %c0_164, %c0_165] : memref<3x3x32x32xbf16, #tpu.memory_space<vmem>>, vector<1x1x32x32xbf16>
    %117 = vector.shape_cast %116 : vector<1x1x32x32xbf16> to vector<32x32xbf16>
    %cst_166 = arith.constant dense<0.000000e+00> : vector<256x32xf32>
    %118 = tpu.matmul %115, %117, %cst_166 {dimension_numbers = #tpu.dot_dimension_numbers<[1], [0], [0], [1], [0, 0, 1, 1], [], []>} : vector<256x32xbf16>, vector<32x32xbf16>, vector<256x32xf32> -> vector<256x32xf32>
    %119 = arith.addf %112, %118 : vector<256x32xf32>
    %c2_167 = arith.constant 2 : index
    %c0_168 = arith.constant 0 : index
    %c2_169 = arith.constant 2 : index
    %c0_170 = arith.constant 0 : index
    %c0_171 = arith.constant 0 : index
    %120 = vector.load %arg3[%c2_167, %c0_168, %c2_169, %c0_170, %c0_171] : memref<3x1x18x16x64xbf16, #tpu.memory_space<vmem>>, vector<1x1x16x16x64xbf16>
    %121 = vector.shape_cast %120 : vector<1x1x16x16x64xbf16> to vector<16x16x64xbf16>
    %122 = vector.shape_cast %121 : vector<16x16x64xbf16> to vector<256x64xbf16>
    %c2_172 = arith.constant 2 : index
    %c2_173 = arith.constant 2 : index
    %c0_174 = arith.constant 0 : index
    %c0_175 = arith.constant 0 : index
    %123 = vector.load %arg4[%c2_172, %c2_173, %c0_174, %c0_175] : memref<3x3x64x32xbf16, #tpu.memory_space<vmem>>, vector<1x1x64x32xbf16>
    %124 = vector.shape_cast %123 : vector<1x1x64x32xbf16> to vector<64x32xbf16>
    %cst_176 = arith.constant dense<0.000000e+00> : vector<256x32xf32>
    %125 = tpu.matmul %122, %124, %cst_176 {dimension_numbers = #tpu.dot_dimension_numbers<[1], [0], [0], [1], [0, 0, 1, 1], [], []>} : vector<256x64xbf16>, vector<64x32xbf16>, vector<256x32xf32> -> vector<256x32xf32>
    %126 = arith.addf %119, %125 : vector<256x32xf32>
    %c0_177 = arith.constant 0 : index
    %c0_178 = arith.constant 0 : index
    %127 = vector.load %arg5[%c0_177, %c0_178] : memref<1x32xf32, #tpu.memory_space<vmem>>, vector<1x32xf32>
    %128 = vector.broadcast %127 : vector<1x32xf32> to vector<256x32xf32>
    %129 = arith.addf %126, %128 : vector<256x32xf32>
    %cst_179 = arith.constant 0.000000e+00 : f32
    %130 = vector.broadcast %cst_179 : f32 to vector<256x32xf32>
    %131 = arith.maximumf %129, %130 : vector<256x32xf32>
    %c0_180 = arith.constant 0 : index
    %c0_181 = arith.constant 0 : index
    %132 = vector.load %arg6[%c0_180, %c0_181] : memref<256x32xf32, #tpu.memory_space<vmem>>, vector<256x32xf32>
    tpu.vector_store %arg6[%c0_180, %c0_181], %131 {strides = array<i32>} : memref<256x32xf32, #tpu.memory_space<vmem>>, vector<256x32xf32>,
    return
  }
  func.func @transform_0(%arg0: i32) -> (i32, i32, i32, i32, i32) {
    %c0_i32 = arith.constant 0 : i32
    %c0_i32_0 = arith.constant 0 : i32
    %c0_i32_1 = arith.constant 0 : i32
    %c0_i32_2 = arith.constant 0 : i32
    %c0_i32_3 = arith.constant 0 : i32
    return %c0_i32, %arg0, %c0_i32_0, %c0_i32_1, %c0_i32_2 : i32, i32, i32, i32, i32
  }
  func.func @transform_1(%arg0: i32) -> (i32, i32, i32, i32) {
    %c0_i32 = arith.constant 0 : i32
    %c0_i32_0 = arith.constant 0 : i32
    %c0_i32_1 = arith.constant 0 : i32
    %c0_i32_2 = arith.constant 0 : i32
    %c0_i32_3 = arith.constant 0 : i32
    return %c0_i32, %c0_i32_0, %c0_i32_1, %c0_i32_2 : i32, i32, i32, i32
  }
  func.func @transform_2(%arg0: i32) -> (i32, i32, i32, i32, i32) {
    %c0_i32 = arith.constant 0 : i32
    %c0_i32_0 = arith.constant 0 : i32
    %c0_i32_1 = arith.constant 0 : i32
    %c0_i32_2 = arith.constant 0 : i32
    %c0_i32_3 = arith.constant 0 : i32
    return %c0_i32, %arg0, %c0_i32_0, %c0_i32_1, %c0_i32_2 : i32, i32, i32, i32, i32
  }
  func.func @transform_3(%arg0: i32) -> (i32, i32, i32, i32) {
    %c0_i32 = arith.constant 0 : i32
    %c0_i32_0 = arith.constant 0 : i32
    %c0_i32_1 = arith.constant 0 : i32
    %c0_i32_2 = arith.constant 0 : i32
    %c0_i32_3 = arith.constant 0 : i32
    return %c0_i32, %c0_i32_0, %c0_i32_1, %c0_i32_2 : i32, i32, i32, i32
  }
  func.func @transform_4(%arg0: i32) -> (i32, i32) {
    %c0_i32 = arith.constant 0 : i32
    %c0_i32_0 = arith.constant 0 : i32
    %c0_i32_1 = arith.constant 0 : i32
    return %c0_i32, %c0_i32_0 : i32, i32
  }
  func.func @transform_5(%arg0: i32) -> (i32, i32) {
    %c0_i32 = arith.constant 0 : i32
    %c0_i32_0 = arith.constant 0 : i32
    return %arg0, %c0_i32 : i32, i32
  }
}

</mosaic_0001>

<llo_original>
// kernel: decoder_forward.2
$region0: #{decoder_forward.2}
  #allocation0 [shape = 'u32[]', space=smem, size = 0x4, offset = 0x4, fixed_abs, tag = 'smem constant byte address 0x4 - core index']
  #allocation1 [shape = 'u32[144,128]{1,0:T(1,128)}', space=vmem, size = 0x12000, scoped, tag = 'internal scratch']
  %s0 = inlined_call_operand.vmem [shape: bf16[3,2,10,8,64], index: 0, kind: input, shape index: {}]
  %s1 = inlined_call_operand.vmem [shape: bf16[3,3,64,128], index: 1, kind: input, shape index: {}]
  %s2 = inlined_call_operand.vmem [shape: f32[1,128], index: 2, kind: input, shape index: {}]
  %s3 = inlined_call_operand.vmem [shape: bf16[128,128], index: 3, kind: output, shape index: {}]
  %s4 = sld [smem:[#allocation0]]
  $region86: #{decoder_forward.2} parent=0
    _
  %s6 = ssub.s32 1, %s4
  %s7 = scalar_select 0, %s6, %s4
  $region1: #{decoder_forward.2} parent=0
    #allocation2 [shape = 'u8[122880]{0}', space=vmem, size = 0x1e000, scoped, tag = 'input window, operand 0']
    loop: start=0, step=1, limit=4
    $region2: #{decoder_forward.2} parent=1 // loop_pre_header
      _
    $region3: #{decoder_forward.2} parent=1 // loop_header
      %s9 = sphi 0, %s13
      %p10 = scmp.ge.s32.totalorder %s9, 4
      %s19 = sphi 0, %s21
      %s22 = sphi 0, %s19
      %s23 = sphi 0, %s22
      %s39 = sphi 0, %s23
      %s43 = sphi 0, %s43
      %s45 = sphi 0, %s43
      %s46 = sphi 0, %s45
      %s60 = sphi 0, %s46
      %s64 = sphi 0, %s64
      %s66 = sphi 0, %s64
      %s67 = sphi 0, %s66
      %s81 = sphi 0, %s67
      %s87 = sphi 0, %s89
      %s90 = sphi 0, %s87
      %s91 = sphi 0, %s90
      %s107 = sphi 0, %s91
    $region4: #{decoder_forward.2} parent=1 // loop_header_branch
      %12 = sbr.rel (%p10) target = $region8
    $region5: #{decoder_forward.2} parent=1 // loop_body
      %s14 = ssub.s32 %s9, 1
      %s15 = ssub.s32 %s9, 2
      %s16 = sadd.s32 %s9, 1
      %s17 = ssub.s32 %s9, %s16
      %p18 = scmp.eq.s32.totalorder %s17, 0
      %s20 = sadd.s32 %s19, 1
      %s21 = scalar_select %p18, %s19, %s20
      %p24 = pneg %p18
      %p25 = scmp.eq.s32.totalorder %s9, 1
      %p26 = por %p24, %p25
      %p27 = scmp.ne.s32.totalorder %s19, %s22
      %p28 = scmp.eq.s32.totalorder %s9, 0
      %p29 = por %p27, %p28
      %p30 = scmp.ne.s32.totalorder %s19, %s22
      %p31 = scmp.eq.s32.totalorder %s14, 1
      %p32 = por %p30, %p31
      %p33 = scmp.ne.s32.totalorder %s22, %s23
      %p34 = scmp.eq.s32.totalorder %s14, 0
      %p35 = por %p33, %p34
      %p36 = scmp.ne.s32.totalorder %s22, %s23
      %p37 = scmp.eq.s32.totalorder %s15, 1
      %p38 = por %p36, %p37
      %p40 = scmp.ne.s32.totalorder %s23, %s39
      %p41 = scmp.eq.s32.totalorder %s15, 0
      %p42 = por %p40, %p41
      %s44 = sadd.s32 %s43, 1
      %p47 = scmp.eq.s32.totalorder %s9, 1
      %p48 = scmp.ne.s32.totalorder %s43, %s45
      %p49 = scmp.eq.s32.totalorder %s9, 0
      %p50 = por %p48, %p49
      %p51 = scmp.ne.s32.totalorder %s43, %s45
      %p52 = scmp.eq.s32.totalorder %s14, 1
      %p53 = por %p51, %p52
      %p54 = scmp.ne.s32.totalorder %s45, %s46
      %p55 = scmp.eq.s32.totalorder %s14, 0
      %p56 = por %p54, %p55
      %p57 = scmp.ne.s32.totalorder %s45, %s46
      %p58 = scmp.eq.s32.totalorder %s15, 1
      %p59 = por %p57, %p58
      %p61 = scmp.ne.s32.totalorder %s46, %s60
      %p62 = scmp.eq.s32.totalorder %s15, 0
      %p63 = por %p61, %p62
      %s65 = sadd.s32 %s64, 1
      %p68 = scmp.eq.s32.totalorder %s9, 1
      %p69 = scmp.ne.s32.totalorder %s64, %s66
      %p70 = scmp.eq.s32.totalorder %s9, 0
      %p71 = por %p69, %p70
      %p72 = scmp.ne.s32.totalorder %s64, %s66
      %p73 = scmp.eq.s32.totalorder %s14, 1
      %p74 = por %p72, %p73
      %p75 = scmp.ne.s32.totalorder %s66, %s67
      %p76 = scmp.eq.s32.totalorder %s14, 0
      %p77 = por %p75, %p76
      %p78 = scmp.ne.s32.totalorder %s66, %s67
      %p79 = scmp.eq.s32.totalorder %s15, 1
      %p80 = por %p78, %p79
      %p82 = scmp.ne.s32.totalorder %s67, %s81
      %p83 = scmp.eq.s32.totalorder %s15, 0
      %p84 = por %p82, %p83
      %s85 = ssub.s32 %s9, %s16
      %p86 = scmp.eq.s32.totalorder %s85, 0
      %s88 = sadd.s32 %s87, 1
      %s89 = scalar_select %p86, %s87, %s88
      %p92 = pneg %p86
      %p93 = scmp.eq.s32.totalorder %s9, 1
      %p94 = por %p92, %p93
      %p95 = scmp.ne.s32.totalorder %s87, %s90
      %p96 = scmp.eq.s32.totalorder %s9, 0
      %p97 = por %p95, %p96
      %p98 = scmp.ne.s32.totalorder %s87, %s90
      %p99 = scmp.eq.s32.totalorder %s14, 1
      %p100 = por %p98, %p99
      %p101 = scmp.ne.s32.totalorder %s90, %s91
      %p102 = scmp.eq.s32.totalorder %s14, 0
      %p103 = por %p101, %p102
      %p104 = scmp.ne.s32.totalorder %s90, %s91
      %p105 = scmp.eq.s32.totalorder %s15, 1
      %p106 = por %p104, %p105
      %p108 = scmp.ne.s32.totalorder %s91, %s107
      %p109 = scmp.eq.s32.totalorder %s15, 0
      %p110 = por %p108, %p109
      %p111 = scmp.le.s32.totalorder 1, %s9
      %p112 = scmp.lt.s32.totalorder %s9, 3
      %p113 = pnand %p111, %p112
      %p114 = pneg %p113
      // Predicated region
      $region9: #{decoder_forward.2} parent=5 // pred_check
        _
      $region10: #{decoder_forward.2} parent=5 // pred_check_branch
        %116 = sbr.rel (%p113) target = $region12
      $region11: #{decoder_forward.2} parent=5 // pred_region
        %s117 = ssub.s32 %s9, 1
        // Predicated region
        $region13: #{decoder_forward.2} parent=11 // pred_check
          %p118 = pneg %p56
        $region14: #{decoder_forward.2} parent=11 // pred_check_branch
          %120 = sbr.rel (%p118) target = $region16
        $region15: #{decoder_forward.2} parent=11 // pred_region
          _
        $region16: #{decoder_forward.2} parent=11 // pred_fallthru
          _
        // Predicated region
        $region17: #{decoder_forward.2} parent=11 // pred_check
          %p121 = pneg %p77
        $region18: #{decoder_forward.2} parent=11 // pred_check_branch
          %123 = sbr.rel (%p121) target = $region20
        $region19: #{decoder_forward.2} parent=11 // pred_region
          _
        $region20: #{decoder_forward.2} parent=11 // pred_fallthru
          _
      $region12: #{decoder_forward.2} parent=5 // pred_fallthru
        _
      %p124 = scmp.lt.s32.totalorder %s9, 2
      // Predicated region
      $region21: #{decoder_forward.2} parent=5 // pred_check
        %p125 = pneg %p124
      $region22: #{decoder_forward.2} parent=5 // pred_check_branch
        %127 = sbr.rel (%p125) target = $region24
      $region23: #{decoder_forward.2} parent=5 // pred_region
        // Predicated region
        $region25: #{decoder_forward.2} parent=23 // pred_check
          %p128 = pneg %p29
        $region26: #{decoder_forward.2} parent=23 // pred_check_branch
          %130 = sbr.rel (%p128) target = $region28
        $region27: #{decoder_forward.2} parent=23 // pred_region
          %s131 = sand.u32 %s19, 1
          %s132 = sand.u32 %s19, 1
          %s133 = smul.addr %s132, 120
          %s134 = scalar_lea.vmem [#allocation2], %s133
          %s135 = smul.addr %s9, 10
          %s136 = smul.addr %s135, 4
          %s137 = scalar_lea.vmem %s0, %s136
          // Predicated region
          $region29: #{decoder_forward.2} parent=27 // pred_check
            _
          $region30: #{decoder_forward.2} parent=27 // pred_check_branch
            %139 = sbr.rel (0) target = $region32
          $region31: #{decoder_forward.2} parent=27 // pred_region
            // Predicated region
            $region33: #{decoder_forward.2} parent=31 // pred_check
              _
            $region34: #{decoder_forward.2} parent=31 // pred_check_branch
              %141 = sbr.rel target = $region36
            $region35: #{decoder_forward.2} parent=31 // pred_region
              // Predicated region
              $region48: #{decoder_forward.2} parent=35 // pred_check
                _
              $region49: #{decoder_forward.2} parent=35 // pred_check_branch
                %214 = sbr.rel (0) target = $region51
              $region50: #{decoder_forward.2} parent=35 // pred_region
                loop: start=0, step=1, limit=1
                $region52: #{decoder_forward.2} parent=50 // loop_pre_header
                  _
                $region53: #{decoder_forward.2} parent=50 // loop_header
                  %s216 = sphi 0, %s220
                  %p217 = scmp.ge.s32.totalorder %s216, 1
                  %s221 = sphi %s137, %s137
                  %s222 = sphi %s134, %s134
                $region54: #{decoder_forward.2} parent=50 // loop_header_branch
                  %219 = sbr.rel (%p217) target = $region58
                $region55: #{decoder_forward.2} parent=50 // loop_body
                  _
                $region56: #{decoder_forward.2} parent=50 // loop_footer
                  %s220 = sadd.s32 1, %s216
                $region57: #{decoder_forward.2} parent=50 // loop_footer_branch
                  %215 = sbr.rel target = $region53
                $region58: #{decoder_forward.2} parent=50 // loop_exit
                  _
                loop: start=0, step=1, limit=1
                $region59: #{decoder_forward.2} parent=50 // loop_pre_header
                  _
                $region60: #{decoder_forward.2} parent=50 // loop_header
                  %s225 = sphi 0, %s229
                  %p226 = scmp.ge.s32.totalorder %s225, 1
                  %s230 = sphi %s137, %s137
                  %s231 = sphi %s134, %s134
                $region61: #{decoder_forward.2} parent=50 // loop_header_branch
                  %228 = sbr.rel (%p226) target = $region65
                $region62: #{decoder_forward.2} parent=50 // loop_body
                  %v232 = vld [vmem:[%s230] sm:$0xf]
                  %233 = vst [vmem:[%s231] sm:$0xf] %v232
                  %v234 = vld [vmem:[%s230 + $0x4] sm:$0xf]
                  %235 = vst [vmem:[%s231 + $0x4] sm:$0xf] %v234
                  %v236 = vld [vmem:[%s230 + $0x8] sm:$0xf]
                  %237 = vst [vmem:[%s231 + $0x8] sm:$0xf] %v236
                  %v238 = vld [vmem:[%s230 + $0xc] sm:$0xf]
                  %239 = vst [vmem:[%s231 + $0xc] sm:$0xf] %v238
                  %v240 = vld [vmem:[%s230 + $0x10] sm:$0xf]
                  %241 = vst [vmem:[%s231 + $0x10] sm:$0xf] %v240
                  %v242 = vld [vmem:[%s230 + $0x14] sm:$0xf]
                  %243 = vst [vmem:[%s231 + $0x14] sm:$0xf] %v242
                  %v244 = vld [vmem:[%s230 + $0x18] sm:$0xf]
                  %245 = vst [vmem:[%s231 + $0x18] sm:$0xf] %v244
                  %v246 = vld [vmem:[%s230 + $0x1c] sm:$0xf]
                  %247 = vst [vmem:[%s231 + $0x1c] sm:$0xf] %v246
                  %v248 = vld [vmem:[%s230 + $0x20] sm:$0xf]
                  %249 = vst [vmem:[%s231 + $0x20] sm:$0xf] %v248
                  %v250 = vld [vmem:[%s230 + $0x24] sm:$0xf]
                  %251 = vst [vmem:[%s231 + $0x24] sm:$0xf] %v250
                  %v252 = vld [vmem:[%s230 + $0x50] sm:$0xf]
                  %253 = vst [vmem:[%s231 + $0x28] sm:$0xf] %v252
                  %v254 = vld [vmem:[%s230 + $0x54] sm:$0xf]
                  %255 = vst [vmem:[%s231 + $0x2c] sm:$0xf] %v254
                  %v256 = vld [vmem:[%s230 + $0x58] sm:$0xf]
                  %257 = vst [vmem:[%s231 + $0x30] sm:$0xf] %v256
                  %v258 = vld [vmem:[%s230 + $0x5c] sm:$0xf]
                  %259 = vst [vmem:[%s231 + $0x34] sm:$0xf] %v258
                  %v260 = vld [vmem:[%s230 + $0x60] sm:$0xf]
                  %261 = vst [vmem:[%s231 + $0x38] sm:$0xf] %v260
                  %v262 = vld [vmem:[%s230 + $0x64] sm:$0xf]
                  %263 = vst [vmem:[%s231 + $0x3c] sm:$0xf] %v262
                  %v264 = vld [vmem:[%s230 + $0x68] sm:$0xf]
                  %265 = vst [vmem:[%s231 + $0x40] sm:$0xf] %v264
                  %v266 = vld [vmem:[%s230 + $0x6c] sm:$0xf]
                  %267 = vst [vmem:[%s231 + $0x44] sm:$0xf] %v266
                  %v268 = vld [vmem:[%s230 + $0x70] sm:$0xf]
                  %269 = vst [vmem:[%s231 + $0x48] sm:$0xf] %v268
                  %v270 = vld [vmem:[%s230 + $0x74] sm:$0xf]
                  %271 = vst [vmem:[%s231 + $0x4c] sm:$0xf] %v270
                  %v272 = vld [vmem:[%s230 + $0xa0] sm:$0xf]
                  %273 = vst [vmem:[%s231 + $0x50] sm:$0xf] %v272
                  %v274 = vld [vmem:[%s230 + $0xa4] sm:$0xf]
                  %275 = vst [vmem:[%s231 + $0x54] sm:$0xf] %v274
                  %v276 = vld [vmem:[%s230 + $0xa8] sm:$0xf]
                  %277 = vst [vmem:[%s231 + $0x58] sm:$0xf] %v276
                  %v278 = vld [vmem:[%s230 + $0xac] sm:$0xf]
                  %279 = vst [vmem:[%s231 + $0x5c] sm:$0xf] %v278
                  %v280 = vld [vmem:[%s230 + $0xb0] sm:$0xf]
                  %281 = vst [vmem:[%s231 + $0x60] sm:$0xf] %v280
                  %v282 = vld [vmem:[%s230 + $0xb4] sm:$0xf]
                  %283 = vst [vmem:[%s231 + $0x64] sm:$0xf] %v282
                  %v284 = vld [vmem:[%s230 + $0xb8] sm:$0xf]
                  %285 = vst [vmem:[%s231 + $0x68] sm:$0xf] %v284
                  %v286 = vld [vmem:[%s230 + $0xbc] sm:$0xf]
                  %287 = vst [vmem:[%s231 + $0x6c] sm:$0xf] %v286
                  %v288 = vld [vmem:[%s230 + $0xc0] sm:$0xf]
                  %289 = vst [vmem:[%s231 + $0x70] sm:$0xf] %v288
                  %v290 = vld [vmem:[%s230 + $0xc4] sm:$0xf]
                  %291 = vst [vmem:[%s231 + $0x74] sm:$0xf] %v290
                $region63: #{decoder_forward.2} parent=50 // loop_footer
                  %s229 = sadd.s32 1, %s225
                $region64: #{decoder_forward.2} parent=50 // loop_footer_branch
                  %224 = sbr.rel target = $region60
                $region65: #{decoder_forward.2} parent=50 // loop_exit
                  _
              $region51: #{decoder_forward.2} parent=35 // pred_fallthru
                _
            $region36: #{decoder_forward.2} parent=31 // pred_fallthru
              _
            // Predicated region
            $region37: #{decoder_forward.2} parent=31 // pred_check
              _
            $region38: #{decoder_forward.2} parent=31 // pred_check_branch
              %143 = sbr.rel (0) target = $region40
            $region39: #{decoder_forward.2} parent=31 // pred_region
              loop: start=0, step=1, limit=1
              $region41: #{decoder_forward.2} parent=39 // loop_pre_header
                _
              $region42: #{decoder_forward.2} parent=39 // loop_header
                %s146 = sphi 0, %s150
                %p147 = scmp.ge.s32.totalorder %s146, 1
                %s151 = sphi %s137, %s137
                %s152 = sphi %s134, %s134
              $region43: #{decoder_forward.2} parent=39 // loop_header_branch
                %149 = sbr.rel (%p147) target = $region47
              $region44: #{decoder_forward.2} parent=39 // loop_body
                %v153 = vld [vmem:[%s151] sm:$0xf]
                %154 = vst [vmem:[%s152] sm:$0xf] %v153
                %v155 = vld [vmem:[%s151 + $0x4] sm:$0xf]
                %156 = vst [vmem:[%s152 + $0x4] sm:$0xf] %v155
                %v157 = vld [vmem:[%s151 + $0x8] sm:$0xf]
                %158 = vst [vmem:[%s152 + $0x8] sm:$0xf] %v157
                %v159 = vld [vmem:[%s151 + $0xc] sm:$0xf]
                %160 = vst [vmem:[%s152 + $0xc] sm:$0xf] %v159
                %v161 = vld [vmem:[%s151 + $0x10] sm:$0xf]
                %162 = vst [vmem:[%s152 + $0x10] sm:$0xf] %v161
                %v163 = vld [vmem:[%s151 + $0x14] sm:$0xf]
                %164 = vst [vmem:[%s152 + $0x14] sm:$0xf] %v163
                %v165 = vld [vmem:[%s151 + $0x18] sm:$0xf]
                %166 = vst [vmem:[%s152 + $0x18] sm:$0xf] %v165
                %v167 = vld [vmem:[%s151 + $0x1c] sm:$0xf]
                %168 = vst [vmem:[%s152 + $0x1c] sm:$0xf] %v167
                %v169 = vld [vmem:[%s151 + $0x20] sm:$0xf]
                %170 = vst [vmem:[%s152 + $0x20] sm:$0xf] %v169
                %v171 = vld [vmem:[%s151 + $0x24] sm:$0xf]
                %172 = vst [vmem:[%s152 + $0x24] sm:$0xf] %v171
                %v173 = vld [vmem:[%s151 + $0x50] sm:$0xf]
                %174 = vst [vmem:[%s152 + $0x28] sm:$0xf] %v173
                %v175 = vld [vmem:[%s151 + $0x54] sm:$0xf]
                %176 = vst [vmem:[%s152 + $0x2c] sm:$0xf] %v175
                %v177 = vld [vmem:[%s151 + $0x58] sm:$0xf]
                %178 = vst [vmem:[%s152 + $0x30] sm:$0xf] %v177
                %v179 = vld [vmem:[%s151 + $0x5c] sm:$0xf]
                %180 = vst [vmem:[%s152 + $0x34] sm:$0xf] %v179
                %v181 = vld [vmem:[%s151 + $0x60] sm:$0xf]
                %182 = vst [vmem:[%s152 + $0x38] sm:$0xf] %v181
                %v183 = vld [vmem:[%s151 + $0x64] sm:$0xf]
                %184 = vst [vmem:[%s152 + $0x3c] sm:$0xf] %v183
                %v185 = vld [vmem:[%s151 + $0x68] sm:$0xf]
                %186 = vst [vmem:[%s152 + $0x40] sm:$0xf] %v185
                %v187 = vld [vmem:[%s151 + $0x6c] sm:$0xf]
                %188 = vst [vmem:[%s152 + $0x44] sm:$0xf] %v187
                %v189 = vld [vmem:[%s151 + $0x70] sm:$0xf]
                %190 = vst [vmem:[%s152 + $0x48] sm:$0xf] %v189
                %v191 = vld [vmem:[%s151 + $0x74] sm:$0xf]
                %192 = vst [vmem:[%s152 + $0x4c] sm:$0xf] %v191
                %v193 = vld [vmem:[%s151 + $0xa0] sm:$0xf]
                %194 = vst [vmem:[%s152 + $0x50] sm:$0xf] %v193
                %v195 = vld [vmem:[%s151 + $0xa4] sm:$0xf]
                %196 = vst [vmem:[%s152 + $0x54] sm:$0xf] %v195
                %v197 = vld [vmem:[%s151 + $0xa8] sm:$0xf]
                %198 = vst [vmem:[%s152 + $0x58] sm:$0xf] %v197
                %v199 = vld [vmem:[%s151 + $0xac] sm:$0xf]
                %200 = vst [vmem:[%s152 + $0x5c] sm:$0xf] %v199
                %v201 = vld [vmem:[%s151 + $0xb0] sm:$0xf]
                %202 = vst [vmem:[%s152 + $0x60] sm:$0xf] %v201
                %v203 = vld [vmem:[%s151 + $0xb4] sm:$0xf]
                %204 = vst [vmem:[%s152 + $0x64] sm:$0xf] %v203
                %v205 = vld [vmem:[%s151 + $0xb8] sm:$0xf]
                %206 = vst [vmem:[%s152 + $0x68] sm:$0xf] %v205
                %v207 = vld [vmem:[%s151 + $0xbc] sm:$0xf]
                %208 = vst [vmem:[%s152 + $0x6c] sm:$0xf] %v207
                %v209 = vld [vmem:[%s151 + $0xc0] sm:$0xf]
                %210 = vst [vmem:[%s152 + $0x70] sm:$0xf] %v209
                %v211 = vld [vmem:[%s151 + $0xc4] sm:$0xf]
                %212 = vst [vmem:[%s152 + $0x74] sm:$0xf] %v211
              $region45: #{decoder_forward.2} parent=39 // loop_footer
                %s150 = sadd.s32 1, %s146
              $region46: #{decoder_forward.2} parent=39 // loop_footer_branch
                %145 = sbr.rel target = $region42
              $region47: #{decoder_forward.2} parent=39 // loop_exit
                _
            $region40: #{decoder_forward.2} parent=31 // pred_fallthru
              _
          $region32: #{decoder_forward.2} parent=27 // pred_fallthru
            _
          %292 = vnop
        $region28: #{decoder_forward.2} parent=23 // pred_fallthru
          _
      $region24: #{decoder_forward.2} parent=5 // pred_fallthru
        _
      %p293 = scmp.le.s32.totalorder 1, %s9
      %p294 = scmp.lt.s32.totalorder %s9, 3
      %p295 = pnand %p293, %p294
      %p296 = pneg %p295
      // Predicated region
      $region66: #{decoder_forward.2} parent=5 // pred_check
        _
      $region67: #{decoder_forward.2} parent=5 // pred_check_branch
        %298 = sbr.rel (%p295) target = $region69
      $region68: #{decoder_forward.2} parent=5 // pred_region
        %s299 = ssub.s32 %s9, 1
        %s300 = sand.u32 %s22, 1
        %s301 = sand.u32 %s22, 1
        %s302 = smul.addr %s301, 120
        %s303 = scalar_lea.vmem [#allocation2], %s302
        // Predicated region
        $region70: #{decoder_forward.2} parent=68 // pred_check
          %p304 = pneg %p35
        $region71: #{decoder_forward.2} parent=68 // pred_check_branch
          %306 = sbr.rel (%p304) target = $region73
        $region72: #{decoder_forward.2} parent=68 // pred_region
          _
        $region73: #{decoder_forward.2} parent=68 // pred_fallthru
          _
        %s307 = sand.u32 %s22, 1
        %s308 = sand.u32 %s22, 1
        %s309 = smul.addr %s308, 120
        %s310 = scalar_lea.vmem [#allocation2], %s309
        %p311 = pneg %p35
        %p312 = pneg %p32
        %p313 = pneg %p56
        %p314 = pneg %p53
        %p315 = pneg %p77
        %p316 = pneg %p74
        %p317 = pneg %p103
        %p318 = pneg %p100
        %s319 = smul.u32 8, %s14
        %p320 = scmp.lt.s32.totalorder %s319, 15
        %s321 = scalar_select %p320, %s319, 15
        %s322 = smul.addr %s321, 4
        %s323 = scalar_lea.vmem %s3, %s322
        %s324 = smul.u32 8, %s14
        %p325 = scmp.lt.s32.totalorder %s324, 15
        %s326 = scalar_select %p325, %s324, 15
        %s327 = smul.addr %s326, 4
        %s328 = scalar_lea.vmem %s3, %s327
        %s329 = smul.u32 8, %s14
        %v331 = vld [vmem:[%s303] sm:$0xf]
        %v332 = vld [vmem:[%s303 + $0x4] sm:$0xf]
        %v333 = vld [vmem:[%s303 + $0x8] sm:$0xf]
        %v334 = vld [vmem:[%s303 + $0xc] sm:$0xf]
        %v335 = vld [vmem:[%s303 + $0x10] sm:$0xf]
        %v336 = vld [vmem:[%s303 + $0x14] sm:$0xf]
        %v337 = vld [vmem:[%s303 + $0x18] sm:$0xf]
        %v338 = vld [vmem:[%s303 + $0x1c] sm:$0xf]
        %v339 = vld [vmem:[%s1] sm:$0xf]
        %v340 = vld [vmem:[%s1 + $0x4] sm:$0xf]
        %v341 = vld [vmem:[%s1 + $0x8] sm:$0xf]
        %v342 = vld [vmem:[%s1 + $0xc] sm:$0xf]
        %v343 = vld [vmem:[%s1 + $0x10] sm:$0xf]
        %v344 = vld [vmem:[%s1 + $0x14] sm:$0xf]
        %v345 = vld [vmem:[%s1 + $0x18] sm:$0xf]
        %v346 = vld [vmem:[%s1 + $0x1c] sm:$0xf]
        %s347 = scalar_lea.vmem %s303, 40 [#allocation2]
        %v348 = vld [vmem:[%s347] sm:$0xf]
        %v349 = vld [vmem:[%s347 + $0x4] sm:$0xf]
        %v350 = vld [vmem:[%s347 + $0x8] sm:$0xf]
        %v351 = vld [vmem:[%s347 + $0xc] sm:$0xf]
        %v352 = vld [vmem:[%s347 + $0x10] sm:$0xf]
        %v353 = vld [vmem:[%s347 + $0x14] sm:$0xf]
        %v354 = vld [vmem:[%s347 + $0x18] sm:$0xf]
        %v355 = vld [vmem:[%s347 + $0x1c] sm:$0xf]
        %s356 = scalar_lea.vmem %s1, 32
        %v357 = vld [vmem:[%s356] sm:$0xf]
        %v358 = vld [vmem:[%s356 + $0x4] sm:$0xf]
        %v359 = vld [vmem:[%s356 + $0x8] sm:$0xf]
        %v360 = vld [vmem:[%s356 + $0xc] sm:$0xf]
        %v361 = vld [vmem:[%s356 + $0x10] sm:$0xf]
        %v362 = vld [vmem:[%s356 + $0x14] sm:$0xf]
        %v363 = vld [vmem:[%s356 + $0x18] sm:$0xf]
        %v364 = vld [vmem:[%s356 + $0x1c] sm:$0xf]
        %v373 = vunpack.c.l.b16 %v348
        %v374 = vunpack.c.l.b16 %v349
        %v375 = vunpack.c.l.b16 %v350
        %v376 = vunpack.c.l.b16 %v351
        %v377 = vunpack.c.l.b16 %v352
        %v378 = vunpack.c.l.b16 %v353
        %v379 = vunpack.c.l.b16 %v354
        %v380 = vunpack.c.l.b16 %v355
        %v381 = vpack.c.b16 %v374, %v373
        %v382 = vpack.c.b16 %v376, %v375
        %v383 = vpack.c.b16 %v378, %v377
        %v384 = vpack.c.b16 %v380, %v379
        %v393 = vunpack.c.l.b16 %v357
        %v394 = vunpack.c.l.b16 %v358
        %v395 = vunpack.c.l.b16 %v359
        %v396 = vunpack.c.l.b16 %v360
        %v397 = vunpack.c.l.b16 %v361
        %v398 = vunpack.c.l.b16 %v362
        %v399 = vunpack.c.l.b16 %v363
        %v400 = vunpack.c.l.b16 %v364
        %v401 = vpack.c.b16 %v394, %v393
        %v402 = vpack.c.b16 %v396, %v395
        %v403 = vpack.c.b16 %v398, %v397
        %v404 = vpack.c.b16 %v400, %v399
        %vm409 = vcmask 523264
        %v411 = vsel %vm409, %v381, 0
        %v414 = vsel %vm409, %v382, 0
        %v417 = vsel %vm409, %v383, 0
        %v420 = vsel %vm409, %v384, 0
        %422 = vmatprep.subr.bf16.mxu0 0
        %423 = vmatpush1.bf16.msra.mxu0 %v401
        %424 = vmatprep.subr.bf16.mxu0 0
        %425 = vmatpush1.bf16.msra.mxu0 %v402
        %426 = vmatprep.subr.bf16.mxu0 0
        %427 = vmatpush1.bf16.msra.mxu0 %v403
        %428 = vmatprep.subr.bf16.mxu0 0
        %429 = vmatpush1.bf16.msra.mxu0 %v404
        %430 = vmatprep.subr.bf16.mxu0 0
        %431 = vmatpush1.bf16.msra.mxu0 0
        %432 = vmatprep.subr.bf16.mxu0 0
        %433 = vmatpush1.bf16.msra.mxu0 0
        %434 = vmatprep.subr.bf16.mxu0 0
        %435 = vmatpush1.bf16.msra.mxu0 0
        %436 = vmatprep.subr.bf16.mxu0 0
        %437 = vmatpush1.bf16.msra.mxu0 0
        %438 = vmatprep.subr.bf16.mxu0 0
        %439 = vmatpush1.bf16.msra.mxu0 0
        %440 = vmatprep.subr.bf16.mxu0 0
        %441 = vmatpush1.bf16.msra.mxu0 0
        %442 = vmatprep.subr.bf16.mxu0 0
        %443 = vmatpush1.bf16.msra.mxu0 0
        %444 = vmatprep.subr.bf16.mxu0 0
        %445 = vmatpush1.bf16.msra.mxu0 0
        %446 = vmatprep.subr.bf16.mxu0 0
        %447 = vmatpush1.bf16.msra.mxu0 0
        %448 = vmatprep.subr.bf16.mxu0 0
        %449 = vmatpush1.bf16.msra.mxu0 0
        %450 = vmatprep.subr.bf16.mxu0 0
        %451 = vmatpush1.bf16.msra.mxu0 0
        %452 = vmatprep.subr.bf16.mxu0 0
        %453 = vmatpush1.bf16.msra.mxu0 0
        %454 = vmatprep.mubr.bf16.mxu0 0
        %455 = vmatmul.mubr.bf16.gmra.mrb[0].mxu0 %v411
        %v456 = vpop.f32.mrb[0].mxu0
        %v457 = vadd.f32 0.0, %v456
        %v458 = vpop.f32.mrb[0].mxu0
        %v459 = vpop.f32.mrb[0].mxu0
        %v460 = vadd.f32 0.0, %v459
        %v461 = vpop.f32.mrb[0].mxu0
        %462 = vmatprep.mubr.bf16.mxu0 0
        %463 = vmatmul.mubr.bf16.gmra.mrb[0].mxu0 %v414
        %v464 = vpop.f32.mrb[0].mxu0
        %v465 = vadd.f32 0.0, %v464
        %v466 = vpop.f32.mrb[0].mxu0
        %v467 = vpop.f32.mrb[0].mxu0
        %v468 = vadd.f32 0.0, %v467
        %v469 = vpop.f32.mrb[0].mxu0
        %470 = vmatprep.mubr.bf16.mxu0 0
        %471 = vmatmul.mubr.bf16.gmra.mrb[0].mxu0 %v417
        %v472 = vpop.f32.mrb[0].mxu0
        %v473 = vadd.f32 0.0, %v472
        %v474 = vpop.f32.mrb[0].mxu0
        %v475 = vpop.f32.mrb[0].mxu0
        %v476 = vadd.f32 0.0, %v475
        %v477 = vpop.f32.mrb[0].mxu0
        %478 = vmatprep.mubr.bf16.mxu0 0
        %479 = vmatmul.mubr.bf16.gmra.mrb[0].mxu0 %v420
        %v480 = vpop.f32.mrb[0].mxu0
        %v481 = vadd.f32 0.0, %v480
        %v482 = vpop.f32.mrb[0].mxu0
        %v483 = vpop.f32.mrb[0].mxu0
        %v484 = vadd.f32 0.0, %v483
        %v485 = vpop.f32.mrb[0].mxu0
        %486 = vdwg.mxu0
        %v495 = vunpack.c.l.b16 %v331
        %v496 = vunpack.c.l.b16 %v332
        %v497 = vunpack.c.l.b16 %v333
        %v498 = vunpack.c.l.b16 %v334
        %v499 = vunpack.c.l.b16 %v335
        %v500 = vunpack.c.l.b16 %v336
        %v501 = vunpack.c.l.b16 %v337
        %v502 = vunpack.c.l.b16 %v338
        %v503 = vpack.c.b16 %v496, %v495
        %v504 = vpack.c.b16 %v498, %v497
        %v505 = vpack.c.b16 %v500, %v499
        %v506 = vpack.c.b16 %v502, %v501
        %v515 = vunpack.c.l.b16 %v339
        %v516 = vunpack.c.l.b16 %v340
        %v517 = vunpack.c.l.b16 %v341
        %v518 = vunpack.c.l.b16 %v342
        %v519 = vunpack.c.l.b16 %v343
        %v520 = vunpack.c.l.b16 %v344
        %v521 = vunpack.c.l.b16 %v345
        %v522 = vunpack.c.l.b16 %v346
        %v523 = vpack.c.b16 %v516, %v515
        %v524 = vpack.c.b16 %v518, %v517
        %v525 = vpack.c.b16 %v520, %v519
        %v526 = vpack.c.b16 %v522, %v521
        %v532 = vsel %vm409, %v503, 0
        %v535 = vsel %vm409, %v504, 0
        %v538 = vsel %vm409, %v505, 0
        %v541 = vsel %vm409, %v506, 0
        %543 = vmatprep.subr.bf16.mxu0 0
        %544 = vmatpush1.bf16.msra.mxu0 %v523
        %545 = vmatprep.subr.bf16.mxu0 0
        %546 = vmatpush1.bf16.msra.mxu0 %v524
        %547 = vmatprep.subr.bf16.mxu0 0
        %548 = vmatpush1.bf16.msra.mxu0 %v525
        %549 = vmatprep.subr.bf16.mxu0 0
        %550 = vmatpush1.bf16.msra.mxu0 %v526
        %551 = vmatprep.subr.bf16.mxu0 0
        %552 = vmatpush1.bf16.msra.mxu0 0
        %553 = vmatprep.subr.bf16.mxu0 0
        %554 = vmatpush1.bf16.msra.mxu0 0
        %555 = vmatprep.subr.bf16.mxu0 0
        %556 = vmatpush1.bf16.msra.mxu0 0
        %557 = vmatprep.subr.bf16.mxu0 0
        %558 = vmatpush1.bf16.msra.mxu0 0
        %559 = vmatprep.subr.bf16.mxu0 0
        %560 = vmatpush1.bf16.msra.mxu0 0
        %561 = vmatprep.subr.bf16.mxu0 0
        %562 = vmatpush1.bf16.msra.mxu0 0
        %563 = vmatprep.subr.bf16.mxu0 0
        %564 = vmatpush1.bf16.msra.mxu0 0
        %565 = vmatprep.subr.bf16.mxu0 0
        %566 = vmatpush1.bf16.msra.mxu0 0
        %567 = vmatprep.subr.bf16.mxu0 0
        %568 = vmatpush1.bf16.msra.mxu0 0
        %569 = vmatprep.subr.bf16.mxu0 0
        %570 = vmatpush1.bf16.msra.mxu0 0
        %571 = vmatprep.subr.bf16.mxu0 0
        %572 = vmatpush1.bf16.msra.mxu0 0
        %573 = vmatprep.subr.bf16.mxu0 0
        %574 = vmatpush1.bf16.msra.mxu0 0
        %575 = vmatprep.mubr.bf16.mxu0 0
        %576 = vmatmul.mubr.bf16.gmra.mrb[0].mxu0 %v532
        %v577 = vpop.f32.mrb[0].mxu0
        %v578 = vadd.f32 %v457, %v577
        %v579 = vpop.f32.mrb[0].mxu0
        %v580 = vpop.f32.mrb[0].mxu0
        %v581 = vadd.f32 %v460, %v580
        %v582 = vpop.f32.mrb[0].mxu0
        %583 = vmatprep.mubr.bf16.mxu0 0
        %584 = vmatmul.mubr.bf16.gmra.mrb[0].mxu0 %v535
        %v585 = vpop.f32.mrb[0].mxu0
        %v586 = vadd.f32 %v465, %v585
        %v587 = vpop.f32.mrb[0].mxu0
        %v588 = vpop.f32.mrb[0].mxu0
        %v589 = vadd.f32 %v468, %v588
        %v590 = vpop.f32.mrb[0].mxu0
        %591 = vmatprep.mubr.bf16.mxu0 0
        %592 = vmatmul.mubr.bf16.gmra.mrb[0].mxu0 %v538
        %v593 = vpop.f32.mrb[0].mxu0
        %v594 = vadd.f32 %v473, %v593
        %v595 = vpop.f32.mrb[0].mxu0
        %v596 = vpop.f32.mrb[0].mxu0
        %v597 = vadd.f32 %v476, %v596
        %v598 = vpop.f32.mrb[0].mxu0
        %599 = vmatprep.mubr.bf16.mxu0 0
        %600 = vmatmul.mubr.bf16.gmra.mrb[0].mxu0 %v541
        %v601 = vpop.f32.mrb[0].mxu0
        %v602 = vadd.f32 %v481, %v601
        %v603 = vpop.f32.mrb[0].mxu0
        %v604 = vpop.f32.mrb[0].mxu0
        %v605 = vadd.f32 %v484, %v604
        %v606 = vpop.f32.mrb[0].mxu0
        %607 = vdwg.mxu0
        %s608 = scalar_lea.vmem %s303, 80 [#allocation2]
        %v609 = vld [vmem:[%s608] sm:$0xf]
        %v610 = vld [vmem:[%s608 + $0x4] sm:$0xf]
        %v611 = vld [vmem:[%s608 + $0x8] sm:$0xf]
        %v612 = vld [vmem:[%s608 + $0xc] sm:$0xf]
        %v613 = vld [vmem:[%s608 + $0x10] sm:$0xf]
        %v614 = vld [vmem:[%s608 + $0x14] sm:$0xf]
        %v615 = vld [vmem:[%s608 + $0x18] sm:$0xf]
        %v616 = vld [vmem:[%s608 + $0x1c] sm:$0xf]
        %s617 = scalar_lea.vmem %s1, 64
        %v618 = vld [vmem:[%s617] sm:$0xf]
        %v619 = vld [vmem:[%s617 + $0x4] sm:$0xf]
        %v620 = vld [vmem:[%s617 + $0x8] sm:$0xf]
        %v621 = vld [vmem:[%s617 + $0xc] sm:$0xf]
        %v622 = vld [vmem:[%s617 + $0x10] sm:$0xf]
        %v623 = vld [vmem:[%s617 + $0x14] sm:$0xf]
        %v624 = vld [vmem:[%s617 + $0x18] sm:$0xf]
        %v625 = vld [vmem:[%s617 + $0x1c] sm:$0xf]
        %v634 = vunpack.c.l.b16 %v609
        %v635 = vunpack.c.l.b16 %v610
        %v636 = vunpack.c.l.b16 %v611
        %v637 = vunpack.c.l.b16 %v612
        %v638 = vunpack.c.l.b16 %v613
        %v639 = vunpack.c.l.b16 %v614
        %v640 = vunpack.c.l.b16 %v615
        %v641 = vunpack.c.l.b16 %v616
        %v642 = vpack.c.b16 %v635, %v634
        %v643 = vpack.c.b16 %v637, %v636
        %v644 = vpack.c.b16 %v639, %v638
        %v645 = vpack.c.b16 %v641, %v640
        %v654 = vunpack.c.l.b16 %v618
        %v655 = vunpack.c.l.b16 %v619
        %v656 = vunpack.c.l.b16 %v620
        %v657 = vunpack.c.l.b16 %v621
        %v658 = vunpack.c.l.b16 %v622
        %v659 = vunpack.c.l.b16 %v623
        %v660 = vunpack.c.l.b16 %v624
        %v661 = vunpack.c.l.b16 %v625
        %v662 = vpack.c.b16 %v655, %v654
        %v663 = vpack.c.b16 %v657, %v656
        %v664 = vpack.c.b16 %v659, %v658
        %v665 = vpack.c.b16 %v661, %v660
        %v671 = vsel %vm409, %v642, 0
        %v674 = vsel %vm409, %v643, 0
        %v677 = vsel %vm409, %v644, 0
        %v680 = vsel %vm409, %v645, 0
        %682 = vmatprep.subr.bf16.mxu0 0
        %683 = vmatpush1.bf16.msra.mxu0 %v662
        %684 = vmatprep.subr.bf16.mxu0 0
        %685 = vmatpush1.bf16.msra.mxu0 %v663
        %686 = vmatprep.subr.bf16.mxu0 0
        %687 = vmatpush1.bf16.msra.mxu0 %v664
        %688 = vmatprep.subr.bf16.mxu0 0
        %689 = vmatpush1.bf16.msra.mxu0 %v665
        %690 = vmatprep.subr.bf16.mxu0 0
        %691 = vmatpush1.bf16.msra.mxu0 0
        %692 = vmatprep.subr.bf16.mxu0 0
        %693 = vmatpush1.bf16.msra.mxu0 0
        %694 = vmatprep.subr.bf16.mxu0 0
        %695 = vmatpush1.bf16.msra.mxu0 0
        %696 = vmatprep.subr.bf16.mxu0 0
        %697 = vmatpush1.bf16.msra.mxu0 0
        %698 = vmatprep.subr.bf16.mxu0 0
        %699 = vmatpush1.bf16.msra.mxu0 0
        %700 = vmatprep.subr.bf16.mxu0 0
        %701 = vmatpush1.bf16.msra.mxu0 0
        %702 = vmatprep.subr.bf16.mxu0 0
        %703 = vmatpush1.bf16.msra.mxu0 0
        %704 = vmatprep.subr.bf16.mxu0 0
        %705 = vmatpush1.bf16.msra.mxu0 0
        %706 = vmatprep.subr.bf16.mxu0 0
        %707 = vmatpush1.bf16.msra.mxu0 0
        %708 = vmatprep.subr.bf16.mxu0 0
        %709 = vmatpush1.bf16.msra.mxu0 0
        %710 = vmatprep.subr.bf16.mxu0 0
        %711 = vmatpush1.bf16.msra.mxu0 0
        %712 = vmatprep.subr.bf16.mxu0 0
        %713 = vmatpush1.bf16.msra.mxu0 0
        %714 = vmatprep.mubr.bf16.mxu0 0
        %715 = vmatmul.mubr.bf16.gmra.mrb[0].mxu0 %v671
        %v716 = vpop.f32.mrb[0].mxu0
        %v717 = vadd.f32 0.0, %v716
        %v718 = vpop.f32.mrb[0].mxu0
        %v719 = vpop.f32.mrb[0].mxu0
        %v720 = vadd.f32 0.0, %v719
        %v721 = vpop.f32.mrb[0].mxu0
        %722 = vmatprep.mubr.bf16.mxu0 0
        %723 = vmatmul.mubr.bf16.gmra.mrb[0].mxu0 %v674
        %v724 = vpop.f32.mrb[0].mxu0
        %v725 = vadd.f32 0.0, %v724
        %v726 = vpop.f32.mrb[0].mxu0
        %v727 = vpop.f32.mrb[0].mxu0
        %v728 = vadd.f32 0.0, %v727
        %v729 = vpop.f32.mrb[0].mxu0
        %730 = vmatprep.mubr.bf16.mxu0 0
        %731 = vmatmul.mubr.bf16.gmra.mrb[0].mxu0 %v677
        %v732 = vpop.f32.mrb[0].mxu0
        %v733 = vadd.f32 0.0, %v732
        %v734 = vpop.f32.mrb[0].mxu0
        %v735 = vpop.f32.mrb[0].mxu0
        %v736 = vadd.f32 0.0, %v735
        %v737 = vpop.f32.mrb[0].mxu0
        %738 = vmatprep.mubr.bf16.mxu0 0
        %739 = vmatmul.mubr.bf16.gmra.mrb[0].mxu0 %v680
        %v740 = vpop.f32.mrb[0].mxu0
        %v741 = vadd.f32 0.0, %v740
        %v742 = vpop.f32.mrb[0].mxu0
        %v743 = vpop.f32.mrb[0].mxu0
        %v744 = vadd.f32 0.0, %v743
        %v745 = vpop.f32.mrb[0].mxu0
        %746 = vdwg.mxu0
        %v747 = vadd.f32 %v578, %v717
        %v748 = vadd.f32 %v581, %v720
        %v749 = vadd.f32 %v586, %v725
        %v750 = vadd.f32 %v589, %v728
        %v751 = vadd.f32 %v594, %v733
        %v752 = vadd.f32 %v597, %v736
        %v753 = vadd.f32 %v602, %v741
        %v754 = vadd.f32 %v605, %v744
        %s755 = scalar_lea.vmem %s303, 4 [#allocation2]
        %v756 = vld [vmem:[%s755] sm:$0xf]
        %v757 = vld [vmem:[%s755 + $0x4] sm:$0xf]
        %v758 = vld [vmem:[%s755 + $0x8] sm:$0xf]
        %v759 = vld [vmem:[%s755 + $0xc] sm:$0xf]
        %v760 = vld [vmem:[%s755 + $0x10] sm:$0xf]
        %v761 = vld [vmem:[%s755 + $0x14] sm:$0xf]
        %v762 = vld [vmem:[%s755 + $0x18] sm:$0xf]
        %v763 = vld [vmem:[%s755 + $0x1c] sm:$0xf]
        %s764 = scalar_lea.vmem %s1, 96
        %v765 = vld [vmem:[%s764] sm:$0xf]
        %v766 = vld [vmem:[%s764 + $0x4] sm:$0xf]
        %v767 = vld [vmem:[%s764 + $0x8] sm:$0xf]
        %v768 = vld [vmem:[%s764 + $0xc] sm:$0xf]
        %v769 = vld [vmem:[%s764 + $0x10] sm:$0xf]
        %v770 = vld [vmem:[%s764 + $0x14] sm:$0xf]
        %v771 = vld [vmem:[%s764 + $0x18] sm:$0xf]
        %v772 = vld [vmem:[%s764 + $0x1c] sm:$0xf]
        %v781 = vunpack.c.l.b16 %v756
        %v782 = vunpack.c.l.b16 %v757
        %v783 = vunpack.c.l.b16 %v758
        %v784 = vunpack.c.l.b16 %v759
        %v785 = vunpack.c.l.b16 %v760
        %v786 = vunpack.c.l.b16 %v761
        %v787 = vunpack.c.l.b16 %v762
        %v788 = vunpack.c.l.b16 %v763
        %v789 = vpack.c.b16 %v782, %v781
        %v790 = vpack.c.b16 %v784, %v783
        %v791 = vpack.c.b16 %v786, %v785
        %v792 = vpack.c.b16 %v788, %v787
        %v801 = vunpack.c.l.b16 %v765
        %v802 = vunpack.c.l.b16 %v766
        %v803 = vunpack.c.l.b16 %v767
        %v804 = vunpack.c.l.b16 %v768
        %v805 = vunpack.c.l.b16 %v769
        %v806 = vunpack.c.l.b16 %v770
        %v807 = vunpack.c.l.b16 %v771
        %v808 = vunpack.c.l.b16 %v772
        %v809 = vpack.c.b16 %v802, %v801
        %v810 = vpack.c.b16 %v804, %v803
        %v811 = vpack.c.b16 %v806, %v805
        %v812 = vpack.c.b16 %v808, %v807
        %v818 = vsel %vm409, %v789, 0
        %v821 = vsel %vm409, %v790, 0
        %v824 = vsel %vm409, %v791, 0
        %v827 = vsel %vm409, %v792, 0
        %829 = vmatprep.subr.bf16.mxu0 0
        %830 = vmatpush1.bf16.msra.mxu0 %v809
        %831 = vmatprep.subr.bf16.mxu0 0
        %832 = vmatpush1.bf16.msra.mxu0 %v810
        %833 = vmatprep.subr.bf16.mxu0 0
        %834 = vmatpush1.bf16.msra.mxu0 %v811
        %835 = vmatprep.subr.bf16.mxu0 0
        %836 = vmatpush1.bf16.msra.mxu0 %v812
        %837 = vmatprep.subr.bf16.mxu0 0
        %838 = vmatpush1.bf16.msra.mxu0 0
        %839 = vmatprep.subr.bf16.mxu0 0
        %840 = vmatpush1.bf16.msra.mxu0 0
        %841 = vmatprep.subr.bf16.mxu0 0
        %842 = vmatpush1.bf16.msra.mxu0 0
        %843 = vmatprep.subr.bf16.mxu0 0
        %844 = vmatpush1.bf16.msra.mxu0 0
        %845 = vmatprep.subr.bf16.mxu0 0
        %846 = vmatpush1.bf16.msra.mxu0 0
        %847 = vmatprep.subr.bf16.mxu0 0
        %848 = vmatpush1.bf16.msra.mxu0 0
        %849 = vmatprep.subr.bf16.mxu0 0
        %850 = vmatpush1.bf16.msra.mxu0 0
        %851 = vmatprep.subr.bf16.mxu0 0
        %852 = vmatpush1.bf16.msra.mxu0 0
        %853 = vmatprep.subr.bf16.mxu0 0
        %854 = vmatpush1.bf16.msra.mxu0 0
        %855 = vmatprep.subr.bf16.mxu0 0
        %856 = vmatpush1.bf16.msra.mxu0 0
        %857 = vmatprep.subr.bf16.mxu0 0
        %858 = vmatpush1.bf16.msra.mxu0 0
        %859 = vmatprep.subr.bf16.mxu0 0
        %860 = vmatpush1.bf16.msra.mxu0 0
        %861 = vmatprep.mubr.bf16.mxu0 0
        %862 = vmatmul.mubr.bf16.gmra.mrb[0].mxu0 %v818
        %v863 = vpop.f32.mrb[0].mxu0
        %v864 = vadd.f32 0.0, %v863
        %v865 = vpop.f32.mrb[0].mxu0
        %v866 = vpop.f32.mrb[0].mxu0
        %v867 = vadd.f32 0.0, %v866
        %v868 = vpop.f32.mrb[0].mxu0
        %869 = vmatprep.mubr.bf16.mxu0 0
        %870 = vmatmul.mubr.bf16.gmra.mrb[0].mxu0 %v821
        %v871 = vpop.f32.mrb[0].mxu0
        %v872 = vadd.f32 0.0, %v871
        %v873 = vpop.f32.mrb[0].mxu0
        %v874 = vpop.f32.mrb[0].mxu0
        %v875 = vadd.f32 0.0, %v874
        %v876 = vpop.f32.mrb[0].mxu0
        %877 = vmatprep.mubr.bf16.mxu0 0
        %878 = vmatmul.mubr.bf16.gmra.mrb[0].mxu0 %v824
        %v879 = vpop.f32.mrb[0].mxu0
        %v880 = vadd.f32 0.0, %v879
        %v881 = vpop.f32.mrb[0].mxu0
        %v882 = vpop.f32.mrb[0].mxu0
        %v883 = vadd.f32 0.0, %v882
        %v884 = vpop.f32.mrb[0].mxu0
        %885 = vmatprep.mubr.bf16.mxu0 0
        %886 = vmatmul.mubr.bf16.gmra.mrb[0].mxu0 %v827
        %v887 = vpop.f32.mrb[0].mxu0
        %v888 = vadd.f32 0.0, %v887
        %v889 = vpop.f32.mrb[0].mxu0
        %v890 = vpop.f32.mrb[0].mxu0
        %v891 = vadd.f32 0.0, %v890
        %v892 = vpop.f32.mrb[0].mxu0
        %893 = vdwg.mxu0
        %v894 = vadd.f32 %v747, %v864
        %v895 = vadd.f32 %v748, %v867
        %v896 = vadd.f32 %v749, %v872
        %v897 = vadd.f32 %v750, %v875
        %v898 = vadd.f32 %v751, %v880
        %v899 = vadd.f32 %v752, %v883
        %v900 = vadd.f32 %v753, %v888
        %v901 = vadd.f32 %v754, %v891
        %s902 = scalar_lea.vmem %s303, 44 [#allocation2]
        %v903 = vld [vmem:[%s902] sm:$0xf]
        %v904 = vld [vmem:[%s902 + $0x4] sm:$0xf]
        %v905 = vld [vmem:[%s902 + $0x8] sm:$0xf]
        %v906 = vld [vmem:[%s902 + $0xc] sm:$0xf]
        %v907 = vld [vmem:[%s902 + $0x10] sm:$0xf]
        %v908 = vld [vmem:[%s902 + $0x14] sm:$0xf]
        %v909 = vld [vmem:[%s902 + $0x18] sm:$0xf]
        %v910 = vld [vmem:[%s902 + $0x1c] sm:$0xf]
        %s911 = scalar_lea.vmem %s1, 128
        %v912 = vld [vmem:[%s911] sm:$0xf]
        %v913 = vld [vmem:[%s911 + $0x4] sm:$0xf]
        %v914 = vld [vmem:[%s911 + $0x8] sm:$0xf]
        %v915 = vld [vmem:[%s911 + $0xc] sm:$0xf]
        %v916 = vld [vmem:[%s911 + $0x10] sm:$0xf]
        %v917 = vld [vmem:[%s911 + $0x14] sm:$0xf]
        %v918 = vld [vmem:[%s911 + $0x18] sm:$0xf]
        %v919 = vld [vmem:[%s911 + $0x1c] sm:$0xf]
        %v928 = vunpack.c.l.b16 %v903
        %v929 = vunpack.c.l.b16 %v904
        %v930 = vunpack.c.l.b16 %v905
        %v931 = vunpack.c.l.b16 %v906
        %v932 = vunpack.c.l.b16 %v907
        %v933 = vunpack.c.l.b16 %v908
        %v934 = vunpack.c.l.b16 %v909
        %v935 = vunpack.c.l.b16 %v910
        %v936 = vpack.c.b16 %v929, %v928
        %v937 = vpack.c.b16 %v931, %v930
        %v938 = vpack.c.b16 %v933, %v932
        %v939 = vpack.c.b16 %v935, %v934
        %v948 = vunpack.c.l.b16 %v912
        %v949 = vunpack.c.l.b16 %v913
        %v950 = vunpack.c.l.b16 %v914
        %v951 = vunpack.c.l.b16 %v915
        %v952 = vunpack.c.l.b16 %v916
        %v953 = vunpack.c.l.b16 %v917
        %v954 = vunpack.c.l.b16 %v918
        %v955 = vunpack.c.l.b16 %v919
        %v956 = vpack.c.b16 %v949, %v948
        %v957 = vpack.c.b16 %v951, %v950
        %v958 = vpack.c.b16 %v953, %v952
        %v959 = vpack.c.b16 %v955, %v954
        %v965 = vsel %vm409, %v936, 0
        %v968 = vsel %vm409, %v937, 0
        %v971 = vsel %vm409, %v938, 0
        %v974 = vsel %vm409, %v939, 0
        %976 = vmatprep.subr.bf16.mxu0 0
        %977 = vmatpush1.bf16.msra.mxu0 %v956
        %978 = vmatprep.subr.bf16.mxu0 0
        %979 = vmatpush1.bf16.msra.mxu0 %v957
        %980 = vmatprep.subr.bf16.mxu0 0
        %981 = vmatpush1.bf16.msra.mxu0 %v958
        %982 = vmatprep.subr.bf16.mxu0 0
        %983 = vmatpush1.bf16.msra.mxu0 %v959
        %984 = vmatprep.subr.bf16.mxu0 0
        %985 = vmatpush1.bf16.msra.mxu0 0
        %986 = vmatprep.subr.bf16.mxu0 0
        %987 = vmatpush1.bf16.msra.mxu0 0
        %988 = vmatprep.subr.bf16.mxu0 0
        %989 = vmatpush1.bf16.msra.mxu0 0
        %990 = vmatprep.subr.bf16.mxu0 0
        %991 = vmatpush1.bf16.msra.mxu0 0
        %992 = vmatprep.subr.bf16.mxu0 0
        %993 = vmatpush1.bf16.msra.mxu0 0
        %994 = vmatprep.subr.bf16.mxu0 0
        %995 = vmatpush1.bf16.msra.mxu0 0
        %996 = vmatprep.subr.bf16.mxu0 0
        %997 = vmatpush1.bf16.msra.mxu0 0
        %998 = vmatprep.subr.bf16.mxu0 0
        %999 = vmatpush1.bf16.msra.mxu0 0
        %1000 = vmatprep.subr.bf16.mxu0 0
        %1001 = vmatpush1.bf16.msra.mxu0 0
        %1002 = vmatprep.subr.bf16.mxu0 0
        %1003 = vmatpush1.bf16.msra.mxu0 0
        %1004 = vmatprep.subr.bf16.mxu0 0
        %1005 = vmatpush1.bf16.msra.mxu0 0
        %1006 = vmatprep.subr.bf16.mxu0 0
        %1007 = vmatpush1.bf16.msra.mxu0 0
        %1008 = vmatprep.mubr.bf16.mxu0 0
        %1009 = vmatmul.mubr.bf16.gmra.mrb[0].mxu0 %v965
        %v1010 = vpop.f32.mrb[0].mxu0
        %v1011 = vadd.f32 0.0, %v1010
        %v1012 = vpop.f32.mrb[0].mxu0
        %v1013 = vpop.f32.mrb[0].mxu0
        %v1014 = vadd.f32 0.0, %v1013
        %v1015 = vpop.f32.mrb[0].mxu0
        %1016 = vmatprep.mubr.bf16.mxu0 0
        %1017 = vmatmul.mubr.bf16.gmra.mrb[0].mxu0 %v968
        %v1018 = vpop.f32.mrb[0].mxu0
        %v1019 = vadd.f32 0.0, %v1018
        %v1020 = vpop.f32.mrb[0].mxu0
        %v1021 = vpop.f32.mrb[0].mxu0
        %v1022 = vadd.f32 0.0, %v1021
        %v1023 = vpop.f32.mrb[0].mxu0
        %1024 = vmatprep.mubr.bf16.mxu0 0
        %1025 = vmatmul.mubr.bf16.gmra.mrb[0].mxu0 %v971
        %v1026 = vpop.f32.mrb[0].mxu0
        %v1027 = vadd.f32 0.0, %v1026
        %v1028 = vpop.f32.mrb[0].mxu0
        %v1029 = vpop.f32.mrb[0].mxu0
        %v1030 = vadd.f32 0.0, %v1029
        %v1031 = vpop.f32.mrb[0].mxu0
        %1032 = vmatprep.mubr.bf16.mxu0 0
        %1033 = vmatmul.mubr.bf16.gmra.mrb[0].mxu0 %v974
        %v1034 = vpop.f32.mrb[0].mxu0
        %v1035 = vadd.f32 0.0, %v1034
        %v1036 = vpop.f32.mrb[0].mxu0
        %v1037 = vpop.f32.mrb[0].mxu0
        %v1038 = vadd.f32 0.0, %v1037
        %v1039 = vpop.f32.mrb[0].mxu0
        %1040 = vdwg.mxu0
        %v1041 = vadd.f32 %v894, %v1011
        %v1042 = vadd.f32 %v895, %v1014
        %v1043 = vadd.f32 %v896, %v1019
        %v1044 = vadd.f32 %v897, %v1022
        %v1045 = vadd.f32 %v898, %v1027
        %v1046 = vadd.f32 %v899, %v1030
        %v1047 = vadd.f32 %v900, %v1035
        %v1048 = vadd.f32 %v901, %v1038
        %s1049 = scalar_lea.vmem %s303, 84 [#allocation2]
        %v1050 = vld [vmem:[%s1049] sm:$0xf]
        %v1051 = vld [vmem:[%s1049 + $0x4] sm:$0xf]
        %v1052 = vld [vmem:[%s1049 + $0x8] sm:$0xf]
        %v1053 = vld [vmem:[%s1049 + $0xc] sm:$0xf]
        %v1054 = vld [vmem:[%s1049 + $0x10] sm:$0xf]
        %v1055 = vld [vmem:[%s1049 + $0x14] sm:$0xf]
        %v1056 = vld [vmem:[%s1049 + $0x18] sm:$0xf]
        %v1057 = vld [vmem:[%s1049 + $0x1c] sm:$0xf]
        %s1058 = scalar_lea.vmem %s1, 160
        %v1059 = vld [vmem:[%s1058] sm:$0xf]
        %v1060 = vld [vmem:[%s1058 + $0x4] sm:$0xf]
        %v1061 = vld [vmem:[%s1058 + $0x8] sm:$0xf]
        %v1062 = vld [vmem:[%s1058 + $0xc] sm:$0xf]
        %v1063 = vld [vmem:[%s1058 + $0x10] sm:$0xf]
        %v1064 = vld [vmem:[%s1058 + $0x14] sm:$0xf]
        %v1065 = vld [vmem:[%s1058 + $0x18] sm:$0xf]
        %v1066 = vld [vmem:[%s1058 + $0x1c] sm:$0xf]
        %v1075 = vunpack.c.l.b16 %v1050
        %v1076 = vunpack.c.l.b16 %v1051
        %v1077 = vunpack.c.l.b16 %v1052
        %v1078 = vunpack.c.l.b16 %v1053
        %v1079 = vunpack.c.l.b16 %v1054
        %v1080 = vunpack.c.l.b16 %v1055
        %v1081 = vunpack.c.l.b16 %v1056
        %v1082 = vunpack.c.l.b16 %v1057
        %v1083 = vpack.c.b16 %v1076, %v1075
        %v1084 = vpack.c.b16 %v1078, %v1077
        %v1085 = vpack.c.b16 %v1080, %v1079
        %v1086 = vpack.c.b16 %v1082, %v1081
        %v1095 = vunpack.c.l.b16 %v1059
        %v1096 = vunpack.c.l.b16 %v1060
        %v1097 = vunpack.c.l.b16 %v1061
        %v1098 = vunpack.c.l.b16 %v1062
        %v1099 = vunpack.c.l.b16 %v1063
        %v1100 = vunpack.c.l.b16 %v1064
        %v1101 = vunpack.c.l.b16 %v1065
        %v1102 = vunpack.c.l.b16 %v1066
        %v1103 = vpack.c.b16 %v1096, %v1095
        %v1104 = vpack.c.b16 %v1098, %v1097
        %v1105 = vpack.c.b16 %v1100, %v1099
        %v1106 = vpack.c.b16 %v1102, %v1101
        %v1112 = vsel %vm409, %v1083, 0
        %v1115 = vsel %vm409, %v1084, 0
        %v1118 = vsel %vm409, %v1085, 0
        %v1121 = vsel %vm409, %v1086, 0
        %1123 = vmatprep.subr.bf16.mxu0 0
        %1124 = vmatpush1.bf16.msra.mxu0 %v1103
        %1125 = vmatprep.subr.bf16.mxu0 0
        %1126 = vmatpush1.bf16.msra.mxu0 %v1104
        %1127 = vmatprep.subr.bf16.mxu0 0
        %1128 = vmatpush1.bf16.msra.mxu0 %v1105
        %1129 = vmatprep.subr.bf16.mxu0 0
        %1130 = vmatpush1.bf16.msra.mxu0 %v1106
        %1131 = vmatprep.subr.bf16.mxu0 0
        %1132 = vmatpush1.bf16.msra.mxu0 0
        %1133 = vmatprep.subr.bf16.mxu0 0
        %1134 = vmatpush1.bf16.msra.mxu0 0
        %1135 = vmatprep.subr.bf16.mxu0 0
        %1136 = vmatpush1.bf16.msra.mxu0 0
        %1137 = vmatprep.subr.bf16.mxu0 0
        %1138 = vmatpush1.bf16.msra.mxu0 0
        %1139 = vmatprep.subr.bf16.mxu0 0
        %1140 = vmatpush1.bf16.msra.mxu0 0
        %1141 = vmatprep.subr.bf16.mxu0 0
        %1142 = vmatpush1.bf16.msra.mxu0 0
        %1143 = vmatprep.subr.bf16.mxu0 0
        %1144 = vmatpush1.bf16.msra.mxu0 0
        %1145 = vmatprep.subr.bf16.mxu0 0
        %1146 = vmatpush1.bf16.msra.mxu0 0
        %1147 = vmatprep.subr.bf16.mxu0 0
        %1148 = vmatpush1.bf16.msra.mxu0 0
        %1149 = vmatprep.subr.bf16.mxu0 0
        %1150 = vmatpush1.bf16.msra.mxu0 0
        %1151 = vmatprep.subr.bf16.mxu0 0
        %1152 = vmatpush1.bf16.msra.mxu0 0
        %1153 = vmatprep.subr.bf16.mxu0 0
        %1154 = vmatpush1.bf16.msra.mxu0 0
        %1155 = vmatprep.mubr.bf16.mxu0 0
        %1156 = vmatmul.mubr.bf16.gmra.mrb[0].mxu0 %v1112
        %v1157 = vpop.f32.mrb[0].mxu0
        %v1158 = vadd.f32 0.0, %v1157
        %v1159 = vpop.f32.mrb[0].mxu0
        %v1160 = vpop.f32.mrb[0].mxu0
        %v1161 = vadd.f32 0.0, %v1160
        %v1162 = vpop.f32.mrb[0].mxu0
        %1163 = vmatprep.mubr.bf16.mxu0 0
        %1164 = vmatmul.mubr.bf16.gmra.mrb[0].mxu0 %v1115
        %v1165 = vpop.f32.mrb[0].mxu0
        %v1166 = vadd.f32 0.0, %v1165
        %v1167 = vpop.f32.mrb[0].mxu0
        %v1168 = vpop.f32.mrb[0].mxu0
        %v1169 = vadd.f32 0.0, %v1168
        %v1170 = vpop.f32.mrb[0].mxu0
        %1171 = vmatprep.mubr.bf16.mxu0 0
        %1172 = vmatmul.mubr.bf16.gmra.mrb[0].mxu0 %v1118
        %v1173 = vpop.f32.mrb[0].mxu0
        %v1174 = vadd.f32 0.0, %v1173
        %v1175 = vpop.f32.mrb[0].mxu0
        %v1176 = vpop.f32.mrb[0].mxu0
        %v1177 = vadd.f32 0.0, %v1176
        %v1178 = vpop.f32.mrb[0].mxu0
        %1179 = vmatprep.mubr.bf16.mxu0 0
        %1180 = vmatmul.mubr.bf16.gmra.mrb[0].mxu0 %v1121
        %v1181 = vpop.f32.mrb[0].mxu0
        %v1182 = vadd.f32 0.0, %v1181
        %v1183 = vpop.f32.mrb[0].mxu0
        %v1184 = vpop.f32.mrb[0].mxu0
        %v1185 = vadd.f32 0.0, %v1184
        %v1186 = vpop.f32.mrb[0].mxu0
        %1187 = vdwg.mxu0
        %v1188 = vadd.f32 %v1041, %v1158
        %v1189 = vadd.f32 %v1042, %v1161
        %v1190 = vadd.f32 %v1043, %v1166
        %v1191 = vadd.f32 %v1044, %v1169
        %v1192 = vadd.f32 %v1045, %v1174
        %v1193 = vadd.f32 %v1046, %v1177
        %v1194 = vadd.f32 %v1047, %v1182
        %v1195 = vadd.f32 %v1048, %v1185
        %s1196 = scalar_lea.vmem %s303, 8 [#allocation2]
        %v1197 = vld [vmem:[%s1196] sm:$0xf]
        %v1198 = vld [vmem:[%s1196 + $0x4] sm:$0xf]
        %v1199 = vld [vmem:[%s1196 + $0x8] sm:$0xf]
        %v1200 = vld [vmem:[%s1196 + $0xc] sm:$0xf]
        %v1201 = vld [vmem:[%s1196 + $0x10] sm:$0xf]
        %v1202 = vld [vmem:[%s1196 + $0x14] sm:$0xf]
        %v1203 = vld [vmem:[%s1196 + $0x18] sm:$0xf]
        %v1204 = vld [vmem:[%s1196 + $0x1c] sm:$0xf]
        %s1205 = scalar_lea.vmem %s1, 192
        %v1206 = vld [vmem:[%s1205] sm:$0xf]
        %v1207 = vld [vmem:[%s1205 + $0x4] sm:$0xf]
        %v1208 = vld [vmem:[%s1205 + $0x8] sm:$0xf]
        %v1209 = vld [vmem:[%s1205 + $0xc] sm:$0xf]
        %v1210 = vld [vmem:[%s1205 + $0x10] sm:$0xf]
        %v1211 = vld [vmem:[%s1205 + $0x14] sm:$0xf]
        %v1212 = vld [vmem:[%s1205 + $0x18] sm:$0xf]
        %v1213 = vld [vmem:[%s1205 + $0x1c] sm:$0xf]
        %v1222 = vunpack.c.l.b16 %v1197
        %v1223 = vunpack.c.l.b16 %v1198
        %v1224 = vunpack.c.l.b16 %v1199
        %v1225 = vunpack.c.l.b16 %v1200
        %v1226 = vunpack.c.l.b16 %v1201
        %v1227 = vunpack.c.l.b16 %v1202
        %v1228 = vunpack.c.l.b16 %v1203
        %v1229 = vunpack.c.l.b16 %v1204
        %v1230 = vpack.c.b16 %v1223, %v1222
        %v1231 = vpack.c.b16 %v1225, %v1224
        %v1232 = vpack.c.b16 %v1227, %v1226
        %v1233 = vpack.c.b16 %v1229, %v1228
        %v1242 = vunpack.c.l.b16 %v1206
        %v1243 = vunpack.c.l.b16 %v1207
        %v1244 = vunpack.c.l.b16 %v1208
        %v1245 = vunpack.c.l.b16 %v1209
        %v1246 = vunpack.c.l.b16 %v1210
        %v1247 = vunpack.c.l.b16 %v1211
        %v1248 = vunpack.c.l.b16 %v1212
        %v1249 = vunpack.c.l.b16 %v1213
        %v1250 = vpack.c.b16 %v1243, %v1242
        %v1251 = vpack.c.b16 %v1245, %v1244
        %v1252 = vpack.c.b16 %v1247, %v1246
        %v1253 = vpack.c.b16 %v1249, %v1248
        %v1259 = vsel %vm409, %v1230, 0
        %v1262 = vsel %vm409, %v1231, 0
        %v1265 = vsel %vm409, %v1232, 0
        %v1268 = vsel %vm409, %v1233, 0
        %1270 = vmatprep.subr.bf16.mxu0 0
        %1271 = vmatpush1.bf16.msra.mxu0 %v1250
        %1272 = vmatprep.subr.bf16.mxu0 0
        %1273 = vmatpush1.bf16.msra.mxu0 %v1251
        %1274 = vmatprep.subr.bf16.mxu0 0
        %1275 = vmatpush1.bf16.msra.mxu0 %v1252
        %1276 = vmatprep.subr.bf16.mxu0 0
        %1277 = vmatpush1.bf16.msra.mxu0 %v1253
        %1278 = vmatprep.subr.bf16.mxu0 0
        %1279 = vmatpush1.bf16.msra.mxu0 0
        %1280 = vmatprep.subr.bf16.mxu0 0
        %1281 = vmatpush1.bf16.msra.mxu0 0
        %1282 = vmatprep.subr.bf16.mxu0 0
        %1283 = vmatpush1.bf16.msra.mxu0 0
        %1284 = vmatprep.subr.bf16.mxu0 0
        %1285 = vmatpush1.bf16.msra.mxu0 0
        %1286 = vmatprep.subr.bf16.mxu0 0
        %1287 = vmatpush1.bf16.msra.mxu0 0
        %1288 = vmatprep.subr.bf16.mxu0 0
        %1289 = vmatpush1.bf16.msra.mxu0 0
        %1290 = vmatprep.subr.bf16.mxu0 0
        %1291 = vmatpush1.bf16.msra.mxu0 0
        %1292 = vmatprep.subr.bf16.mxu0 0
        %1293 = vmatpush1.bf16.msra.mxu0 0
        %1294 = vmatprep.subr.bf16.mxu0 0
        %1295 = vmatpush1.bf16.msra.mxu0 0
        %1296 = vmatprep.subr.bf16.mxu0 0
        %1297 = vmatpush1.bf16.msra.mxu0 0
        %1298 = vmatprep.subr.bf16.mxu0 0
        %1299 = vmatpush1.bf16.msra.mxu0 0
        %1300 = vmatprep.subr.bf16.mxu0 0
        %1301 = vmatpush1.bf16.msra.mxu0 0
        %1302 = vmatprep.mubr.bf16.mxu0 0
        %1303 = vmatmul.mubr.bf16.gmra.mrb[0].mxu0 %v1259
        %v1304 = vpop.f32.mrb[0].mxu0
        %v1305 = vadd.f32 0.0, %v1304
        %v1306 = vpop.f32.mrb[0].mxu0
        %v1307 = vpop.f32.mrb[0].mxu0
        %v1308 = vadd.f32 0.0, %v1307
        %v1309 = vpop.f32.mrb[0].mxu0
        %1310 = vmatprep.mubr.bf16.mxu0 0
        %1311 = vmatmul.mubr.bf16.gmra.mrb[0].mxu0 %v1262
        %v1312 = vpop.f32.mrb[0].mxu0
        %v1313 = vadd.f32 0.0, %v1312
        %v1314 = vpop.f32.mrb[0].mxu0
        %v1315 = vpop.f32.mrb[0].mxu0
        %v1316 = vadd.f32 0.0, %v1315
        %v1317 = vpop.f32.mrb[0].mxu0
        %1318 = vmatprep.mubr.bf16.mxu0 0
        %1319 = vmatmul.mubr.bf16.gmra.mrb[0].mxu0 %v1265
        %v1320 = vpop.f32.mrb[0].mxu0
        %v1321 = vadd.f32 0.0, %v1320
        %v1322 = vpop.f32.mrb[0].mxu0
        %v1323 = vpop.f32.mrb[0].mxu0
        %v1324 = vadd.f32 0.0, %v1323
        %v1325 = vpop.f32.mrb[0].mxu0
        %1326 = vmatprep.mubr.bf16.mxu0 0
        %1327 = vmatmul.mubr.bf16.gmra.mrb[0].mxu0 %v1268
        %v1328 = vpop.f32.mrb[0].mxu0
        %v1329 = vadd.f32 0.0, %v1328
        %v1330 = vpop.f32.mrb[0].mxu0
        %v1331 = vpop.f32.mrb[0].mxu0
        %v1332 = vadd.f32 0.0, %v1331
        %v1333 = vpop.f32.mrb[0].mxu0
        %1334 = vdwg.mxu0
        %v1335 = vadd.f32 %v1188, %v1305
        %v1336 = vadd.f32 %v1189, %v1308
        %v1337 = vadd.f32 %v1190, %v1313
        %v1338 = vadd.f32 %v1191, %v1316
        %v1339 = vadd.f32 %v1192, %v1321
        %v1340 = vadd.f32 %v1193, %v1324
        %v1341 = vadd.f32 %v1194, %v1329
        %v1342 = vadd.f32 %v1195, %v1332
        %s1343 = scalar_lea.vmem %s303, 48 [#allocation2]
        %v1344 = vld [vmem:[%s1343] sm:$0xf]
        %v1345 = vld [vmem:[%s1343 + $0x4] sm:$0xf]
        %v1346 = vld [vmem:[%s1343 + $0x8] sm:$0xf]
        %v1347 = vld [vmem:[%s1343 + $0xc] sm:$0xf]
        %v1348 = vld [vmem:[%s1343 + $0x10] sm:$0xf]
        %v1349 = vld [vmem:[%s1343 + $0x14] sm:$0xf]
        %v1350 = vld [vmem:[%s1343 + $0x18] sm:$0xf]
        %v1351 = vld [vmem:[%s1343 + $0x1c] sm:$0xf]
        %s1352 = scalar_lea.vmem %s1, 224
        %v1353 = vld [vmem:[%s1352] sm:$0xf]
        %v1354 = vld [vmem:[%s1352 + $0x4] sm:$0xf]
        %v1355 = vld [vmem:[%s1352 + $0x8] sm:$0xf]
        %v1356 = vld [vmem:[%s1352 + $0xc] sm:$0xf]
        %v1357 = vld [vmem:[%s1352 + $0x10] sm:$0xf]
        %v1358 = vld [vmem:[%s1352 + $0x14] sm:$0xf]
        %v1359 = vld [vmem:[%s1352 + $0x18] sm:$0xf]
        %v1360 = vld [vmem:[%s1352 + $0x1c] sm:$0xf]
        %v1369 = vunpack.c.l.b16 %v1344
        %v1370 = vunpack.c.l.b16 %v1345
        %v1371 = vunpack.c.l.b16 %v1346
        %v1372 = vunpack.c.l.b16 %v1347
        %v1373 = vunpack.c.l.b16 %v1348
        %v1374 = vunpack.c.l.b16 %v1349
        %v1375 = vunpack.c.l.b16 %v1350
        %v1376 = vunpack.c.l.b16 %v1351
        %v1377 = vpack.c.b16 %v1370, %v1369
        %v1378 = vpack.c.b16 %v1372, %v1371
        %v1379 = vpack.c.b16 %v1374, %v1373
        %v1380 = vpack.c.b16 %v1376, %v1375
        %v1389 = vunpack.c.l.b16 %v1353
        %v1390 = vunpack.c.l.b16 %v1354
        %v1391 = vunpack.c.l.b16 %v1355
        %v1392 = vunpack.c.l.b16 %v1356
        %v1393 = vunpack.c.l.b16 %v1357
        %v1394 = vunpack.c.l.b16 %v1358
        %v1395 = vunpack.c.l.b16 %v1359
        %v1396 = vunpack.c.l.b16 %v1360
        %v1397 = vpack.c.b16 %v1390, %v1389
        %v1398 = vpack.c.b16 %v1392, %v1391
        %v1399 = vpack.c.b16 %v1394, %v1393
        %v1400 = vpack.c.b16 %v1396, %v1395
        %v1406 = vsel %vm409, %v1377, 0
        %v1409 = vsel %vm409, %v1378, 0
        %v1412 = vsel %vm409, %v1379, 0
        %v1415 = vsel %vm409, %v1380, 0
        %1417 = vmatprep.subr.bf16.mxu0 0
        %1418 = vmatpush1.bf16.msra.mxu0 %v1397
        %1419 = vmatprep.subr.bf16.mxu0 0
        %1420 = vmatpush1.bf16.msra.mxu0 %v1398
        %1421 = vmatprep.subr.bf16.mxu0 0
        %1422 = vmatpush1.bf16.msra.mxu0 %v1399
        %1423 = vmatprep.subr.bf16.mxu0 0
        %1424 = vmatpush1.bf16.msra.mxu0 %v1400
        %1425 = vmatprep.subr.bf16.mxu0 0
        %1426 = vmatpush1.bf16.msra.mxu0 0
        %1427 = vmatprep.subr.bf16.mxu0 0
        %1428 = vmatpush1.bf16.msra.mxu0 0
        %1429 = vmatprep.subr.bf16.mxu0 0
        %1430 = vmatpush1.bf16.msra.mxu0 0
        %1431 = vmatprep.subr.bf16.mxu0 0
        %1432 = vmatpush1.bf16.msra.mxu0 0
        %1433 = vmatprep.subr.bf16.mxu0 0
        %1434 = vmatpush1.bf16.msra.mxu0 0
        %1435 = vmatprep.subr.bf16.mxu0 0
        %1436 = vmatpush1.bf16.msra.mxu0 0
        %1437 = vmatprep.subr.bf16.mxu0 0
        %1438 = vmatpush1.bf16.msra.mxu0 0
        %1439 = vmatprep.subr.bf16.mxu0 0
        %1440 = vmatpush1.bf16.msra.mxu0 0
        %1441 = vmatprep.subr.bf16.mxu0 0
        %1442 = vmatpush1.bf16.msra.mxu0 0
        %1443 = vmatprep.subr.bf16.mxu0 0
        %1444 = vmatpush1.bf16.msra.mxu0 0
        %1445 = vmatprep.subr.bf16.mxu0 0
        %1446 = vmatpush1.bf16.msra.mxu0 0
        %1447 = vmatprep.subr.bf16.mxu0 0
        %1448 = vmatpush1.bf16.msra.mxu0 0
        %1449 = vmatprep.mubr.bf16.mxu0 0
        %1450 = vmatmul.mubr.bf16.gmra.mrb[0].mxu0 %v1406
        %v1451 = vpop.f32.mrb[0].mxu0
        %v1452 = vadd.f32 0.0, %v1451
        %v1453 = vpop.f32.mrb[0].mxu0
        %v1454 = vpop.f32.mrb[0].mxu0
        %v1455 = vadd.f32 0.0, %v1454
        %v1456 = vpop.f32.mrb[0].mxu0
        %1457 = vmatprep.mubr.bf16.mxu0 0
        %1458 = vmatmul.mubr.bf16.gmra.mrb[0].mxu0 %v1409
        %v1459 = vpop.f32.mrb[0].mxu0
        %v1460 = vadd.f32 0.0, %v1459
        %v1461 = vpop.f32.mrb[0].mxu0
        %v1462 = vpop.f32.mrb[0].mxu0
        %v1463 = vadd.f32 0.0, %v1462
        %v1464 = vpop.f32.mrb[0].mxu0
        %1465 = vmatprep.mubr.bf16.mxu0 0
        %1466 = vmatmul.mubr.bf16.gmra.mrb[0].mxu0 %v1412
        %v1467 = vpop.f32.mrb[0].mxu0
        %v1468 = vadd.f32 0.0, %v1467
        %v1469 = vpop.f32.mrb[0].mxu0
        %v1470 = vpop.f32.mrb[0].mxu0
        %v1471 = vadd.f32 0.0, %v1470
        %v1472 = vpop.f32.mrb[0].mxu0
        %1473 = vmatprep.mubr.bf16.mxu0 0
        %1474 = vmatmul.mubr.bf16.gmra.mrb[0].mxu0 %v1415
        %v1475 = vpop.f32.mrb[0].mxu0
        %v1476 = vadd.f32 0.0, %v1475
        %v1477 = vpop.f32.mrb[0].mxu0
        %v1478 = vpop.f32.mrb[0].mxu0
        %v1479 = vadd.f32 0.0, %v1478
        %v1480 = vpop.f32.mrb[0].mxu0
        %1481 = vdwg.mxu0
        %v1482 = vadd.f32 %v1335, %v1452
        %v1483 = vadd.f32 %v1336, %v1455
        %v1484 = vadd.f32 %v1337, %v1460
        %v1485 = vadd.f32 %v1338, %v1463
        %v1486 = vadd.f32 %v1339, %v1468
        %v1487 = vadd.f32 %v1340, %v1471
        %v1488 = vadd.f32 %v1341, %v1476
        %v1489 = vadd.f32 %v1342, %v1479
        %s1490 = scalar_lea.vmem %s303, 88 [#allocation2]
        %v1491 = vld [vmem:[%s1490] sm:$0xf]
        %v1492 = vld [vmem:[%s1490 + $0x4] sm:$0xf]
        %v1493 = vld [vmem:[%s1490 + $0x8] sm:$0xf]
        %v1494 = vld [vmem:[%s1490 + $0xc] sm:$0xf]
        %v1495 = vld [vmem:[%s1490 + $0x10] sm:$0xf]
        %v1496 = vld [vmem:[%s1490 + $0x14] sm:$0xf]
        %v1497 = vld [vmem:[%s1490 + $0x18] sm:$0xf]
        %v1498 = vld [vmem:[%s1490 + $0x1c] sm:$0xf]
        %s1499 = scalar_lea.vmem %s1, 256
        %v1500 = vld [vmem:[%s1499] sm:$0xf]
        %v1501 = vld [vmem:[%s1499 + $0x4] sm:$0xf]
        %v1502 = vld [vmem:[%s1499 + $0x8] sm:$0xf]
        %v1503 = vld [vmem:[%s1499 + $0xc] sm:$0xf]
        %v1504 = vld [vmem:[%s1499 + $0x10] sm:$0xf]
        %v1505 = vld [vmem:[%s1499 + $0x14] sm:$0xf]
        %v1506 = vld [vmem:[%s1499 + $0x18] sm:$0xf]
        %v1507 = vld [vmem:[%s1499 + $0x1c] sm:$0xf]
        %v1516 = vunpack.c.l.b16 %v1491
        %v1517 = vunpack.c.l.b16 %v1492
        %v1518 = vunpack.c.l.b16 %v1493
        %v1519 = vunpack.c.l.b16 %v1494
        %v1520 = vunpack.c.l.b16 %v1495
        %v1521 = vunpack.c.l.b16 %v1496
        %v1522 = vunpack.c.l.b16 %v1497
        %v1523 = vunpack.c.l.b16 %v1498
        %v1524 = vpack.c.b16 %v1517, %v1516
        %v1525 = vpack.c.b16 %v1519, %v1518
        %v1526 = vpack.c.b16 %v1521, %v1520
        %v1527 = vpack.c.b16 %v1523, %v1522
        %v1536 = vunpack.c.l.b16 %v1500
        %v1537 = vunpack.c.l.b16 %v1501
        %v1538 = vunpack.c.l.b16 %v1502
        %v1539 = vunpack.c.l.b16 %v1503
        %v1540 = vunpack.c.l.b16 %v1504
        %v1541 = vunpack.c.l.b16 %v1505
        %v1542 = vunpack.c.l.b16 %v1506
        %v1543 = vunpack.c.l.b16 %v1507
        %v1544 = vpack.c.b16 %v1537, %v1536
        %v1545 = vpack.c.b16 %v1539, %v1538
        %v1546 = vpack.c.b16 %v1541, %v1540
        %v1547 = vpack.c.b16 %v1543, %v1542
        %v1553 = vsel %vm409, %v1524, 0
        %v1556 = vsel %vm409, %v1525, 0
        %v1559 = vsel %vm409, %v1526, 0
        %v1562 = vsel %vm409, %v1527, 0
        %1564 = vmatprep.subr.bf16.mxu0 0
        %1565 = vmatpush1.bf16.msra.mxu0 %v1544
        %1566 = vmatprep.subr.bf16.mxu0 0
        %1567 = vmatpush1.bf16.msra.mxu0 %v1545
        %1568 = vmatprep.subr.bf16.mxu0 0
        %1569 = vmatpush1.bf16.msra.mxu0 %v1546
        %1570 = vmatprep.subr.bf16.mxu0 0
        %1571 = vmatpush1.bf16.msra.mxu0 %v1547
        %1572 = vmatprep.subr.bf16.mxu0 0
        %1573 = vmatpush1.bf16.msra.mxu0 0
        %1574 = vmatprep.subr.bf16.mxu0 0
        %1575 = vmatpush1.bf16.msra.mxu0 0
        %1576 = vmatprep.subr.bf16.mxu0 0
        %1577 = vmatpush1.bf16.msra.mxu0 0
        %1578 = vmatprep.subr.bf16.mxu0 0
        %1579 = vmatpush1.bf16.msra.mxu0 0
        %1580 = vmatprep.subr.bf16.mxu0 0
        %1581 = vmatpush1.bf16.msra.mxu0 0
        %1582 = vmatprep.subr.bf16.mxu0 0
        %1583 = vmatpush1.bf16.msra.mxu0 0
        %1584 = vmatprep.subr.bf16.mxu0 0
        %1585 = vmatpush1.bf16.msra.mxu0 0
        %1586 = vmatprep.subr.bf16.mxu0 0
        %1587 = vmatpush1.bf16.msra.mxu0 0
        %1588 = vmatprep.subr.bf16.mxu0 0
        %1589 = vmatpush1.bf16.msra.mxu0 0
        %1590 = vmatprep.subr.bf16.mxu0 0
        %1591 = vmatpush1.bf16.msra.mxu0 0
        %1592 = vmatprep.subr.bf16.mxu0 0
        %1593 = vmatpush1.bf16.msra.mxu0 0
        %1594 = vmatprep.subr.bf16.mxu0 0
        %1595 = vmatpush1.bf16.msra.mxu0 0
        %1596 = vmatprep.mubr.bf16.mxu0 0
        %1597 = vmatmul.mubr.bf16.gmra.mrb[0].mxu0 %v1553
        %v1598 = vpop.f32.mrb[0].mxu0
        %v1599 = vadd.f32 0.0, %v1598
        %v1600 = vpop.f32.mrb[0].mxu0
        %v1601 = vpop.f32.mrb[0].mxu0
        %v1602 = vadd.f32 0.0, %v1601
        %v1603 = vpop.f32.mrb[0].mxu0
        %1604 = vmatprep.mubr.bf16.mxu0 0
        %1605 = vmatmul.mubr.bf16.gmra.mrb[0].mxu0 %v1556
        %v1606 = vpop.f32.mrb[0].mxu0
        %v1607 = vadd.f32 0.0, %v1606
        %v1608 = vpop.f32.mrb[0].mxu0
        %v1609 = vpop.f32.mrb[0].mxu0
        %v1610 = vadd.f32 0.0, %v1609
        %v1611 = vpop.f32.mrb[0].mxu0
        %1612 = vmatprep.mubr.bf16.mxu0 0
        %1613 = vmatmul.mubr.bf16.gmra.mrb[0].mxu0 %v1559
        %v1614 = vpop.f32.mrb[0].mxu0
        %v1615 = vadd.f32 0.0, %v1614
        %v1616 = vpop.f32.mrb[0].mxu0
        %v1617 = vpop.f32.mrb[0].mxu0
        %v1618 = vadd.f32 0.0, %v1617
        %v1619 = vpop.f32.mrb[0].mxu0
        %1620 = vmatprep.mubr.bf16.mxu0 0
        %1621 = vmatmul.mubr.bf16.gmra.mrb[0].mxu0 %v1562
        %v1622 = vpop.f32.mrb[0].mxu0
        %v1623 = vadd.f32 0.0, %v1622
        %v1624 = vpop.f32.mrb[0].mxu0
        %v1625 = vpop.f32.mrb[0].mxu0
        %v1626 = vadd.f32 0.0, %v1625
        %v1627 = vpop.f32.mrb[0].mxu0
        %1628 = vdwg.mxu0
        %v1629 = vadd.f32 %v1482, %v1599
        %v1630 = vadd.f32 %v1483, %v1602
        %v1631 = vadd.f32 %v1484, %v1607
        %v1632 = vadd.f32 %v1485, %v1610
        %v1633 = vadd.f32 %v1486, %v1615
        %v1634 = vadd.f32 %v1487, %v1618
        %v1635 = vadd.f32 %v1488, %v1623
        %v1636 = vadd.f32 %v1489, %v1626
        %v1637 = vld [vmem:[%s2] sm:$0x1]
        %v1639 = vlaneseq
        %v1640 = vshrl.u32 %v1639, 7
        %v1641 = vsub.s32 0, %v1640
        %v1642 = vrot.slane %v1637, %v1641
        %v1644 = vadd.f32 %v1629, %v1642
        %v1645 = vadd.f32 %v1630, %v1642
        %v1646 = vadd.f32 %v1631, %v1642
        %v1647 = vadd.f32 %v1632, %v1642
        %v1648 = vadd.f32 %v1633, %v1642
        %v1649 = vadd.f32 %v1634, %v1642
        %v1650 = vadd.f32 %v1635, %v1642
        %v1651 = vadd.f32 %v1636, %v1642
        %v1652 = vpack.c.bf16 %v1645, %v1644
        %v1653 = vpack.c.bf16 %v1647, %v1646
        %v1654 = vpack.c.bf16 %v1649, %v1648
        %v1655 = vpack.c.bf16 %v1651, %v1650
        %v1660 = vunpack.c.l.b16 %v1652
        %v1661 = vunpack.c.h.b16 %v1652
        %v1662 = vunpack.c.l.b16 %v1653
        %v1663 = vunpack.c.h.b16 %v1653
        %v1664 = vunpack.c.l.b16 %v1654
        %v1665 = vunpack.c.h.b16 %v1654
        %v1666 = vunpack.c.l.b16 %v1655
        %v1667 = vunpack.c.h.b16 %v1655
        %v1668 = vpack.c.b16 %v1660, %v1660
        %v1669 = vpack.c.b16 %v1661, %v1661
        %v1670 = vpack.c.b16 %v1662, %v1662
        %v1671 = vpack.c.b16 %v1663, %v1663
        %v1672 = vpack.c.b16 %v1664, %v1664
        %v1673 = vpack.c.b16 %v1665, %v1665
        %v1674 = vpack.c.b16 %v1666, %v1666
        %v1675 = vpack.c.b16 %v1667, %v1667
        %1684 = vst [vmem:[%s328] sm:$0xf] %v1668
        %1685 = vst [vmem:[%s328 + $0x4] sm:$0xf] %v1669
        %1686 = vst [vmem:[%s328 + $0x8] sm:$0xf] %v1670
        %1687 = vst [vmem:[%s328 + $0xc] sm:$0xf] %v1671
        %1688 = vst [vmem:[%s328 + $0x10] sm:$0xf] %v1672
        %1689 = vst [vmem:[%s328 + $0x14] sm:$0xf] %v1673
        %1690 = vst [vmem:[%s328 + $0x18] sm:$0xf] %v1674
        %1691 = vst [vmem:[%s328 + $0x1c] sm:$0xf] %v1675
        %s1692 = smul.u32 8, %s14
        %p1693 = scmp.lt.s32.totalorder %s1692, 15
        %s1694 = scalar_select %p1693, %s1692, 15
        %s1695 = smul.addr %s1694, 4
        %s1696 = scalar_lea.vmem %s3, %s1695
        // Predicated region
        $region74: #{decoder_forward.2} parent=68 // pred_check
          %p1697 = pneg %p100
        $region75: #{decoder_forward.2} parent=68 // pred_check_branch
          %1699 = sbr.rel (%p1697) target = $region77
        $region76: #{decoder_forward.2} parent=68 // pred_region
          %s1700 = smul.u32 8, %s14
        $region77: #{decoder_forward.2} parent=68 // pred_fallthru
          _
      $region69: #{decoder_forward.2} parent=5 // pred_fallthru
        _
      %p1701 = scmp.le.s32.totalorder 2, %s9
      // Predicated region
      $region78: #{decoder_forward.2} parent=5 // pred_check
        %p1702 = pneg %p1701
      $region79: #{decoder_forward.2} parent=5 // pred_check_branch
        %1704 = sbr.rel (%p1702) target = $region81
      $region80: #{decoder_forward.2} parent=5 // pred_region
        %s1705 = ssub.s32 %s9, 2
        // Predicated region
        $region82: #{decoder_forward.2} parent=80 // pred_check
          %p1706 = pneg %p106
        $region83: #{decoder_forward.2} parent=80 // pred_check_branch
          %1708 = sbr.rel (%p1706) target = $region85
        $region84: #{decoder_forward.2} parent=80 // pred_region
          %s1709 = smul.u32 8, %s15
          %p1710 = scmp.lt.s32.totalorder %s1709, 15
          %s1711 = scalar_select %p1710, %s1709, 15
          %s1712 = smul.addr %s1711, 4
          %s1713 = scalar_lea.vmem %s3, %s1712
        $region85: #{decoder_forward.2} parent=80 // pred_fallthru
          _
      $region81: #{decoder_forward.2} parent=5 // pred_fallthru
        _
    $region6: #{decoder_forward.2} parent=1 // loop_footer
      %s13 = sadd.s32 1, %s9
    $region7: #{decoder_forward.2} parent=1 // loop_footer_branch
      %8 = sbr.rel target = $region3
    $region8: #{decoder_forward.2} parent=1 // loop_exit
      _

// kernel: decoder_forward.3
$region0: #{decoder_forward.3}
  #allocation0 [shape = 'u32[]', space=smem, size = 0x4, offset = 0x4, fixed_abs, tag = 'smem constant byte address 0x4 - core index']
  #allocation1 [shape = 'u32[144,128]{1,0:T(1,128)}', space=vmem, size = 0x12000, scoped, tag = 'internal scratch']
  %s0 = inlined_call_operand.vmem [shape: bf16[3,2,18,16,32], index: 0, kind: input, shape index: {}]
  %s1 = inlined_call_operand.vmem [shape: bf16[3,3,32,32], index: 1, kind: input, shape index: {}]
  %s2 = inlined_call_operand.vmem [shape: bf16[3,2,18,16,64], index: 2, kind: input, shape index: {}]
  %s3 = inlined_call_operand.vmem [shape: bf16[3,3,64,32], index: 3, kind: input, shape index: {}]
  %s4 = inlined_call_operand.vmem [shape: f32[1,32], index: 4, kind: input, shape index: {}]
  %s5 = inlined_call_operand.hbm [shape: f32[512,32], index: 5, kind: output, shape index: {}]
  %s6 = sld [smem:[#allocation0]]
  $region135: #{decoder_forward.3} parent=0
    _
  %s8 = ssub.s32 1, %s6
  %s9 = scalar_select 0, %s8, %s6
  $region1: #{decoder_forward.3} parent=0
    #allocation2 [shape = 'u8[442368]{0}', space=vmem, size = 0x6c000, scoped, tag = 'input window, operand 0']
    #allocation3 [shape = 'u8[442368]{0}', space=vmem, size = 0x6c000, scoped, tag = 'input window, operand 2']
    #allocation4 [shape = 'u8[262144]{0}', space=vmem, size = 0x40000, scoped, tag = 'output window, operand 0']
    #allocation5 [shape = 's32[2]{0}', space=sflag, size = 0x8, scoped, tag = 'scoped memory for decoder_forward.3']
    %10 = vsyncpa [#allocation5], 0
    %s11 = scalar_lea.sflag [#allocation5], 1
    %12 = vsyncpa %s11, 0
    loop: start=0, step=1, limit=4
    $region2: #{decoder_forward.3} parent=1 // loop_pre_header
      _
    $region3: #{decoder_forward.3} parent=1 // loop_header
      %s14 = sphi 0, %s18
      %p15 = scmp.ge.s32.totalorder %s14, 4
      %s24 = sphi 0, %s26
      %s27 = sphi 0, %s24
      %s28 = sphi 0, %s27
      %s44 = sphi 0, %s28
      %s48 = sphi 0, %s48
      %s50 = sphi 0, %s48
      %s51 = sphi 0, %s50
      %s65 = sphi 0, %s51
      %s71 = sphi 0, %s73
      %s74 = sphi 0, %s71
      %s75 = sphi 0, %s74
      %s91 = sphi 0, %s75
      %s95 = sphi 0, %s95
      %s97 = sphi 0, %s95
      %s98 = sphi 0, %s97
      %s112 = sphi 0, %s98
      %s116 = sphi 0, %s116
      %s118 = sphi 0, %s116
      %s119 = sphi 0, %s118
      %s133 = sphi 0, %s119
      %s139 = sphi 0, %s141
      %s142 = sphi 0, %s139
      %s143 = sphi 0, %s142
      %s159 = sphi 0, %s143
    $region4: #{decoder_forward.3} parent=1 // loop_header_branch
      %17 = sbr.rel (%p15) target = $region8
    $region5: #{decoder_forward.3} parent=1 // loop_body
      %s19 = ssub.s32 %s14, 1
      %s20 = ssub.s32 %s14, 2
      %s21 = sadd.s32 %s14, 1
      %s22 = ssub.s32 %s14, %s21
      %p23 = scmp.eq.s32.totalorder %s22, 0
      %s25 = sadd.s32 %s24, 1
      %s26 = scalar_select %p23, %s24, %s25
      %p29 = pneg %p23
      %p30 = scmp.eq.s32.totalorder %s14, 1
      %p31 = por %p29, %p30
      %p32 = scmp.ne.s32.totalorder %s24, %s27
      %p33 = scmp.eq.s32.totalorder %s14, 0
      %p34 = por %p32, %p33
      %p35 = scmp.ne.s32.totalorder %s24, %s27
      %p36 = scmp.eq.s32.totalorder %s19, 1
      %p37 = por %p35, %p36
      %p38 = scmp.ne.s32.totalorder %s27, %s28
      %p39 = scmp.eq.s32.totalorder %s19, 0
      %p40 = por %p38, %p39
      %p41 = scmp.ne.s32.totalorder %s27, %s28
      %p42 = scmp.eq.s32.totalorder %s20, 1
      %p43 = por %p41, %p42
      %p45 = scmp.ne.s32.totalorder %s28, %s44
      %p46 = scmp.eq.s32.totalorder %s20, 0
      %p47 = por %p45, %p46
      %s49 = sadd.s32 %s48, 1
      %p52 = scmp.eq.s32.totalorder %s14, 1
      %p53 = scmp.ne.s32.totalorder %s48, %s50
      %p54 = scmp.eq.s32.totalorder %s14, 0
      %p55 = por %p53, %p54
      %p56 = scmp.ne.s32.totalorder %s48, %s50
      %p57 = scmp.eq.s32.totalorder %s19, 1
      %p58 = por %p56, %p57
      %p59 = scmp.ne.s32.totalorder %s50, %s51
      %p60 = scmp.eq.s32.totalorder %s19, 0
      %p61 = por %p59, %p60
      %p62 = scmp.ne.s32.totalorder %s50, %s51
      %p63 = scmp.eq.s32.totalorder %s20, 1
      %p64 = por %p62, %p63
      %p66 = scmp.ne.s32.totalorder %s51, %s65
      %p67 = scmp.eq.s32.totalorder %s20, 0
      %p68 = por %p66, %p67
      %s69 = ssub.s32 %s14, %s21
      %p70 = scmp.eq.s32.totalorder %s69, 0
      %s72 = sadd.s32 %s71, 1
      %s73 = scalar_select %p70, %s71, %s72
      %p76 = pneg %p70
      %p77 = scmp.eq.s32.totalorder %s14, 1
      %p78 = por %p76, %p77
      %p79 = scmp.ne.s32.totalorder %s71, %s74
      %p80 = scmp.eq.s32.totalorder %s14, 0
      %p81 = por %p79, %p80
      %p82 = scmp.ne.s32.totalorder %s71, %s74
      %p83 = scmp.eq.s32.totalorder %s19, 1
      %p84 = por %p82, %p83
      %p85 = scmp.ne.s32.totalorder %s74, %s75
      %p86 = scmp.eq.s32.totalorder %s19, 0
      %p87 = por %p85, %p86
      %p88 = scmp.ne.s32.totalorder %s74, %s75
      %p89 = scmp.eq.s32.totalorder %s20, 1
      %p90 = por %p88, %p89
      %p92 = scmp.ne.s32.totalorder %s75, %s91
      %p93 = scmp.eq.s32.totalorder %s20, 0
      %p94 = por %p92, %p93
      %s96 = sadd.s32 %s95, 1
      %p99 = scmp.eq.s32.totalorder %s14, 1
      %p100 = scmp.ne.s32.totalorder %s95, %s97
      %p101 = scmp.eq.s32.totalorder %s14, 0
      %p102 = por %p100, %p101
      %p103 = scmp.ne.s32.totalorder %s95, %s97
      %p104 = scmp.eq.s32.totalorder %s19, 1
      %p105 = por %p103, %p104
      %p106 = scmp.ne.s32.totalorder %s97, %s98
      %p107 = scmp.eq.s32.totalorder %s19, 0
      %p108 = por %p106, %p107
      %p109 = scmp.ne.s32.totalorder %s97, %s98
      %p110 = scmp.eq.s32.totalorder %s20, 1
      %p111 = por %p109, %p110
      %p113 = scmp.ne.s32.totalorder %s98, %s112
      %p114 = scmp.eq.s32.totalorder %s20, 0
      %p115 = por %p113, %p114
      %s117 = sadd.s32 %s116, 1
      %p120 = scmp.eq.s32.totalorder %s14, 1
      %p121 = scmp.ne.s32.totalorder %s116, %s118
      %p122 = scmp.eq.s32.totalorder %s14, 0
      %p123 = por %p121, %p122
      %p124 = scmp.ne.s32.totalorder %s116, %s118
      %p125 = scmp.eq.s32.totalorder %s19, 1
      %p126 = por %p124, %p125
      %p127 = scmp.ne.s32.totalorder %s118, %s119
      %p128 = scmp.eq.s32.totalorder %s19, 0
      %p129 = por %p127, %p128
      %p130 = scmp.ne.s32.totalorder %s118, %s119
      %p131 = scmp.eq.s32.totalorder %s20, 1
      %p132 = por %p130, %p131
      %p134 = scmp.ne.s32.totalorder %s119, %s133
      %p135 = scmp.eq.s32.totalorder %s20, 0
      %p136 = por %p134, %p135
      %s137 = ssub.s32 %s14, %s21
      %p138 = scmp.eq.s32.totalorder %s137, 0
      %s140 = sadd.s32 %s139, 1
      %s141 = scalar_select %p138, %s139, %s140
      %p144 = pneg %p138
      %p145 = scmp.eq.s32.totalorder %s14, 1
      %p146 = por %p144, %p145
      %p147 = scmp.ne.s32.totalorder %s139, %s142
      %p148 = scmp.eq.s32.totalorder %s14, 0
      %p149 = por %p147, %p148
      %p150 = scmp.ne.s32.totalorder %s139, %s142
      %p151 = scmp.eq.s32.totalorder %s19, 1
      %p152 = por %p150, %p151
      %p153 = scmp.ne.s32.totalorder %s142, %s143
      %p154 = scmp.eq.s32.totalorder %s19, 0
      %p155 = por %p153, %p154
      %p156 = scmp.ne.s32.totalorder %s142, %s143
      %p157 = scmp.eq.s32.totalorder %s20, 1
      %p158 = por %p156, %p157
      %p160 = scmp.ne.s32.totalorder %s143, %s159
      %p161 = scmp.eq.s32.totalorder %s20, 0
      %p162 = por %p160, %p161
      %p163 = scmp.le.s32.totalorder 1, %s14
      %p164 = scmp.lt.s32.totalorder %s14, 3
      %p165 = pnand %p163, %p164
      %p166 = pneg %p165
      // Predicated region
      $region9: #{decoder_forward.3} parent=5 // pred_check
        _
      $region10: #{decoder_forward.3} parent=5 // pred_check_branch
        %168 = sbr.rel (%p165) target = $region12
      $region11: #{decoder_forward.3} parent=5 // pred_region
        %s169 = ssub.s32 %s14, 1
        // Predicated region
        $region13: #{decoder_forward.3} parent=11 // pred_check
          %p170 = pneg %p61
        $region14: #{decoder_forward.3} parent=11 // pred_check_branch
          %172 = sbr.rel (%p170) target = $region16
        $region15: #{decoder_forward.3} parent=11 // pred_region
          _
        $region16: #{decoder_forward.3} parent=11 // pred_fallthru
          _
        // Predicated region
        $region17: #{decoder_forward.3} parent=11 // pred_check
          %p173 = pneg %p108
        $region18: #{decoder_forward.3} parent=11 // pred_check_branch
          %175 = sbr.rel (%p173) target = $region20
        $region19: #{decoder_forward.3} parent=11 // pred_region
          _
        $region20: #{decoder_forward.3} parent=11 // pred_fallthru
          _
        // Predicated region
        $region21: #{decoder_forward.3} parent=11 // pred_check
          %p176 = pneg %p129
        $region22: #{decoder_forward.3} parent=11 // pred_check_branch
          %178 = sbr.rel (%p176) target = $region24
        $region23: #{decoder_forward.3} parent=11 // pred_region
          _
        $region24: #{decoder_forward.3} parent=11 // pred_fallthru
          _
      $region12: #{decoder_forward.3} parent=5 // pred_fallthru
        _
      %p179 = scmp.lt.s32.totalorder %s14, 2
      // Predicated region
      $region25: #{decoder_forward.3} parent=5 // pred_check
        %p180 = pneg %p179
      $region26: #{decoder_forward.3} parent=5 // pred_check_branch
        %182 = sbr.rel (%p180) target = $region28
      $region27: #{decoder_forward.3} parent=5 // pred_region
        // Predicated region
        $region29: #{decoder_forward.3} parent=27 // pred_check
          %p183 = pneg %p34
        $region30: #{decoder_forward.3} parent=27 // pred_check_branch
          %185 = sbr.rel (%p183) target = $region32
        $region31: #{decoder_forward.3} parent=27 // pred_region
          %s186 = sand.u32 %s24, 1
          %s187 = sand.u32 %s24, 1
          %s188 = smul.addr %s187, 432
          %s189 = scalar_lea.vmem [#allocation2], %s188
          %s190 = smul.addr %s14, 36
          %s191 = smul.addr %s190, 4
          %s192 = scalar_lea.vmem %s0, %s191
          // Predicated region
          $region33: #{decoder_forward.3} parent=31 // pred_check
            _
          $region34: #{decoder_forward.3} parent=31 // pred_check_branch
            %194 = sbr.rel (0) target = $region36
          $region35: #{decoder_forward.3} parent=31 // pred_region
            // Predicated region
            $region37: #{decoder_forward.3} parent=35 // pred_check
              _
            $region38: #{decoder_forward.3} parent=35 // pred_check_branch
              %196 = sbr.rel target = $region40
            $region39: #{decoder_forward.3} parent=35 // pred_region
              // Predicated region
              $region52: #{decoder_forward.3} parent=39 // pred_check
                _
              $region53: #{decoder_forward.3} parent=39 // pred_check_branch
                %425 = sbr.rel (0) target = $region55
              $region54: #{decoder_forward.3} parent=39 // pred_region
                loop: start=0, step=1, limit=1
                $region56: #{decoder_forward.3} parent=54 // loop_pre_header
                  _
                $region57: #{decoder_forward.3} parent=54 // loop_header
                  %s427 = sphi 0, %s431
                  %p428 = scmp.ge.s32.totalorder %s427, 1
                  %s432 = sphi %s192, %s192
                  %s433 = sphi %s189, %s189
                $region58: #{decoder_forward.3} parent=54 // loop_header_branch
                  %430 = sbr.rel (%p428) target = $region62
                $region59: #{decoder_forward.3} parent=54 // loop_body
                  _
                $region60: #{decoder_forward.3} parent=54 // loop_footer
                  %s431 = sadd.s32 1, %s427
                $region61: #{decoder_forward.3} parent=54 // loop_footer_branch
                  %426 = sbr.rel target = $region57
                $region62: #{decoder_forward.3} parent=54 // loop_exit
                  _
                loop: start=0, step=1, limit=1
                $region63: #{decoder_forward.3} parent=54 // loop_pre_header
                  _
                $region64: #{decoder_forward.3} parent=54 // loop_header
                  %s436 = sphi 0, %s440
                  %p437 = scmp.ge.s32.totalorder %s436, 1
                  %s441 = sphi %s192, %s192
                  %s442 = sphi %s189, %s189
                $region65: #{decoder_forward.3} parent=54 // loop_header_branch
                  %439 = sbr.rel (%p437) target = $region69
                $region66: #{decoder_forward.3} parent=54 // loop_body
                  %v443 = vld [vmem:[%s441] sm:$0xf]
                  %444 = vst [vmem:[%s442] sm:$0xf] %v443
                  %v445 = vld [vmem:[%s441 + $0x4] sm:$0xf]
                  %446 = vst [vmem:[%s442 + $0x4] sm:$0xf] %v445
                  %v447 = vld [vmem:[%s441 + $0x8] sm:$0xf]
                  %448 = vst [vmem:[%s442 + $0x8] sm:$0xf] %v447
                  %v449 = vld [vmem:[%s441 + $0xc] sm:$0xf]
                  %450 = vst [vmem:[%s442 + $0xc] sm:$0xf] %v449
                  %v451 = vld [vmem:[%s441 + $0x10] sm:$0xf]
                  %452 = vst [vmem:[%s442 + $0x10] sm:$0xf] %v451
                  %v453 = vld [vmem:[%s441 + $0x14] sm:$0xf]
                  %454 = vst [vmem:[%s442 + $0x14] sm:$0xf] %v453
                  %v455 = vld [vmem:[%s441 + $0x18] sm:$0xf]
                  %456 = vst [vmem:[%s442 + $0x18] sm:$0xf] %v455
                  %v457 = vld [vmem:[%s441 + $0x1c] sm:$0xf]
                  %458 = vst [vmem:[%s442 + $0x1c] sm:$0xf] %v457
                  %v459 = vld [vmem:[%s441 + $0x20] sm:$0xf]
                  %460 = vst [vmem:[%s442 + $0x20] sm:$0xf] %v459
                  %v461 = vld [vmem:[%s441 + $0x24] sm:$0xf]
                  %462 = vst [vmem:[%s442 + $0x24] sm:$0xf] %v461
                  %v463 = vld [vmem:[%s441 + $0x28] sm:$0xf]
                  %464 = vst [vmem:[%s442 + $0x28] sm:$0xf] %v463
                  %v465 = vld [vmem:[%s441 + $0x2c] sm:$0xf]
                  %466 = vst [vmem:[%s442 + $0x2c] sm:$0xf] %v465
                  %v467 = vld [vmem:[%s441 + $0x30] sm:$0xf]
                  %468 = vst [vmem:[%s442 + $0x30] sm:$0xf] %v467
                  %v469 = vld [vmem:[%s441 + $0x34] sm:$0xf]
                  %470 = vst [vmem:[%s442 + $0x34] sm:$0xf] %v469
                  %v471 = vld [vmem:[%s441 + $0x38] sm:$0xf]
                  %472 = vst [vmem:[%s442 + $0x38] sm:$0xf] %v471
                  %v473 = vld [vmem:[%s441 + $0x3c] sm:$0xf]
                  %474 = vst [vmem:[%s442 + $0x3c] sm:$0xf] %v473
                  %v475 = vld [vmem:[%s441 + $0x40] sm:$0xf]
                  %476 = vst [vmem:[%s442 + $0x40] sm:$0xf] %v475
                  %v477 = vld [vmem:[%s441 + $0x44] sm:$0xf]
                  %478 = vst [vmem:[%s442 + $0x44] sm:$0xf] %v477
                  %v479 = vld [vmem:[%s441 + $0x48] sm:$0xf]
                  %480 = vst [vmem:[%s442 + $0x48] sm:$0xf] %v479
                  %v481 = vld [vmem:[%s441 + $0x4c] sm:$0xf]
                  %482 = vst [vmem:[%s442 + $0x4c] sm:$0xf] %v481
                  %v483 = vld [vmem:[%s441 + $0x50] sm:$0xf]
                  %484 = vst [vmem:[%s442 + $0x50] sm:$0xf] %v483
                  %v485 = vld [vmem:[%s441 + $0x54] sm:$0xf]
                  %486 = vst [vmem:[%s442 + $0x54] sm:$0xf] %v485
                  %v487 = vld [vmem:[%s441 + $0x58] sm:$0xf]
                  %488 = vst [vmem:[%s442 + $0x58] sm:$0xf] %v487
                  %v489 = vld [vmem:[%s441 + $0x5c] sm:$0xf]
                  %490 = vst [vmem:[%s442 + $0x5c] sm:$0xf] %v489
                  %v491 = vld [vmem:[%s441 + $0x60] sm:$0xf]
                  %492 = vst [vmem:[%s442 + $0x60] sm:$0xf] %v491
                  %v493 = vld [vmem:[%s441 + $0x64] sm:$0xf]
                  %494 = vst [vmem:[%s442 + $0x64] sm:$0xf] %v493
                  %v495 = vld [vmem:[%s441 + $0x68] sm:$0xf]
                  %496 = vst [vmem:[%s442 + $0x68] sm:$0xf] %v495
                  %v497 = vld [vmem:[%s441 + $0x6c] sm:$0xf]
                  %498 = vst [vmem:[%s442 + $0x6c] sm:$0xf] %v497
                  %v499 = vld [vmem:[%s441 + $0x70] sm:$0xf]
                  %500 = vst [vmem:[%s442 + $0x70] sm:$0xf] %v499
                  %v501 = vld [vmem:[%s441 + $0x74] sm:$0xf]
                  %502 = vst [vmem:[%s442 + $0x74] sm:$0xf] %v501
                  %v503 = vld [vmem:[%s441 + $0x78] sm:$0xf]
                  %504 = vst [vmem:[%s442 + $0x78] sm:$0xf] %v503
                  %v505 = vld [vmem:[%s441 + $0x7c] sm:$0xf]
                  %506 = vst [vmem:[%s442 + $0x7c] sm:$0xf] %v505
                  %v507 = vld [vmem:[%s441 + $0x80] sm:$0xf]
                  %508 = vst [vmem:[%s442 + $0x80] sm:$0xf] %v507
                  %v509 = vld [vmem:[%s441 + $0x84] sm:$0xf]
                  %510 = vst [vmem:[%s442 + $0x84] sm:$0xf] %v509
                  %v511 = vld [vmem:[%s441 + $0x88] sm:$0xf]
                  %512 = vst [vmem:[%s442 + $0x88] sm:$0xf] %v511
                  %v513 = vld [vmem:[%s441 + $0x8c] sm:$0xf]
                  %514 = vst [vmem:[%s442 + $0x8c] sm:$0xf] %v513
                  %v515 = vld [vmem:[%s441 + $0x120] sm:$0xf]
                  %516 = vst [vmem:[%s442 + $0x90] sm:$0xf] %v515
                  %v517 = vld [vmem:[%s441 + $0x124] sm:$0xf]
                  %518 = vst [vmem:[%s442 + $0x94] sm:$0xf] %v517
                  %v519 = vld [vmem:[%s441 + $0x128] sm:$0xf]
                  %520 = vst [vmem:[%s442 + $0x98] sm:$0xf] %v519
                  %v521 = vld [vmem:[%s441 + $0x12c] sm:$0xf]
                  %522 = vst [vmem:[%s442 + $0x9c] sm:$0xf] %v521
                  %v523 = vld [vmem:[%s441 + $0x130] sm:$0xf]
                  %524 = vst [vmem:[%s442 + $0xa0] sm:$0xf] %v523
                  %v525 = vld [vmem:[%s441 + $0x134] sm:$0xf]
                  %526 = vst [vmem:[%s442 + $0xa4] sm:$0xf] %v525
                  %v527 = vld [vmem:[%s441 + $0x138] sm:$0xf]
                  %528 = vst [vmem:[%s442 + $0xa8] sm:$0xf] %v527
                  %v529 = vld [vmem:[%s441 + $0x13c] sm:$0xf]
                  %530 = vst [vmem:[%s442 + $0xac] sm:$0xf] %v529
                  %v531 = vld [vmem:[%s441 + $0x140] sm:$0xf]
                  %532 = vst [vmem:[%s442 + $0xb0] sm:$0xf] %v531
                  %v533 = vld [vmem:[%s441 + $0x144] sm:$0xf]
                  %534 = vst [vmem:[%s442 + $0xb4] sm:$0xf] %v533
                  %v535 = vld [vmem:[%s441 + $0x148] sm:$0xf]
                  %536 = vst [vmem:[%s442 + $0xb8] sm:$0xf] %v535
                  %v537 = vld [vmem:[%s441 + $0x14c] sm:$0xf]
                  %538 = vst [vmem:[%s442 + $0xbc] sm:$0xf] %v537
                  %v539 = vld [vmem:[%s441 + $0x150] sm:$0xf]
                  %540 = vst [vmem:[%s442 + $0xc0] sm:$0xf] %v539
                  %v541 = vld [vmem:[%s441 + $0x154] sm:$0xf]
                  %542 = vst [vmem:[%s442 + $0xc4] sm:$0xf] %v541
                  %v543 = vld [vmem:[%s441 + $0x158] sm:$0xf]
                  %544 = vst [vmem:[%s442 + $0xc8] sm:$0xf] %v543
                  %v545 = vld [vmem:[%s441 + $0x15c] sm:$0xf]
                  %546 = vst [vmem:[%s442 + $0xcc] sm:$0xf] %v545
                  %v547 = vld [vmem:[%s441 + $0x160] sm:$0xf]
                  %548 = vst [vmem:[%s442 + $0xd0] sm:$0xf] %v547
                  %v549 = vld [vmem:[%s441 + $0x164] sm:$0xf]
                  %550 = vst [vmem:[%s442 + $0xd4] sm:$0xf] %v549
                  %v551 = vld [vmem:[%s441 + $0x168] sm:$0xf]
                  %552 = vst [vmem:[%s442 + $0xd8] sm:$0xf] %v551
                  %v553 = vld [vmem:[%s441 + $0x16c] sm:$0xf]
                  %554 = vst [vmem:[%s442 + $0xdc] sm:$0xf] %v553
                  %v555 = vld [vmem:[%s441 + $0x170] sm:$0xf]
                  %556 = vst [vmem:[%s442 + $0xe0] sm:$0xf] %v555
                  %v557 = vld [vmem:[%s441 + $0x174] sm:$0xf]
                  %558 = vst [vmem:[%s442 + $0xe4] sm:$0xf] %v557
                  %v559 = vld [vmem:[%s441 + $0x178] sm:$0xf]
                  %560 = vst [vmem:[%s442 + $0xe8] sm:$0xf] %v559
                  %v561 = vld [vmem:[%s441 + $0x17c] sm:$0xf]
                  %562 = vst [vmem:[%s442 + $0xec] sm:$0xf] %v561
                  %v563 = vld [vmem:[%s441 + $0x180] sm:$0xf]
                  %564 = vst [vmem:[%s442 + $0xf0] sm:$0xf] %v563
                  %v565 = vld [vmem:[%s441 + $0x184] sm:$0xf]
                  %566 = vst [vmem:[%s442 + $0xf4] sm:$0xf] %v565
                  %v567 = vld [vmem:[%s441 + $0x188] sm:$0xf]
                  %568 = vst [vmem:[%s442 + $0xf8] sm:$0xf] %v567
                  %v569 = vld [vmem:[%s441 + $0x18c] sm:$0xf]
                  %570 = vst [vmem:[%s442 + $0xfc] sm:$0xf] %v569
                  %v571 = vld [vmem:[%s441 + $0x190] sm:$0xf]
                  %572 = vst [vmem:[%s442 + $0x100] sm:$0xf] %v571
                  %v573 = vld [vmem:[%s441 + $0x194] sm:$0xf]
                  %574 = vst [vmem:[%s442 + $0x104] sm:$0xf] %v573
                  %v575 = vld [vmem:[%s441 + $0x198] sm:$0xf]
                  %576 = vst [vmem:[%s442 + $0x108] sm:$0xf] %v575
                  %v577 = vld [vmem:[%s441 + $0x19c] sm:$0xf]
                  %578 = vst [vmem:[%s442 + $0x10c] sm:$0xf] %v577
                  %v579 = vld [vmem:[%s441 + $0x1a0] sm:$0xf]
                  %580 = vst [vmem:[%s442 + $0x110] sm:$0xf] %v579
                  %v581 = vld [vmem:[%s441 + $0x1a4] sm:$0xf]
                  %582 = vst [vmem:[%s442 + $0x114] sm:$0xf] %v581
                  %v583 = vld [vmem:[%s441 + $0x1a8] sm:$0xf]
                  %584 = vst [vmem:[%s442 + $0x118] sm:$0xf] %v583
                  %v585 = vld [vmem:[%s441 + $0x1ac] sm:$0xf]
                  %586 = vst [vmem:[%s442 + $0x11c] sm:$0xf] %v585
                  %v587 = vld [vmem:[%s441 + $0x240] sm:$0xf]
                  %588 = vst [vmem:[%s442 + $0x120] sm:$0xf] %v587
                  %v589 = vld [vmem:[%s441 + $0x244] sm:$0xf]
                  %590 = vst [vmem:[%s442 + $0x124] sm:$0xf] %v589
                  %v591 = vld [vmem:[%s441 + $0x248] sm:$0xf]
                  %592 = vst [vmem:[%s442 + $0x128] sm:$0xf] %v591
                  %v593 = vld [vmem:[%s441 + $0x24c] sm:$0xf]
                  %594 = vst [vmem:[%s442 + $0x12c] sm:$0xf] %v593
                  %v595 = vld [vmem:[%s441 + $0x250] sm:$0xf]
                  %596 = vst [vmem:[%s442 + $0x130] sm:$0xf] %v595
                  %v597 = vld [vmem:[%s441 + $0x254] sm:$0xf]
                  %598 = vst [vmem:[%s442 + $0x134] sm:$0xf] %v597
                  %v599 = vld [vmem:[%s441 + $0x258] sm:$0xf]
                  %600 = vst [vmem:[%s442 + $0x138] sm:$0xf] %v599
                  %v601 = vld [vmem:[%s441 + $0x25c] sm:$0xf]
                  %602 = vst [vmem:[%s442 + $0x13c] sm:$0xf] %v601
                  %v603 = vld [vmem:[%s441 + $0x260] sm:$0xf]
                  %604 = vst [vmem:[%s442 + $0x140] sm:$0xf] %v603
                  %v605 = vld [vmem:[%s441 + $0x264] sm:$0xf]
                  %606 = vst [vmem:[%s442 + $0x144] sm:$0xf] %v605
                  %v607 = vld [vmem:[%s441 + $0x268] sm:$0xf]
                  %608 = vst [vmem:[%s442 + $0x148] sm:$0xf] %v607
                  %v609 = vld [vmem:[%s441 + $0x26c] sm:$0xf]
                  %610 = vst [vmem:[%s442 + $0x14c] sm:$0xf] %v609
                  %v611 = vld [vmem:[%s441 + $0x270] sm:$0xf]
                  %612 = vst [vmem:[%s442 + $0x150] sm:$0xf] %v611
                  %v613 = vld [vmem:[%s441 + $0x274] sm:$0xf]
                  %614 = vst [vmem:[%s442 + $0x154] sm:$0xf] %v613
                  %v615 = vld [vmem:[%s441 + $0x278] sm:$0xf]
                  %616 = vst [vmem:[%s442 + $0x158] sm:$0xf] %v615
                  %v617 = vld [vmem:[%s441 + $0x27c] sm:$0xf]
                  %618 = vst [vmem:[%s442 + $0x15c] sm:$0xf] %v617
                  %v619 = vld [vmem:[%s441 + $0x280] sm:$0xf]
                  %620 = vst [vmem:[%s442 + $0x160] sm:$0xf] %v619
                  %v621 = vld [vmem:[%s441 + $0x284] sm:$0xf]
                  %622 = vst [vmem:[%s442 + $0x164] sm:$0xf] %v621
                  %v623 = vld [vmem:[%s441 + $0x288] sm:$0xf]
                  %624 = vst [vmem:[%s442 + $0x168] sm:$0xf] %v623
                  %v625 = vld [vmem:[%s441 + $0x28c] sm:$0xf]
                  %626 = vst [vmem:[%s442 + $0x16c] sm:$0xf] %v625
                  %v627 = vld [vmem:[%s441 + $0x290] sm:$0xf]
                  %628 = vst [vmem:[%s442 + $0x170] sm:$0xf] %v627
                  %v629 = vld [vmem:[%s441 + $0x294] sm:$0xf]
                  %630 = vst [vmem:[%s442 + $0x174] sm:$0xf] %v629
                  %v631 = vld [vmem:[%s441 + $0x298] sm:$0xf]
                  %632 = vst [vmem:[%s442 + $0x178] sm:$0xf] %v631
                  %v633 = vld [vmem:[%s441 + $0x29c] sm:$0xf]
                  %634 = vst [vmem:[%s442 + $0x17c] sm:$0xf] %v633
                  %v635 = vld [vmem:[%s441 + $0x2a0] sm:$0xf]
                  %636 = vst [vmem:[%s442 + $0x180] sm:$0xf] %v635
                  %v637 = vld [vmem:[%s441 + $0x2a4] sm:$0xf]
                  %638 = vst [vmem:[%s442 + $0x184] sm:$0xf] %v637
                  %v639 = vld [vmem:[%s441 + $0x2a8] sm:$0xf]
                  %640 = vst [vmem:[%s442 + $0x188] sm:$0xf] %v639
                  %v641 = vld [vmem:[%s441 + $0x2ac] sm:$0xf]
                  %642 = vst [vmem:[%s442 + $0x18c] sm:$0xf] %v641
                  %v643 = vld [vmem:[%s441 + $0x2b0] sm:$0xf]
                  %644 = vst [vmem:[%s442 + $0x190] sm:$0xf] %v643
                  %v645 = vld [vmem:[%s441 + $0x2b4] sm:$0xf]
                  %646 = vst [vmem:[%s442 + $0x194] sm:$0xf] %v645
                  %v647 = vld [vmem:[%s441 + $0x2b8] sm:$0xf]
                  %648 = vst [vmem:[%s442 + $0x198] sm:$0xf] %v647
                  %v649 = vld [vmem:[%s441 + $0x2bc] sm:$0xf]
                  %650 = vst [vmem:[%s442 + $0x19c] sm:$0xf] %v649
                  %v651 = vld [vmem:[%s441 + $0x2c0] sm:$0xf]
                  %652 = vst [vmem:[%s442 + $0x1a0] sm:$0xf] %v651
                  %v653 = vld [vmem:[%s441 + $0x2c4] sm:$0xf]
                  %654 = vst [vmem:[%s442 + $0x1a4] sm:$0xf] %v653
                  %v655 = vld [vmem:[%s441 + $0x2c8] sm:$0xf]
                  %656 = vst [vmem:[%s442 + $0x1a8] sm:$0xf] %v655
                  %v657 = vld [vmem:[%s441 + $0x2cc] sm:$0xf]
                  %658 = vst [vmem:[%s442 + $0x1ac] sm:$0xf] %v657
                $region67: #{decoder_forward.3} parent=54 // loop_footer
                  %s440 = sadd.s32 1, %s436
                $region68: #{decoder_forward.3} parent=54 // loop_footer_branch
                  %435 = sbr.rel target = $region64
                $region69: #{decoder_forward.3} parent=54 // loop_exit
                  _
              $region55: #{decoder_forward.3} parent=39 // pred_fallthru
                _
            $region40: #{decoder_forward.3} parent=35 // pred_fallthru
              _
            // Predicated region
            $region41: #{decoder_forward.3} parent=35 // pred_check
              _
            $region42: #{decoder_forward.3} parent=35 // pred_check_branch
              %198 = sbr.rel (0) target = $region44
            $region43: #{decoder_forward.3} parent=35 // pred_region
              loop: start=0, step=1, limit=1
              $region45: #{decoder_forward.3} parent=43 // loop_pre_header
                _
              $region46: #{decoder_forward.3} parent=43 // loop_header
                %s201 = sphi 0, %s205
                %p202 = scmp.ge.s32.totalorder %s201, 1
                %s206 = sphi %s192, %s192
                %s207 = sphi %s189, %s189
              $region47: #{decoder_forward.3} parent=43 // loop_header_branch
                %204 = sbr.rel (%p202) target = $region51
              $region48: #{decoder_forward.3} parent=43 // loop_body
                %v208 = vld [vmem:[%s206] sm:$0xf]
                %209 = vst [vmem:[%s207] sm:$0xf] %v208
                %v210 = vld [vmem:[%s206 + $0x4] sm:$0xf]
                %211 = vst [vmem:[%s207 + $0x4] sm:$0xf] %v210
                %v212 = vld [vmem:[%s206 + $0x8] sm:$0xf]
                %213 = vst [vmem:[%s207 + $0x8] sm:$0xf] %v212
                %v214 = vld [vmem:[%s206 + $0xc] sm:$0xf]
                %215 = vst [vmem:[%s207 + $0xc] sm:$0xf] %v214
                %v216 = vld [vmem:[%s206 + $0x10] sm:$0xf]
                %217 = vst [vmem:[%s207 + $0x10] sm:$0xf] %v216
                %v218 = vld [vmem:[%s206 + $0x14] sm:$0xf]
                %219 = vst [vmem:[%s207 + $0x14] sm:$0xf] %v218
                %v220 = vld [vmem:[%s206 + $0x18] sm:$0xf]
                %221 = vst [vmem:[%s207 + $0x18] sm:$0xf] %v220
                %v222 = vld [vmem:[%s206 + $0x1c] sm:$0xf]
                %223 = vst [vmem:[%s207 + $0x1c] sm:$0xf] %v222
                %v224 = vld [vmem:[%s206 + $0x20] sm:$0xf]
                %225 = vst [vmem:[%s207 + $0x20] sm:$0xf] %v224
                %v226 = vld [vmem:[%s206 + $0x24] sm:$0xf]
                %227 = vst [vmem:[%s207 + $0x24] sm:$0xf] %v226
                %v228 = vld [vmem:[%s206 + $0x28] sm:$0xf]
                %229 = vst [vmem:[%s207 + $0x28] sm:$0xf] %v228
                %v230 = vld [vmem:[%s206 + $0x2c] sm:$0xf]
                %231 = vst [vmem:[%s207 + $0x2c] sm:$0xf] %v230
                %v232 = vld [vmem:[%s206 + $0x30] sm:$0xf]
                %233 = vst [vmem:[%s207 + $0x30] sm:$0xf] %v232
                %v234 = vld [vmem:[%s206 + $0x34] sm:$0xf]
                %235 = vst [vmem:[%s207 + $0x34] sm:$0xf] %v234
                %v236 = vld [vmem:[%s206 + $0x38] sm:$0xf]
                %237 = vst [vmem:[%s207 + $0x38] sm:$0xf] %v236
                %v238 = vld [vmem:[%s206 + $0x3c] sm:$0xf]
                %239 = vst [vmem:[%s207 + $0x3c] sm:$0xf] %v238
                %v240 = vld [vmem:[%s206 + $0x40] sm:$0xf]
                %241 = vst [vmem:[%s207 + $0x40] sm:$0xf] %v240
                %v242 = vld [vmem:[%s206 + $0x44] sm:$0xf]
                %243 = vst [vmem:[%s207 + $0x44] sm:$0xf] %v242
                %v244 = vld [vmem:[%s206 + $0x48] sm:$0xf]
                %245 = vst [vmem:[%s207 + $0x48] sm:$0xf] %v244
                %v246 = vld [vmem:[%s206 + $0x4c] sm:$0xf]
                %247 = vst [vmem:[%s207 + $0x4c] sm:$0xf] %v246
                %v248 = vld [vmem:[%s206 + $0x50] sm:$0xf]
                %249 = vst [vmem:[%s207 + $0x50] sm:$0xf] %v248
                %v250 = vld [vmem:[%s206 + $0x54] sm:$0xf]
                %251 = vst [vmem:[%s207 + $0x54] sm:$0xf] %v250
                %v252 = vld [vmem:[%s206 + $0x58] sm:$0xf]
                %253 = vst [vmem:[%s207 + $0x58] sm:$0xf] %v252
                %v254 = vld [vmem:[%s206 + $0x5c] sm:$0xf]
                %255 = vst [vmem:[%s207 + $0x5c] sm:$0xf] %v254
                %v256 = vld [vmem:[%s206 + $0x60] sm:$0xf]
                %257 = vst [vmem:[%s207 + $0x60] sm:$0xf] %v256
                %v258 = vld [vmem:[%s206 + $0x64] sm:$0xf]
                %259 = vst [vmem:[%s207 + $0x64] sm:$0xf] %v258
                %v260 = vld [vmem:[%s206 + $0x68] sm:$0xf]
                %261 = vst [vmem:[%s207 + $0x68] sm:$0xf] %v260
                %v262 = vld [vmem:[%s206 + $0x6c] sm:$0xf]
                %263 = vst [vmem:[%s207 + $0x6c] sm:$0xf] %v262
                %v264 = vld [vmem:[%s206 + $0x70] sm:$0xf]
                %265 = vst [vmem:[%s207 + $0x70] sm:$0xf] %v264
                %v266 = vld [vmem:[%s206 + $0x74] sm:$0xf]
                %267 = vst [vmem:[%s207 + $0x74] sm:$0xf] %v266
                %v268 = vld [vmem:[%s206 + $0x78] sm:$0xf]
                %269 = vst [vmem:[%s207 + $0x78] sm:$0xf] %v268
                %v270 = vld [vmem:[%s206 + $0x7c] sm:$0xf]
                %271 = vst [vmem:[%s207 + $0x7c] sm:$0xf] %v270
                %v272 = vld [vmem:[%s206 + $0x80] sm:$0xf]
                %273 = vst [vmem:[%s207 + $0x80] sm:$0xf] %v272
                %v274 = vld [vmem:[%s206 + $0x84] sm:$0xf]
                %275 = vst [vmem:[%s207 + $0x84] sm:$0xf] %v274
                %v276 = vld [vmem:[%s206 + $0x88] sm:$0xf]
                %277 = vst [vmem:[%s207 + $0x88] sm:$0xf] %v276
                %v278 = vld [vmem:[%s206 + $0x8c] sm:$0xf]
                %279 = vst [vmem:[%s207 + $0x8c] sm:$0xf] %v278
                %v280 = vld [vmem:[%s206 + $0x120] sm:$0xf]
                %281 = vst [vmem:[%s207 + $0x90] sm:$0xf] %v280
                %v282 = vld [vmem:[%s206 + $0x124] sm:$0xf]
                %283 = vst [vmem:[%s207 + $0x94] sm:$0xf] %v282
                %v284 = vld [vmem:[%s206 + $0x128] sm:$0xf]
                %285 = vst [vmem:[%s207 + $0x98] sm:$0xf] %v284
                %v286 = vld [vmem:[%s206 + $0x12c] sm:$0xf]
                %287 = vst [vmem:[%s207 + $0x9c] sm:$0xf] %v286
                %v288 = vld [vmem:[%s206 + $0x130] sm:$0xf]
                %289 = vst [vmem:[%s207 + $0xa0] sm:$0xf] %v288
                %v290 = vld [vmem:[%s206 + $0x134] sm:$0xf]
                %291 = vst [vmem:[%s207 + $0xa4] sm:$0xf] %v290
                %v292 = vld [vmem:[%s206 + $0x138] sm:$0xf]
                %293 = vst [vmem:[%s207 + $0xa8] sm:$0xf] %v292
                %v294 = vld [vmem:[%s206 + $0x13c] sm:$0xf]
                %295 = vst [vmem:[%s207 + $0xac] sm:$0xf] %v294
                %v296 = vld [vmem:[%s206 + $0x140] sm:$0xf]
                %297 = vst [vmem:[%s207 + $0xb0] sm:$0xf] %v296
                %v298 = vld [vmem:[%s206 + $0x144] sm:$0xf]
                %299 = vst [vmem:[%s207 + $0xb4] sm:$0xf] %v298
                %v300 = vld [vmem:[%s206 + $0x148] sm:$0xf]
                %301 = vst [vmem:[%s207 + $0xb8] sm:$0xf] %v300
                %v302 = vld [vmem:[%s206 + $0x14c] sm:$0xf]
                %303 = vst [vmem:[%s207 + $0xbc] sm:$0xf] %v302
                %v304 = vld [vmem:[%s206 + $0x150] sm:$0xf]
                %305 = vst [vmem:[%s207 + $0xc0] sm:$0xf] %v304
                %v306 = vld [vmem:[%s206 + $0x154] sm:$0xf]
                %307 = vst [vmem:[%s207 + $0xc4] sm:$0xf] %v306
                %v308 = vld [vmem:[%s206 + $0x158] sm:$0xf]
                %309 = vst [vmem:[%s207 + $0xc8] sm:$0xf] %v308
                %v310 = vld [vmem:[%s206 + $0x15c] sm:$0xf]
                %311 = vst [vmem:[%s207 + $0xcc] sm:$0xf] %v310
                %v312 = vld [vmem:[%s206 + $0x160] sm:$0xf]
                %313 = vst [vmem:[%s207 + $0xd0] sm:$0xf] %v312
                %v314 = vld [vmem:[%s206 + $0x164] sm:$0xf]
                %315 = vst [vmem:[%s207 + $0xd4] sm:$0xf] %v314
                %v316 = vld [vmem:[%s206 + $0x168] sm:$0xf]
                %317 = vst [vmem:[%s207 + $0xd8] sm:$0xf] %v316
                %v318 = vld [vmem:[%s206 + $0x16c] sm:$0xf]
                %319 = vst [vmem:[%s207 + $0xdc] sm:$0xf] %v318
                %v320 = vld [vmem:[%s206 + $0x170] sm:$0xf]
                %321 = vst [vmem:[%s207 + $0xe0] sm:$0xf] %v320
                %v322 = vld [vmem:[%s206 + $0x174] sm:$0xf]
                %323 = vst [vmem:[%s207 + $0xe4] sm:$0xf] %v322
                %v324 = vld [vmem:[%s206 + $0x178] sm:$0xf]
                %325 = vst [vmem:[%s207 + $0xe8] sm:$0xf] %v324
                %v326 = vld [vmem:[%s206 + $0x17c] sm:$0xf]
                %327 = vst [vmem:[%s207 + $0xec] sm:$0xf] %v326
                %v328 = vld [vmem:[%s206 + $0x180] sm:$0xf]
                %329 = vst [vmem:[%s207 + $0xf0] sm:$0xf] %v328
                %v330 = vld [vmem:[%s206 + $0x184] sm:$0xf]
                %331 = vst [vmem:[%s207 + $0xf4] sm:$0xf] %v330
                %v332 = vld [vmem:[%s206 + $0x188] sm:$0xf]
                %333 = vst [vmem:[%s207 + $0xf8] sm:$0xf] %v332
                %v334 = vld [vmem:[%s206 + $0x18c] sm:$0xf]
                %335 = vst [vmem:[%s207 + $0xfc] sm:$0xf] %v334
                %v336 = vld [vmem:[%s206 + $0x190] sm:$0xf]
                %337 = vst [vmem:[%s207 + $0x100] sm:$0xf] %v336
                %v338 = vld [vmem:[%s206 + $0x194] sm:$0xf]
                %339 = vst [vmem:[%s207 + $0x104] sm:$0xf] %v338
                %v340 = vld [vmem:[%s206 + $0x198] sm:$0xf]
                %341 = vst [vmem:[%s207 + $0x108] sm:$0xf] %v340
                %v342 = vld [vmem:[%s206 + $0x19c] sm:$0xf]
                %343 = vst [vmem:[%s207 + $0x10c] sm:$0xf] %v342
                %v344 = vld [vmem:[%s206 + $0x1a0] sm:$0xf]
                %345 = vst [vmem:[%s207 + $0x110] sm:$0xf] %v344
                %v346 = vld [vmem:[%s206 + $0x1a4] sm:$0xf]
                %347 = vst [vmem:[%s207 + $0x114] sm:$0xf] %v346
                %v348 = vld [vmem:[%s206 + $0x1a8] sm:$0xf]
                %349 = vst [vmem:[%s207 + $0x118] sm:$0xf] %v348
                %v350 = vld [vmem:[%s206 + $0x1ac] sm:$0xf]
                %351 = vst [vmem:[%s207 + $0x11c] sm:$0xf] %v350
                %v352 = vld [vmem:[%s206 + $0x240] sm:$0xf]
                %353 = vst [vmem:[%s207 + $0x120] sm:$0xf] %v352
                %v354 = vld [vmem:[%s206 + $0x244] sm:$0xf]
                %355 = vst [vmem:[%s207 + $0x124] sm:$0xf] %v354
                %v356 = vld [vmem:[%s206 + $0x248] sm:$0xf]
                %357 = vst [vmem:[%s207 + $0x128] sm:$0xf] %v356
                %v358 = vld [vmem:[%s206 + $0x24c] sm:$0xf]
                %359 = vst [vmem:[%s207 + $0x12c] sm:$0xf] %v358
                %v360 = vld [vmem:[%s206 + $0x250] sm:$0xf]
                %361 = vst [vmem:[%s207 + $0x130] sm:$0xf] %v360
                %v362 = vld [vmem:[%s206 + $0x254] sm:$0xf]
                %363 = vst [vmem:[%s207 + $0x134] sm:$0xf] %v362
                %v364 = vld [vmem:[%s206 + $0x258] sm:$0xf]
                %365 = vst [vmem:[%s207 + $0x138] sm:$0xf] %v364
                %v366 = vld [vmem:[%s206 + $0x25c] sm:$0xf]
                %367 = vst [vmem:[%s207 + $0x13c] sm:$0xf] %v366
                %v368 = vld [vmem:[%s206 + $0x260] sm:$0xf]
                %369 = vst [vmem:[%s207 + $0x140] sm:$0xf] %v368
                %v370 = vld [vmem:[%s206 + $0x264] sm:$0xf]
                %371 = vst [vmem:[%s207 + $0x144] sm:$0xf] %v370
                %v372 = vld [vmem:[%s206 + $0x268] sm:$0xf]
                %373 = vst [vmem:[%s207 + $0x148] sm:$0xf] %v372
                %v374 = vld [vmem:[%s206 + $0x26c] sm:$0xf]
                %375 = vst [vmem:[%s207 + $0x14c] sm:$0xf] %v374
                %v376 = vld [vmem:[%s206 + $0x270] sm:$0xf]
                %377 = vst [vmem:[%s207 + $0x150] sm:$0xf] %v376
                %v378 = vld [vmem:[%s206 + $0x274] sm:$0xf]
                %379 = vst [vmem:[%s207 + $0x154] sm:$0xf] %v378
                %v380 = vld [vmem:[%s206 + $0x278] sm:$0xf]
                %381 = vst [vmem:[%s207 + $0x158] sm:$0xf] %v380
                %v382 = vld [vmem:[%s206 + $0x27c] sm:$0xf]
                %383 = vst [vmem:[%s207 + $0x15c] sm:$0xf] %v382
                %v384 = vld [vmem:[%s206 + $0x280] sm:$0xf]
                %385 = vst [vmem:[%s207 + $0x160] sm:$0xf] %v384
                %v386 = vld [vmem:[%s206 + $0x284] sm:$0xf]
                %387 = vst [vmem:[%s207 + $0x164] sm:$0xf] %v386
                %v388 = vld [vmem:[%s206 + $0x288] sm:$0xf]
                %389 = vst [vmem:[%s207 + $0x168] sm:$0xf] %v388
                %v390 = vld [vmem:[%s206 + $0x28c] sm:$0xf]
                %391 = vst [vmem:[%s207 + $0x16c] sm:$0xf] %v390
                %v392 = vld [vmem:[%s206 + $0x290] sm:$0xf]
                %393 = vst [vmem:[%s207 + $0x170] sm:$0xf] %v392
                %v394 = vld [vmem:[%s206 + $0x294] sm:$0xf]
                %395 = vst [vmem:[%s207 + $0x174] sm:$0xf] %v394
                %v396 = vld [vmem:[%s206 + $0x298] sm:$0xf]
                %397 = vst [vmem:[%s207 + $0x178] sm:$0xf] %v396
                %v398 = vld [vmem:[%s206 + $0x29c] sm:$0xf]
                %399 = vst [vmem:[%s207 + $0x17c] sm:$0xf] %v398
                %v400 = vld [vmem:[%s206 + $0x2a0] sm:$0xf]
                %401 = vst [vmem:[%s207 + $0x180] sm:$0xf] %v400
                %v402 = vld [vmem:[%s206 + $0x2a4] sm:$0xf]
                %403 = vst [vmem:[%s207 + $0x184] sm:$0xf] %v402
                %v404 = vld [vmem:[%s206 + $0x2a8] sm:$0xf]
                %405 = vst [vmem:[%s207 + $0x188] sm:$0xf] %v404
                %v406 = vld [vmem:[%s206 + $0x2ac] sm:$0xf]
                %407 = vst [vmem:[%s207 + $0x18c] sm:$0xf] %v406
                %v408 = vld [vmem:[%s206 + $0x2b0] sm:$0xf]
                %409 = vst [vmem:[%s207 + $0x190] sm:$0xf] %v408
                %v410 = vld [vmem:[%s206 + $0x2b4] sm:$0xf]
                %411 = vst [vmem:[%s207 + $0x194] sm:$0xf] %v410
                %v412 = vld [vmem:[%s206 + $0x2b8] sm:$0xf]
                %413 = vst [vmem:[%s207 + $0x198] sm:$0xf] %v412
                %v414 = vld [vmem:[%s206 + $0x2bc] sm:$0xf]
                %415 = vst [vmem:[%s207 + $0x19c] sm:$0xf] %v414
                %v416 = vld [vmem:[%s206 + $0x2c0] sm:$0xf]
                %417 = vst [vmem:[%s207 + $0x1a0] sm:$0xf] %v416
                %v418 = vld [vmem:[%s206 + $0x2c4] sm:$0xf]
                %419 = vst [vmem:[%s207 + $0x1a4] sm:$0xf] %v418
                %v420 = vld [vmem:[%s206 + $0x2c8] sm:$0xf]
                %421 = vst [vmem:[%s207 + $0x1a8] sm:$0xf] %v420
                %v422 = vld [vmem:[%s206 + $0x2cc] sm:$0xf]
                %423 = vst [vmem:[%s207 + $0x1ac] sm:$0xf] %v422
              $region49: #{decoder_forward.3} parent=43 // loop_footer
                %s205 = sadd.s32 1, %s201
              $region50: #{decoder_forward.3} parent=43 // loop_footer_branch
                %200 = sbr.rel target = $region46
              $region51: #{decoder_forward.3} parent=43 // loop_exit
                _
            $region44: #{decoder_forward.3} parent=35 // pred_fallthru
              _
          $region36: #{decoder_forward.3} parent=31 // pred_fallthru
            _
          %659 = vnop
        $region32: #{decoder_forward.3} parent=27 // pred_fallthru
          _
        // Predicated region
        $region70: #{decoder_forward.3} parent=27 // pred_check
          %p660 = pneg %p81
        $region71: #{decoder_forward.3} parent=27 // pred_check_branch
          %662 = sbr.rel (%p660) target = $region73
        $region72: #{decoder_forward.3} parent=27 // pred_region
          %s663 = sand.u32 %s71, 1
          %s664 = sand.u32 %s71, 1
          %s665 = smul.addr %s664, 432
          %s666 = scalar_lea.vmem [#allocation3], %s665
          %s667 = smul.addr %s14, 36
          %s668 = smul.addr %s667, 4
          %s669 = scalar_lea.vmem %s2, %s668
          // Predicated region
          $region74: #{decoder_forward.3} parent=72 // pred_check
            _
          $region75: #{decoder_forward.3} parent=72 // pred_check_branch
            %671 = sbr.rel (0) target = $region77
          $region76: #{decoder_forward.3} parent=72 // pred_region
            // Predicated region
            $region78: #{decoder_forward.3} parent=76 // pred_check
              _
            $region79: #{decoder_forward.3} parent=76 // pred_check_branch
              %673 = sbr.rel target = $region81
            $region80: #{decoder_forward.3} parent=76 // pred_region
              // Predicated region
              $region93: #{decoder_forward.3} parent=80 // pred_check
                _
              $region94: #{decoder_forward.3} parent=80 // pred_check_branch
                %902 = sbr.rel (0) target = $region96
              $region95: #{decoder_forward.3} parent=80 // pred_region
                loop: start=0, step=1, limit=1
                $region97: #{decoder_forward.3} parent=95 // loop_pre_header
                  _
                $region98: #{decoder_forward.3} parent=95 // loop_header
                  %s904 = sphi 0, %s908
                  %p905 = scmp.ge.s32.totalorder %s904, 1
                  %s909 = sphi %s669, %s669
                  %s910 = sphi %s666, %s666
                $region99: #{decoder_forward.3} parent=95 // loop_header_branch
                  %907 = sbr.rel (%p905) target = $region103
                $region100: #{decoder_forward.3} parent=95 // loop_body
                  _
                $region101: #{decoder_forward.3} parent=95 // loop_footer
                  %s908 = sadd.s32 1, %s904
                $region102: #{decoder_forward.3} parent=95 // loop_footer_branch
                  %903 = sbr.rel target = $region98
                $region103: #{decoder_forward.3} parent=95 // loop_exit
                  _
                loop: start=0, step=1, limit=1
                $region104: #{decoder_forward.3} parent=95 // loop_pre_header
                  _
                $region105: #{decoder_forward.3} parent=95 // loop_header
                  %s913 = sphi 0, %s917
                  %p914 = scmp.ge.s32.totalorder %s913, 1
                  %s918 = sphi %s669, %s669
                  %s919 = sphi %s666, %s666
                $region106: #{decoder_forward.3} parent=95 // loop_header_branch
                  %916 = sbr.rel (%p914) target = $region110
                $region107: #{decoder_forward.3} parent=95 // loop_body
                  %v920 = vld [vmem:[%s918] sm:$0xf]
                  %921 = vst [vmem:[%s919] sm:$0xf] %v920
                  %v922 = vld [vmem:[%s918 + $0x4] sm:$0xf]
                  %923 = vst [vmem:[%s919 + $0x4] sm:$0xf] %v922
                  %v924 = vld [vmem:[%s918 + $0x8] sm:$0xf]
                  %925 = vst [vmem:[%s919 + $0x8] sm:$0xf] %v924
                  %v926 = vld [vmem:[%s918 + $0xc] sm:$0xf]
                  %927 = vst [vmem:[%s919 + $0xc] sm:$0xf] %v926
                  %v928 = vld [vmem:[%s918 + $0x10] sm:$0xf]
                  %929 = vst [vmem:[%s919 + $0x10] sm:$0xf] %v928
                  %v930 = vld [vmem:[%s918 + $0x14] sm:$0xf]
                  %931 = vst [vmem:[%s919 + $0x14] sm:$0xf] %v930
                  %v932 = vld [vmem:[%s918 + $0x18] sm:$0xf]
                  %933 = vst [vmem:[%s919 + $0x18] sm:$0xf] %v932
                  %v934 = vld [vmem:[%s918 + $0x1c] sm:$0xf]
                  %935 = vst [vmem:[%s919 + $0x1c] sm:$0xf] %v934
                  %v936 = vld [vmem:[%s918 + $0x20] sm:$0xf]
                  %937 = vst [vmem:[%s919 + $0x20] sm:$0xf] %v936
                  %v938 = vld [vmem:[%s918 + $0x24] sm:$0xf]
                  %939 = vst [vmem:[%s919 + $0x24] sm:$0xf] %v938
                  %v940 = vld [vmem:[%s918 + $0x28] sm:$0xf]
                  %941 = vst [vmem:[%s919 + $0x28] sm:$0xf] %v940
                  %v942 = vld [vmem:[%s918 + $0x2c] sm:$0xf]
                  %943 = vst [vmem:[%s919 + $0x2c] sm:$0xf] %v942
                  %v944 = vld [vmem:[%s918 + $0x30] sm:$0xf]
                  %945 = vst [vmem:[%s919 + $0x30] sm:$0xf] %v944
                  %v946 = vld [vmem:[%s918 + $0x34] sm:$0xf]
                  %947 = vst [vmem:[%s919 + $0x34] sm:$0xf] %v946
                  %v948 = vld [vmem:[%s918 + $0x38] sm:$0xf]
                  %949 = vst [vmem:[%s919 + $0x38] sm:$0xf] %v948
                  %v950 = vld [vmem:[%s918 + $0x3c] sm:$0xf]
                  %951 = vst [vmem:[%s919 + $0x3c] sm:$0xf] %v950
                  %v952 = vld [vmem:[%s918 + $0x40] sm:$0xf]
                  %953 = vst [vmem:[%s919 + $0x40] sm:$0xf] %v952
                  %v954 = vld [vmem:[%s918 + $0x44] sm:$0xf]
                  %955 = vst [vmem:[%s919 + $0x44] sm:$0xf] %v954
                  %v956 = vld [vmem:[%s918 + $0x48] sm:$0xf]
                  %957 = vst [vmem:[%s919 + $0x48] sm:$0xf] %v956
                  %v958 = vld [vmem:[%s918 + $0x4c] sm:$0xf]
                  %959 = vst [vmem:[%s919 + $0x4c] sm:$0xf] %v958
                  %v960 = vld [vmem:[%s918 + $0x50] sm:$0xf]
                  %961 = vst [vmem:[%s919 + $0x50] sm:$0xf] %v960
                  %v962 = vld [vmem:[%s918 + $0x54] sm:$0xf]
                  %963 = vst [vmem:[%s919 + $0x54] sm:$0xf] %v962
                  %v964 = vld [vmem:[%s918 + $0x58] sm:$0xf]
                  %965 = vst [vmem:[%s919 + $0x58] sm:$0xf] %v964
                  %v966 = vld [vmem:[%s918 + $0x5c] sm:$0xf]
                  %967 = vst [vmem:[%s919 + $0x5c] sm:$0xf] %v966
                  %v968 = vld [vmem:[%s918 + $0x60] sm:$0xf]
                  %969 = vst [vmem:[%s919 + $0x60] sm:$0xf] %v968
                  %v970 = vld [vmem:[%s918 + $0x64] sm:$0xf]
                  %971 = vst [vmem:[%s919 + $0x64] sm:$0xf] %v970
                  %v972 = vld [vmem:[%s918 + $0x68] sm:$0xf]
                  %973 = vst [vmem:[%s919 + $0x68] sm:$0xf] %v972
                  %v974 = vld [vmem:[%s918 + $0x6c] sm:$0xf]
                  %975 = vst [vmem:[%s919 + $0x6c] sm:$0xf] %v974
                  %v976 = vld [vmem:[%s918 + $0x70] sm:$0xf]
                  %977 = vst [vmem:[%s919 + $0x70] sm:$0xf] %v976
                  %v978 = vld [vmem:[%s918 + $0x74] sm:$0xf]
                  %979 = vst [vmem:[%s919 + $0x74] sm:$0xf] %v978
                  %v980 = vld [vmem:[%s918 + $0x78] sm:$0xf]
                  %981 = vst [vmem:[%s919 + $0x78] sm:$0xf] %v980
                  %v982 = vld [vmem:[%s918 + $0x7c] sm:$0xf]
                  %983 = vst [vmem:[%s919 + $0x7c] sm:$0xf] %v982
                  %v984 = vld [vmem:[%s918 + $0x80] sm:$0xf]
                  %985 = vst [vmem:[%s919 + $0x80] sm:$0xf] %v984
                  %v986 = vld [vmem:[%s918 + $0x84] sm:$0xf]
                  %987 = vst [vmem:[%s919 + $0x84] sm:$0xf] %v986
                  %v988 = vld [vmem:[%s918 + $0x88] sm:$0xf]
                  %989 = vst [vmem:[%s919 + $0x88] sm:$0xf] %v988
                  %v990 = vld [vmem:[%s918 + $0x8c] sm:$0xf]
                  %991 = vst [vmem:[%s919 + $0x8c] sm:$0xf] %v990
                  %v992 = vld [vmem:[%s918 + $0x120] sm:$0xf]
                  %993 = vst [vmem:[%s919 + $0x90] sm:$0xf] %v992
                  %v994 = vld [vmem:[%s918 + $0x124] sm:$0xf]
                  %995 = vst [vmem:[%s919 + $0x94] sm:$0xf] %v994
                  %v996 = vld [vmem:[%s918 + $0x128] sm:$0xf]
                  %997 = vst [vmem:[%s919 + $0x98] sm:$0xf] %v996
                  %v998 = vld [vmem:[%s918 + $0x12c] sm:$0xf]
                  %999 = vst [vmem:[%s919 + $0x9c] sm:$0xf] %v998
                  %v1000 = vld [vmem:[%s918 + $0x130] sm:$0xf]
                  %1001 = vst [vmem:[%s919 + $0xa0] sm:$0xf] %v1000
                  %v1002 = vld [vmem:[%s918 + $0x134] sm:$0xf]
                  %1003 = vst [vmem:[%s919 + $0xa4] sm:$0xf] %v1002
                  %v1004 = vld [vmem:[%s918 + $0x138] sm:$0xf]
                  %1005 = vst [vmem:[%s919 + $0xa8] sm:$0xf] %v1004
                  %v1006 = vld [vmem:[%s918 + $0x13c] sm:$0xf]
                  %1007 = vst [vmem:[%s919 + $0xac] sm:$0xf] %v1006
                  %v1008 = vld [vmem:[%s918 + $0x140] sm:$0xf]
                  %1009 = vst [vmem:[%s919 + $0xb0] sm:$0xf] %v1008
                  %v1010 = vld [vmem:[%s918 + $0x144] sm:$0xf]
                  %1011 = vst [vmem:[%s919 + $0xb4] sm:$0xf] %v1010
                  %v1012 = vld [vmem:[%s918 + $0x148] sm:$0xf]
                  %1013 = vst [vmem:[%s919 + $0xb8] sm:$0xf] %v1012
                  %v1014 = vld [vmem:[%s918 + $0x14c] sm:$0xf]
                  %1015 = vst [vmem:[%s919 + $0xbc] sm:$0xf] %v1014
                  %v1016 = vld [vmem:[%s918 + $0x150] sm:$0xf]
                  %1017 = vst [vmem:[%s919 + $0xc0] sm:$0xf] %v1016
                  %v1018 = vld [vmem:[%s918 + $0x154] sm:$0xf]
                  %1019 = vst [vmem:[%s919 + $0xc4] sm:$0xf] %v1018
                  %v1020 = vld [vmem:[%s918 + $0x158] sm:$0xf]
                  %1021 = vst [vmem:[%s919 + $0xc8] sm:$0xf] %v1020
                  %v1022 = vld [vmem:[%s918 + $0x15c] sm:$0xf]
                  %1023 = vst [vmem:[%s919 + $0xcc] sm:$0xf] %v1022
                  %v1024 = vld [vmem:[%s918 + $0x160] sm:$0xf]
                  %1025 = vst [vmem:[%s919 + $0xd0] sm:$0xf] %v1024
                  %v1026 = vld [vmem:[%s918 + $0x164] sm:$0xf]
                  %1027 = vst [vmem:[%s919 + $0xd4] sm:$0xf] %v1026
                  %v1028 = vld [vmem:[%s918 + $0x168] sm:$0xf]
                  %1029 = vst [vmem:[%s919 + $0xd8] sm:$0xf] %v1028
                  %v1030 = vld [vmem:[%s918 + $0x16c] sm:$0xf]
                  %1031 = vst [vmem:[%s919 + $0xdc] sm:$0xf] %v1030
                  %v1032 = vld [vmem:[%s918 + $0x170] sm:$0xf]
                  %1033 = vst [vmem:[%s919 + $0xe0] sm:$0xf] %v1032
                  %v1034 = vld [vmem:[%s918 + $0x174] sm:$0xf]
                  %1035 = vst [vmem:[%s919 + $0xe4] sm:$0xf] %v1034
                  %v1036 = vld [vmem:[%s918 + $0x178] sm:$0xf]
                  %1037 = vst [vmem:[%s919 + $0xe8] sm:$0xf] %v1036
                  %v1038 = vld [vmem:[%s918 + $0x17c] sm:$0xf]
                  %1039 = vst [vmem:[%s919 + $0xec] sm:$0xf] %v1038
                  %v1040 = vld [vmem:[%s918 + $0x180] sm:$0xf]
                  %1041 = vst [vmem:[%s919 + $0xf0] sm:$0xf] %v1040
                  %v1042 = vld [vmem:[%s918 + $0x184] sm:$0xf]
                  %1043 = vst [vmem:[%s919 + $0xf4] sm:$0xf] %v1042
                  %v1044 = vld [vmem:[%s918 + $0x188] sm:$0xf]
                  %1045 = vst [vmem:[%s919 + $0xf8] sm:$0xf] %v1044
                  %v1046 = vld [vmem:[%s918 + $0x18c] sm:$0xf]
                  %1047 = vst [vmem:[%s919 + $0xfc] sm:$0xf] %v1046
                  %v1048 = vld [vmem:[%s918 + $0x190] sm:$0xf]
                  %1049 = vst [vmem:[%s919 + $0x100] sm:$0xf] %v1048
                  %v1050 = vld [vmem:[%s918 + $0x194] sm:$0xf]
                  %1051 = vst [vmem:[%s919 + $0x104] sm:$0xf] %v1050
                  %v1052 = vld [vmem:[%s918 + $0x198] sm:$0xf]
                  %1053 = vst [vmem:[%s919 + $0x108] sm:$0xf] %v1052
                  %v1054 = vld [vmem:[%s918 + $0x19c] sm:$0xf]
                  %1055 = vst [vmem:[%s919 + $0x10c] sm:$0xf] %v1054
                  %v1056 = vld [vmem:[%s918 + $0x1a0] sm:$0xf]
                  %1057 = vst [vmem:[%s919 + $0x110] sm:$0xf] %v1056
                  %v1058 = vld [vmem:[%s918 + $0x1a4] sm:$0xf]
                  %1059 = vst [vmem:[%s919 + $0x114] sm:$0xf] %v1058
                  %v1060 = vld [vmem:[%s918 + $0x1a8] sm:$0xf]
                  %1061 = vst [vmem:[%s919 + $0x118] sm:$0xf] %v1060
                  %v1062 = vld [vmem:[%s918 + $0x1ac] sm:$0xf]
                  %1063 = vst [vmem:[%s919 + $0x11c] sm:$0xf] %v1062
                  %v1064 = vld [vmem:[%s918 + $0x240] sm:$0xf]
                  %1065 = vst [vmem:[%s919 + $0x120] sm:$0xf] %v1064
                  %v1066 = vld [vmem:[%s918 + $0x244] sm:$0xf]
                  %1067 = vst [vmem:[%s919 + $0x124] sm:$0xf] %v1066
                  %v1068 = vld [vmem:[%s918 + $0x248] sm:$0xf]
                  %1069 = vst [vmem:[%s919 + $0x128] sm:$0xf] %v1068
                  %v1070 = vld [vmem:[%s918 + $0x24c] sm:$0xf]
                  %1071 = vst [vmem:[%s919 + $0x12c] sm:$0xf] %v1070
                  %v1072 = vld [vmem:[%s918 + $0x250] sm:$0xf]
                  %1073 = vst [vmem:[%s919 + $0x130] sm:$0xf] %v1072
                  %v1074 = vld [vmem:[%s918 + $0x254] sm:$0xf]
                  %1075 = vst [vmem:[%s919 + $0x134] sm:$0xf] %v1074
                  %v1076 = vld [vmem:[%s918 + $0x258] sm:$0xf]
                  %1077 = vst [vmem:[%s919 + $0x138] sm:$0xf] %v1076
                  %v1078 = vld [vmem:[%s918 + $0x25c] sm:$0xf]
                  %1079 = vst [vmem:[%s919 + $0x13c] sm:$0xf] %v1078
                  %v1080 = vld [vmem:[%s918 + $0x260] sm:$0xf]
                  %1081 = vst [vmem:[%s919 + $0x140] sm:$0xf] %v1080
                  %v1082 = vld [vmem:[%s918 + $0x264] sm:$0xf]
                  %1083 = vst [vmem:[%s919 + $0x144] sm:$0xf] %v1082
                  %v1084 = vld [vmem:[%s918 + $0x268] sm:$0xf]
                  %1085 = vst [vmem:[%s919 + $0x148] sm:$0xf] %v1084
                  %v1086 = vld [vmem:[%s918 + $0x26c] sm:$0xf]
                  %1087 = vst [vmem:[%s919 + $0x14c] sm:$0xf] %v1086
                  %v1088 = vld [vmem:[%s918 + $0x270] sm:$0xf]
                  %1089 = vst [vmem:[%s919 + $0x150] sm:$0xf] %v1088
                  %v1090 = vld [vmem:[%s918 + $0x274] sm:$0xf]
                  %1091 = vst [vmem:[%s919 + $0x154] sm:$0xf] %v1090
                  %v1092 = vld [vmem:[%s918 + $0x278] sm:$0xf]
                  %1093 = vst [vmem:[%s919 + $0x158] sm:$0xf] %v1092
                  %v1094 = vld [vmem:[%s918 + $0x27c] sm:$0xf]
                  %1095 = vst [vmem:[%s919 + $0x15c] sm:$0xf] %v1094
                  %v1096 = vld [vmem:[%s918 + $0x280] sm:$0xf]
                  %1097 = vst [vmem:[%s919 + $0x160] sm:$0xf] %v1096
                  %v1098 = vld [vmem:[%s918 + $0x284] sm:$0xf]
                  %1099 = vst [vmem:[%s919 + $0x164] sm:$0xf] %v1098
                  %v1100 = vld [vmem:[%s918 + $0x288] sm:$0xf]
                  %1101 = vst [vmem:[%s919 + $0x168] sm:$0xf] %v1100
                  %v1102 = vld [vmem:[%s918 + $0x28c] sm:$0xf]
                  %1103 = vst [vmem:[%s919 + $0x16c] sm:$0xf] %v1102
                  %v1104 = vld [vmem:[%s918 + $0x290] sm:$0xf]
                  %1105 = vst [vmem:[%s919 + $0x170] sm:$0xf] %v1104
                  %v1106 = vld [vmem:[%s918 + $0x294] sm:$0xf]
                  %1107 = vst [vmem:[%s919 + $0x174] sm:$0xf] %v1106
                  %v1108 = vld [vmem:[%s918 + $0x298] sm:$0xf]
                  %1109 = vst [vmem:[%s919 + $0x178] sm:$0xf] %v1108
                  %v1110 = vld [vmem:[%s918 + $0x29c] sm:$0xf]
                  %1111 = vst [vmem:[%s919 + $0x17c] sm:$0xf] %v1110
                  %v1112 = vld [vmem:[%s918 + $0x2a0] sm:$0xf]
                  %1113 = vst [vmem:[%s919 + $0x180] sm:$0xf] %v1112
                  %v1114 = vld [vmem:[%s918 + $0x2a4] sm:$0xf]
                  %1115 = vst [vmem:[%s919 + $0x184] sm:$0xf] %v1114
                  %v1116 = vld [vmem:[%s918 + $0x2a8] sm:$0xf]
                  %1117 = vst [vmem:[%s919 + $0x188] sm:$0xf] %v1116
                  %v1118 = vld [vmem:[%s918 + $0x2ac] sm:$0xf]
                  %1119 = vst [vmem:[%s919 + $0x18c] sm:$0xf] %v1118
                  %v1120 = vld [vmem:[%s918 + $0x2b0] sm:$0xf]
                  %1121 = vst [vmem:[%s919 + $0x190] sm:$0xf] %v1120
                  %v1122 = vld [vmem:[%s918 + $0x2b4] sm:$0xf]
                  %1123 = vst [vmem:[%s919 + $0x194] sm:$0xf] %v1122
                  %v1124 = vld [vmem:[%s918 + $0x2b8] sm:$0xf]
                  %1125 = vst [vmem:[%s919 + $0x198] sm:$0xf] %v1124
                  %v1126 = vld [vmem:[%s918 + $0x2bc] sm:$0xf]
                  %1127 = vst [vmem:[%s919 + $0x19c] sm:$0xf] %v1126
                  %v1128 = vld [vmem:[%s918 + $0x2c0] sm:$0xf]
                  %1129 = vst [vmem:[%s919 + $0x1a0] sm:$0xf] %v1128
                  %v1130 = vld [vmem:[%s918 + $0x2c4] sm:$0xf]
                  %1131 = vst [vmem:[%s919 + $0x1a4] sm:$0xf] %v1130
                  %v1132 = vld [vmem:[%s918 + $0x2c8] sm:$0xf]
                  %1133 = vst [vmem:[%s919 + $0x1a8] sm:$0xf] %v1132
                  %v1134 = vld [vmem:[%s918 + $0x2cc] sm:$0xf]
                  %1135 = vst [vmem:[%s919 + $0x1ac] sm:$0xf] %v1134
                $region108: #{decoder_forward.3} parent=95 // loop_footer
                  %s917 = sadd.s32 1, %s913
                $region109: #{decoder_forward.3} parent=95 // loop_footer_branch
                  %912 = sbr.rel target = $region105
                $region110: #{decoder_forward.3} parent=95 // loop_exit
                  _
              $region96: #{decoder_forward.3} parent=80 // pred_fallthru
                _
            $region81: #{decoder_forward.3} parent=76 // pred_fallthru
              _
            // Predicated region
            $region82: #{decoder_forward.3} parent=76 // pred_check
              _
            $region83: #{decoder_forward.3} parent=76 // pred_check_branch
              %675 = sbr.rel (0) target = $region85
            $region84: #{decoder_forward.3} parent=76 // pred_region
              loop: start=0, step=1, limit=1
              $region86: #{decoder_forward.3} parent=84 // loop_pre_header
                _
              $region87: #{decoder_forward.3} parent=84 // loop_header
                %s678 = sphi 0, %s682
                %p679 = scmp.ge.s32.totalorder %s678, 1
                %s683 = sphi %s669, %s669
                %s684 = sphi %s666, %s666
              $region88: #{decoder_forward.3} parent=84 // loop_header_branch
                %681 = sbr.rel (%p679) target = $region92
              $region89: #{decoder_forward.3} parent=84 // loop_body
                %v685 = vld [vmem:[%s683] sm:$0xf]
                %686 = vst [vmem:[%s684] sm:$0xf] %v685
                %v687 = vld [vmem:[%s683 + $0x4] sm:$0xf]
                %688 = vst [vmem:[%s684 + $0x4] sm:$0xf] %v687
                %v689 = vld [vmem:[%s683 + $0x8] sm:$0xf]
                %690 = vst [vmem:[%s684 + $0x8] sm:$0xf] %v689
                %v691 = vld [vmem:[%s683 + $0xc] sm:$0xf]
                %692 = vst [vmem:[%s684 + $0xc] sm:$0xf] %v691
                %v693 = vld [vmem:[%s683 + $0x10] sm:$0xf]
                %694 = vst [vmem:[%s684 + $0x10] sm:$0xf] %v693
                %v695 = vld [vmem:[%s683 + $0x14] sm:$0xf]
                %696 = vst [vmem:[%s684 + $0x14] sm:$0xf] %v695
                %v697 = vld [vmem:[%s683 + $0x18] sm:$0xf]
                %698 = vst [vmem:[%s684 + $0x18] sm:$0xf] %v697
                %v699 = vld [vmem:[%s683 + $0x1c] sm:$0xf]
                %700 = vst [vmem:[%s684 + $0x1c] sm:$0xf] %v699
                %v701 = vld [vmem:[%s683 + $0x20] sm:$0xf]
                %702 = vst [vmem:[%s684 + $0x20] sm:$0xf] %v701
                %v703 = vld [vmem:[%s683 + $0x24] sm:$0xf]
                %704 = vst [vmem:[%s684 + $0x24] sm:$0xf] %v703
                %v705 = vld [vmem:[%s683 + $0x28] sm:$0xf]
                %706 = vst [vmem:[%s684 + $0x28] sm:$0xf] %v705
                %v707 = vld [vmem:[%s683 + $0x2c] sm:$0xf]
                %708 = vst [vmem:[%s684 + $0x2c] sm:$0xf] %v707
                %v709 = vld [vmem:[%s683 + $0x30] sm:$0xf]
                %710 = vst [vmem:[%s684 + $0x30] sm:$0xf] %v709
                %v711 = vld [vmem:[%s683 + $0x34] sm:$0xf]
                %712 = vst [vmem:[%s684 + $0x34] sm:$0xf] %v711
                %v713 = vld [vmem:[%s683 + $0x38] sm:$0xf]
                %714 = vst [vmem:[%s684 + $0x38] sm:$0xf] %v713
                %v715 = vld [vmem:[%s683 + $0x3c] sm:$0xf]
                %716 = vst [vmem:[%s684 + $0x3c] sm:$0xf] %v715
                %v717 = vld [vmem:[%s683 + $0x40] sm:$0xf]
                %718 = vst [vmem:[%s684 + $0x40] sm:$0xf] %v717
                %v719 = vld [vmem:[%s683 + $0x44] sm:$0xf]
                %720 = vst [vmem:[%s684 + $0x44] sm:$0xf] %v719
                %v721 = vld [vmem:[%s683 + $0x48] sm:$0xf]
                %722 = vst [vmem:[%s684 + $0x48] sm:$0xf] %v721
                %v723 = vld [vmem:[%s683 + $0x4c] sm:$0xf]
                %724 = vst [vmem:[%s684 + $0x4c] sm:$0xf] %v723
                %v725 = vld [vmem:[%s683 + $0x50] sm:$0xf]
                %726 = vst [vmem:[%s684 + $0x50] sm:$0xf] %v725
                %v727 = vld [vmem:[%s683 + $0x54] sm:$0xf]
                %728 = vst [vmem:[%s684 + $0x54] sm:$0xf] %v727
                %v729 = vld [vmem:[%s683 + $0x58] sm:$0xf]
                %730 = vst [vmem:[%s684 + $0x58] sm:$0xf] %v729
                %v731 = vld [vmem:[%s683 + $0x5c] sm:$0xf]
                %732 = vst [vmem:[%s684 + $0x5c] sm:$0xf] %v731
                %v733 = vld [vmem:[%s683 + $0x60] sm:$0xf]
                %734 = vst [vmem:[%s684 + $0x60] sm:$0xf] %v733
                %v735 = vld [vmem:[%s683 + $0x64] sm:$0xf]
                %736 = vst [vmem:[%s684 + $0x64] sm:$0xf] %v735
                %v737 = vld [vmem:[%s683 + $0x68] sm:$0xf]
                %738 = vst [vmem:[%s684 + $0x68] sm:$0xf] %v737
                %v739 = vld [vmem:[%s683 + $0x6c] sm:$0xf]
                %740 = vst [vmem:[%s684 + $0x6c] sm:$0xf] %v739
                %v741 = vld [vmem:[%s683 + $0x70] sm:$0xf]
                %742 = vst [vmem:[%s684 + $0x70] sm:$0xf] %v741
                %v743 = vld [vmem:[%s683 + $0x74] sm:$0xf]
                %744 = vst [vmem:[%s684 + $0x74] sm:$0xf] %v743
                %v745 = vld [vmem:[%s683 + $0x78] sm:$0xf]
                %746 = vst [vmem:[%s684 + $0x78] sm:$0xf] %v745
                %v747 = vld [vmem:[%s683 + $0x7c] sm:$0xf]
                %748 = vst [vmem:[%s684 + $0x7c] sm:$0xf] %v747
                %v749 = vld [vmem:[%s683 + $0x80] sm:$0xf]
                %750 = vst [vmem:[%s684 + $0x80] sm:$0xf] %v749
                %v751 = vld [vmem:[%s683 + $0x84] sm:$0xf]
                %752 = vst [vmem:[%s684 + $0x84] sm:$0xf] %v751
                %v753 = vld [vmem:[%s683 + $0x88] sm:$0xf]
                %754 = vst [vmem:[%s684 + $0x88] sm:$0xf] %v753
                %v755 = vld [vmem:[%s683 + $0x8c] sm:$0xf]
                %756 = vst [vmem:[%s684 + $0x8c] sm:$0xf] %v755
                %v757 = vld [vmem:[%s683 + $0x120] sm:$0xf]
                %758 = vst [vmem:[%s684 + $0x90] sm:$0xf] %v757
                %v759 = vld [vmem:[%s683 + $0x124] sm:$0xf]
                %760 = vst [vmem:[%s684 + $0x94] sm:$0xf] %v759
                %v761 = vld [vmem:[%s683 + $0x128] sm:$0xf]
                %762 = vst [vmem:[%s684 + $0x98] sm:$0xf] %v761
                %v763 = vld [vmem:[%s683 + $0x12c] sm:$0xf]
                %764 = vst [vmem:[%s684 + $0x9c] sm:$0xf] %v763
                %v765 = vld [vmem:[%s683 + $0x130] sm:$0xf]
                %766 = vst [vmem:[%s684 + $0xa0] sm:$0xf] %v765
                %v767 = vld [vmem:[%s683 + $0x134] sm:$0xf]
                %768 = vst [vmem:[%s684 + $0xa4] sm:$0xf] %v767
                %v769 = vld [vmem:[%s683 + $0x138] sm:$0xf]
                %770 = vst [vmem:[%s684 + $0xa8] sm:$0xf] %v769
                %v771 = vld [vmem:[%s683 + $0x13c] sm:$0xf]
                %772 = vst [vmem:[%s684 + $0xac] sm:$0xf] %v771
                %v773 = vld [vmem:[%s683 + $0x140] sm:$0xf]
                %774 = vst [vmem:[%s684 + $0xb0] sm:$0xf] %v773
                %v775 = vld [vmem:[%s683 + $0x144] sm:$0xf]
                %776 = vst [vmem:[%s684 + $0xb4] sm:$0xf] %v775
                %v777 = vld [vmem:[%s683 + $0x148] sm:$0xf]
                %778 = vst [vmem:[%s684 + $0xb8] sm:$0xf] %v777
                %v779 = vld [vmem:[%s683 + $0x14c] sm:$0xf]
                %780 = vst [vmem:[%s684 + $0xbc] sm:$0xf] %v779
                %v781 = vld [vmem:[%s683 + $0x150] sm:$0xf]
                %782 = vst [vmem:[%s684 + $0xc0] sm:$0xf] %v781
                %v783 = vld [vmem:[%s683 + $0x154] sm:$0xf]
                %784 = vst [vmem:[%s684 + $0xc4] sm:$0xf] %v783
                %v785 = vld [vmem:[%s683 + $0x158] sm:$0xf]
                %786 = vst [vmem:[%s684 + $0xc8] sm:$0xf] %v785
                %v787 = vld [vmem:[%s683 + $0x15c] sm:$0xf]
                %788 = vst [vmem:[%s684 + $0xcc] sm:$0xf] %v787
                %v789 = vld [vmem:[%s683 + $0x160] sm:$0xf]
                %790 = vst [vmem:[%s684 + $0xd0] sm:$0xf] %v789
                %v791 = vld [vmem:[%s683 + $0x164] sm:$0xf]
                %792 = vst [vmem:[%s684 + $0xd4] sm:$0xf] %v791
                %v793 = vld [vmem:[%s683 + $0x168] sm:$0xf]
                %794 = vst [vmem:[%s684 + $0xd8] sm:$0xf] %v793
                %v795 = vld [vmem:[%s683 + $0x16c] sm:$0xf]
                %796 = vst [vmem:[%s684 + $0xdc] sm:$0xf] %v795
                %v797 = vld [vmem:[%s683 + $0x170] sm:$0xf]
                %798 = vst [vmem:[%s684 + $0xe0] sm:$0xf] %v797
                %v799 = vld [vmem:[%s683 + $0x174] sm:$0xf]
                %800 = vst [vmem:[%s684 + $0xe4] sm:$0xf] %v799
                %v801 = vld [vmem:[%s683 + $0x178] sm:$0xf]
                %802 = vst [vmem:[%s684 + $0xe8] sm:$0xf] %v801
                %v803 = vld [vmem:[%s683 + $0x17c] sm:$0xf]
                %804 = vst [vmem:[%s684 + $0xec] sm:$0xf] %v803
                %v805 = vld [vmem:[%s683 + $0x180] sm:$0xf]
                %806 = vst [vmem:[%s684 + $0xf0] sm:$0xf] %v805
                %v807 = vld [vmem:[%s683 + $0x184] sm:$0xf]
                %808 = vst [vmem:[%s684 + $0xf4] sm:$0xf] %v807
                %v809 = vld [vmem:[%s683 + $0x188] sm:$0xf]
                %810 = vst [vmem:[%s684 + $0xf8] sm:$0xf] %v809
                %v811 = vld [vmem:[%s683 + $0x18c] sm:$0xf]
                %812 = vst [vmem:[%s684 + $0xfc] sm:$0xf] %v811
                %v813 = vld [vmem:[%s683 + $0x190] sm:$0xf]
                %814 = vst [vmem:[%s684 + $0x100] sm:$0xf] %v813
                %v815 = vld [vmem:[%s683 + $0x194] sm:$0xf]
                %816 = vst [vmem:[%s684 + $0x104] sm:$0xf] %v815
                %v817 = vld [vmem:[%s683 + $0x198] sm:$0xf]
                %818 = vst [vmem:[%s684 + $0x108] sm:$0xf] %v817
                %v819 = vld [vmem:[%s683 + $0x19c] sm:$0xf]
                %820 = vst [vmem:[%s684 + $0x10c] sm:$0xf] %v819
                %v821 = vld [vmem:[%s683 + $0x1a0] sm:$0xf]
                %822 = vst [vmem:[%s684 + $0x110] sm:$0xf] %v821
                %v823 = vld [vmem:[%s683 + $0x1a4] sm:$0xf]
                %824 = vst [vmem:[%s684 + $0x114] sm:$0xf] %v823
                %v825 = vld [vmem:[%s683 + $0x1a8] sm:$0xf]
                %826 = vst [vmem:[%s684 + $0x118] sm:$0xf] %v825
                %v827 = vld [vmem:[%s683 + $0x1ac] sm:$0xf]
                %828 = vst [vmem:[%s684 + $0x11c] sm:$0xf] %v827
                %v829 = vld [vmem:[%s683 + $0x240] sm:$0xf]
                %830 = vst [vmem:[%s684 + $0x120] sm:$0xf] %v829
                %v831 = vld [vmem:[%s683 + $0x244] sm:$0xf]
                %832 = vst [vmem:[%s684 + $0x124] sm:$0xf] %v831
                %v833 = vld [vmem:[%s683 + $0x248] sm:$0xf]
                %834 = vst [vmem:[%s684 + $0x128] sm:$0xf] %v833
                %v835 = vld [vmem:[%s683 + $0x24c] sm:$0xf]
                %836 = vst [vmem:[%s684 + $0x12c] sm:$0xf] %v835
                %v837 = vld [vmem:[%s683 + $0x250] sm:$0xf]
                %838 = vst [vmem:[%s684 + $0x130] sm:$0xf] %v837
                %v839 = vld [vmem:[%s683 + $0x254] sm:$0xf]
                %840 = vst [vmem:[%s684 + $0x134] sm:$0xf] %v839
                %v841 = vld [vmem:[%s683 + $0x258] sm:$0xf]
                %842 = vst [vmem:[%s684 + $0x138] sm:$0xf] %v841
                %v843 = vld [vmem:[%s683 + $0x25c] sm:$0xf]
                %844 = vst [vmem:[%s684 + $0x13c] sm:$0xf] %v843
                %v845 = vld [vmem:[%s683 + $0x260] sm:$0xf]
                %846 = vst [vmem:[%s684 + $0x140] sm:$0xf] %v845
                %v847 = vld [vmem:[%s683 + $0x264] sm:$0xf]
                %848 = vst [vmem:[%s684 + $0x144] sm:$0xf] %v847
                %v849 = vld [vmem:[%s683 + $0x268] sm:$0xf]
                %850 = vst [vmem:[%s684 + $0x148] sm:$0xf] %v849
                %v851 = vld [vmem:[%s683 + $0x26c] sm:$0xf]
                %852 = vst [vmem:[%s684 + $0x14c] sm:$0xf] %v851
                %v853 = vld [vmem:[%s683 + $0x270] sm:$0xf]
                %854 = vst [vmem:[%s684 + $0x150] sm:$0xf] %v853
                %v855 = vld [vmem:[%s683 + $0x274] sm:$0xf]
                %856 = vst [vmem:[%s684 + $0x154] sm:$0xf] %v855
                %v857 = vld [vmem:[%s683 + $0x278] sm:$0xf]
                %858 = vst [vmem:[%s684 + $0x158] sm:$0xf] %v857
                %v859 = vld [vmem:[%s683 + $0x27c] sm:$0xf]
                %860 = vst [vmem:[%s684 + $0x15c] sm:$0xf] %v859
                %v861 = vld [vmem:[%s683 + $0x280] sm:$0xf]
                %862 = vst [vmem:[%s684 + $0x160] sm:$0xf] %v861
                %v863 = vld [vmem:[%s683 + $0x284] sm:$0xf]
                %864 = vst [vmem:[%s684 + $0x164] sm:$0xf] %v863
                %v865 = vld [vmem:[%s683 + $0x288] sm:$0xf]
                %866 = vst [vmem:[%s684 + $0x168] sm:$0xf] %v865
                %v867 = vld [vmem:[%s683 + $0x28c] sm:$0xf]
                %868 = vst [vmem:[%s684 + $0x16c] sm:$0xf] %v867
                %v869 = vld [vmem:[%s683 + $0x290] sm:$0xf]
                %870 = vst [vmem:[%s684 + $0x170] sm:$0xf] %v869
                %v871 = vld [vmem:[%s683 + $0x294] sm:$0xf]
                %872 = vst [vmem:[%s684 + $0x174] sm:$0xf] %v871
                %v873 = vld [vmem:[%s683 + $0x298] sm:$0xf]
                %874 = vst [vmem:[%s684 + $0x178] sm:$0xf] %v873
                %v875 = vld [vmem:[%s683 + $0x29c] sm:$0xf]
                %876 = vst [vmem:[%s684 + $0x17c] sm:$0xf] %v875
                %v877 = vld [vmem:[%s683 + $0x2a0] sm:$0xf]
                %878 = vst [vmem:[%s684 + $0x180] sm:$0xf] %v877
                %v879 = vld [vmem:[%s683 + $0x2a4] sm:$0xf]
                %880 = vst [vmem:[%s684 + $0x184] sm:$0xf] %v879
                %v881 = vld [vmem:[%s683 + $0x2a8] sm:$0xf]
                %882 = vst [vmem:[%s684 + $0x188] sm:$0xf] %v881
                %v883 = vld [vmem:[%s683 + $0x2ac] sm:$0xf]
                %884 = vst [vmem:[%s684 + $0x18c] sm:$0xf] %v883
                %v885 = vld [vmem:[%s683 + $0x2b0] sm:$0xf]
                %886 = vst [vmem:[%s684 + $0x190] sm:$0xf] %v885
                %v887 = vld [vmem:[%s683 + $0x2b4] sm:$0xf]
                %888 = vst [vmem:[%s684 + $0x194] sm:$0xf] %v887
                %v889 = vld [vmem:[%s683 + $0x2b8] sm:$0xf]
                %890 = vst [vmem:[%s684 + $0x198] sm:$0xf] %v889
                %v891 = vld [vmem:[%s683 + $0x2bc] sm:$0xf]
                %892 = vst [vmem:[%s684 + $0x19c] sm:$0xf] %v891
                %v893 = vld [vmem:[%s683 + $0x2c0] sm:$0xf]
                %894 = vst [vmem:[%s684 + $0x1a0] sm:$0xf] %v893
                %v895 = vld [vmem:[%s683 + $0x2c4] sm:$0xf]
                %896 = vst [vmem:[%s684 + $0x1a4] sm:$0xf] %v895
                %v897 = vld [vmem:[%s683 + $0x2c8] sm:$0xf]
                %898 = vst [vmem:[%s684 + $0x1a8] sm:$0xf] %v897
                %v899 = vld [vmem:[%s683 + $0x2cc] sm:$0xf]
                %900 = vst [vmem:[%s684 + $0x1ac] sm:$0xf] %v899
              $region90: #{decoder_forward.3} parent=84 // loop_footer
                %s682 = sadd.s32 1, %s678
              $region91: #{decoder_forward.3} parent=84 // loop_footer_branch
                %677 = sbr.rel target = $region87
              $region92: #{decoder_forward.3} parent=84 // loop_exit
                _
            $region85: #{decoder_forward.3} parent=76 // pred_fallthru
              _
          $region77: #{decoder_forward.3} parent=72 // pred_fallthru
            _
          %1136 = vnop
        $region73: #{decoder_forward.3} parent=27 // pred_fallthru
          _
      $region28: #{decoder_forward.3} parent=5 // pred_fallthru
        _
      %p1137 = scmp.le.s32.totalorder 1, %s14
      %p1138 = scmp.lt.s32.totalorder %s14, 3
      %p1139 = pnand %p1137, %p1138
      %p1140 = pneg %p1139
      // Predicated region
      $region111: #{decoder_forward.3} parent=5 // pred_check
        _
      $region112: #{decoder_forward.3} parent=5 // pred_check_branch
        %1142 = sbr.rel (%p1139) target = $region114
      $region113: #{decoder_forward.3} parent=5 // pred_region
        %s1143 = ssub.s32 %s14, 1
        %s1144 = sand.u32 %s27, 1
        %s1145 = sand.u32 %s27, 1
        %s1146 = smul.addr %s1145, 432
        %s1147 = scalar_lea.vmem [#allocation2], %s1146
        // Predicated region
        $region115: #{decoder_forward.3} parent=113 // pred_check
          %p1148 = pneg %p40
        $region116: #{decoder_forward.3} parent=113 // pred_check_branch
          %1150 = sbr.rel (%p1148) target = $region118
        $region117: #{decoder_forward.3} parent=113 // pred_region
          _
        $region118: #{decoder_forward.3} parent=113 // pred_fallthru
          _
        %s1151 = sand.u32 %s74, 1
        %s1152 = sand.u32 %s74, 1
        %s1153 = smul.addr %s1152, 432
        %s1154 = scalar_lea.vmem [#allocation3], %s1153
        // Predicated region
        $region119: #{decoder_forward.3} parent=113 // pred_check
          %p1155 = pneg %p87
        $region120: #{decoder_forward.3} parent=113 // pred_check_branch
          %1157 = sbr.rel (%p1155) target = $region122
        $region121: #{decoder_forward.3} parent=113 // pred_region
          _
        $region122: #{decoder_forward.3} parent=113 // pred_fallthru
          _
        %s1158 = sand.u32 %s27, 1
        %s1159 = sand.u32 %s27, 1
        %s1160 = smul.addr %s1159, 432
        %s1161 = scalar_lea.vmem [#allocation2], %s1160
        %p1162 = pneg %p40
        %p1163 = pneg %p37
        %p1164 = pneg %p61
        %p1165 = pneg %p58
        %s1166 = sand.u32 %s74, 1
        %s1167 = sand.u32 %s74, 1
        %s1168 = smul.addr %s1167, 432
        %s1169 = scalar_lea.vmem [#allocation3], %s1168
        %p1170 = pneg %p87
        %p1171 = pneg %p84
        %p1172 = pneg %p108
        %p1173 = pneg %p105
        %p1174 = pneg %p129
        %p1175 = pneg %p126
        %p1176 = pneg %p155
        %p1177 = pneg %p152
        %s1178 = sand.u32 %s142, 1
        %s1179 = scalar_lea.sflag [#allocation5], %s1178
        %s1180 = sand.u32 %s142, 1
        %s1181 = smul.addr %s1180, 256
        %s1182 = scalar_lea.vmem [#allocation4], %s1181
        %s1183 = smul.u32 32, %s19
        %v1185 = vld [vmem:[%s1147] sm:$0xf]
        %v1186 = vld [vmem:[%s1147 + $0x4] sm:$0xf]
        %v1187 = vld [vmem:[%s1147 + $0x8] sm:$0xf]
        %v1188 = vld [vmem:[%s1147 + $0xc] sm:$0xf]
        %v1189 = vld [vmem:[%s1147 + $0x10] sm:$0xf]
        %v1190 = vld [vmem:[%s1147 + $0x14] sm:$0xf]
        %v1191 = vld [vmem:[%s1147 + $0x18] sm:$0xf]
        %v1192 = vld [vmem:[%s1147 + $0x1c] sm:$0xf]
        %v1193 = vld [vmem:[%s1147 + $0x20] sm:$0xf]
        %v1194 = vld [vmem:[%s1147 + $0x24] sm:$0xf]
        %v1195 = vld [vmem:[%s1147 + $0x28] sm:$0xf]
        %v1196 = vld [vmem:[%s1147 + $0x2c] sm:$0xf]
        %v1197 = vld [vmem:[%s1147 + $0x30] sm:$0xf]
        %v1198 = vld [vmem:[%s1147 + $0x34] sm:$0xf]
        %v1199 = vld [vmem:[%s1147 + $0x38] sm:$0xf]
        %v1200 = vld [vmem:[%s1147 + $0x3c] sm:$0xf]
        %v1201 = vld [vmem:[%s1147 + $0x40] sm:$0xf]
        %v1202 = vld [vmem:[%s1147 + $0x44] sm:$0xf]
        %v1203 = vld [vmem:[%s1147 + $0x48] sm:$0xf]
        %v1204 = vld [vmem:[%s1147 + $0x4c] sm:$0xf]
        %v1205 = vld [vmem:[%s1147 + $0x50] sm:$0xf]
        %v1206 = vld [vmem:[%s1147 + $0x54] sm:$0xf]
        %v1207 = vld [vmem:[%s1147 + $0x58] sm:$0xf]
        %v1208 = vld [vmem:[%s1147 + $0x5c] sm:$0xf]
        %v1209 = vld [vmem:[%s1147 + $0x60] sm:$0xf]
        %v1210 = vld [vmem:[%s1147 + $0x64] sm:$0xf]
        %v1211 = vld [vmem:[%s1147 + $0x68] sm:$0xf]
        %v1212 = vld [vmem:[%s1147 + $0x6c] sm:$0xf]
        %v1213 = vld [vmem:[%s1147 + $0x70] sm:$0xf]
        %v1214 = vld [vmem:[%s1147 + $0x74] sm:$0xf]
        %v1215 = vld [vmem:[%s1147 + $0x78] sm:$0xf]
        %v1216 = vld [vmem:[%s1147 + $0x7c] sm:$0xf]
        %v1217 = vld [vmem:[%s1] sm:$0xf]
        %v1218 = vld [vmem:[%s1 + $0x4] sm:$0xf]
        %v1219 = vld [vmem:[%s1 + $0x8] sm:$0xf]
        %v1220 = vld [vmem:[%s1 + $0xc] sm:$0xf]
        %v1221 = vld [vmem:[%s1154] sm:$0xf]
        %v1222 = vld [vmem:[%s1154 + $0x4] sm:$0xf]
        %v1223 = vld [vmem:[%s1154 + $0x8] sm:$0xf]
        %v1224 = vld [vmem:[%s1154 + $0xc] sm:$0xf]
        %v1225 = vld [vmem:[%s1154 + $0x10] sm:$0xf]
        %v1226 = vld [vmem:[%s1154 + $0x14] sm:$0xf]
        %v1227 = vld [vmem:[%s1154 + $0x18] sm:$0xf]
        %v1228 = vld [vmem:[%s1154 + $0x1c] sm:$0xf]
        %v1229 = vld [vmem:[%s1154 + $0x20] sm:$0xf]
        %v1230 = vld [vmem:[%s1154 + $0x24] sm:$0xf]
        %v1231 = vld [vmem:[%s1154 + $0x28] sm:$0xf]
        %v1232 = vld [vmem:[%s1154 + $0x2c] sm:$0xf]
        %v1233 = vld [vmem:[%s1154 + $0x30] sm:$0xf]
        %v1234 = vld [vmem:[%s1154 + $0x34] sm:$0xf]
        %v1235 = vld [vmem:[%s1154 + $0x38] sm:$0xf]
        %v1236 = vld [vmem:[%s1154 + $0x3c] sm:$0xf]
        %v1237 = vld [vmem:[%s1154 + $0x40] sm:$0xf]
        %v1238 = vld [vmem:[%s1154 + $0x44] sm:$0xf]
        %v1239 = vld [vmem:[%s1154 + $0x48] sm:$0xf]
        %v1240 = vld [vmem:[%s1154 + $0x4c] sm:$0xf]
        %v1241 = vld [vmem:[%s1154 + $0x50] sm:$0xf]
        %v1242 = vld [vmem:[%s1154 + $0x54] sm:$0xf]
        %v1243 = vld [vmem:[%s1154 + $0x58] sm:$0xf]
        %v1244 = vld [vmem:[%s1154 + $0x5c] sm:$0xf]
        %v1245 = vld [vmem:[%s1154 + $0x60] sm:$0xf]
        %v1246 = vld [vmem:[%s1154 + $0x64] sm:$0xf]
        %v1247 = vld [vmem:[%s1154 + $0x68] sm:$0xf]
        %v1248 = vld [vmem:[%s1154 + $0x6c] sm:$0xf]
        %v1249 = vld [vmem:[%s1154 + $0x70] sm:$0xf]
        %v1250 = vld [vmem:[%s1154 + $0x74] sm:$0xf]
        %v1251 = vld [vmem:[%s1154 + $0x78] sm:$0xf]
        %v1252 = vld [vmem:[%s1154 + $0x7c] sm:$0xf]
        %v1253 = vld [vmem:[%s3] sm:$0xf]
        %v1254 = vld [vmem:[%s3 + $0x4] sm:$0xf]
        %v1255 = vld [vmem:[%s3 + $0x8] sm:$0xf]
        %v1256 = vld [vmem:[%s3 + $0xc] sm:$0xf]
        %v1257 = vld [vmem:[%s3 + $0x10] sm:$0xf]
        %v1258 = vld [vmem:[%s3 + $0x14] sm:$0xf]
        %v1259 = vld [vmem:[%s3 + $0x18] sm:$0xf]
        %v1260 = vld [vmem:[%s3 + $0x1c] sm:$0xf]
        %v1293 = vunpack.c.l.b16 %v1221
        %v1294 = vunpack.c.l.b16 %v1222
        %v1295 = vunpack.c.l.b16 %v1223
        %v1296 = vunpack.c.l.b16 %v1224
        %v1297 = vunpack.c.l.b16 %v1225
        %v1298 = vunpack.c.l.b16 %v1226
        %v1299 = vunpack.c.l.b16 %v1227
        %v1300 = vunpack.c.l.b16 %v1228
        %v1301 = vunpack.c.l.b16 %v1229
        %v1302 = vunpack.c.l.b16 %v1230
        %v1303 = vunpack.c.l.b16 %v1231
        %v1304 = vunpack.c.l.b16 %v1232
        %v1305 = vunpack.c.l.b16 %v1233
        %v1306 = vunpack.c.l.b16 %v1234
        %v1307 = vunpack.c.l.b16 %v1235
        %v1308 = vunpack.c.l.b16 %v1236
        %v1309 = vunpack.c.l.b16 %v1237
        %v1310 = vunpack.c.l.b16 %v1238
        %v1311 = vunpack.c.l.b16 %v1239
        %v1312 = vunpack.c.l.b16 %v1240
        %v1313 = vunpack.c.l.b16 %v1241
        %v1314 = vunpack.c.l.b16 %v1242
        %v1315 = vunpack.c.l.b16 %v1243
        %v1316 = vunpack.c.l.b16 %v1244
        %v1317 = vunpack.c.l.b16 %v1245
        %v1318 = vunpack.c.l.b16 %v1246
        %v1319 = vunpack.c.l.b16 %v1247
        %v1320 = vunpack.c.l.b16 %v1248
        %v1321 = vunpack.c.l.b16 %v1249
        %v1322 = vunpack.c.l.b16 %v1250
        %v1323 = vunpack.c.l.b16 %v1251
        %v1324 = vunpack.c.l.b16 %v1252
        %v1325 = vpack.c.b16 %v1294, %v1293
        %v1326 = vpack.c.b16 %v1296, %v1295
        %v1327 = vpack.c.b16 %v1298, %v1297
        %v1328 = vpack.c.b16 %v1300, %v1299
        %v1329 = vpack.c.b16 %v1302, %v1301
        %v1330 = vpack.c.b16 %v1304, %v1303
        %v1331 = vpack.c.b16 %v1306, %v1305
        %v1332 = vpack.c.b16 %v1308, %v1307
        %v1333 = vpack.c.b16 %v1310, %v1309
        %v1334 = vpack.c.b16 %v1312, %v1311
        %v1335 = vpack.c.b16 %v1314, %v1313
        %v1336 = vpack.c.b16 %v1316, %v1315
        %v1337 = vpack.c.b16 %v1318, %v1317
        %v1338 = vpack.c.b16 %v1320, %v1319
        %v1339 = vpack.c.b16 %v1322, %v1321
        %v1340 = vpack.c.b16 %v1324, %v1323
        %v1349 = vunpack.c.l.b16 %v1253
        %v1350 = vunpack.c.l.b16 %v1254
        %v1351 = vunpack.c.l.b16 %v1255
        %v1352 = vunpack.c.l.b16 %v1256
        %v1353 = vunpack.c.l.b16 %v1257
        %v1354 = vunpack.c.l.b16 %v1258
        %v1355 = vunpack.c.l.b16 %v1259
        %v1356 = vunpack.c.l.b16 %v1260
        %v1357 = vpack.c.b16 %v1350, %v1349
        %v1358 = vpack.c.b16 %v1352, %v1351
        %v1359 = vpack.c.b16 %v1354, %v1353
        %v1360 = vpack.c.b16 %v1356, %v1355
        %vm1365 = vcmask 523264
        %v1367 = vsel %vm1365, %v1325, 0
        %v1370 = vsel %vm1365, %v1326, 0
        %v1373 = vsel %vm1365, %v1327, 0
        %v1376 = vsel %vm1365, %v1328, 0
        %v1379 = vsel %vm1365, %v1329, 0
        %v1382 = vsel %vm1365, %v1330, 0
        %v1385 = vsel %vm1365, %v1331, 0
        %v1388 = vsel %vm1365, %v1332, 0
        %v1391 = vsel %vm1365, %v1333, 0
        %v1394 = vsel %vm1365, %v1334, 0
        %v1397 = vsel %vm1365, %v1335, 0
        %v1400 = vsel %vm1365, %v1336, 0
        %v1403 = vsel %vm1365, %v1337, 0
        %v1406 = vsel %vm1365, %v1338, 0
        %v1409 = vsel %vm1365, %v1339, 0
        %v1412 = vsel %vm1365, %v1340, 0
        %1414 = vmatprep.subr.bf16.mxu0 0
        %1415 = vmatpush1.bf16.msra.mxu0 %v1357
        %1416 = vmatprep.subr.bf16.mxu0 0
        %1417 = vmatpush1.bf16.msra.mxu0 %v1358
        %1418 = vmatprep.subr.bf16.mxu0 0
        %1419 = vmatpush1.bf16.msra.mxu0 %v1359
        %1420 = vmatprep.subr.bf16.mxu0 0
        %1421 = vmatpush1.bf16.msra.mxu0 %v1360
        %1422 = vmatprep.subr.bf16.mxu0 0
        %1423 = vmatpush1.bf16.msra.mxu0 0
        %1424 = vmatprep.subr.bf16.mxu0 0
        %1425 = vmatpush1.bf16.msra.mxu0 0
        %1426 = vmatprep.subr.bf16.mxu0 0
        %1427 = vmatpush1.bf16.msra.mxu0 0
        %1428 = vmatprep.subr.bf16.mxu0 0
        %1429 = vmatpush1.bf16.msra.mxu0 0
        %1430 = vmatprep.subr.bf16.mxu0 0
        %1431 = vmatpush1.bf16.msra.mxu0 0
        %1432 = vmatprep.subr.bf16.mxu0 0
        %1433 = vmatpush1.bf16.msra.mxu0 0
        %1434 = vmatprep.subr.bf16.mxu0 0
        %1435 = vmatpush1.bf16.msra.mxu0 0
        %1436 = vmatprep.subr.bf16.mxu0 0
        %1437 = vmatpush1.bf16.msra.mxu0 0
        %1438 = vmatprep.subr.bf16.mxu0 0
        %1439 = vmatpush1.bf16.msra.mxu0 0
        %1440 = vmatprep.subr.bf16.mxu0 0
        %1441 = vmatpush1.bf16.msra.mxu0 0
        %1442 = vmatprep.subr.bf16.mxu0 0
        %1443 = vmatpush1.bf16.msra.mxu0 0
        %1444 = vmatprep.subr.bf16.mxu0 0
        %1445 = vmatpush1.bf16.msra.mxu0 0
        %1446 = vmatprep.mubr.bf16.mxu0 0
        %1447 = vmatmul.mubr.bf16.gmra.mrb[0].mxu0 %v1367
        %v1448 = vpop.f32.mrb[0].mxu0
        %v1449 = vadd.f32 0.0, %v1448
        %v1450 = vpop.f32.mrb[0].mxu0
        %v1451 = vpop.f32.mrb[0].mxu0
        %v1452 = vadd.f32 0.0, %v1451
        %v1453 = vpop.f32.mrb[0].mxu0
        %1454 = vmatprep.mubr.bf16.mxu0 0
        %1455 = vmatmul.mubr.bf16.gmra.mrb[0].mxu0 %v1370
        %v1456 = vpop.f32.mrb[0].mxu0
        %v1457 = vadd.f32 0.0, %v1456
        %v1458 = vpop.f32.mrb[0].mxu0
        %v1459 = vpop.f32.mrb[0].mxu0
        %v1460 = vadd.f32 0.0, %v1459
        %v1461 = vpop.f32.mrb[0].mxu0
        %1462 = vmatprep.mubr.bf16.mxu0 0
        %1463 = vmatmul.mubr.bf16.gmra.mrb[0].mxu0 %v1373
        %v1464 = vpop.f32.mrb[0].mxu0
        %v1465 = vadd.f32 0.0, %v1464
        %v1466 = vpop.f32.mrb[0].mxu0
        %v1467 = vpop.f32.mrb[0].mxu0
        %v1468 = vadd.f32 0.0, %v1467
        %v1469 = vpop.f32.mrb[0].mxu0
        %1470 = vmatprep.mubr.bf16.mxu0 0
        %1471 = vmatmul.mubr.bf16.gmra.mrb[0].mxu0 %v1376
        %v1472 = vpop.f32.mrb[0].mxu0
        %v1473 = vadd.f32 0.0, %v1472
        %v1474 = vpop.f32.mrb[0].mxu0
        %v1475 = vpop.f32.mrb[0].mxu0
        %v1476 = vadd.f32 0.0, %v1475
        %v1477 = vpop.f32.mrb[0].mxu0
        %1478 = vmatprep.mubr.bf16.mxu0 0
        %1479 = vmatmul.mubr.bf16.gmra.mrb[0].mxu0 %v1379
        %v1480 = vpop.f32.mrb[0].mxu0
        %v1481 = vadd.f32 0.0, %v1480
        %v1482 = vpop.f32.mrb[0].mxu0
        %v1483 = vpop.f32.mrb[0].mxu0
        %v1484 = vadd.f32 0.0, %v1483
        %v1485 = vpop.f32.mrb[0].mxu0
        %1486 = vmatprep.mubr.bf16.mxu0 0
        %1487 = vmatmul.mubr.bf16.gmra.mrb[0].mxu0 %v1382
        %v1488 = vpop.f32.mrb[0].mxu0
        %v1489 = vadd.f32 0.0, %v1488
        %v1490 = vpop.f32.mrb[0].mxu0
        %v1491 = vpop.f32.mrb[0].mxu0
        %v1492 = vadd.f32 0.0, %v1491
        %v1493 = vpop.f32.mrb[0].mxu0
        %1494 = vmatprep.mubr.bf16.mxu0 0
        %1495 = vmatmul.mubr.bf16.gmra.mrb[0].mxu0 %v1385
        %v1496 = vpop.f32.mrb[0].mxu0
        %v1497 = vadd.f32 0.0, %v1496
        %v1498 = vpop.f32.mrb[0].mxu0
        %v1499 = vpop.f32.mrb[0].mxu0
        %v1500 = vadd.f32 0.0, %v1499
        %v1501 = vpop.f32.mrb[0].mxu0
        %1502 = vmatprep.mubr.bf16.mxu0 0
        %1503 = vmatmul.mubr.bf16.gmra.mrb[0].mxu0 %v1388
        %v1504 = vpop.f32.mrb[0].mxu0
        %v1505 = vadd.f32 0.0, %v1504
        %v1506 = vpop.f32.mrb[0].mxu0
        %v1507 = vpop.f32.mrb[0].mxu0
        %v1508 = vadd.f32 0.0, %v1507
        %v1509 = vpop.f32.mrb[0].mxu0
        %1510 = vmatprep.mubr.bf16.mxu0 0
        %1511 = vmatmul.mubr.bf16.gmra.mrb[0].mxu0 %v1391
        %v1512 = vpop.f32.mrb[0].mxu0
        %v1513 = vadd.f32 0.0, %v1512
        %v1514 = vpop.f32.mrb[0].mxu0
        %v1515 = vpop.f32.mrb[0].mxu0
        %v1516 = vadd.f32 0.0, %v1515
        %v1517 = vpop.f32.mrb[0].mxu0
        %1518 = vmatprep.mubr.bf16.mxu0 0
        %1519 = vmatmul.mubr.bf16.gmra.mrb[0].mxu0 %v1394
        %v1520 = vpop.f32.mrb[0].mxu0
        %v1521 = vadd.f32 0.0, %v1520
        %v1522 = vpop.f32.mrb[0].mxu0
        %v1523 = vpop.f32.mrb[0].mxu0
        %v1524 = vadd.f32 0.0, %v1523
        %v1525 = vpop.f32.mrb[0].mxu0
        %1526 = vmatprep.mubr.bf16.mxu0 0
        %1527 = vmatmul.mubr.bf16.gmra.mrb[0].mxu0 %v1397
        %v1528 = vpop.f32.mrb[0].mxu0
        %v1529 = vadd.f32 0.0, %v1528
        %v1530 = vpop.f32.mrb[0].mxu0
        %v1531 = vpop.f32.mrb[0].mxu0
        %v1532 = vadd.f32 0.0, %v1531
        %v1533 = vpop.f32.mrb[0].mxu0
        %1534 = vmatprep.mubr.bf16.mxu0 0
        %1535 = vmatmul.mubr.bf16.gmra.mrb[0].mxu0 %v1400
        %v1536 = vpop.f32.mrb[0].mxu0
        %v1537 = vadd.f32 0.0, %v1536
        %v1538 = vpop.f32.mrb[0].mxu0
        %v1539 = vpop.f32.mrb[0].mxu0
        %v1540 = vadd.f32 0.0, %v1539
        %v1541 = vpop.f32.mrb[0].mxu0
        %1542 = vmatprep.mubr.bf16.mxu0 0
        %1543 = vmatmul.mubr.bf16.gmra.mrb[0].mxu0 %v1403
        %v1544 = vpop.f32.mrb[0].mxu0
        %v1545 = vadd.f32 0.0, %v1544
        %v1546 = vpop.f32.mrb[0].mxu0
        %v1547 = vpop.f32.mrb[0].mxu0
        %v1548 = vadd.f32 0.0, %v1547
        %v1549 = vpop.f32.mrb[0].mxu0
        %1550 = vmatprep.mubr.bf16.mxu0 0
        %1551 = vmatmul.mubr.bf16.gmra.mrb[0].mxu0 %v1406
        %v1552 = vpop.f32.mrb[0].mxu0
        %v1553 = vadd.f32 0.0, %v1552
        %v1554 = vpop.f32.mrb[0].mxu0
        %v1555 = vpop.f32.mrb[0].mxu0
        %v1556 = vadd.f32 0.0, %v1555
        %v1557 = vpop.f32.mrb[0].mxu0
        %1558 = vmatprep.mubr.bf16.mxu0 0
        %1559 = vmatmul.mubr.bf16.gmra.mrb[0].mxu0 %v1409
        %v1560 = vpop.f32.mrb[0].mxu0
        %v1561 = vadd.f32 0.0, %v1560
        %v1562 = vpop.f32.mrb[0].mxu0
        %v1563 = vpop.f32.mrb[0].mxu0
        %v1564 = vadd.f32 0.0, %v1563
        %v1565 = vpop.f32.mrb[0].mxu0
        %1566 = vmatprep.mubr.bf16.mxu0 0
        %1567 = vmatmul.mubr.bf16.gmra.mrb[0].mxu0 %v1412
        %v1568 = vpop.f32.mrb[0].mxu0
        %v1569 = vadd.f32 0.0, %v1568
        %v1570 = vpop.f32.mrb[0].mxu0
        %v1571 = vpop.f32.mrb[0].mxu0
        %v1572 = vadd.f32 0.0, %v1571
        %v1573 = vpop.f32.mrb[0].mxu0
        %1574 = vdwg.mxu0
        %v1607 = vunpack.c.l.b16 %v1185
        %v1608 = vunpack.c.l.b16 %v1186
        %v1609 = vunpack.c.l.b16 %v1187
        %v1610 = vunpack.c.l.b16 %v1188
        %v1611 = vunpack.c.l.b16 %v1189
        %v1612 = vunpack.c.l.b16 %v1190
        %v1613 = vunpack.c.l.b16 %v1191
        %v1614 = vunpack.c.l.b16 %v1192
        %v1615 = vunpack.c.l.b16 %v1193
        %v1616 = vunpack.c.l.b16 %v1194
        %v1617 = vunpack.c.l.b16 %v1195
        %v1618 = vunpack.c.l.b16 %v1196
        %v1619 = vunpack.c.l.b16 %v1197
        %v1620 = vunpack.c.l.b16 %v1198
        %v1621 = vunpack.c.l.b16 %v1199
        %v1622 = vunpack.c.l.b16 %v1200
        %v1623 = vunpack.c.l.b16 %v1201
        %v1624 = vunpack.c.l.b16 %v1202
        %v1625 = vunpack.c.l.b16 %v1203
        %v1626 = vunpack.c.l.b16 %v1204
        %v1627 = vunpack.c.l.b16 %v1205
        %v1628 = vunpack.c.l.b16 %v1206
        %v1629 = vunpack.c.l.b16 %v1207
        %v1630 = vunpack.c.l.b16 %v1208
        %v1631 = vunpack.c.l.b16 %v1209
        %v1632 = vunpack.c.l.b16 %v1210
        %v1633 = vunpack.c.l.b16 %v1211
        %v1634 = vunpack.c.l.b16 %v1212
        %v1635 = vunpack.c.l.b16 %v1213
        %v1636 = vunpack.c.l.b16 %v1214
        %v1637 = vunpack.c.l.b16 %v1215
        %v1638 = vunpack.c.l.b16 %v1216
        %v1639 = vpack.c.b16 %v1608, %v1607
        %v1640 = vpack.c.b16 %v1610, %v1609
        %v1641 = vpack.c.b16 %v1612, %v1611
        %v1642 = vpack.c.b16 %v1614, %v1613
        %v1643 = vpack.c.b16 %v1616, %v1615
        %v1644 = vpack.c.b16 %v1618, %v1617
        %v1645 = vpack.c.b16 %v1620, %v1619
        %v1646 = vpack.c.b16 %v1622, %v1621
        %v1647 = vpack.c.b16 %v1624, %v1623
        %v1648 = vpack.c.b16 %v1626, %v1625
        %v1649 = vpack.c.b16 %v1628, %v1627
        %v1650 = vpack.c.b16 %v1630, %v1629
        %v1651 = vpack.c.b16 %v1632, %v1631
        %v1652 = vpack.c.b16 %v1634, %v1633
        %v1653 = vpack.c.b16 %v1636, %v1635
        %v1654 = vpack.c.b16 %v1638, %v1637
        %v1659 = vunpack.c.l.b16 %v1217
        %v1660 = vunpack.c.l.b16 %v1218
        %v1661 = vunpack.c.l.b16 %v1219
        %v1662 = vunpack.c.l.b16 %v1220
        %v1663 = vpack.c.b16 %v1660, %v1659
        %v1664 = vpack.c.b16 %v1662, %v1661
        %vm1667 = vcmask 261120
        %v1669 = vsel %vm1667, %v1639, 0
        %v1672 = vsel %vm1667, %v1640, 0
        %v1675 = vsel %vm1667, %v1641, 0
        %v1678 = vsel %vm1667, %v1642, 0
        %v1681 = vsel %vm1667, %v1643, 0
        %v1684 = vsel %vm1667, %v1644, 0
        %v1687 = vsel %vm1667, %v1645, 0
        %v1690 = vsel %vm1667, %v1646, 0
        %v1693 = vsel %vm1667, %v1647, 0
        %v1696 = vsel %vm1667, %v1648, 0
        %v1699 = vsel %vm1667, %v1649, 0
        %v1702 = vsel %vm1667, %v1650, 0
        %v1705 = vsel %vm1667, %v1651, 0
        %v1708 = vsel %vm1667, %v1652, 0
        %v1711 = vsel %vm1667, %v1653, 0
        %v1714 = vsel %vm1667, %v1654, 0
        %1716 = vmatprep.subr.bf16.mxu0 0
        %1717 = vmatpush1.bf16.msra.mxu0 %v1663
        %1718 = vmatprep.subr.bf16.mxu0 0
        %1719 = vmatpush1.bf16.msra.mxu0 %v1664
        %1720 = vmatprep.subr.bf16.mxu0 0
        %1721 = vmatpush1.bf16.msra.mxu0 0
        %1722 = vmatprep.subr.bf16.mxu0 0
        %1723 = vmatpush1.bf16.msra.mxu0 0
        %1724 = vmatprep.subr.bf16.mxu0 0
        %1725 = vmatpush1.bf16.msra.mxu0 0
        %1726 = vmatprep.subr.bf16.mxu0 0
        %1727 = vmatpush1.bf16.msra.mxu0 0
        %1728 = vmatprep.subr.bf16.mxu0 0
        %1729 = vmatpush1.bf16.msra.mxu0 0
        %1730 = vmatprep.subr.bf16.mxu0 0
        %1731 = vmatpush1.bf16.msra.mxu0 0
        %1732 = vmatprep.subr.bf16.mxu0 0
        %1733 = vmatpush1.bf16.msra.mxu0 0
        %1734 = vmatprep.subr.bf16.mxu0 0
        %1735 = vmatpush1.bf16.msra.mxu0 0
        %1736 = vmatprep.subr.bf16.mxu0 0
        %1737 = vmatpush1.bf16.msra.mxu0 0
        %1738 = vmatprep.subr.bf16.mxu0 0
        %1739 = vmatpush1.bf16.msra.mxu0 0
        %1740 = vmatprep.subr.bf16.mxu0 0
        %1741 = vmatpush1.bf16.msra.mxu0 0
        %1742 = vmatprep.subr.bf16.mxu0 0
        %1743 = vmatpush1.bf16.msra.mxu0 0
        %1744 = vmatprep.subr.bf16.mxu0 0
        %1745 = vmatpush1.bf16.msra.mxu0 0
        %1746 = vmatprep.subr.bf16.mxu0 0
        %1747 = vmatpush1.bf16.msra.mxu0 0
        %1748 = vmatprep.mubr.bf16.mxu0 0
        %1749 = vmatmul.mubr.bf16.gmra.mrb[0].mxu0 %v1669
        %v1750 = vpop.f32.mrb[0].mxu0
        %v1751 = vadd.f32 %v1449, %v1750
        %v1752 = vpop.f32.mrb[0].mxu0
        %v1753 = vpop.f32.mrb[0].mxu0
        %v1754 = vadd.f32 %v1452, %v1753
        %v1755 = vpop.f32.mrb[0].mxu0
        %1756 = vmatprep.mubr.bf16.mxu0 0
        %1757 = vmatmul.mubr.bf16.gmra.mrb[0].mxu0 %v1672
        %v1758 = vpop.f32.mrb[0].mxu0
        %v1759 = vadd.f32 %v1457, %v1758
        %v1760 = vpop.f32.mrb[0].mxu0
        %v1761 = vpop.f32.mrb[0].mxu0
        %v1762 = vadd.f32 %v1460, %v1761
        %v1763 = vpop.f32.mrb[0].mxu0
        %1764 = vmatprep.mubr.bf16.mxu0 0
        %1765 = vmatmul.mubr.bf16.gmra.mrb[0].mxu0 %v1675
        %v1766 = vpop.f32.mrb[0].mxu0
        %v1767 = vadd.f32 %v1465, %v1766
        %v1768 = vpop.f32.mrb[0].mxu0
        %v1769 = vpop.f32.mrb[0].mxu0
        %v1770 = vadd.f32 %v1468, %v1769
        %v1771 = vpop.f32.mrb[0].mxu0
        %1772 = vmatprep.mubr.bf16.mxu0 0
        %1773 = vmatmul.mubr.bf16.gmra.mrb[0].mxu0 %v1678
        %v1774 = vpop.f32.mrb[0].mxu0
        %v1775 = vadd.f32 %v1473, %v1774
        %v1776 = vpop.f32.mrb[0].mxu0
        %v1777 = vpop.f32.mrb[0].mxu0
        %v1778 = vadd.f32 %v1476, %v1777
        %v1779 = vpop.f32.mrb[0].mxu0
        %1780 = vmatprep.mubr.bf16.mxu0 0
        %1781 = vmatmul.mubr.bf16.gmra.mrb[0].mxu0 %v1681
        %v1782 = vpop.f32.mrb[0].mxu0
        %v1783 = vadd.f32 %v1481, %v1782
        %v1784 = vpop.f32.mrb[0].mxu0
        %v1785 = vpop.f32.mrb[0].mxu0
        %v1786 = vadd.f32 %v1484, %v1785
        %v1787 = vpop.f32.mrb[0].mxu0
        %1788 = vmatprep.mubr.bf16.mxu0 0
        %1789 = vmatmul.mubr.bf16.gmra.mrb[0].mxu0 %v1684
        %v1790 = vpop.f32.mrb[0].mxu0
        %v1791 = vadd.f32 %v1489, %v1790
        %v1792 = vpop.f32.mrb[0].mxu0
        %v1793 = vpop.f32.mrb[0].mxu0
        %v1794 = vadd.f32 %v1492, %v1793
        %v1795 = vpop.f32.mrb[0].mxu0
        %1796 = vmatprep.mubr.bf16.mxu0 0
        %1797 = vmatmul.mubr.bf16.gmra.mrb[0].mxu0 %v1687
        %v1798 = vpop.f32.mrb[0].mxu0
        %v1799 = vadd.f32 %v1497, %v1798
        %v1800 = vpop.f32.mrb[0].mxu0
        %v1801 = vpop.f32.mrb[0].mxu0
        %v1802 = vadd.f32 %v1500, %v1801
        %v1803 = vpop.f32.mrb[0].mxu0
        %1804 = vmatprep.mubr.bf16.mxu0 0
        %1805 = vmatmul.mubr.bf16.gmra.mrb[0].mxu0 %v1690
        %v1806 = vpop.f32.mrb[0].mxu0
        %v1807 = vadd.f32 %v1505, %v1806
        %v1808 = vpop.f32.mrb[0].mxu0
        %v1809 = vpop.f32.mrb[0].mxu0
        %v1810 = vadd.f32 %v1508, %v1809
        %v1811 = vpop.f32.mrb[0].mxu0
        %1812 = vmatprep.mubr.bf16.mxu0 0
        %1813 = vmatmul.mubr.bf16.gmra.mrb[0].mxu0 %v1693
        %v1814 = vpop.f32.mrb[0].mxu0
        %v1815 = vadd.f32 %v1513, %v1814
        %v1816 = vpop.f32.mrb[0].mxu0
        %v1817 = vpop.f32.mrb[0].mxu0
        %v1818 = vadd.f32 %v1516, %v1817
        %v1819 = vpop.f32.mrb[0].mxu0
        %1820 = vmatprep.mubr.bf16.mxu0 0
        %1821 = vmatmul.mubr.bf16.gmra.mrb[0].mxu0 %v1696
        %v1822 = vpop.f32.mrb[0].mxu0
        %v1823 = vadd.f32 %v1521, %v1822
        %v1824 = vpop.f32.mrb[0].mxu0
        %v1825 = vpop.f32.mrb[0].mxu0
        %v1826 = vadd.f32 %v1524, %v1825
        %v1827 = vpop.f32.mrb[0].mxu0
        %1828 = vmatprep.mubr.bf16.mxu0 0
        %1829 = vmatmul.mubr.bf16.gmra.mrb[0].mxu0 %v1699
        %v1830 = vpop.f32.mrb[0].mxu0
        %v1831 = vadd.f32 %v1529, %v1830
        %v1832 = vpop.f32.mrb[0].mxu0
        %v1833 = vpop.f32.mrb[0].mxu0
        %v1834 = vadd.f32 %v1532, %v1833
        %v1835 = vpop.f32.mrb[0].mxu0
        %1836 = vmatprep.mubr.bf16.mxu0 0
        %1837 = vmatmul.mubr.bf16.gmra.mrb[0].mxu0 %v1702
        %v1838 = vpop.f32.mrb[0].mxu0
        %v1839 = vadd.f32 %v1537, %v1838
        %v1840 = vpop.f32.mrb[0].mxu0
        %v1841 = vpop.f32.mrb[0].mxu0
        %v1842 = vadd.f32 %v1540, %v1841
        %v1843 = vpop.f32.mrb[0].mxu0
        %1844 = vmatprep.mubr.bf16.mxu0 0
        %1845 = vmatmul.mubr.bf16.gmra.mrb[0].mxu0 %v1705
        %v1846 = vpop.f32.mrb[0].mxu0
        %v1847 = vadd.f32 %v1545, %v1846
        %v1848 = vpop.f32.mrb[0].mxu0
        %v1849 = vpop.f32.mrb[0].mxu0
        %v1850 = vadd.f32 %v1548, %v1849
        %v1851 = vpop.f32.mrb[0].mxu0
        %1852 = vmatprep.mubr.bf16.mxu0 0
        %1853 = vmatmul.mubr.bf16.gmra.mrb[0].mxu0 %v1708
        %v1854 = vpop.f32.mrb[0].mxu0
        %v1855 = vadd.f32 %v1553, %v1854
        %v1856 = vpop.f32.mrb[0].mxu0
        %v1857 = vpop.f32.mrb[0].mxu0
        %v1858 = vadd.f32 %v1556, %v1857
        %v1859 = vpop.f32.mrb[0].mxu0
        %1860 = vmatprep.mubr.bf16.mxu0 0
        %1861 = vmatmul.mubr.bf16.gmra.mrb[0].mxu0 %v1711
        %v1862 = vpop.f32.mrb[0].mxu0
        %v1863 = vadd.f32 %v1561, %v1862
        %v1864 = vpop.f32.mrb[0].mxu0
        %v1865 = vpop.f32.mrb[0].mxu0
        %v1866 = vadd.f32 %v1564, %v1865
        %v1867 = vpop.f32.mrb[0].mxu0
        %1868 = vmatprep.mubr.bf16.mxu0 0
        %1869 = vmatmul.mubr.bf16.gmra.mrb[0].mxu0 %v1714
        %v1870 = vpop.f32.mrb[0].mxu0
        %v1871 = vadd.f32 %v1569, %v1870
        %v1872 = vpop.f32.mrb[0].mxu0
        %v1873 = vpop.f32.mrb[0].mxu0
        %v1874 = vadd.f32 %v1572, %v1873
        %v1875 = vpop.f32.mrb[0].mxu0
        %1876 = vdwg.mxu0
        %s1877 = scalar_lea.vmem %s1147, 144 [#allocation2]
        %v1878 = vld [vmem:[%s1877] sm:$0xf]
        %v1879 = vld [vmem:[%s1877 + $0x4] sm:$0xf]
        %v1880 = vld [vmem:[%s1877 + $0x8] sm:$0xf]
        %v1881 = vld [vmem:[%s1877 + $0xc] sm:$0xf]
        %v1882 = vld [vmem:[%s1877 + $0x10] sm:$0xf]
        %v1883 = vld [vmem:[%s1877 + $0x14] sm:$0xf]
        %v1884 = vld [vmem:[%s1877 + $0x18] sm:$0xf]
        %v1885 = vld [vmem:[%s1877 + $0x1c] sm:$0xf]
        %v1886 = vld [vmem:[%s1877 + $0x20] sm:$0xf]
        %v1887 = vld [vmem:[%s1877 + $0x24] sm:$0xf]
        %v1888 = vld [vmem:[%s1877 + $0x28] sm:$0xf]
        %v1889 = vld [vmem:[%s1877 + $0x2c] sm:$0xf]
        %v1890 = vld [vmem:[%s1877 + $0x30] sm:$0xf]
        %v1891 = vld [vmem:[%s1877 + $0x34] sm:$0xf]
        %v1892 = vld [vmem:[%s1877 + $0x38] sm:$0xf]
        %v1893 = vld [vmem:[%s1877 + $0x3c] sm:$0xf]
        %v1894 = vld [vmem:[%s1877 + $0x40] sm:$0xf]
        %v1895 = vld [vmem:[%s1877 + $0x44] sm:$0xf]
        %v1896 = vld [vmem:[%s1877 + $0x48] sm:$0xf]
        %v1897 = vld [vmem:[%s1877 + $0x4c] sm:$0xf]
        %v1898 = vld [vmem:[%s1877 + $0x50] sm:$0xf]
        %v1899 = vld [vmem:[%s1877 + $0x54] sm:$0xf]
        %v1900 = vld [vmem:[%s1877 + $0x58] sm:$0xf]
        %v1901 = vld [vmem:[%s1877 + $0x5c] sm:$0xf]
        %v1902 = vld [vmem:[%s1877 + $0x60] sm:$0xf]
        %v1903 = vld [vmem:[%s1877 + $0x64] sm:$0xf]
        %v1904 = vld [vmem:[%s1877 + $0x68] sm:$0xf]
        %v1905 = vld [vmem:[%s1877 + $0x6c] sm:$0xf]
        %v1906 = vld [vmem:[%s1877 + $0x70] sm:$0xf]
        %v1907 = vld [vmem:[%s1877 + $0x74] sm:$0xf]
        %v1908 = vld [vmem:[%s1877 + $0x78] sm:$0xf]
        %v1909 = vld [vmem:[%s1877 + $0x7c] sm:$0xf]
        %s1910 = scalar_lea.vmem %s1, 16
        %v1911 = vld [vmem:[%s1910] sm:$0xf]
        %v1912 = vld [vmem:[%s1910 + $0x4] sm:$0xf]
        %v1913 = vld [vmem:[%s1910 + $0x8] sm:$0xf]
        %v1914 = vld [vmem:[%s1910 + $0xc] sm:$0xf]
        %v1947 = vunpack.c.l.b16 %v1878
        %v1948 = vunpack.c.l.b16 %v1879
        %v1949 = vunpack.c.l.b16 %v1880
        %v1950 = vunpack.c.l.b16 %v1881
        %v1951 = vunpack.c.l.b16 %v1882
        %v1952 = vunpack.c.l.b16 %v1883
        %v1953 = vunpack.c.l.b16 %v1884
        %v1954 = vunpack.c.l.b16 %v1885
        %v1955 = vunpack.c.l.b16 %v1886
        %v1956 = vunpack.c.l.b16 %v1887
        %v1957 = vunpack.c.l.b16 %v1888
        %v1958 = vunpack.c.l.b16 %v1889
        %v1959 = vunpack.c.l.b16 %v1890
        %v1960 = vunpack.c.l.b16 %v1891
        %v1961 = vunpack.c.l.b16 %v1892
        %v1962 = vunpack.c.l.b16 %v1893
        %v1963 = vunpack.c.l.b16 %v1894
        %v1964 = vunpack.c.l.b16 %v1895
        %v1965 = vunpack.c.l.b16 %v1896
        %v1966 = vunpack.c.l.b16 %v1897
        %v1967 = vunpack.c.l.b16 %v1898
        %v1968 = vunpack.c.l.b16 %v1899
        %v1969 = vunpack.c.l.b16 %v1900
        %v1970 = vunpack.c.l.b16 %v1901
        %v1971 = vunpack.c.l.b16 %v1902
        %v1972 = vunpack.c.l.b16 %v1903
        %v1973 = vunpack.c.l.b16 %v1904
        %v1974 = vunpack.c.l.b16 %v1905
        %v1975 = vunpack.c.l.b16 %v1906
        %v1976 = vunpack.c.l.b16 %v1907
        %v1977 = vunpack.c.l.b16 %v1908
        %v1978 = vunpack.c.l.b16 %v1909
        %v1979 = vpack.c.b16 %v1948, %v1947
        %v1980 = vpack.c.b16 %v1950, %v1949
        %v1981 = vpack.c.b16 %v1952, %v1951
        %v1982 = vpack.c.b16 %v1954, %v1953
        %v1983 = vpack.c.b16 %v1956, %v1955
        %v1984 = vpack.c.b16 %v1958, %v1957
        %v1985 = vpack.c.b16 %v1960, %v1959
        %v1986 = vpack.c.b16 %v1962, %v1961
        %v1987 = vpack.c.b16 %v1964, %v1963
        %v1988 = vpack.c.b16 %v1966, %v1965
        %v1989 = vpack.c.b16 %v1968, %v1967
        %v1990 = vpack.c.b16 %v1970, %v1969
        %v1991 = vpack.c.b16 %v1972, %v1971
        %v1992 = vpack.c.b16 %v1974, %v1973
        %v1993 = vpack.c.b16 %v1976, %v1975
        %v1994 = vpack.c.b16 %v1978, %v1977
        %v1999 = vunpack.c.l.b16 %v1911
        %v2000 = vunpack.c.l.b16 %v1912
        %v2001 = vunpack.c.l.b16 %v1913
        %v2002 = vunpack.c.l.b16 %v1914
        %v2003 = vpack.c.b16 %v2000, %v1999
        %v2004 = vpack.c.b16 %v2002, %v2001
        %v2008 = vsel %vm1667, %v1979, 0
        %v2011 = vsel %vm1667, %v1980, 0
        %v2014 = vsel %vm1667, %v1981, 0
        %v2017 = vsel %vm1667, %v1982, 0
        %v2020 = vsel %vm1667, %v1983, 0
        %v2023 = vsel %vm1667, %v1984, 0
        %v2026 = vsel %vm1667, %v1985, 0
        %v2029 = vsel %vm1667, %v1986, 0
        %v2032 = vsel %vm1667, %v1987, 0
        %v2035 = vsel %vm1667, %v1988, 0
        %v2038 = vsel %vm1667, %v1989, 0
        %v2041 = vsel %vm1667, %v1990, 0
        %v2044 = vsel %vm1667, %v1991, 0
        %v2047 = vsel %vm1667, %v1992, 0
        %v2050 = vsel %vm1667, %v1993, 0
        %v2053 = vsel %vm1667, %v1994, 0
        %2055 = vmatprep.subr.bf16.mxu0 0
        %2056 = vmatpush1.bf16.msra.mxu0 %v2003
        %2057 = vmatprep.subr.bf16.mxu0 0
        %2058 = vmatpush1.bf16.msra.mxu0 %v2004
        %2059 = vmatprep.subr.bf16.mxu0 0
        %2060 = vmatpush1.bf16.msra.mxu0 0
        %2061 = vmatprep.subr.bf16.mxu0 0
        %2062 = vmatpush1.bf16.msra.mxu0 0
        %2063 = vmatprep.subr.bf16.mxu0 0
        %2064 = vmatpush1.bf16.msra.mxu0 0
        %2065 = vmatprep.subr.bf16.mxu0 0
        %2066 = vmatpush1.bf16.msra.mxu0 0
        %2067 = vmatprep.subr.bf16.mxu0 0
        %2068 = vmatpush1.bf16.msra.mxu0 0
        %2069 = vmatprep.subr.bf16.mxu0 0
        %2070 = vmatpush1.bf16.msra.mxu0 0
        %2071 = vmatprep.subr.bf16.mxu0 0
        %2072 = vmatpush1.bf16.msra.mxu0 0
        %2073 = vmatprep.subr.bf16.mxu0 0
        %2074 = vmatpush1.bf16.msra.mxu0 0
        %2075 = vmatprep.subr.bf16.mxu0 0
        %2076 = vmatpush1.bf16.msra.mxu0 0
        %2077 = vmatprep.subr.bf16.mxu0 0
        %2078 = vmatpush1.bf16.msra.mxu0 0
        %2079 = vmatprep.subr.bf16.mxu0 0
        %2080 = vmatpush1.bf16.msra.mxu0 0
        %2081 = vmatprep.subr.bf16.mxu0 0
        %2082 = vmatpush1.bf16.msra.mxu0 0
        %2083 = vmatprep.subr.bf16.mxu0 0
        %2084 = vmatpush1.bf16.msra.mxu0 0
        %2085 = vmatprep.subr.bf16.mxu0 0
        %2086 = vmatpush1.bf16.msra.mxu0 0
        %2087 = vmatprep.mubr.bf16.mxu0 0
        %2088 = vmatmul.mubr.bf16.gmra.mrb[0].mxu0 %v2008
        %v2089 = vpop.f32.mrb[0].mxu0
        %v2090 = vadd.f32 0.0, %v2089
        %v2091 = vpop.f32.mrb[0].mxu0
        %v2092 = vpop.f32.mrb[0].mxu0
        %v2093 = vadd.f32 0.0, %v2092
        %v2094 = vpop.f32.mrb[0].mxu0
        %2095 = vmatprep.mubr.bf16.mxu0 0
        %2096 = vmatmul.mubr.bf16.gmra.mrb[0].mxu0 %v2011
        %v2097 = vpop.f32.mrb[0].mxu0
        %v2098 = vadd.f32 0.0, %v2097
        %v2099 = vpop.f32.mrb[0].mxu0
        %v2100 = vpop.f32.mrb[0].mxu0
        %v2101 = vadd.f32 0.0, %v2100
        %v2102 = vpop.f32.mrb[0].mxu0
        %2103 = vmatprep.mubr.bf16.mxu0 0
        %2104 = vmatmul.mubr.bf16.gmra.mrb[0].mxu0 %v2014
        %v2105 = vpop.f32.mrb[0].mxu0
        %v2106 = vadd.f32 0.0, %v2105
        %v2107 = vpop.f32.mrb[0].mxu0
        %v2108 = vpop.f32.mrb[0].mxu0
        %v2109 = vadd.f32 0.0, %v2108
        %v2110 = vpop.f32.mrb[0].mxu0
        %2111 = vmatprep.mubr.bf16.mxu0 0
        %2112 = vmatmul.mubr.bf16.gmra.mrb[0].mxu0 %v2017
        %v2113 = vpop.f32.mrb[0].mxu0
        %v2114 = vadd.f32 0.0, %v2113
        %v2115 = vpop.f32.mrb[0].mxu0
        %v2116 = vpop.f32.mrb[0].mxu0
        %v2117 = vadd.f32 0.0, %v2116
        %v2118 = vpop.f32.mrb[0].mxu0
        %2119 = vmatprep.mubr.bf16.mxu0 0
        %2120 = vmatmul.mubr.bf16.gmra.mrb[0].mxu0 %v2020
        %v2121 = vpop.f32.mrb[0].mxu0
        %v2122 = vadd.f32 0.0, %v2121
        %v2123 = vpop.f32.mrb[0].mxu0
        %v2124 = vpop.f32.mrb[0].mxu0
        %v2125 = vadd.f32 0.0, %v2124
        %v2126 = vpop.f32.mrb[0].mxu0
        %2127 = vmatprep.mubr.bf16.mxu0 0
        %2128 = vmatmul.mubr.bf16.gmra.mrb[0].mxu0 %v2023
        %v2129 = vpop.f32.mrb[0].mxu0
        %v2130 = vadd.f32 0.0, %v2129
        %v2131 = vpop.f32.mrb[0].mxu0
        %v2132 = vpop.f32.mrb[0].mxu0
        %v2133 = vadd.f32 0.0, %v2132
        %v2134 = vpop.f32.mrb[0].mxu0
        %2135 = vmatprep.mubr.bf16.mxu0 0
        %2136 = vmatmul.mubr.bf16.gmra.mrb[0].mxu0 %v2026
        %v2137 = vpop.f32.mrb[0].mxu0
        %v2138 = vadd.f32 0.0, %v2137
        %v2139 = vpop.f32.mrb[0].mxu0
        %v2140 = vpop.f32.mrb[0].mxu0
        %v2141 = vadd.f32 0.0, %v2140
        %v2142 = vpop.f32.mrb[0].mxu0
        %2143 = vmatprep.mubr.bf16.mxu0 0
        %2144 = vmatmul.mubr.bf16.gmra.mrb[0].mxu0 %v2029
        %v2145 = vpop.f32.mrb[0].mxu0
        %v2146 = vadd.f32 0.0, %v2145
        %v2147 = vpop.f32.mrb[0].mxu0
        %v2148 = vpop.f32.mrb[0].mxu0
        %v2149 = vadd.f32 0.0, %v2148
        %v2150 = vpop.f32.mrb[0].mxu0
        %2151 = vmatprep.mubr.bf16.mxu0 0
        %2152 = vmatmul.mubr.bf16.gmra.mrb[0].mxu0 %v2032
        %v2153 = vpop.f32.mrb[0].mxu0
        %v2154 = vadd.f32 0.0, %v2153
        %v2155 = vpop.f32.mrb[0].mxu0
        %v2156 = vpop.f32.mrb[0].mxu0
        %v2157 = vadd.f32 0.0, %v2156
        %v2158 = vpop.f32.mrb[0].mxu0
        %2159 = vmatprep.mubr.bf16.mxu0 0
        %2160 = vmatmul.mubr.bf16.gmra.mrb[0].mxu0 %v2035
        %v2161 = vpop.f32.mrb[0].mxu0
        %v2162 = vadd.f32 0.0, %v2161
        %v2163 = vpop.f32.mrb[0].mxu0
        %v2164 = vpop.f32.mrb[0].mxu0
        %v2165 = vadd.f32 0.0, %v2164
        %v2166 = vpop.f32.mrb[0].mxu0
        %2167 = vmatprep.mubr.bf16.mxu0 0
        %2168 = vmatmul.mubr.bf16.gmra.mrb[0].mxu0 %v2038
        %v2169 = vpop.f32.mrb[0].mxu0
        %v2170 = vadd.f32 0.0, %v2169
        %v2171 = vpop.f32.mrb[0].mxu0
        %v2172 = vpop.f32.mrb[0].mxu0
        %v2173 = vadd.f32 0.0, %v2172
        %v2174 = vpop.f32.mrb[0].mxu0
        %2175 = vmatprep.mubr.bf16.mxu0 0
        %2176 = vmatmul.mubr.bf16.gmra.mrb[0].mxu0 %v2041
        %v2177 = vpop.f32.mrb[0].mxu0
        %v2178 = vadd.f32 0.0, %v2177
        %v2179 = vpop.f32.mrb[0].mxu0
        %v2180 = vpop.f32.mrb[0].mxu0
        %v2181 = vadd.f32 0.0, %v2180
        %v2182 = vpop.f32.mrb[0].mxu0
        %2183 = vmatprep.mubr.bf16.mxu0 0
        %2184 = vmatmul.mubr.bf16.gmra.mrb[0].mxu0 %v2044
        %v2185 = vpop.f32.mrb[0].mxu0
        %v2186 = vadd.f32 0.0, %v2185
        %v2187 = vpop.f32.mrb[0].mxu0
        %v2188 = vpop.f32.mrb[0].mxu0
        %v2189 = vadd.f32 0.0, %v2188
        %v2190 = vpop.f32.mrb[0].mxu0
        %2191 = vmatprep.mubr.bf16.mxu0 0
        %2192 = vmatmul.mubr.bf16.gmra.mrb[0].mxu0 %v2047
        %v2193 = vpop.f32.mrb[0].mxu0
        %v2194 = vadd.f32 0.0, %v2193
        %v2195 = vpop.f32.mrb[0].mxu0
        %v2196 = vpop.f32.mrb[0].mxu0
        %v2197 = vadd.f32 0.0, %v2196
        %v2198 = vpop.f32.mrb[0].mxu0
        %2199 = vmatprep.mubr.bf16.mxu0 0
        %2200 = vmatmul.mubr.bf16.gmra.mrb[0].mxu0 %v2050
        %v2201 = vpop.f32.mrb[0].mxu0
        %v2202 = vadd.f32 0.0, %v2201
        %v2203 = vpop.f32.mrb[0].mxu0
        %v2204 = vpop.f32.mrb[0].mxu0
        %v2205 = vadd.f32 0.0, %v2204
        %v2206 = vpop.f32.mrb[0].mxu0
        %2207 = vmatprep.mubr.bf16.mxu0 0
        %2208 = vmatmul.mubr.bf16.gmra.mrb[0].mxu0 %v2053
        %v2209 = vpop.f32.mrb[0].mxu0
        %v2210 = vadd.f32 0.0, %v2209
        %v2211 = vpop.f32.mrb[0].mxu0
        %v2212 = vpop.f32.mrb[0].mxu0
        %v2213 = vadd.f32 0.0, %v2212
        %v2214 = vpop.f32.mrb[0].mxu0
        %2215 = vdwg.mxu0
        %v2216 = vadd.f32 %v1751, %v2090
        %v2217 = vadd.f32 %v1754, %v2093
        %v2218 = vadd.f32 %v1759, %v2098
        %v2219 = vadd.f32 %v1762, %v2101
        %v2220 = vadd.f32 %v1767, %v2106
        %v2221 = vadd.f32 %v1770, %v2109
        %v2222 = vadd.f32 %v1775, %v2114
        %v2223 = vadd.f32 %v1778, %v2117
        %v2224 = vadd.f32 %v1783, %v2122
        %v2225 = vadd.f32 %v1786, %v2125
        %v2226 = vadd.f32 %v1791, %v2130
        %v2227 = vadd.f32 %v1794, %v2133
        %v2228 = vadd.f32 %v1799, %v2138
        %v2229 = vadd.f32 %v1802, %v2141
        %v2230 = vadd.f32 %v1807, %v2146
        %v2231 = vadd.f32 %v1810, %v2149
        %v2232 = vadd.f32 %v1815, %v2154
        %v2233 = vadd.f32 %v1818, %v2157
        %v2234 = vadd.f32 %v1823, %v2162
        %v2235 = vadd.f32 %v1826, %v2165
        %v2236 = vadd.f32 %v1831, %v2170
        %v2237 = vadd.f32 %v1834, %v2173
        %v2238 = vadd.f32 %v1839, %v2178
        %v2239 = vadd.f32 %v1842, %v2181
        %v2240 = vadd.f32 %v1847, %v2186
        %v2241 = vadd.f32 %v1850, %v2189
        %v2242 = vadd.f32 %v1855, %v2194
        %v2243 = vadd.f32 %v1858, %v2197
        %v2244 = vadd.f32 %v1863, %v2202
        %v2245 = vadd.f32 %v1866, %v2205
        %v2246 = vadd.f32 %v1871, %v2210
        %v2247 = vadd.f32 %v1874, %v2213
        %s2248 = scalar_lea.vmem %s1154, 144 [#allocation3]
        %v2249 = vld [vmem:[%s2248] sm:$0xf]
        %v2250 = vld [vmem:[%s2248 + $0x4] sm:$0xf]
        %v2251 = vld [vmem:[%s2248 + $0x8] sm:$0xf]
        %v2252 = vld [vmem:[%s2248 + $0xc] sm:$0xf]
        %v2253 = vld [vmem:[%s2248 + $0x10] sm:$0xf]
        %v2254 = vld [vmem:[%s2248 + $0x14] sm:$0xf]
        %v2255 = vld [vmem:[%s2248 + $0x18] sm:$0xf]
        %v2256 = vld [vmem:[%s2248 + $0x1c] sm:$0xf]
        %v2257 = vld [vmem:[%s2248 + $0x20] sm:$0xf]
        %v2258 = vld [vmem:[%s2248 + $0x24] sm:$0xf]
        %v2259 = vld [vmem:[%s2248 + $0x28] sm:$0xf]
        %v2260 = vld [vmem:[%s2248 + $0x2c] sm:$0xf]
        %v2261 = vld [vmem:[%s2248 + $0x30] sm:$0xf]
        %v2262 = vld [vmem:[%s2248 + $0x34] sm:$0xf]
        %v2263 = vld [vmem:[%s2248 + $0x38] sm:$0xf]
        %v2264 = vld [vmem:[%s2248 + $0x3c] sm:$0xf]
        %v2265 = vld [vmem:[%s2248 + $0x40] sm:$0xf]
        %v2266 = vld [vmem:[%s2248 + $0x44] sm:$0xf]
        %v2267 = vld [vmem:[%s2248 + $0x48] sm:$0xf]
        %v2268 = vld [vmem:[%s2248 + $0x4c] sm:$0xf]
        %v2269 = vld [vmem:[%s2248 + $0x50] sm:$0xf]
        %v2270 = vld [vmem:[%s2248 + $0x54] sm:$0xf]
        %v2271 = vld [vmem:[%s2248 + $0x58] sm:$0xf]
        %v2272 = vld [vmem:[%s2248 + $0x5c] sm:$0xf]
        %v2273 = vld [vmem:[%s2248 + $0x60] sm:$0xf]
        %v2274 = vld [vmem:[%s2248 + $0x64] sm:$0xf]
        %v2275 = vld [vmem:[%s2248 + $0x68] sm:$0xf]
        %v2276 = vld [vmem:[%s2248 + $0x6c] sm:$0xf]
        %v2277 = vld [vmem:[%s2248 + $0x70] sm:$0xf]
        %v2278 = vld [vmem:[%s2248 + $0x74] sm:$0xf]
        %v2279 = vld [vmem:[%s2248 + $0x78] sm:$0xf]
        %v2280 = vld [vmem:[%s2248 + $0x7c] sm:$0xf]
        %s2281 = scalar_lea.vmem %s3, 32
        %v2282 = vld [vmem:[%s2281] sm:$0xf]
        %v2283 = vld [vmem:[%s2281 + $0x4] sm:$0xf]
        %v2284 = vld [vmem:[%s2281 + $0x8] sm:$0xf]
        %v2285 = vld [vmem:[%s2281 + $0xc] sm:$0xf]
        %v2286 = vld [vmem:[%s2281 + $0x10] sm:$0xf]
        %v2287 = vld [vmem:[%s2281 + $0x14] sm:$0xf]
        %v2288 = vld [vmem:[%s2281 + $0x18] sm:$0xf]
        %v2289 = vld [vmem:[%s2281 + $0x1c] sm:$0xf]
        %v2322 = vunpack.c.l.b16 %v2249
        %v2323 = vunpack.c.l.b16 %v2250
        %v2324 = vunpack.c.l.b16 %v2251
        %v2325 = vunpack.c.l.b16 %v2252
        %v2326 = vunpack.c.l.b16 %v2253
        %v2327 = vunpack.c.l.b16 %v2254
        %v2328 = vunpack.c.l.b16 %v2255
        %v2329 = vunpack.c.l.b16 %v2256
        %v2330 = vunpack.c.l.b16 %v2257
        %v2331 = vunpack.c.l.b16 %v2258
        %v2332 = vunpack.c.l.b16 %v2259
        %v2333 = vunpack.c.l.b16 %v2260
        %v2334 = vunpack.c.l.b16 %v2261
        %v2335 = vunpack.c.l.b16 %v2262
        %v2336 = vunpack.c.l.b16 %v2263
        %v2337 = vunpack.c.l.b16 %v2264
        %v2338 = vunpack.c.l.b16 %v2265
        %v2339 = vunpack.c.l.b16 %v2266
        %v2340 = vunpack.c.l.b16 %v2267
        %v2341 = vunpack.c.l.b16 %v2268
        %v2342 = vunpack.c.l.b16 %v2269
        %v2343 = vunpack.c.l.b16 %v2270
        %v2344 = vunpack.c.l.b16 %v2271
        %v2345 = vunpack.c.l.b16 %v2272
        %v2346 = vunpack.c.l.b16 %v2273
        %v2347 = vunpack.c.l.b16 %v2274
        %v2348 = vunpack.c.l.b16 %v2275
        %v2349 = vunpack.c.l.b16 %v2276
        %v2350 = vunpack.c.l.b16 %v2277
        %v2351 = vunpack.c.l.b16 %v2278
        %v2352 = vunpack.c.l.b16 %v2279
        %v2353 = vunpack.c.l.b16 %v2280
        %v2354 = vpack.c.b16 %v2323, %v2322
        %v2355 = vpack.c.b16 %v2325, %v2324
        %v2356 = vpack.c.b16 %v2327, %v2326
        %v2357 = vpack.c.b16 %v2329, %v2328
        %v2358 = vpack.c.b16 %v2331, %v2330
        %v2359 = vpack.c.b16 %v2333, %v2332
        %v2360 = vpack.c.b16 %v2335, %v2334
        %v2361 = vpack.c.b16 %v2337, %v2336
        %v2362 = vpack.c.b16 %v2339, %v2338
        %v2363 = vpack.c.b16 %v2341, %v2340
        %v2364 = vpack.c.b16 %v2343, %v2342
        %v2365 = vpack.c.b16 %v2345, %v2344
        %v2366 = vpack.c.b16 %v2347, %v2346
        %v2367 = vpack.c.b16 %v2349, %v2348
        %v2368 = vpack.c.b16 %v2351, %v2350
        %v2369 = vpack.c.b16 %v2353, %v2352
        %v2378 = vunpack.c.l.b16 %v2282
        %v2379 = vunpack.c.l.b16 %v2283
        %v2380 = vunpack.c.l.b16 %v2284
        %v2381 = vunpack.c.l.b16 %v2285
        %v2382 = vunpack.c.l.b16 %v2286
        %v2383 = vunpack.c.l.b16 %v2287
        %v2384 = vunpack.c.l.b16 %v2288
        %v2385 = vunpack.c.l.b16 %v2289
        %v2386 = vpack.c.b16 %v2379, %v2378
        %v2387 = vpack.c.b16 %v2381, %v2380
        %v2388 = vpack.c.b16 %v2383, %v2382
        %v2389 = vpack.c.b16 %v2385, %v2384
        %v2395 = vsel %vm1365, %v2354, 0
        %v2398 = vsel %vm1365, %v2355, 0
        %v2401 = vsel %vm1365, %v2356, 0
        %v2404 = vsel %vm1365, %v2357, 0
        %v2407 = vsel %vm1365, %v2358, 0
        %v2410 = vsel %vm1365, %v2359, 0
        %v2413 = vsel %vm1365, %v2360, 0
        %v2416 = vsel %vm1365, %v2361, 0
        %v2419 = vsel %vm1365, %v2362, 0
        %v2422 = vsel %vm1365, %v2363, 0
        %v2425 = vsel %vm1365, %v2364, 0
        %v2428 = vsel %vm1365, %v2365, 0
        %v2431 = vsel %vm1365, %v2366, 0
        %v2434 = vsel %vm1365, %v2367, 0
        %v2437 = vsel %vm1365, %v2368, 0
        %v2440 = vsel %vm1365, %v2369, 0
        %2442 = vmatprep.subr.bf16.mxu0 0
        %2443 = vmatpush1.bf16.msra.mxu0 %v2386
        %2444 = vmatprep.subr.bf16.mxu0 0
        %2445 = vmatpush1.bf16.msra.mxu0 %v2387
        %2446 = vmatprep.subr.bf16.mxu0 0
        %2447 = vmatpush1.bf16.msra.mxu0 %v2388
        %2448 = vmatprep.subr.bf16.mxu0 0
        %2449 = vmatpush1.bf16.msra.mxu0 %v2389
        %2450 = vmatprep.subr.bf16.mxu0 0
        %2451 = vmatpush1.bf16.msra.mxu0 0
        %2452 = vmatprep.subr.bf16.mxu0 0
        %2453 = vmatpush1.bf16.msra.mxu0 0
        %2454 = vmatprep.subr.bf16.mxu0 0
        %2455 = vmatpush1.bf16.msra.mxu0 0
        %2456 = vmatprep.subr.bf16.mxu0 0
        %2457 = vmatpush1.bf16.msra.mxu0 0
        %2458 = vmatprep.subr.bf16.mxu0 0
        %2459 = vmatpush1.bf16.msra.mxu0 0
        %2460 = vmatprep.subr.bf16.mxu0 0
        %2461 = vmatpush1.bf16.msra.mxu0 0
        %2462 = vmatprep.subr.bf16.mxu0 0
        %2463 = vmatpush1.bf16.msra.mxu0 0
        %2464 = vmatprep.subr.bf16.mxu0 0
        %2465 = vmatpush1.bf16.msra.mxu0 0
        %2466 = vmatprep.subr.bf16.mxu0 0
        %2467 = vmatpush1.bf16.msra.mxu0 0
        %2468 = vmatprep.subr.bf16.mxu0 0
        %2469 = vmatpush1.bf16.msra.mxu0 0
        %2470 = vmatprep.subr.bf16.mxu0 0
        %2471 = vmatpush1.bf16.msra.mxu0 0
        %2472 = vmatprep.subr.bf16.mxu0 0
        %2473 = vmatpush1.bf16.msra.mxu0 0
        %2474 = vmatprep.mubr.bf16.mxu0 0
        %2475 = vmatmul.mubr.bf16.gmra.mrb[0].mxu0 %v2395
        %v2476 = vpop.f32.mrb[0].mxu0
        %v2477 = vadd.f32 0.0, %v2476
        %v2478 = vpop.f32.mrb[0].mxu0
        %v2479 = vpop.f32.mrb[0].mxu0
        %v2480 = vadd.f32 0.0, %v2479
        %v2481 = vpop.f32.mrb[0].mxu0
        %2482 = vmatprep.mubr.bf16.mxu0 0
        %2483 = vmatmul.mubr.bf16.gmra.mrb[0].mxu0 %v2398
        %v2484 = vpop.f32.mrb[0].mxu0
        %v2485 = vadd.f32 0.0, %v2484
        %v2486 = vpop.f32.mrb[0].mxu0
        %v2487 = vpop.f32.mrb[0].mxu0
        %v2488 = vadd.f32 0.0, %v2487
        %v2489 = vpop.f32.mrb[0].mxu0
        %2490 = vmatprep.mubr.bf16.mxu0 0
        %2491 = vmatmul.mubr.bf16.gmra.mrb[0].mxu0 %v2401
        %v2492 = vpop.f32.mrb[0].mxu0
        %v2493 = vadd.f32 0.0, %v2492
        %v2494 = vpop.f32.mrb[0].mxu0
        %v2495 = vpop.f32.mrb[0].mxu0
        %v2496 = vadd.f32 0.0, %v2495
        %v2497 = vpop.f32.mrb[0].mxu0
        %2498 = vmatprep.mubr.bf16.mxu0 0
        %2499 = vmatmul.mubr.bf16.gmra.mrb[0].mxu0 %v2404
        %v2500 = vpop.f32.mrb[0].mxu0
        %v2501 = vadd.f32 0.0, %v2500
        %v2502 = vpop.f32.mrb[0].mxu0
        %v2503 = vpop.f32.mrb[0].mxu0
        %v2504 = vadd.f32 0.0, %v2503
        %v2505 = vpop.f32.mrb[0].mxu0
        %2506 = vmatprep.mubr.bf16.mxu0 0
        %2507 = vmatmul.mubr.bf16.gmra.mrb[0].mxu0 %v2407
        %v2508 = vpop.f32.mrb[0].mxu0
        %v2509 = vadd.f32 0.0, %v2508
        %v2510 = vpop.f32.mrb[0].mxu0
        %v2511 = vpop.f32.mrb[0].mxu0
        %v2512 = vadd.f32 0.0, %v2511
        %v2513 = vpop.f32.mrb[0].mxu0
        %2514 = vmatprep.mubr.bf16.mxu0 0
        %2515 = vmatmul.mubr.bf16.gmra.mrb[0].mxu0 %v2410
        %v2516 = vpop.f32.mrb[0].mxu0
        %v2517 = vadd.f32 0.0, %v2516
        %v2518 = vpop.f32.mrb[0].mxu0
        %v2519 = vpop.f32.mrb[0].mxu0
        %v2520 = vadd.f32 0.0, %v2519
        %v2521 = vpop.f32.mrb[0].mxu0
        %2522 = vmatprep.mubr.bf16.mxu0 0
        %2523 = vmatmul.mubr.bf16.gmra.mrb[0].mxu0 %v2413
        %v2524 = vpop.f32.mrb[0].mxu0
        %v2525 = vadd.f32 0.0, %v2524
        %v2526 = vpop.f32.mrb[0].mxu0
        %v2527 = vpop.f32.mrb[0].mxu0
        %v2528 = vadd.f32 0.0, %v2527
        %v2529 = vpop.f32.mrb[0].mxu0
        %2530 = vmatprep.mubr.bf16.mxu0 0
        %2531 = vmatmul.mubr.bf16.gmra.mrb[0].mxu0 %v2416
        %v2532 = vpop.f32.mrb[0].mxu0
        %v2533 = vadd.f32 0.0, %v2532
        %v2534 = vpop.f32.mrb[0].mxu0
        %v2535 = vpop.f32.mrb[0].mxu0
        %v2536 = vadd.f32 0.0, %v2535
        %v2537 = vpop.f32.mrb[0].mxu0
        %2538 = vmatprep.mubr.bf16.mxu0 0
        %2539 = vmatmul.mubr.bf16.gmra.mrb[0].mxu0 %v2419
        %v2540 = vpop.f32.mrb[0].mxu0
        %v2541 = vadd.f32 0.0, %v2540
        %v2542 = vpop.f32.mrb[0].mxu0
        %v2543 = vpop.f32.mrb[0].mxu0
        %v2544 = vadd.f32 0.0, %v2543
        %v2545 = vpop.f32.mrb[0].mxu0
        %2546 = vmatprep.mubr.bf16.mxu0 0
        %2547 = vmatmul.mubr.bf16.gmra.mrb[0].mxu0 %v2422
        %v2548 = vpop.f32.mrb[0].mxu0
        %v2549 = vadd.f32 0.0, %v2548
        %v2550 = vpop.f32.mrb[0].mxu0
        %v2551 = vpop.f32.mrb[0].mxu0
        %v2552 = vadd.f32 0.0, %v2551
        %v2553 = vpop.f32.mrb[0].mxu0
        %2554 = vmatprep.mubr.bf16.mxu0 0
        %2555 = vmatmul.mubr.bf16.gmra.mrb[0].mxu0 %v2425
        %v2556 = vpop.f32.mrb[0].mxu0
        %v2557 = vadd.f32 0.0, %v2556
        %v2558 = vpop.f32.mrb[0].mxu0
        %v2559 = vpop.f32.mrb[0].mxu0
        %v2560 = vadd.f32 0.0, %v2559
        %v2561 = vpop.f32.mrb[0].mxu0
        %2562 = vmatprep.mubr.bf16.mxu0 0
        %2563 = vmatmul.mubr.bf16.gmra.mrb[0].mxu0 %v2428
        %v2564 = vpop.f32.mrb[0].mxu0
        %v2565 = vadd.f32 0.0, %v2564
        %v2566 = vpop.f32.mrb[0].mxu0
        %v2567 = vpop.f32.mrb[0].mxu0
        %v2568 = vadd.f32 0.0, %v2567
        %v2569 = vpop.f32.mrb[0].mxu0
        %2570 = vmatprep.mubr.bf16.mxu0 0
        %2571 = vmatmul.mubr.bf16.gmra.mrb[0].mxu0 %v2431
        %v2572 = vpop.f32.mrb[0].mxu0
        %v2573 = vadd.f32 0.0, %v2572
        %v2574 = vpop.f32.mrb[0].mxu0
        %v2575 = vpop.f32.mrb[0].mxu0
        %v2576 = vadd.f32 0.0, %v2575
        %v2577 = vpop.f32.mrb[0].mxu0
        %2578 = vmatprep.mubr.bf16.mxu0 0
        %2579 = vmatmul.mubr.bf16.gmra.mrb[0].mxu0 %v2434
        %v2580 = vpop.f32.mrb[0].mxu0
        %v2581 = vadd.f32 0.0, %v2580
        %v2582 = vpop.f32.mrb[0].mxu0
        %v2583 = vpop.f32.mrb[0].mxu0
        %v2584 = vadd.f32 0.0, %v2583
        %v2585 = vpop.f32.mrb[0].mxu0
        %2586 = vmatprep.mubr.bf16.mxu0 0
        %2587 = vmatmul.mubr.bf16.gmra.mrb[0].mxu0 %v2437
        %v2588 = vpop.f32.mrb[0].mxu0
        %v2589 = vadd.f32 0.0, %v2588
        %v2590 = vpop.f32.mrb[0].mxu0
        %v2591 = vpop.f32.mrb[0].mxu0
        %v2592 = vadd.f32 0.0, %v2591
        %v2593 = vpop.f32.mrb[0].mxu0
        %2594 = vmatprep.mubr.bf16.mxu0 0
        %2595 = vmatmul.mubr.bf16.gmra.mrb[0].mxu0 %v2440
        %v2596 = vpop.f32.mrb[0].mxu0
        %v2597 = vadd.f32 0.0, %v2596
        %v2598 = vpop.f32.mrb[0].mxu0
        %v2599 = vpop.f32.mrb[0].mxu0
        %v2600 = vadd.f32 0.0, %v2599
        %v2601 = vpop.f32.mrb[0].mxu0
        %2602 = vdwg.mxu0
        %v2603 = vadd.f32 %v2216, %v2477
        %v2604 = vadd.f32 %v2217, %v2480
        %v2605 = vadd.f32 %v2218, %v2485
        %v2606 = vadd.f32 %v2219, %v2488
        %v2607 = vadd.f32 %v2220, %v2493
        %v2608 = vadd.f32 %v2221, %v2496
        %v2609 = vadd.f32 %v2222, %v2501
        %v2610 = vadd.f32 %v2223, %v2504
        %v2611 = vadd.f32 %v2224, %v2509
        %v2612 = vadd.f32 %v2225, %v2512
        %v2613 = vadd.f32 %v2226, %v2517
        %v2614 = vadd.f32 %v2227, %v2520
        %v2615 = vadd.f32 %v2228, %v2525
        %v2616 = vadd.f32 %v2229, %v2528
        %v2617 = vadd.f32 %v2230, %v2533
        %v2618 = vadd.f32 %v2231, %v2536
        %v2619 = vadd.f32 %v2232, %v2541
        %v2620 = vadd.f32 %v2233, %v2544
        %v2621 = vadd.f32 %v2234, %v2549
        %v2622 = vadd.f32 %v2235, %v2552
        %v2623 = vadd.f32 %v2236, %v2557
        %v2624 = vadd.f32 %v2237, %v2560
        %v2625 = vadd.f32 %v2238, %v2565
        %v2626 = vadd.f32 %v2239, %v2568
        %v2627 = vadd.f32 %v2240, %v2573
        %v2628 = vadd.f32 %v2241, %v2576
        %v2629 = vadd.f32 %v2242, %v2581
        %v2630 = vadd.f32 %v2243, %v2584
        %v2631 = vadd.f32 %v2244, %v2589
        %v2632 = vadd.f32 %v2245, %v2592
        %v2633 = vadd.f32 %v2246, %v2597
        %v2634 = vadd.f32 %v2247, %v2600
        %s2635 = scalar_lea.vmem %s1147, 288 [#allocation2]
        %v2636 = vld [vmem:[%s2635] sm:$0xf]
        %v2637 = vld [vmem:[%s2635 + $0x4] sm:$0xf]
        %v2638 = vld [vmem:[%s2635 + $0x8] sm:$0xf]
        %v2639 = vld [vmem:[%s2635 + $0xc] sm:$0xf]
        %v2640 = vld [vmem:[%s2635 + $0x10] sm:$0xf]
        %v2641 = vld [vmem:[%s2635 + $0x14] sm:$0xf]
        %v2642 = vld [vmem:[%s2635 + $0x18] sm:$0xf]
        %v2643 = vld [vmem:[%s2635 + $0x1c] sm:$0xf]
        %v2644 = vld [vmem:[%s2635 + $0x20] sm:$0xf]
        %v2645 = vld [vmem:[%s2635 + $0x24] sm:$0xf]
        %v2646 = vld [vmem:[%s2635 + $0x28] sm:$0xf]
        %v2647 = vld [vmem:[%s2635 + $0x2c] sm:$0xf]
        %v2648 = vld [vmem:[%s2635 + $0x30] sm:$0xf]
        %v2649 = vld [vmem:[%s2635 + $0x34] sm:$0xf]
        %v2650 = vld [vmem:[%s2635 + $0x38] sm:$0xf]
        %v2651 = vld [vmem:[%s2635 + $0x3c] sm:$0xf]
        %v2652 = vld [vmem:[%s2635 + $0x40] sm:$0xf]
        %v2653 = vld [vmem:[%s2635 + $0x44] sm:$0xf]
        %v2654 = vld [vmem:[%s2635 + $0x48] sm:$0xf]
        %v2655 = vld [vmem:[%s2635 + $0x4c] sm:$0xf]
        %v2656 = vld [vmem:[%s2635 + $0x50] sm:$0xf]
        %v2657 = vld [vmem:[%s2635 + $0x54] sm:$0xf]
        %v2658 = vld [vmem:[%s2635 + $0x58] sm:$0xf]
        %v2659 = vld [vmem:[%s2635 + $0x5c] sm:$0xf]
        %v2660 = vld [vmem:[%s2635 + $0x60] sm:$0xf]
        %v2661 = vld [vmem:[%s2635 + $0x64] sm:$0xf]
        %v2662 = vld [vmem:[%s2635 + $0x68] sm:$0xf]
        %v2663 = vld [vmem:[%s2635 + $0x6c] sm:$0xf]
        %v2664 = vld [vmem:[%s2635 + $0x70] sm:$0xf]
        %v2665 = vld [vmem:[%s2635 + $0x74] sm:$0xf]
        %v2666 = vld [vmem:[%s2635 + $0x78] sm:$0xf]
        %v2667 = vld [vmem:[%s2635 + $0x7c] sm:$0xf]
        %s2668 = scalar_lea.vmem %s1, 32
        %v2669 = vld [vmem:[%s2668] sm:$0xf]
        %v2670 = vld [vmem:[%s2668 + $0x4] sm:$0xf]
        %v2671 = vld [vmem:[%s2668 + $0x8] sm:$0xf]
        %v2672 = vld [vmem:[%s2668 + $0xc] sm:$0xf]
        %v2705 = vunpack.c.l.b16 %v2636
        %v2706 = vunpack.c.l.b16 %v2637
        %v2707 = vunpack.c.l.b16 %v2638
        %v2708 = vunpack.c.l.b16 %v2639
        %v2709 = vunpack.c.l.b16 %v2640
        %v2710 = vunpack.c.l.b16 %v2641
        %v2711 = vunpack.c.l.b16 %v2642
        %v2712 = vunpack.c.l.b16 %v2643
        %v2713 = vunpack.c.l.b16 %v2644
        %v2714 = vunpack.c.l.b16 %v2645
        %v2715 = vunpack.c.l.b16 %v2646
        %v2716 = vunpack.c.l.b16 %v2647
        %v2717 = vunpack.c.l.b16 %v2648
        %v2718 = vunpack.c.l.b16 %v2649
        %v2719 = vunpack.c.l.b16 %v2650
        %v2720 = vunpack.c.l.b16 %v2651
        %v2721 = vunpack.c.l.b16 %v2652
        %v2722 = vunpack.c.l.b16 %v2653
        %v2723 = vunpack.c.l.b16 %v2654
        %v2724 = vunpack.c.l.b16 %v2655
        %v2725 = vunpack.c.l.b16 %v2656
        %v2726 = vunpack.c.l.b16 %v2657
        %v2727 = vunpack.c.l.b16 %v2658
        %v2728 = vunpack.c.l.b16 %v2659
        %v2729 = vunpack.c.l.b16 %v2660
        %v2730 = vunpack.c.l.b16 %v2661
        %v2731 = vunpack.c.l.b16 %v2662
        %v2732 = vunpack.c.l.b16 %v2663
        %v2733 = vunpack.c.l.b16 %v2664
        %v2734 = vunpack.c.l.b16 %v2665
        %v2735 = vunpack.c.l.b16 %v2666
        %v2736 = vunpack.c.l.b16 %v2667
        %v2737 = vpack.c.b16 %v2706, %v2705
        %v2738 = vpack.c.b16 %v2708, %v2707
        %v2739 = vpack.c.b16 %v2710, %v2709
        %v2740 = vpack.c.b16 %v2712, %v2711
        %v2741 = vpack.c.b16 %v2714, %v2713
        %v2742 = vpack.c.b16 %v2716, %v2715
        %v2743 = vpack.c.b16 %v2718, %v2717
        %v2744 = vpack.c.b16 %v2720, %v2719
        %v2745 = vpack.c.b16 %v2722, %v2721
        %v2746 = vpack.c.b16 %v2724, %v2723
        %v2747 = vpack.c.b16 %v2726, %v2725
        %v2748 = vpack.c.b16 %v2728, %v2727
        %v2749 = vpack.c.b16 %v2730, %v2729
        %v2750 = vpack.c.b16 %v2732, %v2731
        %v2751 = vpack.c.b16 %v2734, %v2733
        %v2752 = vpack.c.b16 %v2736, %v2735
        %v2757 = vunpack.c.l.b16 %v2669
        %v2758 = vunpack.c.l.b16 %v2670
        %v2759 = vunpack.c.l.b16 %v2671
        %v2760 = vunpack.c.l.b16 %v2672
        %v2761 = vpack.c.b16 %v2758, %v2757
        %v2762 = vpack.c.b16 %v2760, %v2759
        %v2766 = vsel %vm1667, %v2737, 0
        %v2769 = vsel %vm1667, %v2738, 0
        %v2772 = vsel %vm1667, %v2739, 0
        %v2775 = vsel %vm1667, %v2740, 0
        %v2778 = vsel %vm1667, %v2741, 0
        %v2781 = vsel %vm1667, %v2742, 0
        %v2784 = vsel %vm1667, %v2743, 0
        %v2787 = vsel %vm1667, %v2744, 0
        %v2790 = vsel %vm1667, %v2745, 0
        %v2793 = vsel %vm1667, %v2746, 0
        %v2796 = vsel %vm1667, %v2747, 0
        %v2799 = vsel %vm1667, %v2748, 0
        %v2802 = vsel %vm1667, %v2749, 0
        %v2805 = vsel %vm1667, %v2750, 0
        %v2808 = vsel %vm1667, %v2751, 0
        %v2811 = vsel %vm1667, %v2752, 0
        %2813 = vmatprep.subr.bf16.mxu0 0
        %2814 = vmatpush1.bf16.msra.mxu0 %v2761
        %2815 = vmatprep.subr.bf16.mxu0 0
        %2816 = vmatpush1.bf16.msra.mxu0 %v2762
        %2817 = vmatprep.subr.bf16.mxu0 0
        %2818 = vmatpush1.bf16.msra.mxu0 0
        %2819 = vmatprep.subr.bf16.mxu0 0
        %2820 = vmatpush1.bf16.msra.mxu0 0
        %2821 = vmatprep.subr.bf16.mxu0 0
        %2822 = vmatpush1.bf16.msra.mxu0 0
        %2823 = vmatprep.subr.bf16.mxu0 0
        %2824 = vmatpush1.bf16.msra.mxu0 0
        %2825 = vmatprep.subr.bf16.mxu0 0
        %2826 = vmatpush1.bf16.msra.mxu0 0
        %2827 = vmatprep.subr.bf16.mxu0 0
        %2828 = vmatpush1.bf16.msra.mxu0 0
        %2829 = vmatprep.subr.bf16.mxu0 0
        %2830 = vmatpush1.bf16.msra.mxu0 0
        %2831 = vmatprep.subr.bf16.mxu0 0
        %2832 = vmatpush1.bf16.msra.mxu0 0
        %2833 = vmatprep.subr.bf16.mxu0 0
        %2834 = vmatpush1.bf16.msra.mxu0 0
        %2835 = vmatprep.subr.bf16.mxu0 0
        %2836 = vmatpush1.bf16.msra.mxu0 0
        %2837 = vmatprep.subr.bf16.mxu0 0
        %2838 = vmatpush1.bf16.msra.mxu0 0
        %2839 = vmatprep.subr.bf16.mxu0 0
        %2840 = vmatpush1.bf16.msra.mxu0 0
        %2841 = vmatprep.subr.bf16.mxu0 0
        %2842 = vmatpush1.bf16.msra.mxu0 0
        %2843 = vmatprep.subr.bf16.mxu0 0
        %2844 = vmatpush1.bf16.msra.mxu0 0
        %2845 = vmatprep.mubr.bf16.mxu0 0
        %2846 = vmatmul.mubr.bf16.gmra.mrb[0].mxu0 %v2766
        %v2847 = vpop.f32.mrb[0].mxu0
        %v2848 = vadd.f32 0.0, %v2847
        %v2849 = vpop.f32.mrb[0].mxu0
        %v2850 = vpop.f32.mrb[0].mxu0
        %v2851 = vadd.f32 0.0, %v2850
        %v2852 = vpop.f32.mrb[0].mxu0
        %2853 = vmatprep.mubr.bf16.mxu0 0
        %2854 = vmatmul.mubr.bf16.gmra.mrb[0].mxu0 %v2769
        %v2855 = vpop.f32.mrb[0].mxu0
        %v2856 = vadd.f32 0.0, %v2855
        %v2857 = vpop.f32.mrb[0].mxu0
        %v2858 = vpop.f32.mrb[0].mxu0
        %v2859 = vadd.f32 0.0, %v2858
        %v2860 = vpop.f32.mrb[0].mxu0
        %2861 = vmatprep.mubr.bf16.mxu0 0
        %2862 = vmatmul.mubr.bf16.gmra.mrb[0].mxu0 %v2772
        %v2863 = vpop.f32.mrb[0].mxu0
        %v2864 = vadd.f32 0.0, %v2863
        %v2865 = vpop.f32.mrb[0].mxu0
        %v2866 = vpop.f32.mrb[0].mxu0
        %v2867 = vadd.f32 0.0, %v2866
        %v2868 = vpop.f32.mrb[0].mxu0
        %2869 = vmatprep.mubr.bf16.mxu0 0
        %2870 = vmatmul.mubr.bf16.gmra.mrb[0].mxu0 %v2775
        %v2871 = vpop.f32.mrb[0].mxu0
        %v2872 = vadd.f32 0.0, %v2871
        %v2873 = vpop.f32.mrb[0].mxu0
        %v2874 = vpop.f32.mrb[0].mxu0
        %v2875 = vadd.f32 0.0, %v2874
        %v2876 = vpop.f32.mrb[0].mxu0
        %2877 = vmatprep.mubr.bf16.mxu0 0
        %2878 = vmatmul.mubr.bf16.gmra.mrb[0].mxu0 %v2778
        %v2879 = vpop.f32.mrb[0].mxu0
        %v2880 = vadd.f32 0.0, %v2879
        %v2881 = vpop.f32.mrb[0].mxu0
        %v2882 = vpop.f32.mrb[0].mxu0
        %v2883 = vadd.f32 0.0, %v2882
        %v2884 = vpop.f32.mrb[0].mxu0
        %2885 = vmatprep.mubr.bf16.mxu0 0
        %2886 = vmatmul.mubr.bf16.gmra.mrb[0].mxu0 %v2781
        %v2887 = vpop.f32.mrb[0].mxu0
        %v2888 = vadd.f32 0.0, %v2887
        %v2889 = vpop.f32.mrb[0].mxu0
        %v2890 = vpop.f32.mrb[0].mxu0
        %v2891 = vadd.f32 0.0, %v2890
        %v2892 = vpop.f32.mrb[0].mxu0
        %2893 = vmatprep.mubr.bf16.mxu0 0
        %2894 = vmatmul.mubr.bf16.gmra.mrb[0].mxu0 %v2784
        %v2895 = vpop.f32.mrb[0].mxu0
        %v2896 = vadd.f32 0.0, %v2895
        %v2897 = vpop.f32.mrb[0].mxu0
        %v2898 = vpop.f32.mrb[0].mxu0
        %v2899 = vadd.f32 0.0, %v2898
        %v2900 = vpop.f32.mrb[0].mxu0
        %2901 = vmatprep.mubr.bf16.mxu0 0
        %2902 = vmatmul.mubr.bf16.gmra.mrb[0].mxu0 %v2787
        %v2903 = vpop.f32.mrb[0].mxu0
        %v2904 = vadd.f32 0.0, %v2903
        %v2905 = vpop.f32.mrb[0].mxu0
        %v2906 = vpop.f32.mrb[0].mxu0
        %v2907 = vadd.f32 0.0, %v2906
        %v2908 = vpop.f32.mrb[0].mxu0
        %2909 = vmatprep.mubr.bf16.mxu0 0
        %2910 = vmatmul.mubr.bf16.gmra.mrb[0].mxu0 %v2790
        %v2911 = vpop.f32.mrb[0].mxu0
        %v2912 = vadd.f32 0.0, %v2911
        %v2913 = vpop.f32.mrb[0].mxu0
        %v2914 = vpop.f32.mrb[0].mxu0
        %v2915 = vadd.f32 0.0, %v2914
        %v2916 = vpop.f32.mrb[0].mxu0
        %2917 = vmatprep.mubr.bf16.mxu0 0
        %2918 = vmatmul.mubr.bf16.gmra.mrb[0].mxu0 %v2793
        %v2919 = vpop.f32.mrb[0].mxu0
        %v2920 = vadd.f32 0.0, %v2919
        %v2921 = vpop.f32.mrb[0].mxu0
        %v2922 = vpop.f32.mrb[0].mxu0
        %v2923 = vadd.f32 0.0, %v2922
        %v2924 = vpop.f32.mrb[0].mxu0
        %2925 = vmatprep.mubr.bf16.mxu0 0
        %2926 = vmatmul.mubr.bf16.gmra.mrb[0].mxu0 %v2796
        %v2927 = vpop.f32.mrb[0].mxu0
        %v2928 = vadd.f32 0.0, %v2927
        %v2929 = vpop.f32.mrb[0].mxu0
        %v2930 = vpop.f32.mrb[0].mxu0
        %v2931 = vadd.f32 0.0, %v2930
        %v2932 = vpop.f32.mrb[0].mxu0
        %2933 = vmatprep.mubr.bf16.mxu0 0
        %2934 = vmatmul.mubr.bf16.gmra.mrb[0].mxu0 %v2799
        %v2935 = vpop.f32.mrb[0].mxu0
        %v2936 = vadd.f32 0.0, %v2935
        %v2937 = vpop.f32.mrb[0].mxu0
        %v2938 = vpop.f32.mrb[0].mxu0
        %v2939 = vadd.f32 0.0, %v2938
        %v2940 = vpop.f32.mrb[0].mxu0
        %2941 = vmatprep.mubr.bf16.mxu0 0
        %2942 = vmatmul.mubr.bf16.gmra.mrb[0].mxu0 %v2802
        %v2943 = vpop.f32.mrb[0].mxu0
        %v2944 = vadd.f32 0.0, %v2943
        %v2945 = vpop.f32.mrb[0].mxu0
        %v2946 = vpop.f32.mrb[0].mxu0
        %v2947 = vadd.f32 0.0, %v2946
        %v2948 = vpop.f32.mrb[0].mxu0
        %2949 = vmatprep.mubr.bf16.mxu0 0
        %2950 = vmatmul.mubr.bf16.gmra.mrb[0].mxu0 %v2805
        %v2951 = vpop.f32.mrb[0].mxu0
        %v2952 = vadd.f32 0.0, %v2951
        %v2953 = vpop.f32.mrb[0].mxu0
        %v2954 = vpop.f32.mrb[0].mxu0
        %v2955 = vadd.f32 0.0, %v2954
        %v2956 = vpop.f32.mrb[0].mxu0
        %2957 = vmatprep.mubr.bf16.mxu0 0
        %2958 = vmatmul.mubr.bf16.gmra.mrb[0].mxu0 %v2808
        %v2959 = vpop.f32.mrb[0].mxu0
        %v2960 = vadd.f32 0.0, %v2959
        %v2961 = vpop.f32.mrb[0].mxu0
        %v2962 = vpop.f32.mrb[0].mxu0
        %v2963 = vadd.f32 0.0, %v2962
        %v2964 = vpop.f32.mrb[0].mxu0
        %2965 = vmatprep.mubr.bf16.mxu0 0
        %2966 = vmatmul.mubr.bf16.gmra.mrb[0].mxu0 %v2811
        %v2967 = vpop.f32.mrb[0].mxu0
        %v2968 = vadd.f32 0.0, %v2967
        %v2969 = vpop.f32.mrb[0].mxu0
        %v2970 = vpop.f32.mrb[0].mxu0
        %v2971 = vadd.f32 0.0, %v2970
        %v2972 = vpop.f32.mrb[0].mxu0
        %2973 = vdwg.mxu0
        %v2974 = vadd.f32 %v2603, %v2848
        %v2975 = vadd.f32 %v2604, %v2851
        %v2976 = vadd.f32 %v2605, %v2856
        %v2977 = vadd.f32 %v2606, %v2859
        %v2978 = vadd.f32 %v2607, %v2864
        %v2979 = vadd.f32 %v2608, %v2867
        %v2980 = vadd.f32 %v2609, %v2872
        %v2981 = vadd.f32 %v2610, %v2875
        %v2982 = vadd.f32 %v2611, %v2880
        %v2983 = vadd.f32 %v2612, %v2883
        %v2984 = vadd.f32 %v2613, %v2888
        %v2985 = vadd.f32 %v2614, %v2891
        %v2986 = vadd.f32 %v2615, %v2896
        %v2987 = vadd.f32 %v2616, %v2899
        %v2988 = vadd.f32 %v2617, %v2904
        %v2989 = vadd.f32 %v2618, %v2907
        %v2990 = vadd.f32 %v2619, %v2912
        %v2991 = vadd.f32 %v2620, %v2915
        %v2992 = vadd.f32 %v2621, %v2920
        %v2993 = vadd.f32 %v2622, %v2923
        %v2994 = vadd.f32 %v2623, %v2928
        %v2995 = vadd.f32 %v2624, %v2931
        %v2996 = vadd.f32 %v2625, %v2936
        %v2997 = vadd.f32 %v2626, %v2939
        %v2998 = vadd.f32 %v2627, %v2944
        %v2999 = vadd.f32 %v2628, %v2947
        %v3000 = vadd.f32 %v2629, %v2952
        %v3001 = vadd.f32 %v2630, %v2955
        %v3002 = vadd.f32 %v2631, %v2960
        %v3003 = vadd.f32 %v2632, %v2963
        %v3004 = vadd.f32 %v2633, %v2968
        %v3005 = vadd.f32 %v2634, %v2971
        %s3006 = scalar_lea.vmem %s1154, 288 [#allocation3]
        %v3007 = vld [vmem:[%s3006] sm:$0xf]
        %v3008 = vld [vmem:[%s3006 + $0x4] sm:$0xf]
        %v3009 = vld [vmem:[%s3006 + $0x8] sm:$0xf]
        %v3010 = vld [vmem:[%s3006 + $0xc] sm:$0xf]
        %v3011 = vld [vmem:[%s3006 + $0x10] sm:$0xf]
        %v3012 = vld [vmem:[%s3006 + $0x14] sm:$0xf]
        %v3013 = vld [vmem:[%s3006 + $0x18] sm:$0xf]
        %v3014 = vld [vmem:[%s3006 + $0x1c] sm:$0xf]
        %v3015 = vld [vmem:[%s3006 + $0x20] sm:$0xf]
        %v3016 = vld [vmem:[%s3006 + $0x24] sm:$0xf]
        %v3017 = vld [vmem:[%s3006 + $0x28] sm:$0xf]
        %v3018 = vld [vmem:[%s3006 + $0x2c] sm:$0xf]
        %v3019 = vld [vmem:[%s3006 + $0x30] sm:$0xf]
        %v3020 = vld [vmem:[%s3006 + $0x34] sm:$0xf]
        %v3021 = vld [vmem:[%s3006 + $0x38] sm:$0xf]
        %v3022 = vld [vmem:[%s3006 + $0x3c] sm:$0xf]
        %v3023 = vld [vmem:[%s3006 + $0x40] sm:$0xf]
        %v3024 = vld [vmem:[%s3006 + $0x44] sm:$0xf]
        %v3025 = vld [vmem:[%s3006 + $0x48] sm:$0xf]
        %v3026 = vld [vmem:[%s3006 + $0x4c] sm:$0xf]
        %v3027 = vld [vmem:[%s3006 + $0x50] sm:$0xf]
        %v3028 = vld [vmem:[%s3006 + $0x54] sm:$0xf]
        %v3029 = vld [vmem:[%s3006 + $0x58] sm:$0xf]
        %v3030 = vld [vmem:[%s3006 + $0x5c] sm:$0xf]
        %v3031 = vld [vmem:[%s3006 + $0x60] sm:$0xf]
        %v3032 = vld [vmem:[%s3006 + $0x64] sm:$0xf]
        %v3033 = vld [vmem:[%s3006 + $0x68] sm:$0xf]
        %v3034 = vld [vmem:[%s3006 + $0x6c] sm:$0xf]
        %v3035 = vld [vmem:[%s3006 + $0x70] sm:$0xf]
        %v3036 = vld [vmem:[%s3006 + $0x74] sm:$0xf]
        %v3037 = vld [vmem:[%s3006 + $0x78] sm:$0xf]
        %v3038 = vld [vmem:[%s3006 + $0x7c] sm:$0xf]
        %s3039 = scalar_lea.vmem %s3, 64
        %v3040 = vld [vmem:[%s3039] sm:$0xf]
        %v3041 = vld [vmem:[%s3039 + $0x4] sm:$0xf]
        %v3042 = vld [vmem:[%s3039 + $0x8] sm:$0xf]
        %v3043 = vld [vmem:[%s3039 + $0xc] sm:$0xf]
        %v3044 = vld [vmem:[%s3039 + $0x10] sm:$0xf]
        %v3045 = vld [vmem:[%s3039 + $0x14] sm:$0xf]
        %v3046 = vld [vmem:[%s3039 + $0x18] sm:$0xf]
        %v3047 = vld [vmem:[%s3039 + $0x1c] sm:$0xf]
        %v3080 = vunpack.c.l.b16 %v3007
        %v3081 = vunpack.c.l.b16 %v3008
        %v3082 = vunpack.c.l.b16 %v3009
        %v3083 = vunpack.c.l.b16 %v3010
        %v3084 = vunpack.c.l.b16 %v3011
        %v3085 = vunpack.c.l.b16 %v3012
        %v3086 = vunpack.c.l.b16 %v3013
        %v3087 = vunpack.c.l.b16 %v3014
        %v3088 = vunpack.c.l.b16 %v3015
        %v3089 = vunpack.c.l.b16 %v3016
        %v3090 = vunpack.c.l.b16 %v3017
        %v3091 = vunpack.c.l.b16 %v3018
        %v3092 = vunpack.c.l.b16 %v3019
        %v3093 = vunpack.c.l.b16 %v3020
        %v3094 = vunpack.c.l.b16 %v3021
        %v3095 = vunpack.c.l.b16 %v3022
        %v3096 = vunpack.c.l.b16 %v3023
        %v3097 = vunpack.c.l.b16 %v3024
        %v3098 = vunpack.c.l.b16 %v3025
        %v3099 = vunpack.c.l.b16 %v3026
        %v3100 = vunpack.c.l.b16 %v3027
        %v3101 = vunpack.c.l.b16 %v3028
        %v3102 = vunpack.c.l.b16 %v3029
        %v3103 = vunpack.c.l.b16 %v3030
        %v3104 = vunpack.c.l.b16 %v3031
        %v3105 = vunpack.c.l.b16 %v3032
        %v3106 = vunpack.c.l.b16 %v3033
        %v3107 = vunpack.c.l.b16 %v3034
        %v3108 = vunpack.c.l.b16 %v3035
        %v3109 = vunpack.c.l.b16 %v3036
        %v3110 = vunpack.c.l.b16 %v3037
        %v3111 = vunpack.c.l.b16 %v3038
        %v3112 = vpack.c.b16 %v3081, %v3080
        %v3113 = vpack.c.b16 %v3083, %v3082
        %v3114 = vpack.c.b16 %v3085, %v3084
        %v3115 = vpack.c.b16 %v3087, %v3086
        %v3116 = vpack.c.b16 %v3089, %v3088
        %v3117 = vpack.c.b16 %v3091, %v3090
        %v3118 = vpack.c.b16 %v3093, %v3092
        %v3119 = vpack.c.b16 %v3095, %v3094
        %v3120 = vpack.c.b16 %v3097, %v3096
        %v3121 = vpack.c.b16 %v3099, %v3098
        %v3122 = vpack.c.b16 %v3101, %v3100
        %v3123 = vpack.c.b16 %v3103, %v3102
        %v3124 = vpack.c.b16 %v3105, %v3104
        %v3125 = vpack.c.b16 %v3107, %v3106
        %v3126 = vpack.c.b16 %v3109, %v3108
        %v3127 = vpack.c.b16 %v3111, %v3110
        %v3136 = vunpack.c.l.b16 %v3040
        %v3137 = vunpack.c.l.b16 %v3041
        %v3138 = vunpack.c.l.b16 %v3042
        %v3139 = vunpack.c.l.b16 %v3043
        %v3140 = vunpack.c.l.b16 %v3044
        %v3141 = vunpack.c.l.b16 %v3045
        %v3142 = vunpack.c.l.b16 %v3046
        %v3143 = vunpack.c.l.b16 %v3047
        %v3144 = vpack.c.b16 %v3137, %v3136
        %v3145 = vpack.c.b16 %v3139, %v3138
        %v3146 = vpack.c.b16 %v3141, %v3140
        %v3147 = vpack.c.b16 %v3143, %v3142
        %v3153 = vsel %vm1365, %v3112, 0
        %v3156 = vsel %vm1365, %v3113, 0
        %v3159 = vsel %vm1365, %v3114, 0
        %v3162 = vsel %vm1365, %v3115, 0
        %v3165 = vsel %vm1365, %v3116, 0
        %v3168 = vsel %vm1365, %v3117, 0
        %v3171 = vsel %vm1365, %v3118, 0
        %v3174 = vsel %vm1365, %v3119, 0
        %v3177 = vsel %vm1365, %v3120, 0
        %v3180 = vsel %vm1365, %v3121, 0
        %v3183 = vsel %vm1365, %v3122, 0
        %v3186 = vsel %vm1365, %v3123, 0
        %v3189 = vsel %vm1365, %v3124, 0
        %v3192 = vsel %vm1365, %v3125, 0
        %v3195 = vsel %vm1365, %v3126, 0
        %v3198 = vsel %vm1365, %v3127, 0
        %3200 = vmatprep.subr.bf16.mxu0 0
        %3201 = vmatpush1.bf16.msra.mxu0 %v3144
        %3202 = vmatprep.subr.bf16.mxu0 0
        %3203 = vmatpush1.bf16.msra.mxu0 %v3145
        %3204 = vmatprep.subr.bf16.mxu0 0
        %3205 = vmatpush1.bf16.msra.mxu0 %v3146
        %3206 = vmatprep.subr.bf16.mxu0 0
        %3207 = vmatpush1.bf16.msra.mxu0 %v3147
        %3208 = vmatprep.subr.bf16.mxu0 0
        %3209 = vmatpush1.bf16.msra.mxu0 0
        %3210 = vmatprep.subr.bf16.mxu0 0
        %3211 = vmatpush1.bf16.msra.mxu0 0
        %3212 = vmatprep.subr.bf16.mxu0 0
        %3213 = vmatpush1.bf16.msra.mxu0 0
        %3214 = vmatprep.subr.bf16.mxu0 0
        %3215 = vmatpush1.bf16.msra.mxu0 0
        %3216 = vmatprep.subr.bf16.mxu0 0
        %3217 = vmatpush1.bf16.msra.mxu0 0
        %3218 = vmatprep.subr.bf16.mxu0 0
        %3219 = vmatpush1.bf16.msra.mxu0 0
        %3220 = vmatprep.subr.bf16.mxu0 0
        %3221 = vmatpush1.bf16.msra.mxu0 0
        %3222 = vmatprep.subr.bf16.mxu0 0
        %3223 = vmatpush1.bf16.msra.mxu0 0
        %3224 = vmatprep.subr.bf16.mxu0 0
        %3225 = vmatpush1.bf16.msra.mxu0 0
        %3226 = vmatprep.subr.bf16.mxu0 0
        %3227 = vmatpush1.bf16.msra.mxu0 0
        %3228 = vmatprep.subr.bf16.mxu0 0
        %3229 = vmatpush1.bf16.msra.mxu0 0
        %3230 = vmatprep.subr.bf16.mxu0 0
        %3231 = vmatpush1.bf16.msra.mxu0 0
        %3232 = vmatprep.mubr.bf16.mxu0 0
        %3233 = vmatmul.mubr.bf16.gmra.mrb[0].mxu0 %v3153
        %v3234 = vpop.f32.mrb[0].mxu0
        %v3235 = vadd.f32 0.0, %v3234
        %v3236 = vpop.f32.mrb[0].mxu0
        %v3237 = vpop.f32.mrb[0].mxu0
        %v3238 = vadd.f32 0.0, %v3237
        %v3239 = vpop.f32.mrb[0].mxu0
        %3240 = vmatprep.mubr.bf16.mxu0 0
        %3241 = vmatmul.mubr.bf16.gmra.mrb[0].mxu0 %v3156
        %v3242 = vpop.f32.mrb[0].mxu0
        %v3243 = vadd.f32 0.0, %v3242
        %v3244 = vpop.f32.mrb[0].mxu0
        %v3245 = vpop.f32.mrb[0].mxu0
        %v3246 = vadd.f32 0.0, %v3245
        %v3247 = vpop.f32.mrb[0].mxu0
        %3248 = vmatprep.mubr.bf16.mxu0 0
        %3249 = vmatmul.mubr.bf16.gmra.mrb[0].mxu0 %v3159
        %v3250 = vpop.f32.mrb[0].mxu0
        %v3251 = vadd.f32 0.0, %v3250
        %v3252 = vpop.f32.mrb[0].mxu0
        %v3253 = vpop.f32.mrb[0].mxu0
        %v3254 = vadd.f32 0.0, %v3253
        %v3255 = vpop.f32.mrb[0].mxu0
        %3256 = vmatprep.mubr.bf16.mxu0 0
        %3257 = vmatmul.mubr.bf16.gmra.mrb[0].mxu0 %v3162
        %v3258 = vpop.f32.mrb[0].mxu0
        %v3259 = vadd.f32 0.0, %v3258
        %v3260 = vpop.f32.mrb[0].mxu0
        %v3261 = vpop.f32.mrb[0].mxu0
        %v3262 = vadd.f32 0.0, %v3261
        %v3263 = vpop.f32.mrb[0].mxu0
        %3264 = vmatprep.mubr.bf16.mxu0 0
        %3265 = vmatmul.mubr.bf16.gmra.mrb[0].mxu0 %v3165
        %v3266 = vpop.f32.mrb[0].mxu0
        %v3267 = vadd.f32 0.0, %v3266
        %v3268 = vpop.f32.mrb[0].mxu0
        %v3269 = vpop.f32.mrb[0].mxu0
        %v3270 = vadd.f32 0.0, %v3269
        %v3271 = vpop.f32.mrb[0].mxu0
        %3272 = vmatprep.mubr.bf16.mxu0 0
        %3273 = vmatmul.mubr.bf16.gmra.mrb[0].mxu0 %v3168
        %v3274 = vpop.f32.mrb[0].mxu0
        %v3275 = vadd.f32 0.0, %v3274
        %v3276 = vpop.f32.mrb[0].mxu0
        %v3277 = vpop.f32.mrb[0].mxu0
        %v3278 = vadd.f32 0.0, %v3277
        %v3279 = vpop.f32.mrb[0].mxu0
        %3280 = vmatprep.mubr.bf16.mxu0 0
        %3281 = vmatmul.mubr.bf16.gmra.mrb[0].mxu0 %v3171
        %v3282 = vpop.f32.mrb[0].mxu0
        %v3283 = vadd.f32 0.0, %v3282
        %v3284 = vpop.f32.mrb[0].mxu0
        %v3285 = vpop.f32.mrb[0].mxu0
        %v3286 = vadd.f32 0.0, %v3285
        %v3287 = vpop.f32.mrb[0].mxu0
        %3288 = vmatprep.mubr.bf16.mxu0 0
        %3289 = vmatmul.mubr.bf16.gmra.mrb[0].mxu0 %v3174
        %v3290 = vpop.f32.mrb[0].mxu0
        %v3291 = vadd.f32 0.0, %v3290
        %v3292 = vpop.f32.mrb[0].mxu0
        %v3293 = vpop.f32.mrb[0].mxu0
        %v3294 = vadd.f32 0.0, %v3293
        %v3295 = vpop.f32.mrb[0].mxu0
        %3296 = vmatprep.mubr.bf16.mxu0 0
        %3297 = vmatmul.mubr.bf16.gmra.mrb[0].mxu0 %v3177
        %v3298 = vpop.f32.mrb[0].mxu0
        %v3299 = vadd.f32 0.0, %v3298
        %v3300 = vpop.f32.mrb[0].mxu0
        %v3301 = vpop.f32.mrb[0].mxu0
        %v3302 = vadd.f32 0.0, %v3301
        %v3303 = vpop.f32.mrb[0].mxu0
        %3304 = vmatprep.mubr.bf16.mxu0 0
        %3305 = vmatmul.mubr.bf16.gmra.mrb[0].mxu0 %v3180
        %v3306 = vpop.f32.mrb[0].mxu0
        %v3307 = vadd.f32 0.0, %v3306
        %v3308 = vpop.f32.mrb[0].mxu0
        %v3309 = vpop.f32.mrb[0].mxu0
        %v3310 = vadd.f32 0.0, %v3309
        %v3311 = vpop.f32.mrb[0].mxu0
        %3312 = vmatprep.mubr.bf16.mxu0 0
        %3313 = vmatmul.mubr.bf16.gmra.mrb[0].mxu0 %v3183
        %v3314 = vpop.f32.mrb[0].mxu0
        %v3315 = vadd.f32 0.0, %v3314
        %v3316 = vpop.f32.mrb[0].mxu0
        %v3317 = vpop.f32.mrb[0].mxu0
        %v3318 = vadd.f32 0.0, %v3317
        %v3319 = vpop.f32.mrb[0].mxu0
        %3320 = vmatprep.mubr.bf16.mxu0 0
        %3321 = vmatmul.mubr.bf16.gmra.mrb[0].mxu0 %v3186
        %v3322 = vpop.f32.mrb[0].mxu0
        %v3323 = vadd.f32 0.0, %v3322
        %v3324 = vpop.f32.mrb[0].mxu0
        %v3325 = vpop.f32.mrb[0].mxu0
        %v3326 = vadd.f32 0.0, %v3325
        %v3327 = vpop.f32.mrb[0].mxu0
        %3328 = vmatprep.mubr.bf16.mxu0 0
        %3329 = vmatmul.mubr.bf16.gmra.mrb[0].mxu0 %v3189
        %v3330 = vpop.f32.mrb[0].mxu0
        %v3331 = vadd.f32 0.0, %v3330
        %v3332 = vpop.f32.mrb[0].mxu0
        %v3333 = vpop.f32.mrb[0].mxu0
        %v3334 = vadd.f32 0.0, %v3333
        %v3335 = vpop.f32.mrb[0].mxu0
        %3336 = vmatprep.mubr.bf16.mxu0 0
        %3337 = vmatmul.mubr.bf16.gmra.mrb[0].mxu0 %v3192
        %v3338 = vpop.f32.mrb[0].mxu0
        %v3339 = vadd.f32 0.0, %v3338
        %v3340 = vpop.f32.mrb[0].mxu0
        %v3341 = vpop.f32.mrb[0].mxu0
        %v3342 = vadd.f32 0.0, %v3341
        %v3343 = vpop.f32.mrb[0].mxu0
        %3344 = vmatprep.mubr.bf16.mxu0 0
        %3345 = vmatmul.mubr.bf16.gmra.mrb[0].mxu0 %v3195
        %v3346 = vpop.f32.mrb[0].mxu0
        %v3347 = vadd.f32 0.0, %v3346
        %v3348 = vpop.f32.mrb[0].mxu0
        %v3349 = vpop.f32.mrb[0].mxu0
        %v3350 = vadd.f32 0.0, %v3349
        %v3351 = vpop.f32.mrb[0].mxu0
        %3352 = vmatprep.mubr.bf16.mxu0 0
        %3353 = vmatmul.mubr.bf16.gmra.mrb[0].mxu0 %v3198
        %v3354 = vpop.f32.mrb[0].mxu0
        %v3355 = vadd.f32 0.0, %v3354
        %v3356 = vpop.f32.mrb[0].mxu0
        %v3357 = vpop.f32.mrb[0].mxu0
        %v3358 = vadd.f32 0.0, %v3357
        %v3359 = vpop.f32.mrb[0].mxu0
        %3360 = vdwg.mxu0
        %v3361 = vadd.f32 %v2974, %v3235
        %v3362 = vadd.f32 %v2975, %v3238
        %v3363 = vadd.f32 %v2976, %v3243
        %v3364 = vadd.f32 %v2977, %v3246
        %v3365 = vadd.f32 %v2978, %v3251
        %v3366 = vadd.f32 %v2979, %v3254
        %v3367 = vadd.f32 %v2980, %v3259
        %v3368 = vadd.f32 %v2981, %v3262
        %v3369 = vadd.f32 %v2982, %v3267
        %v3370 = vadd.f32 %v2983, %v3270
        %v3371 = vadd.f32 %v2984, %v3275
        %v3372 = vadd.f32 %v2985, %v3278
        %v3373 = vadd.f32 %v2986, %v3283
        %v3374 = vadd.f32 %v2987, %v3286
        %v3375 = vadd.f32 %v2988, %v3291
        %v3376 = vadd.f32 %v2989, %v3294
        %v3377 = vadd.f32 %v2990, %v3299
        %v3378 = vadd.f32 %v2991, %v3302
        %v3379 = vadd.f32 %v2992, %v3307
        %v3380 = vadd.f32 %v2993, %v3310
        %v3381 = vadd.f32 %v2994, %v3315
        %v3382 = vadd.f32 %v2995, %v3318
        %v3383 = vadd.f32 %v2996, %v3323
        %v3384 = vadd.f32 %v2997, %v3326
        %v3385 = vadd.f32 %v2998, %v3331
        %v3386 = vadd.f32 %v2999, %v3334
        %v3387 = vadd.f32 %v3000, %v3339
        %v3388 = vadd.f32 %v3001, %v3342
        %v3389 = vadd.f32 %v3002, %v3347
        %v3390 = vadd.f32 %v3003, %v3350
        %v3391 = vadd.f32 %v3004, %v3355
        %v3392 = vadd.f32 %v3005, %v3358
        %s3393 = scalar_lea.vmem %s1147, 8 [#allocation2]
        %v3394 = vld [vmem:[%s3393] sm:$0xf]
        %v3395 = vld [vmem:[%s3393 + $0x4] sm:$0xf]
        %v3396 = vld [vmem:[%s3393 + $0x8] sm:$0xf]
        %v3397 = vld [vmem:[%s3393 + $0xc] sm:$0xf]
        %v3398 = vld [vmem:[%s3393 + $0x10] sm:$0xf]
        %v3399 = vld [vmem:[%s3393 + $0x14] sm:$0xf]
        %v3400 = vld [vmem:[%s3393 + $0x18] sm:$0xf]
        %v3401 = vld [vmem:[%s3393 + $0x1c] sm:$0xf]
        %v3402 = vld [vmem:[%s3393 + $0x20] sm:$0xf]
        %v3403 = vld [vmem:[%s3393 + $0x24] sm:$0xf]
        %v3404 = vld [vmem:[%s3393 + $0x28] sm:$0xf]
        %v3405 = vld [vmem:[%s3393 + $0x2c] sm:$0xf]
        %v3406 = vld [vmem:[%s3393 + $0x30] sm:$0xf]
        %v3407 = vld [vmem:[%s3393 + $0x34] sm:$0xf]
        %v3408 = vld [vmem:[%s3393 + $0x38] sm:$0xf]
        %v3409 = vld [vmem:[%s3393 + $0x3c] sm:$0xf]
        %v3410 = vld [vmem:[%s3393 + $0x40] sm:$0xf]
        %v3411 = vld [vmem:[%s3393 + $0x44] sm:$0xf]
        %v3412 = vld [vmem:[%s3393 + $0x48] sm:$0xf]
        %v3413 = vld [vmem:[%s3393 + $0x4c] sm:$0xf]
        %v3414 = vld [vmem:[%s3393 + $0x50] sm:$0xf]
        %v3415 = vld [vmem:[%s3393 + $0x54] sm:$0xf]
        %v3416 = vld [vmem:[%s3393 + $0x58] sm:$0xf]
        %v3417 = vld [vmem:[%s3393 + $0x5c] sm:$0xf]
        %v3418 = vld [vmem:[%s3393 + $0x60] sm:$0xf]
        %v3419 = vld [vmem:[%s3393 + $0x64] sm:$0xf]
        %v3420 = vld [vmem:[%s3393 + $0x68] sm:$0xf]
        %v3421 = vld [vmem:[%s3393 + $0x6c] sm:$0xf]
        %v3422 = vld [vmem:[%s3393 + $0x70] sm:$0xf]
        %v3423 = vld [vmem:[%s3393 + $0x74] sm:$0xf]
        %v3424 = vld [vmem:[%s3393 + $0x78] sm:$0xf]
        %v3425 = vld [vmem:[%s3393 + $0x7c] sm:$0xf]
        %s3426 = scalar_lea.vmem %s1, 48
        %v3427 = vld [vmem:[%s3426] sm:$0xf]
        %v3428 = vld [vmem:[%s3426 + $0x4] sm:$0xf]
        %v3429 = vld [vmem:[%s3426 + $0x8] sm:$0xf]
        %v3430 = vld [vmem:[%s3426 + $0xc] sm:$0xf]
        %v3463 = vunpack.c.l.b16 %v3394
        %v3464 = vunpack.c.l.b16 %v3395
        %v3465 = vunpack.c.l.b16 %v3396
        %v3466 = vunpack.c.l.b16 %v3397
        %v3467 = vunpack.c.l.b16 %v3398
        %v3468 = vunpack.c.l.b16 %v3399
        %v3469 = vunpack.c.l.b16 %v3400
        %v3470 = vunpack.c.l.b16 %v3401
        %v3471 = vunpack.c.l.b16 %v3402
        %v3472 = vunpack.c.l.b16 %v3403
        %v3473 = vunpack.c.l.b16 %v3404
        %v3474 = vunpack.c.l.b16 %v3405
        %v3475 = vunpack.c.l.b16 %v3406
        %v3476 = vunpack.c.l.b16 %v3407
        %v3477 = vunpack.c.l.b16 %v3408
        %v3478 = vunpack.c.l.b16 %v3409
        %v3479 = vunpack.c.l.b16 %v3410
        %v3480 = vunpack.c.l.b16 %v3411
        %v3481 = vunpack.c.l.b16 %v3412
        %v3482 = vunpack.c.l.b16 %v3413
        %v3483 = vunpack.c.l.b16 %v3414
        %v3484 = vunpack.c.l.b16 %v3415
        %v3485 = vunpack.c.l.b16 %v3416
        %v3486 = vunpack.c.l.b16 %v3417
        %v3487 = vunpack.c.l.b16 %v3418
        %v3488 = vunpack.c.l.b16 %v3419
        %v3489 = vunpack.c.l.b16 %v3420
        %v3490 = vunpack.c.l.b16 %v3421
        %v3491 = vunpack.c.l.b16 %v3422
        %v3492 = vunpack.c.l.b16 %v3423
        %v3493 = vunpack.c.l.b16 %v3424
        %v3494 = vunpack.c.l.b16 %v3425
        %v3495 = vpack.c.b16 %v3464, %v3463
        %v3496 = vpack.c.b16 %v3466, %v3465
        %v3497 = vpack.c.b16 %v3468, %v3467
        %v3498 = vpack.c.b16 %v3470, %v3469
        %v3499 = vpack.c.b16 %v3472, %v3471
        %v3500 = vpack.c.b16 %v3474, %v3473
        %v3501 = vpack.c.b16 %v3476, %v3475
        %v3502 = vpack.c.b16 %v3478, %v3477
        %v3503 = vpack.c.b16 %v3480, %v3479
        %v3504 = vpack.c.b16 %v3482, %v3481
        %v3505 = vpack.c.b16 %v3484, %v3483
        %v3506 = vpack.c.b16 %v3486, %v3485
        %v3507 = vpack.c.b16 %v3488, %v3487
        %v3508 = vpack.c.b16 %v3490, %v3489
        %v3509 = vpack.c.b16 %v3492, %v3491
        %v3510 = vpack.c.b16 %v3494, %v3493
        %v3515 = vunpack.c.l.b16 %v3427
        %v3516 = vunpack.c.l.b16 %v3428
        %v3517 = vunpack.c.l.b16 %v3429
        %v3518 = vunpack.c.l.b16 %v3430
        %v3519 = vpack.c.b16 %v3516, %v3515
        %v3520 = vpack.c.b16 %v3518, %v3517
        %v3524 = vsel %vm1667, %v3495, 0
        %v3527 = vsel %vm1667, %v3496, 0
        %v3530 = vsel %vm1667, %v3497, 0
        %v3533 = vsel %vm1667, %v3498, 0
        %v3536 = vsel %vm1667, %v3499, 0
        %v3539 = vsel %vm1667, %v3500, 0
        %v3542 = vsel %vm1667, %v3501, 0
        %v3545 = vsel %vm1667, %v3502, 0
        %v3548 = vsel %vm1667, %v3503, 0
        %v3551 = vsel %vm1667, %v3504, 0
        %v3554 = vsel %vm1667, %v3505, 0
        %v3557 = vsel %vm1667, %v3506, 0
        %v3560 = vsel %vm1667, %v3507, 0
        %v3563 = vsel %vm1667, %v3508, 0
        %v3566 = vsel %vm1667, %v3509, 0
        %v3569 = vsel %vm1667, %v3510, 0
        %3571 = vmatprep.subr.bf16.mxu0 0
        %3572 = vmatpush1.bf16.msra.mxu0 %v3519
        %3573 = vmatprep.subr.bf16.mxu0 0
        %3574 = vmatpush1.bf16.msra.mxu0 %v3520
        %3575 = vmatprep.subr.bf16.mxu0 0
        %3576 = vmatpush1.bf16.msra.mxu0 0
        %3577 = vmatprep.subr.bf16.mxu0 0
        %3578 = vmatpush1.bf16.msra.mxu0 0
        %3579 = vmatprep.subr.bf16.mxu0 0
        %3580 = vmatpush1.bf16.msra.mxu0 0
        %3581 = vmatprep.subr.bf16.mxu0 0
        %3582 = vmatpush1.bf16.msra.mxu0 0
        %3583 = vmatprep.subr.bf16.mxu0 0
        %3584 = vmatpush1.bf16.msra.mxu0 0
        %3585 = vmatprep.subr.bf16.mxu0 0
        %3586 = vmatpush1.bf16.msra.mxu0 0
        %3587 = vmatprep.subr.bf16.mxu0 0
        %3588 = vmatpush1.bf16.msra.mxu0 0
        %3589 = vmatprep.subr.bf16.mxu0 0
        %3590 = vmatpush1.bf16.msra.mxu0 0
        %3591 = vmatprep.subr.bf16.mxu0 0
        %3592 = vmatpush1.bf16.msra.mxu0 0
        %3593 = vmatprep.subr.bf16.mxu0 0
        %3594 = vmatpush1.bf16.msra.mxu0 0
        %3595 = vmatprep.subr.bf16.mxu0 0
        %3596 = vmatpush1.bf16.msra.mxu0 0
        %3597 = vmatprep.subr.bf16.mxu0 0
        %3598 = vmatpush1.bf16.msra.mxu0 0
        %3599 = vmatprep.subr.bf16.mxu0 0
        %3600 = vmatpush1.bf16.msra.mxu0 0
        %3601 = vmatprep.subr.bf16.mxu0 0
        %3602 = vmatpush1.bf16.msra.mxu0 0
        %3603 = vmatprep.mubr.bf16.mxu0 0
        %3604 = vmatmul.mubr.bf16.gmra.mrb[0].mxu0 %v3524
        %v3605 = vpop.f32.mrb[0].mxu0
        %v3606 = vadd.f32 0.0, %v3605
        %v3607 = vpop.f32.mrb[0].mxu0
        %v3608 = vpop.f32.mrb[0].mxu0
        %v3609 = vadd.f32 0.0, %v3608
        %v3610 = vpop.f32.mrb[0].mxu0
        %3611 = vmatprep.mubr.bf16.mxu0 0
        %3612 = vmatmul.mubr.bf16.gmra.mrb[0].mxu0 %v3527
        %v3613 = vpop.f32.mrb[0].mxu0
        %v3614 = vadd.f32 0.0, %v3613
        %v3615 = vpop.f32.mrb[0].mxu0
        %v3616 = vpop.f32.mrb[0].mxu0
        %v3617 = vadd.f32 0.0, %v3616
        %v3618 = vpop.f32.mrb[0].mxu0
        %3619 = vmatprep.mubr.bf16.mxu0 0
        %3620 = vmatmul.mubr.bf16.gmra.mrb[0].mxu0 %v3530
        %v3621 = vpop.f32.mrb[0].mxu0
        %v3622 = vadd.f32 0.0, %v3621
        %v3623 = vpop.f32.mrb[0].mxu0
        %v3624 = vpop.f32.mrb[0].mxu0
        %v3625 = vadd.f32 0.0, %v3624
        %v3626 = vpop.f32.mrb[0].mxu0
        %3627 = vmatprep.mubr.bf16.mxu0 0
        %3628 = vmatmul.mubr.bf16.gmra.mrb[0].mxu0 %v3533
        %v3629 = vpop.f32.mrb[0].mxu0
        %v3630 = vadd.f32 0.0, %v3629
        %v3631 = vpop.f32.mrb[0].mxu0
        %v3632 = vpop.f32.mrb[0].mxu0
        %v3633 = vadd.f32 0.0, %v3632
        %v3634 = vpop.f32.mrb[0].mxu0
        %3635 = vmatprep.mubr.bf16.mxu0 0
        %3636 = vmatmul.mubr.bf16.gmra.mrb[0].mxu0 %v3536
        %v3637 = vpop.f32.mrb[0].mxu0
        %v3638 = vadd.f32 0.0, %v3637
        %v3639 = vpop.f32.mrb[0].mxu0
        %v3640 = vpop.f32.mrb[0].mxu0
        %v3641 = vadd.f32 0.0, %v3640
        %v3642 = vpop.f32.mrb[0].mxu0
        %3643 = vmatprep.mubr.bf16.mxu0 0
        %3644 = vmatmul.mubr.bf16.gmra.mrb[0].mxu0 %v3539
        %v3645 = vpop.f32.mrb[0].mxu0
        %v3646 = vadd.f32 0.0, %v3645
        %v3647 = vpop.f32.mrb[0].mxu0
        %v3648 = vpop.f32.mrb[0].mxu0
        %v3649 = vadd.f32 0.0, %v3648
        %v3650 = vpop.f32.mrb[0].mxu0
        %3651 = vmatprep.mubr.bf16.mxu0 0
        %3652 = vmatmul.mubr.bf16.gmra.mrb[0].mxu0 %v3542
        %v3653 = vpop.f32.mrb[0].mxu0
        %v3654 = vadd.f32 0.0, %v3653
        %v3655 = vpop.f32.mrb[0].mxu0
        %v3656 = vpop.f32.mrb[0].mxu0
        %v3657 = vadd.f32 0.0, %v3656
        %v3658 = vpop.f32.mrb[0].mxu0
        %3659 = vmatprep.mubr.bf16.mxu0 0
        %3660 = vmatmul.mubr.bf16.gmra.mrb[0].mxu0 %v3545
        %v3661 = vpop.f32.mrb[0].mxu0
        %v3662 = vadd.f32 0.0, %v3661
        %v3663 = vpop.f32.mrb[0].mxu0
        %v3664 = vpop.f32.mrb[0].mxu0
        %v3665 = vadd.f32 0.0, %v3664
        %v3666 = vpop.f32.mrb[0].mxu0
        %3667 = vmatprep.mubr.bf16.mxu0 0
        %3668 = vmatmul.mubr.bf16.gmra.mrb[0].mxu0 %v3548
        %v3669 = vpop.f32.mrb[0].mxu0
        %v3670 = vadd.f32 0.0, %v3669
        %v3671 = vpop.f32.mrb[0].mxu0
        %v3672 = vpop.f32.mrb[0].mxu0
        %v3673 = vadd.f32 0.0, %v3672
        %v3674 = vpop.f32.mrb[0].mxu0
        %3675 = vmatprep.mubr.bf16.mxu0 0
        %3676 = vmatmul.mubr.bf16.gmra.mrb[0].mxu0 %v3551
        %v3677 = vpop.f32.mrb[0].mxu0
        %v3678 = vadd.f32 0.0, %v3677
        %v3679 = vpop.f32.mrb[0].mxu0
        %v3680 = vpop.f32.mrb[0].mxu0
        %v3681 = vadd.f32 0.0, %v3680
        %v3682 = vpop.f32.mrb[0].mxu0
        %3683 = vmatprep.mubr.bf16.mxu0 0
        %3684 = vmatmul.mubr.bf16.gmra.mrb[0].mxu0 %v3554
        %v3685 = vpop.f32.mrb[0].mxu0
        %v3686 = vadd.f32 0.0, %v3685
        %v3687 = vpop.f32.mrb[0].mxu0
        %v3688 = vpop.f32.mrb[0].mxu0
        %v3689 = vadd.f32 0.0, %v3688
        %v3690 = vpop.f32.mrb[0].mxu0
        %3691 = vmatprep.mubr.bf16.mxu0 0
        %3692 = vmatmul.mubr.bf16.gmra.mrb[0].mxu0 %v3557
        %v3693 = vpop.f32.mrb[0].mxu0
        %v3694 = vadd.f32 0.0, %v3693
        %v3695 = vpop.f32.mrb[0].mxu0
        %v3696 = vpop.f32.mrb[0].mxu0
        %v3697 = vadd.f32 0.0, %v3696
        %v3698 = vpop.f32.mrb[0].mxu0
        %3699 = vmatprep.mubr.bf16.mxu0 0
        %3700 = vmatmul.mubr.bf16.gmra.mrb[0].mxu0 %v3560
        %v3701 = vpop.f32.mrb[0].mxu0
        %v3702 = vadd.f32 0.0, %v3701
        %v3703 = vpop.f32.mrb[0].mxu0
        %v3704 = vpop.f32.mrb[0].mxu0
        %v3705 = vadd.f32 0.0, %v3704
        %v3706 = vpop.f32.mrb[0].mxu0
        %3707 = vmatprep.mubr.bf16.mxu0 0
        %3708 = vmatmul.mubr.bf16.gmra.mrb[0].mxu0 %v3563
        %v3709 = vpop.f32.mrb[0].mxu0
        %v3710 = vadd.f32 0.0, %v3709
        %v3711 = vpop.f32.mrb[0].mxu0
        %v3712 = vpop.f32.mrb[0].mxu0
        %v3713 = vadd.f32 0.0, %v3712
        %v3714 = vpop.f32.mrb[0].mxu0
        %3715 = vmatprep.mubr.bf16.mxu0 0
        %3716 = vmatmul.mubr.bf16.gmra.mrb[0].mxu0 %v3566
        %v3717 = vpop.f32.mrb[0].mxu0
        %v3718 = vadd.f32 0.0, %v3717
        %v3719 = vpop.f32.mrb[0].mxu0
        %v3720 = vpop.f32.mrb[0].mxu0
        %v3721 = vadd.f32 0.0, %v3720
        %v3722 = vpop.f32.mrb[0].mxu0
        %3723 = vmatprep.mubr.bf16.mxu0 0
        %3724 = vmatmul.mubr.bf16.gmra.mrb[0].mxu0 %v3569
        %v3725 = vpop.f32.mrb[0].mxu0
        %v3726 = vadd.f32 0.0, %v3725
        %v3727 = vpop.f32.mrb[0].mxu0
        %v3728 = vpop.f32.mrb[0].mxu0
        %v3729 = vadd.f32 0.0, %v3728
        %v3730 = vpop.f32.mrb[0].mxu0
        %3731 = vdwg.mxu0
        %v3732 = vadd.f32 %v3361, %v3606
        %v3733 = vadd.f32 %v3362, %v3609
        %v3734 = vadd.f32 %v3363, %v3614
        %v3735 = vadd.f32 %v3364, %v3617
        %v3736 = vadd.f32 %v3365, %v3622
        %v3737 = vadd.f32 %v3366, %v3625
        %v3738 = vadd.f32 %v3367, %v3630
        %v3739 = vadd.f32 %v3368, %v3633
        %v3740 = vadd.f32 %v3369, %v3638
        %v3741 = vadd.f32 %v3370, %v3641
        %v3742 = vadd.f32 %v3371, %v3646
        %v3743 = vadd.f32 %v3372, %v3649
        %v3744 = vadd.f32 %v3373, %v3654
        %v3745 = vadd.f32 %v3374, %v3657
        %v3746 = vadd.f32 %v3375, %v3662
        %v3747 = vadd.f32 %v3376, %v3665
        %v3748 = vadd.f32 %v3377, %v3670
        %v3749 = vadd.f32 %v3378, %v3673
        %v3750 = vadd.f32 %v3379, %v3678
        %v3751 = vadd.f32 %v3380, %v3681
        %v3752 = vadd.f32 %v3381, %v3686
        %v3753 = vadd.f32 %v3382, %v3689
        %v3754 = vadd.f32 %v3383, %v3694
        %v3755 = vadd.f32 %v3384, %v3697
        %v3756 = vadd.f32 %v3385, %v3702
        %v3757 = vadd.f32 %v3386, %v3705
        %v3758 = vadd.f32 %v3387, %v3710
        %v3759 = vadd.f32 %v3388, %v3713
        %v3760 = vadd.f32 %v3389, %v3718
        %v3761 = vadd.f32 %v3390, %v3721
        %v3762 = vadd.f32 %v3391, %v3726
        %v3763 = vadd.f32 %v3392, %v3729
        %s3764 = scalar_lea.vmem %s1154, 8 [#allocation3]
        %v3765 = vld [vmem:[%s3764] sm:$0xf]
        %v3766 = vld [vmem:[%s3764 + $0x4] sm:$0xf]
        %v3767 = vld [vmem:[%s3764 + $0x8] sm:$0xf]
        %v3768 = vld [vmem:[%s3764 + $0xc] sm:$0xf]
        %v3769 = vld [vmem:[%s3764 + $0x10] sm:$0xf]
        %v3770 = vld [vmem:[%s3764 + $0x14] sm:$0xf]
        %v3771 = vld [vmem:[%s3764 + $0x18] sm:$0xf]
        %v3772 = vld [vmem:[%s3764 + $0x1c] sm:$0xf]
        %v3773 = vld [vmem:[%s3764 + $0x20] sm:$0xf]
        %v3774 = vld [vmem:[%s3764 + $0x24] sm:$0xf]
        %v3775 = vld [vmem:[%s3764 + $0x28] sm:$0xf]
        %v3776 = vld [vmem:[%s3764 + $0x2c] sm:$0xf]
        %v3777 = vld [vmem:[%s3764 + $0x30] sm:$0xf]
        %v3778 = vld [vmem:[%s3764 + $0x34] sm:$0xf]
        %v3779 = vld [vmem:[%s3764 + $0x38] sm:$0xf]
        %v3780 = vld [vmem:[%s3764 + $0x3c] sm:$0xf]
        %v3781 = vld [vmem:[%s3764 + $0x40] sm:$0xf]
        %v3782 = vld [vmem:[%s3764 + $0x44] sm:$0xf]
        %v3783 = vld [vmem:[%s3764 + $0x48] sm:$0xf]
        %v3784 = vld [vmem:[%s3764 + $0x4c] sm:$0xf]
        %v3785 = vld [vmem:[%s3764 + $0x50] sm:$0xf]
        %v3786 = vld [vmem:[%s3764 + $0x54] sm:$0xf]
        %v3787 = vld [vmem:[%s3764 + $0x58] sm:$0xf]
        %v3788 = vld [vmem:[%s3764 + $0x5c] sm:$0xf]
        %v3789 = vld [vmem:[%s3764 + $0x60] sm:$0xf]
        %v3790 = vld [vmem:[%s3764 + $0x64] sm:$0xf]
        %v3791 = vld [vmem:[%s3764 + $0x68] sm:$0xf]
        %v3792 = vld [vmem:[%s3764 + $0x6c] sm:$0xf]
        %v3793 = vld [vmem:[%s3764 + $0x70] sm:$0xf]
        %v3794 = vld [vmem:[%s3764 + $0x74] sm:$0xf]
        %v3795 = vld [vmem:[%s3764 + $0x78] sm:$0xf]
        %v3796 = vld [vmem:[%s3764 + $0x7c] sm:$0xf]
        %s3797 = scalar_lea.vmem %s3, 96
        %v3798 = vld [vmem:[%s3797] sm:$0xf]
        %v3799 = vld [vmem:[%s3797 + $0x4] sm:$0xf]
        %v3800 = vld [vmem:[%s3797 + $0x8] sm:$0xf]
        %v3801 = vld [vmem:[%s3797 + $0xc] sm:$0xf]
        %v3802 = vld [vmem:[%s3797 + $0x10] sm:$0xf]
        %v3803 = vld [vmem:[%s3797 + $0x14] sm:$0xf]
        %v3804 = vld [vmem:[%s3797 + $0x18] sm:$0xf]
        %v3805 = vld [vmem:[%s3797 + $0x1c] sm:$0xf]
        %v3838 = vunpack.c.l.b16 %v3765
        %v3839 = vunpack.c.l.b16 %v3766
        %v3840 = vunpack.c.l.b16 %v3767
        %v3841 = vunpack.c.l.b16 %v3768
        %v3842 = vunpack.c.l.b16 %v3769
        %v3843 = vunpack.c.l.b16 %v3770
        %v3844 = vunpack.c.l.b16 %v3771
        %v3845 = vunpack.c.l.b16 %v3772
        %v3846 = vunpack.c.l.b16 %v3773
        %v3847 = vunpack.c.l.b16 %v3774
        %v3848 = vunpack.c.l.b16 %v3775
        %v3849 = vunpack.c.l.b16 %v3776
        %v3850 = vunpack.c.l.b16 %v3777
        %v3851 = vunpack.c.l.b16 %v3778
        %v3852 = vunpack.c.l.b16 %v3779
        %v3853 = vunpack.c.l.b16 %v3780
        %v3854 = vunpack.c.l.b16 %v3781
        %v3855 = vunpack.c.l.b16 %v3782
        %v3856 = vunpack.c.l.b16 %v3783
        %v3857 = vunpack.c.l.b16 %v3784
        %v3858 = vunpack.c.l.b16 %v3785
        %v3859 = vunpack.c.l.b16 %v3786
        %v3860 = vunpack.c.l.b16 %v3787
        %v3861 = vunpack.c.l.b16 %v3788
        %v3862 = vunpack.c.l.b16 %v3789
        %v3863 = vunpack.c.l.b16 %v3790
        %v3864 = vunpack.c.l.b16 %v3791
        %v3865 = vunpack.c.l.b16 %v3792
        %v3866 = vunpack.c.l.b16 %v3793
        %v3867 = vunpack.c.l.b16 %v3794
        %v3868 = vunpack.c.l.b16 %v3795
        %v3869 = vunpack.c.l.b16 %v3796
        %v3870 = vpack.c.b16 %v3839, %v3838
        %v3871 = vpack.c.b16 %v3841, %v3840
        %v3872 = vpack.c.b16 %v3843, %v3842
        %v3873 = vpack.c.b16 %v3845, %v3844
        %v3874 = vpack.c.b16 %v3847, %v3846
        %v3875 = vpack.c.b16 %v3849, %v3848
        %v3876 = vpack.c.b16 %v3851, %v3850
        %v3877 = vpack.c.b16 %v3853, %v3852
        %v3878 = vpack.c.b16 %v3855, %v3854
        %v3879 = vpack.c.b16 %v3857, %v3856
        %v3880 = vpack.c.b16 %v3859, %v3858
        %v3881 = vpack.c.b16 %v3861, %v3860
        %v3882 = vpack.c.b16 %v3863, %v3862
        %v3883 = vpack.c.b16 %v3865, %v3864
        %v3884 = vpack.c.b16 %v3867, %v3866
        %v3885 = vpack.c.b16 %v3869, %v3868
        %v3894 = vunpack.c.l.b16 %v3798
        %v3895 = vunpack.c.l.b16 %v3799
        %v3896 = vunpack.c.l.b16 %v3800
        %v3897 = vunpack.c.l.b16 %v3801
        %v3898 = vunpack.c.l.b16 %v3802
        %v3899 = vunpack.c.l.b16 %v3803
        %v3900 = vunpack.c.l.b16 %v3804
        %v3901 = vunpack.c.l.b16 %v3805
        %v3902 = vpack.c.b16 %v3895, %v3894
        %v3903 = vpack.c.b16 %v3897, %v3896
        %v3904 = vpack.c.b16 %v3899, %v3898
        %v3905 = vpack.c.b16 %v3901, %v3900
        %v3911 = vsel %vm1365, %v3870, 0
        %v3914 = vsel %vm1365, %v3871, 0
        %v3917 = vsel %vm1365, %v3872, 0
        %v3920 = vsel %vm1365, %v3873, 0
        %v3923 = vsel %vm1365, %v3874, 0
        %v3926 = vsel %vm1365, %v3875, 0
        %v3929 = vsel %vm1365, %v3876, 0
        %v3932 = vsel %vm1365, %v3877, 0
        %v3935 = vsel %vm1365, %v3878, 0
        %v3938 = vsel %vm1365, %v3879, 0
        %v3941 = vsel %vm1365, %v3880, 0
        %v3944 = vsel %vm1365, %v3881, 0
        %v3947 = vsel %vm1365, %v3882, 0
        %v3950 = vsel %vm1365, %v3883, 0
        %v3953 = vsel %vm1365, %v3884, 0
        %v3956 = vsel %vm1365, %v3885, 0
        %3958 = vmatprep.subr.bf16.mxu0 0
        %3959 = vmatpush1.bf16.msra.mxu0 %v3902
        %3960 = vmatprep.subr.bf16.mxu0 0
        %3961 = vmatpush1.bf16.msra.mxu0 %v3903
        %3962 = vmatprep.subr.bf16.mxu0 0
        %3963 = vmatpush1.bf16.msra.mxu0 %v3904
        %3964 = vmatprep.subr.bf16.mxu0 0
        %3965 = vmatpush1.bf16.msra.mxu0 %v3905
        %3966 = vmatprep.subr.bf16.mxu0 0
        %3967 = vmatpush1.bf16.msra.mxu0 0
        %3968 = vmatprep.subr.bf16.mxu0 0
        %3969 = vmatpush1.bf16.msra.mxu0 0
        %3970 = vmatprep.subr.bf16.mxu0 0
        %3971 = vmatpush1.bf16.msra.mxu0 0
        %3972 = vmatprep.subr.bf16.mxu0 0
        %3973 = vmatpush1.bf16.msra.mxu0 0
        %3974 = vmatprep.subr.bf16.mxu0 0
        %3975 = vmatpush1.bf16.msra.mxu0 0
        %3976 = vmatprep.subr.bf16.mxu0 0
        %3977 = vmatpush1.bf16.msra.mxu0 0
        %3978 = vmatprep.subr.bf16.mxu0 0
        %3979 = vmatpush1.bf16.msra.mxu0 0
        %3980 = vmatprep.subr.bf16.mxu0 0
        %3981 = vmatpush1.bf16.msra.mxu0 0
        %3982 = vmatprep.subr.bf16.mxu0 0
        %3983 = vmatpush1.bf16.msra.mxu0 0
        %3984 = vmatprep.subr.bf16.mxu0 0
        %3985 = vmatpush1.bf16.msra.mxu0 0
        %3986 = vmatprep.subr.bf16.mxu0 0
        %3987 = vmatpush1.bf16.msra.mxu0 0
        %3988 = vmatprep.subr.bf16.mxu0 0
        %3989 = vmatpush1.bf16.msra.mxu0 0
        %3990 = vmatprep.mubr.bf16.mxu0 0
        %3991 = vmatmul.mubr.bf16.gmra.mrb[0].mxu0 %v3911
        %v3992 = vpop.f32.mrb[0].mxu0
        %v3993 = vadd.f32 0.0, %v3992
        %v3994 = vpop.f32.mrb[0].mxu0
        %v3995 = vpop.f32.mrb[0].mxu0
        %v3996 = vadd.f32 0.0, %v3995
        %v3997 = vpop.f32.mrb[0].mxu0
        %3998 = vmatprep.mubr.bf16.mxu0 0
        %3999 = vmatmul.mubr.bf16.gmra.mrb[0].mxu0 %v3914
        %v4000 = vpop.f32.mrb[0].mxu0
        %v4001 = vadd.f32 0.0, %v4000
        %v4002 = vpop.f32.mrb[0].mxu0
        %v4003 = vpop.f32.mrb[0].mxu0
        %v4004 = vadd.f32 0.0, %v4003
        %v4005 = vpop.f32.mrb[0].mxu0
        %4006 = vmatprep.mubr.bf16.mxu0 0
        %4007 = vmatmul.mubr.bf16.gmra.mrb[0].mxu0 %v3917
        %v4008 = vpop.f32.mrb[0].mxu0
        %v4009 = vadd.f32 0.0, %v4008
        %v4010 = vpop.f32.mrb[0].mxu0
        %v4011 = vpop.f32.mrb[0].mxu0
        %v4012 = vadd.f32 0.0, %v4011
        %v4013 = vpop.f32.mrb[0].mxu0
        %4014 = vmatprep.mubr.bf16.mxu0 0
        %4015 = vmatmul.mubr.bf16.gmra.mrb[0].mxu0 %v3920
        %v4016 = vpop.f32.mrb[0].mxu0
        %v4017 = vadd.f32 0.0, %v4016
        %v4018 = vpop.f32.mrb[0].mxu0
        %v4019 = vpop.f32.mrb[0].mxu0
        %v4020 = vadd.f32 0.0, %v4019
        %v4021 = vpop.f32.mrb[0].mxu0
        %4022 = vmatprep.mubr.bf16.mxu0 0
        %4023 = vmatmul.mubr.bf16.gmra.mrb[0].mxu0 %v3923
        %v4024 = vpop.f32.mrb[0].mxu0
        %v4025 = vadd.f32 0.0, %v4024
        %v4026 = vpop.f32.mrb[0].mxu0
        %v4027 = vpop.f32.mrb[0].mxu0
        %v4028 = vadd.f32 0.0, %v4027
        %v4029 = vpop.f32.mrb[0].mxu0
        %4030 = vmatprep.mubr.bf16.mxu0 0
        %4031 = vmatmul.mubr.bf16.gmra.mrb[0].mxu0 %v3926
        %v4032 = vpop.f32.mrb[0].mxu0
        %v4033 = vadd.f32 0.0, %v4032
        %v4034 = vpop.f32.mrb[0].mxu0
        %v4035 = vpop.f32.mrb[0].mxu0
        %v4036 = vadd.f32 0.0, %v4035
        %v4037 = vpop.f32.mrb[0].mxu0
        %4038 = vmatprep.mubr.bf16.mxu0 0
        %4039 = vmatmul.mubr.bf16.gmra.mrb[0].mxu0 %v3929
        %v4040 = vpop.f32.mrb[0].mxu0
        %v4041 = vadd.f32 0.0, %v4040
        %v4042 = vpop.f32.mrb[0].mxu0
        %v4043 = vpop.f32.mrb[0].mxu0
        %v4044 = vadd.f32 0.0, %v4043
        %v4045 = vpop.f32.mrb[0].mxu0
        %4046 = vmatprep.mubr.bf16.mxu0 0
        %4047 = vmatmul.mubr.bf16.gmra.mrb[0].mxu0 %v3932
        %v4048 = vpop.f32.mrb[0].mxu0
        %v4049 = vadd.f32 0.0, %v4048
        %v4050 = vpop.f32.mrb[0].mxu0
        %v4051 = vpop.f32.mrb[0].mxu0
        %v4052 = vadd.f32 0.0, %v4051
        %v4053 = vpop.f32.mrb[0].mxu0
        %4054 = vmatprep.mubr.bf16.mxu0 0
        %4055 = vmatmul.mubr.bf16.gmra.mrb[0].mxu0 %v3935
        %v4056 = vpop.f32.mrb[0].mxu0
        %v4057 = vadd.f32 0.0, %v4056
        %v4058 = vpop.f32.mrb[0].mxu0
        %v4059 = vpop.f32.mrb[0].mxu0
        %v4060 = vadd.f32 0.0, %v4059
        %v4061 = vpop.f32.mrb[0].mxu0
        %4062 = vmatprep.mubr.bf16.mxu0 0
        %4063 = vmatmul.mubr.bf16.gmra.mrb[0].mxu0 %v3938
        %v4064 = vpop.f32.mrb[0].mxu0
        %v4065 = vadd.f32 0.0, %v4064
        %v4066 = vpop.f32.mrb[0].mxu0
        %v4067 = vpop.f32.mrb[0].mxu0
        %v4068 = vadd.f32 0.0, %v4067
        %v4069 = vpop.f32.mrb[0].mxu0
        %4070 = vmatprep.mubr.bf16.mxu0 0
        %4071 = vmatmul.mubr.bf16.gmra.mrb[0].mxu0 %v3941
        %v4072 = vpop.f32.mrb[0].mxu0
        %v4073 = vadd.f32 0.0, %v4072
        %v4074 = vpop.f32.mrb[0].mxu0
        %v4075 = vpop.f32.mrb[0].mxu0
        %v4076 = vadd.f32 0.0, %v4075
        %v4077 = vpop.f32.mrb[0].mxu0
        %4078 = vmatprep.mubr.bf16.mxu0 0
        %4079 = vmatmul.mubr.bf16.gmra.mrb[0].mxu0 %v3944
        %v4080 = vpop.f32.mrb[0].mxu0
        %v4081 = vadd.f32 0.0, %v4080
        %v4082 = vpop.f32.mrb[0].mxu0
        %v4083 = vpop.f32.mrb[0].mxu0
        %v4084 = vadd.f32 0.0, %v4083
        %v4085 = vpop.f32.mrb[0].mxu0
        %4086 = vmatprep.mubr.bf16.mxu0 0
        %4087 = vmatmul.mubr.bf16.gmra.mrb[0].mxu0 %v3947
        %v4088 = vpop.f32.mrb[0].mxu0
        %v4089 = vadd.f32 0.0, %v4088
        %v4090 = vpop.f32.mrb[0].mxu0
        %v4091 = vpop.f32.mrb[0].mxu0
        %v4092 = vadd.f32 0.0, %v4091
        %v4093 = vpop.f32.mrb[0].mxu0
        %4094 = vmatprep.mubr.bf16.mxu0 0
        %4095 = vmatmul.mubr.bf16.gmra.mrb[0].mxu0 %v3950
        %v4096 = vpop.f32.mrb[0].mxu0
        %v4097 = vadd.f32 0.0, %v4096
        %v4098 = vpop.f32.mrb[0].mxu0
        %v4099 = vpop.f32.mrb[0].mxu0
        %v4100 = vadd.f32 0.0, %v4099
        %v4101 = vpop.f32.mrb[0].mxu0
        %4102 = vmatprep.mubr.bf16.mxu0 0
        %4103 = vmatmul.mubr.bf16.gmra.mrb[0].mxu0 %v3953
        %v4104 = vpop.f32.mrb[0].mxu0
        %v4105 = vadd.f32 0.0, %v4104
        %v4106 = vpop.f32.mrb[0].mxu0
        %v4107 = vpop.f32.mrb[0].mxu0
        %v4108 = vadd.f32 0.0, %v4107
        %v4109 = vpop.f32.mrb[0].mxu0
        %4110 = vmatprep.mubr.bf16.mxu0 0
        %4111 = vmatmul.mubr.bf16.gmra.mrb[0].mxu0 %v3956
        %v4112 = vpop.f32.mrb[0].mxu0
        %v4113 = vadd.f32 0.0, %v4112
        %v4114 = vpop.f32.mrb[0].mxu0
        %v4115 = vpop.f32.mrb[0].mxu0
        %v4116 = vadd.f32 0.0, %v4115
        %v4117 = vpop.f32.mrb[0].mxu0
        %4118 = vdwg.mxu0
        %v4119 = vadd.f32 %v3732, %v3993
        %v4120 = vadd.f32 %v3733, %v3996
        %v4121 = vadd.f32 %v3734, %v4001
        %v4122 = vadd.f32 %v3735, %v4004
        %v4123 = vadd.f32 %v3736, %v4009
        %v4124 = vadd.f32 %v3737, %v4012
        %v4125 = vadd.f32 %v3738, %v4017
        %v4126 = vadd.f32 %v3739, %v4020
        %v4127 = vadd.f32 %v3740, %v4025
        %v4128 = vadd.f32 %v3741, %v4028
        %v4129 = vadd.f32 %v3742, %v4033
        %v4130 = vadd.f32 %v3743, %v4036
        %v4131 = vadd.f32 %v3744, %v4041
        %v4132 = vadd.f32 %v3745, %v4044
        %v4133 = vadd.f32 %v3746, %v4049
        %v4134 = vadd.f32 %v3747, %v4052
        %v4135 = vadd.f32 %v3748, %v4057
        %v4136 = vadd.f32 %v3749, %v4060
        %v4137 = vadd.f32 %v3750, %v4065
        %v4138 = vadd.f32 %v3751, %v4068
        %v4139 = vadd.f32 %v3752, %v4073
        %v4140 = vadd.f32 %v3753, %v4076
        %v4141 = vadd.f32 %v3754, %v4081
        %v4142 = vadd.f32 %v3755, %v4084
        %v4143 = vadd.f32 %v3756, %v4089
        %v4144 = vadd.f32 %v3757, %v4092
        %v4145 = vadd.f32 %v3758, %v4097
        %v4146 = vadd.f32 %v3759, %v4100
        %v4147 = vadd.f32 %v3760, %v4105
        %v4148 = vadd.f32 %v3761, %v4108
        %v4149 = vadd.f32 %v3762, %v4113
        %v4150 = vadd.f32 %v3763, %v4116
        %s4151 = scalar_lea.vmem %s1147, 152 [#allocation2]
        %v4152 = vld [vmem:[%s4151] sm:$0xf]
        %v4153 = vld [vmem:[%s4151 + $0x4] sm:$0xf]
        %v4154 = vld [vmem:[%s4151 + $0x8] sm:$0xf]
        %v4155 = vld [vmem:[%s4151 + $0xc] sm:$0xf]
        %v4156 = vld [vmem:[%s4151 + $0x10] sm:$0xf]
        %v4157 = vld [vmem:[%s4151 + $0x14] sm:$0xf]
        %v4158 = vld [vmem:[%s4151 + $0x18] sm:$0xf]
        %v4159 = vld [vmem:[%s4151 + $0x1c] sm:$0xf]
        %v4160 = vld [vmem:[%s4151 + $0x20] sm:$0xf]
        %v4161 = vld [vmem:[%s4151 + $0x24] sm:$0xf]
        %v4162 = vld [vmem:[%s4151 + $0x28] sm:$0xf]
        %v4163 = vld [vmem:[%s4151 + $0x2c] sm:$0xf]
        %v4164 = vld [vmem:[%s4151 + $0x30] sm:$0xf]
        %v4165 = vld [vmem:[%s4151 + $0x34] sm:$0xf]
        %v4166 = vld [vmem:[%s4151 + $0x38] sm:$0xf]
        %v4167 = vld [vmem:[%s4151 + $0x3c] sm:$0xf]
        %v4168 = vld [vmem:[%s4151 + $0x40] sm:$0xf]
        %v4169 = vld [vmem:[%s4151 + $0x44] sm:$0xf]
        %v4170 = vld [vmem:[%s4151 + $0x48] sm:$0xf]
        %v4171 = vld [vmem:[%s4151 + $0x4c] sm:$0xf]
        %v4172 = vld [vmem:[%s4151 + $0x50] sm:$0xf]
        %v4173 = vld [vmem:[%s4151 + $0x54] sm:$0xf]
        %v4174 = vld [vmem:[%s4151 + $0x58] sm:$0xf]
        %v4175 = vld [vmem:[%s4151 + $0x5c] sm:$0xf]
        %v4176 = vld [vmem:[%s4151 + $0x60] sm:$0xf]
        %v4177 = vld [vmem:[%s4151 + $0x64] sm:$0xf]
        %v4178 = vld [vmem:[%s4151 + $0x68] sm:$0xf]
        %v4179 = vld [vmem:[%s4151 + $0x6c] sm:$0xf]
        %v4180 = vld [vmem:[%s4151 + $0x70] sm:$0xf]
        %v4181 = vld [vmem:[%s4151 + $0x74] sm:$0xf]
        %v4182 = vld [vmem:[%s4151 + $0x78] sm:$0xf]
        %v4183 = vld [vmem:[%s4151 + $0x7c] sm:$0xf]
        %s4184 = scalar_lea.vmem %s1, 64
        %v4185 = vld [vmem:[%s4184] sm:$0xf]
        %v4186 = vld [vmem:[%s4184 + $0x4] sm:$0xf]
        %v4187 = vld [vmem:[%s4184 + $0x8] sm:$0xf]
        %v4188 = vld [vmem:[%s4184 + $0xc] sm:$0xf]
        %v4221 = vunpack.c.l.b16 %v4152
        %v4222 = vunpack.c.l.b16 %v4153
        %v4223 = vunpack.c.l.b16 %v4154
        %v4224 = vunpack.c.l.b16 %v4155
        %v4225 = vunpack.c.l.b16 %v4156
        %v4226 = vunpack.c.l.b16 %v4157
        %v4227 = vunpack.c.l.b16 %v4158
        %v4228 = vunpack.c.l.b16 %v4159
        %v4229 = vunpack.c.l.b16 %v4160
        %v4230 = vunpack.c.l.b16 %v4161
        %v4231 = vunpack.c.l.b16 %v4162
        %v4232 = vunpack.c.l.b16 %v4163
        %v4233 = vunpack.c.l.b16 %v4164
        %v4234 = vunpack.c.l.b16 %v4165
        %v4235 = vunpack.c.l.b16 %v4166
        %v4236 = vunpack.c.l.b16 %v4167
        %v4237 = vunpack.c.l.b16 %v4168
        %v4238 = vunpack.c.l.b16 %v4169
        %v4239 = vunpack.c.l.b16 %v4170
        %v4240 = vunpack.c.l.b16 %v4171
        %v4241 = vunpack.c.l.b16 %v4172
        %v4242 = vunpack.c.l.b16 %v4173
        %v4243 = vunpack.c.l.b16 %v4174
        %v4244 = vunpack.c.l.b16 %v4175
        %v4245 = vunpack.c.l.b16 %v4176
        %v4246 = vunpack.c.l.b16 %v4177
        %v4247 = vunpack.c.l.b16 %v4178
        %v4248 = vunpack.c.l.b16 %v4179
        %v4249 = vunpack.c.l.b16 %v4180
        %v4250 = vunpack.c.l.b16 %v4181
        %v4251 = vunpack.c.l.b16 %v4182
        %v4252 = vunpack.c.l.b16 %v4183
        %v4253 = vpack.c.b16 %v4222, %v4221
        %v4254 = vpack.c.b16 %v4224, %v4223
        %v4255 = vpack.c.b16 %v4226, %v4225
        %v4256 = vpack.c.b16 %v4228, %v4227
        %v4257 = vpack.c.b16 %v4230, %v4229
        %v4258 = vpack.c.b16 %v4232, %v4231
        %v4259 = vpack.c.b16 %v4234, %v4233
        %v4260 = vpack.c.b16 %v4236, %v4235
        %v4261 = vpack.c.b16 %v4238, %v4237
        %v4262 = vpack.c.b16 %v4240, %v4239
        %v4263 = vpack.c.b16 %v4242, %v4241
        %v4264 = vpack.c.b16 %v4244, %v4243
        %v4265 = vpack.c.b16 %v4246, %v4245
        %v4266 = vpack.c.b16 %v4248, %v4247
        %v4267 = vpack.c.b16 %v4250, %v4249
        %v4268 = vpack.c.b16 %v4252, %v4251
        %v4273 = vunpack.c.l.b16 %v4185
        %v4274 = vunpack.c.l.b16 %v4186
        %v4275 = vunpack.c.l.b16 %v4187
        %v4276 = vunpack.c.l.b16 %v4188
        %v4277 = vpack.c.b16 %v4274, %v4273
        %v4278 = vpack.c.b16 %v4276, %v4275
        %v4282 = vsel %vm1667, %v4253, 0
        %v4285 = vsel %vm1667, %v4254, 0
        %v4288 = vsel %vm1667, %v4255, 0
        %v4291 = vsel %vm1667, %v4256, 0
        %v4294 = vsel %vm1667, %v4257, 0
        %v4297 = vsel %vm1667, %v4258, 0
        %v4300 = vsel %vm1667, %v4259, 0
        %v4303 = vsel %vm1667, %v4260, 0
        %v4306 = vsel %vm1667, %v4261, 0
        %v4309 = vsel %vm1667, %v4262, 0
        %v4312 = vsel %vm1667, %v4263, 0
        %v4315 = vsel %vm1667, %v4264, 0
        %v4318 = vsel %vm1667, %v4265, 0
        %v4321 = vsel %vm1667, %v4266, 0
        %v4324 = vsel %vm1667, %v4267, 0
        %v4327 = vsel %vm1667, %v4268, 0
        %4329 = vmatprep.subr.bf16.mxu0 0
        %4330 = vmatpush1.bf16.msra.mxu0 %v4277
        %4331 = vmatprep.subr.bf16.mxu0 0
        %4332 = vmatpush1.bf16.msra.mxu0 %v4278
        %4333 = vmatprep.subr.bf16.mxu0 0
        %4334 = vmatpush1.bf16.msra.mxu0 0
        %4335 = vmatprep.subr.bf16.mxu0 0
        %4336 = vmatpush1.bf16.msra.mxu0 0
        %4337 = vmatprep.subr.bf16.mxu0 0
        %4338 = vmatpush1.bf16.msra.mxu0 0
        %4339 = vmatprep.subr.bf16.mxu0 0
        %4340 = vmatpush1.bf16.msra.mxu0 0
        %4341 = vmatprep.subr.bf16.mxu0 0
        %4342 = vmatpush1.bf16.msra.mxu0 0
        %4343 = vmatprep.subr.bf16.mxu0 0
        %4344 = vmatpush1.bf16.msra.mxu0 0
        %4345 = vmatprep.subr.bf16.mxu0 0
        %4346 = vmatpush1.bf16.msra.mxu0 0
        %4347 = vmatprep.subr.bf16.mxu0 0
        %4348 = vmatpush1.bf16.msra.mxu0 0
        %4349 = vmatprep.subr.bf16.mxu0 0
        %4350 = vmatpush1.bf16.msra.mxu0 0
        %4351 = vmatprep.subr.bf16.mxu0 0
        %4352 = vmatpush1.bf16.msra.mxu0 0
        %4353 = vmatprep.subr.bf16.mxu0 0
        %4354 = vmatpush1.bf16.msra.mxu0 0
        %4355 = vmatprep.subr.bf16.mxu0 0
        %4356 = vmatpush1.bf16.msra.mxu0 0
        %4357 = vmatprep.subr.bf16.mxu0 0
        %4358 = vmatpush1.bf16.msra.mxu0 0
        %4359 = vmatprep.subr.bf16.mxu0 0
        %4360 = vmatpush1.bf16.msra.mxu0 0
        %4361 = vmatprep.mubr.bf16.mxu0 0
        %4362 = vmatmul.mubr.bf16.gmra.mrb[0].mxu0 %v4282
        %v4363 = vpop.f32.mrb[0].mxu0
        %v4364 = vadd.f32 0.0, %v4363
        %v4365 = vpop.f32.mrb[0].mxu0
        %v4366 = vpop.f32.mrb[0].mxu0
        %v4367 = vadd.f32 0.0, %v4366
        %v4368 = vpop.f32.mrb[0].mxu0
        %4369 = vmatprep.mubr.bf16.mxu0 0
        %4370 = vmatmul.mubr.bf16.gmra.mrb[0].mxu0 %v4285
        %v4371 = vpop.f32.mrb[0].mxu0
        %v4372 = vadd.f32 0.0, %v4371
        %v4373 = vpop.f32.mrb[0].mxu0
        %v4374 = vpop.f32.mrb[0].mxu0
        %v4375 = vadd.f32 0.0, %v4374
        %v4376 = vpop.f32.mrb[0].mxu0
        %4377 = vmatprep.mubr.bf16.mxu0 0
        %4378 = vmatmul.mubr.bf16.gmra.mrb[0].mxu0 %v4288
        %v4379 = vpop.f32.mrb[0].mxu0
        %v4380 = vadd.f32 0.0, %v4379
        %v4381 = vpop.f32.mrb[0].mxu0
        %v4382 = vpop.f32.mrb[0].mxu0
        %v4383 = vadd.f32 0.0, %v4382
        %v4384 = vpop.f32.mrb[0].mxu0
        %4385 = vmatprep.mubr.bf16.mxu0 0
        %4386 = vmatmul.mubr.bf16.gmra.mrb[0].mxu0 %v4291
        %v4387 = vpop.f32.mrb[0].mxu0
        %v4388 = vadd.f32 0.0, %v4387
        %v4389 = vpop.f32.mrb[0].mxu0
        %v4390 = vpop.f32.mrb[0].mxu0
        %v4391 = vadd.f32 0.0, %v4390
        %v4392 = vpop.f32.mrb[0].mxu0
        %4393 = vmatprep.mubr.bf16.mxu0 0
        %4394 = vmatmul.mubr.bf16.gmra.mrb[0].mxu0 %v4294
        %v4395 = vpop.f32.mrb[0].mxu0
        %v4396 = vadd.f32 0.0, %v4395
        %v4397 = vpop.f32.mrb[0].mxu0
        %v4398 = vpop.f32.mrb[0].mxu0
        %v4399 = vadd.f32 0.0, %v4398
        %v4400 = vpop.f32.mrb[0].mxu0
        %4401 = vmatprep.mubr.bf16.mxu0 0
        %4402 = vmatmul.mubr.bf16.gmra.mrb[0].mxu0 %v4297
        %v4403 = vpop.f32.mrb[0].mxu0
        %v4404 = vadd.f32 0.0, %v4403
        %v4405 = vpop.f32.mrb[0].mxu0
        %v4406 = vpop.f32.mrb[0].mxu0
        %v4407 = vadd.f32 0.0, %v4406
        %v4408 = vpop.f32.mrb[0].mxu0
        %4409 = vmatprep.mubr.bf16.mxu0 0
        %4410 = vmatmul.mubr.bf16.gmra.mrb[0].mxu0 %v4300
        %v4411 = vpop.f32.mrb[0].mxu0
        %v4412 = vadd.f32 0.0, %v4411
        %v4413 = vpop.f32.mrb[0].mxu0
        %v4414 = vpop.f32.mrb[0].mxu0
        %v4415 = vadd.f32 0.0, %v4414
        %v4416 = vpop.f32.mrb[0].mxu0
        %4417 = vmatprep.mubr.bf16.mxu0 0
        %4418 = vmatmul.mubr.bf16.gmra.mrb[0].mxu0 %v4303
        %v4419 = vpop.f32.mrb[0].mxu0
        %v4420 = vadd.f32 0.0, %v4419
        %v4421 = vpop.f32.mrb[0].mxu0
        %v4422 = vpop.f32.mrb[0].mxu0
        %v4423 = vadd.f32 0.0, %v4422
        %v4424 = vpop.f32.mrb[0].mxu0
        %4425 = vmatprep.mubr.bf16.mxu0 0
        %4426 = vmatmul.mubr.bf16.gmra.mrb[0].mxu0 %v4306
        %v4427 = vpop.f32.mrb[0].mxu0
        %v4428 = vadd.f32 0.0, %v4427
        %v4429 = vpop.f32.mrb[0].mxu0
        %v4430 = vpop.f32.mrb[0].mxu0
        %v4431 = vadd.f32 0.0, %v4430
        %v4432 = vpop.f32.mrb[0].mxu0
        %4433 = vmatprep.mubr.bf16.mxu0 0
        %4434 = vmatmul.mubr.bf16.gmra.mrb[0].mxu0 %v4309
        %v4435 = vpop.f32.mrb[0].mxu0
        %v4436 = vadd.f32 0.0, %v4435
        %v4437 = vpop.f32.mrb[0].mxu0
        %v4438 = vpop.f32.mrb[0].mxu0
        %v4439 = vadd.f32 0.0, %v4438
        %v4440 = vpop.f32.mrb[0].mxu0
        %4441 = vmatprep.mubr.bf16.mxu0 0
        %4442 = vmatmul.mubr.bf16.gmra.mrb[0].mxu0 %v4312
        %v4443 = vpop.f32.mrb[0].mxu0
        %v4444 = vadd.f32 0.0, %v4443
        %v4445 = vpop.f32.mrb[0].mxu0
        %v4446 = vpop.f32.mrb[0].mxu0
        %v4447 = vadd.f32 0.0, %v4446
        %v4448 = vpop.f32.mrb[0].mxu0
        %4449 = vmatprep.mubr.bf16.mxu0 0
        %4450 = vmatmul.mubr.bf16.gmra.mrb[0].mxu0 %v4315
        %v4451 = vpop.f32.mrb[0].mxu0
        %v4452 = vadd.f32 0.0, %v4451
        %v4453 = vpop.f32.mrb[0].mxu0
        %v4454 = vpop.f32.mrb[0].mxu0
        %v4455 = vadd.f32 0.0, %v4454
        %v4456 = vpop.f32.mrb[0].mxu0
        %4457 = vmatprep.mubr.bf16.mxu0 0
        %4458 = vmatmul.mubr.bf16.gmra.mrb[0].mxu0 %v4318
        %v4459 = vpop.f32.mrb[0].mxu0
        %v4460 = vadd.f32 0.0, %v4459
        %v4461 = vpop.f32.mrb[0].mxu0
        %v4462 = vpop.f32.mrb[0].mxu0
        %v4463 = vadd.f32 0.0, %v4462
        %v4464 = vpop.f32.mrb[0].mxu0
        %4465 = vmatprep.mubr.bf16.mxu0 0
        %4466 = vmatmul.mubr.bf16.gmra.mrb[0].mxu0 %v4321
        %v4467 = vpop.f32.mrb[0].mxu0
        %v4468 = vadd.f32 0.0, %v4467
        %v4469 = vpop.f32.mrb[0].mxu0
        %v4470 = vpop.f32.mrb[0].mxu0
        %v4471 = vadd.f32 0.0, %v4470
        %v4472 = vpop.f32.mrb[0].mxu0
        %4473 = vmatprep.mubr.bf16.mxu0 0
        %4474 = vmatmul.mubr.bf16.gmra.mrb[0].mxu0 %v4324
        %v4475 = vpop.f32.mrb[0].mxu0
        %v4476 = vadd.f32 0.0, %v4475
        %v4477 = vpop.f32.mrb[0].mxu0
        %v4478 = vpop.f32.mrb[0].mxu0
        %v4479 = vadd.f32 0.0, %v4478
        %v4480 = vpop.f32.mrb[0].mxu0
        %4481 = vmatprep.mubr.bf16.mxu0 0
        %4482 = vmatmul.mubr.bf16.gmra.mrb[0].mxu0 %v4327
        %v4483 = vpop.f32.mrb[0].mxu0
        %v4484 = vadd.f32 0.0, %v4483
        %v4485 = vpop.f32.mrb[0].mxu0
        %v4486 = vpop.f32.mrb[0].mxu0
        %v4487 = vadd.f32 0.0, %v4486
        %v4488 = vpop.f32.mrb[0].mxu0
        %4489 = vdwg.mxu0
        %v4490 = vadd.f32 %v4119, %v4364
        %v4491 = vadd.f32 %v4120, %v4367
        %v4492 = vadd.f32 %v4121, %v4372
        %v4493 = vadd.f32 %v4122, %v4375
        %v4494 = vadd.f32 %v4123, %v4380
        %v4495 = vadd.f32 %v4124, %v4383
        %v4496 = vadd.f32 %v4125, %v4388
        %v4497 = vadd.f32 %v4126, %v4391
        %v4498 = vadd.f32 %v4127, %v4396
        %v4499 = vadd.f32 %v4128, %v4399
        %v4500 = vadd.f32 %v4129, %v4404
        %v4501 = vadd.f32 %v4130, %v4407
        %v4502 = vadd.f32 %v4131, %v4412
        %v4503 = vadd.f32 %v4132, %v4415
        %v4504 = vadd.f32 %v4133, %v4420
        %v4505 = vadd.f32 %v4134, %v4423
        %v4506 = vadd.f32 %v4135, %v4428
        %v4507 = vadd.f32 %v4136, %v4431
        %v4508 = vadd.f32 %v4137, %v4436
        %v4509 = vadd.f32 %v4138, %v4439
        %v4510 = vadd.f32 %v4139, %v4444
        %v4511 = vadd.f32 %v4140, %v4447
        %v4512 = vadd.f32 %v4141, %v4452
        %v4513 = vadd.f32 %v4142, %v4455
        %v4514 = vadd.f32 %v4143, %v4460
        %v4515 = vadd.f32 %v4144, %v4463
        %v4516 = vadd.f32 %v4145, %v4468
        %v4517 = vadd.f32 %v4146, %v4471
        %v4518 = vadd.f32 %v4147, %v4476
        %v4519 = vadd.f32 %v4148, %v4479
        %v4520 = vadd.f32 %v4149, %v4484
        %v4521 = vadd.f32 %v4150, %v4487
        %s4522 = scalar_lea.vmem %s1154, 152 [#allocation3]
        %v4523 = vld [vmem:[%s4522] sm:$0xf]
        %v4524 = vld [vmem:[%s4522 + $0x4] sm:$0xf]
        %v4525 = vld [vmem:[%s4522 + $0x8] sm:$0xf]
        %v4526 = vld [vmem:[%s4522 + $0xc] sm:$0xf]
        %v4527 = vld [vmem:[%s4522 + $0x10] sm:$0xf]
        %v4528 = vld [vmem:[%s4522 + $0x14] sm:$0xf]
        %v4529 = vld [vmem:[%s4522 + $0x18] sm:$0xf]
        %v4530 = vld [vmem:[%s4522 + $0x1c] sm:$0xf]
        %v4531 = vld [vmem:[%s4522 + $0x20] sm:$0xf]
        %v4532 = vld [vmem:[%s4522 + $0x24] sm:$0xf]
        %v4533 = vld [vmem:[%s4522 + $0x28] sm:$0xf]
        %v4534 = vld [vmem:[%s4522 + $0x2c] sm:$0xf]
        %v4535 = vld [vmem:[%s4522 + $0x30] sm:$0xf]
        %v4536 = vld [vmem:[%s4522 + $0x34] sm:$0xf]
        %v4537 = vld [vmem:[%s4522 + $0x38] sm:$0xf]
        %v4538 = vld [vmem:[%s4522 + $0x3c] sm:$0xf]
        %v4539 = vld [vmem:[%s4522 + $0x40] sm:$0xf]
        %v4540 = vld [vmem:[%s4522 + $0x44] sm:$0xf]
        %v4541 = vld [vmem:[%s4522 + $0x48] sm:$0xf]
        %v4542 = vld [vmem:[%s4522 + $0x4c] sm:$0xf]
        %v4543 = vld [vmem:[%s4522 + $0x50] sm:$0xf]
        %v4544 = vld [vmem:[%s4522 + $0x54] sm:$0xf]
        %v4545 = vld [vmem:[%s4522 + $0x58] sm:$0xf]
        %v4546 = vld [vmem:[%s4522 + $0x5c] sm:$0xf]
        %v4547 = vld [vmem:[%s4522 + $0x60] sm:$0xf]
        %v4548 = vld [vmem:[%s4522 + $0x64] sm:$0xf]
        %v4549 = vld [vmem:[%s4522 + $0x68] sm:$0xf]
        %v4550 = vld [vmem:[%s4522 + $0x6c] sm:$0xf]
        %v4551 = vld [vmem:[%s4522 + $0x70] sm:$0xf]
        %v4552 = vld [vmem:[%s4522 + $0x74] sm:$0xf]
        %v4553 = vld [vmem:[%s4522 + $0x78] sm:$0xf]
        %v4554 = vld [vmem:[%s4522 + $0x7c] sm:$0xf]
        %s4555 = scalar_lea.vmem %s3, 128
        %v4556 = vld [vmem:[%s4555] sm:$0xf]
        %v4557 = vld [vmem:[%s4555 + $0x4] sm:$0xf]
        %v4558 = vld [vmem:[%s4555 + $0x8] sm:$0xf]
        %v4559 = vld [vmem:[%s4555 + $0xc] sm:$0xf]
        %v4560 = vld [vmem:[%s4555 + $0x10] sm:$0xf]
        %v4561 = vld [vmem:[%s4555 + $0x14] sm:$0xf]
        %v4562 = vld [vmem:[%s4555 + $0x18] sm:$0xf]
        %v4563 = vld [vmem:[%s4555 + $0x1c] sm:$0xf]
        %v4596 = vunpack.c.l.b16 %v4523
        %v4597 = vunpack.c.l.b16 %v4524
        %v4598 = vunpack.c.l.b16 %v4525
        %v4599 = vunpack.c.l.b16 %v4526
        %v4600 = vunpack.c.l.b16 %v4527
        %v4601 = vunpack.c.l.b16 %v4528
        %v4602 = vunpack.c.l.b16 %v4529
        %v4603 = vunpack.c.l.b16 %v4530
        %v4604 = vunpack.c.l.b16 %v4531
        %v4605 = vunpack.c.l.b16 %v4532
        %v4606 = vunpack.c.l.b16 %v4533
        %v4607 = vunpack.c.l.b16 %v4534
        %v4608 = vunpack.c.l.b16 %v4535
        %v4609 = vunpack.c.l.b16 %v4536
        %v4610 = vunpack.c.l.b16 %v4537
        %v4611 = vunpack.c.l.b16 %v4538
        %v4612 = vunpack.c.l.b16 %v4539
        %v4613 = vunpack.c.l.b16 %v4540
        %v4614 = vunpack.c.l.b16 %v4541
        %v4615 = vunpack.c.l.b16 %v4542
        %v4616 = vunpack.c.l.b16 %v4543
        %v4617 = vunpack.c.l.b16 %v4544
        %v4618 = vunpack.c.l.b16 %v4545
        %v4619 = vunpack.c.l.b16 %v4546
        %v4620 = vunpack.c.l.b16 %v4547
        %v4621 = vunpack.c.l.b16 %v4548
        %v4622 = vunpack.c.l.b16 %v4549
        %v4623 = vunpack.c.l.b16 %v4550
        %v4624 = vunpack.c.l.b16 %v4551
        %v4625 = vunpack.c.l.b16 %v4552
        %v4626 = vunpack.c.l.b16 %v4553
        %v4627 = vunpack.c.l.b16 %v4554
        %v4628 = vpack.c.b16 %v4597, %v4596
        %v4629 = vpack.c.b16 %v4599, %v4598
        %v4630 = vpack.c.b16 %v4601, %v4600
        %v4631 = vpack.c.b16 %v4603, %v4602
        %v4632 = vpack.c.b16 %v4605, %v4604
        %v4633 = vpack.c.b16 %v4607, %v4606
        %v4634 = vpack.c.b16 %v4609, %v4608
        %v4635 = vpack.c.b16 %v4611, %v4610
        %v4636 = vpack.c.b16 %v4613, %v4612
        %v4637 = vpack.c.b16 %v4615, %v4614
        %v4638 = vpack.c.b16 %v4617, %v4616
        %v4639 = vpack.c.b16 %v4619, %v4618
        %v4640 = vpack.c.b16 %v4621, %v4620
        %v4641 = vpack.c.b16 %v4623, %v4622
        %v4642 = vpack.c.b16 %v4625, %v4624
        %v4643 = vpack.c.b16 %v4627, %v4626
        %v4652 = vunpack.c.l.b16 %v4556
        %v4653 = vunpack.c.l.b16 %v4557
        %v4654 = vunpack.c.l.b16 %v4558
        %v4655 = vunpack.c.l.b16 %v4559
        %v4656 = vunpack.c.l.b16 %v4560
        %v4657 = vunpack.c.l.b16 %v4561
        %v4658 = vunpack.c.l.b16 %v4562
        %v4659 = vunpack.c.l.b16 %v4563
        %v4660 = vpack.c.b16 %v4653, %v4652
        %v4661 = vpack.c.b16 %v4655, %v4654
        %v4662 = vpack.c.b16 %v4657, %v4656
        %v4663 = vpack.c.b16 %v4659, %v4658
        %v4669 = vsel %vm1365, %v4628, 0
        %v4672 = vsel %vm1365, %v4629, 0
        %v4675 = vsel %vm1365, %v4630, 0
        %v4678 = vsel %vm1365, %v4631, 0
        %v4681 = vsel %vm1365, %v4632, 0
        %v4684 = vsel %vm1365, %v4633, 0
        %v4687 = vsel %vm1365, %v4634, 0
        %v4690 = vsel %vm1365, %v4635, 0
        %v4693 = vsel %vm1365, %v4636, 0
        %v4696 = vsel %vm1365, %v4637, 0
        %v4699 = vsel %vm1365, %v4638, 0
        %v4702 = vsel %vm1365, %v4639, 0
        %v4705 = vsel %vm1365, %v4640, 0
        %v4708 = vsel %vm1365, %v4641, 0
        %v4711 = vsel %vm1365, %v4642, 0
        %v4714 = vsel %vm1365, %v4643, 0
        %4716 = vmatprep.subr.bf16.mxu0 0
        %4717 = vmatpush1.bf16.msra.mxu0 %v4660
        %4718 = vmatprep.subr.bf16.mxu0 0
        %4719 = vmatpush1.bf16.msra.mxu0 %v4661
        %4720 = vmatprep.subr.bf16.mxu0 0
        %4721 = vmatpush1.bf16.msra.mxu0 %v4662
        %4722 = vmatprep.subr.bf16.mxu0 0
        %4723 = vmatpush1.bf16.msra.mxu0 %v4663
        %4724 = vmatprep.subr.bf16.mxu0 0
        %4725 = vmatpush1.bf16.msra.mxu0 0
        %4726 = vmatprep.subr.bf16.mxu0 0
        %4727 = vmatpush1.bf16.msra.mxu0 0
        %4728 = vmatprep.subr.bf16.mxu0 0
        %4729 = vmatpush1.bf16.msra.mxu0 0
        %4730 = vmatprep.subr.bf16.mxu0 0
        %4731 = vmatpush1.bf16.msra.mxu0 0
        %4732 = vmatprep.subr.bf16.mxu0 0
        %4733 = vmatpush1.bf16.msra.mxu0 0
        %4734 = vmatprep.subr.bf16.mxu0 0
        %4735 = vmatpush1.bf16.msra.mxu0 0
        %4736 = vmatprep.subr.bf16.mxu0 0
        %4737 = vmatpush1.bf16.msra.mxu0 0
        %4738 = vmatprep.subr.bf16.mxu0 0
        %4739 = vmatpush1.bf16.msra.mxu0 0
        %4740 = vmatprep.subr.bf16.mxu0 0
        %4741 = vmatpush1.bf16.msra.mxu0 0
        %4742 = vmatprep.subr.bf16.mxu0 0
        %4743 = vmatpush1.bf16.msra.mxu0 0
        %4744 = vmatprep.subr.bf16.mxu0 0
        %4745 = vmatpush1.bf16.msra.mxu0 0
        %4746 = vmatprep.subr.bf16.mxu0 0
        %4747 = vmatpush1.bf16.msra.mxu0 0
        %4748 = vmatprep.mubr.bf16.mxu0 0
        %4749 = vmatmul.mubr.bf16.gmra.mrb[0].mxu0 %v4669
        %v4750 = vpop.f32.mrb[0].mxu0
        %v4751 = vadd.f32 0.0, %v4750
        %v4752 = vpop.f32.mrb[0].mxu0
        %v4753 = vpop.f32.mrb[0].mxu0
        %v4754 = vadd.f32 0.0, %v4753
        %v4755 = vpop.f32.mrb[0].mxu0
        %4756 = vmatprep.mubr.bf16.mxu0 0
        %4757 = vmatmul.mubr.bf16.gmra.mrb[0].mxu0 %v4672
        %v4758 = vpop.f32.mrb[0].mxu0
        %v4759 = vadd.f32 0.0, %v4758
        %v4760 = vpop.f32.mrb[0].mxu0
        %v4761 = vpop.f32.mrb[0].mxu0
        %v4762 = vadd.f32 0.0, %v4761
        %v4763 = vpop.f32.mrb[0].mxu0
        %4764 = vmatprep.mubr.bf16.mxu0 0
        %4765 = vmatmul.mubr.bf16.gmra.mrb[0].mxu0 %v4675
        %v4766 = vpop.f32.mrb[0].mxu0
        %v4767 = vadd.f32 0.0, %v4766
        %v4768 = vpop.f32.mrb[0].mxu0
        %v4769 = vpop.f32.mrb[0].mxu0
        %v4770 = vadd.f32 0.0, %v4769
        %v4771 = vpop.f32.mrb[0].mxu0
        %4772 = vmatprep.mubr.bf16.mxu0 0
        %4773 = vmatmul.mubr.bf16.gmra.mrb[0].mxu0 %v4678
        %v4774 = vpop.f32.mrb[0].mxu0
        %v4775 = vadd.f32 0.0, %v4774
        %v4776 = vpop.f32.mrb[0].mxu0
        %v4777 = vpop.f32.mrb[0].mxu0
        %v4778 = vadd.f32 0.0, %v4777
        %v4779 = vpop.f32.mrb[0].mxu0
        %4780 = vmatprep.mubr.bf16.mxu0 0
        %4781 = vmatmul.mubr.bf16.gmra.mrb[0].mxu0 %v4681
        %v4782 = vpop.f32.mrb[0].mxu0
        %v4783 = vadd.f32 0.0, %v4782
        %v4784 = vpop.f32.mrb[0].mxu0
        %v4785 = vpop.f32.mrb[0].mxu0
        %v4786 = vadd.f32 0.0, %v4785
        %v4787 = vpop.f32.mrb[0].mxu0
        %4788 = vmatprep.mubr.bf16.mxu0 0
        %4789 = vmatmul.mubr.bf16.gmra.mrb[0].mxu0 %v4684
        %v4790 = vpop.f32.mrb[0].mxu0
        %v4791 = vadd.f32 0.0, %v4790
        %v4792 = vpop.f32.mrb[0].mxu0
        %v4793 = vpop.f32.mrb[0].mxu0
        %v4794 = vadd.f32 0.0, %v4793
        %v4795 = vpop.f32.mrb[0].mxu0
        %4796 = vmatprep.mubr.bf16.mxu0 0
        %4797 = vmatmul.mubr.bf16.gmra.mrb[0].mxu0 %v4687
        %v4798 = vpop.f32.mrb[0].mxu0
        %v4799 = vadd.f32 0.0, %v4798
        %v4800 = vpop.f32.mrb[0].mxu0
        %v4801 = vpop.f32.mrb[0].mxu0
        %v4802 = vadd.f32 0.0, %v4801
        %v4803 = vpop.f32.mrb[0].mxu0
        %4804 = vmatprep.mubr.bf16.mxu0 0
        %4805 = vmatmul.mubr.bf16.gmra.mrb[0].mxu0 %v4690
        %v4806 = vpop.f32.mrb[0].mxu0
        %v4807 = vadd.f32 0.0, %v4806
        %v4808 = vpop.f32.mrb[0].mxu0
        %v4809 = vpop.f32.mrb[0].mxu0
        %v4810 = vadd.f32 0.0, %v4809
        %v4811 = vpop.f32.mrb[0].mxu0
        %4812 = vmatprep.mubr.bf16.mxu0 0
        %4813 = vmatmul.mubr.bf16.gmra.mrb[0].mxu0 %v4693
        %v4814 = vpop.f32.mrb[0].mxu0
        %v4815 = vadd.f32 0.0, %v4814
        %v4816 = vpop.f32.mrb[0].mxu0
        %v4817 = vpop.f32.mrb[0].mxu0
        %v4818 = vadd.f32 0.0, %v4817
        %v4819 = vpop.f32.mrb[0].mxu0
        %4820 = vmatprep.mubr.bf16.mxu0 0
        %4821 = vmatmul.mubr.bf16.gmra.mrb[0].mxu0 %v4696
        %v4822 = vpop.f32.mrb[0].mxu0
        %v4823 = vadd.f32 0.0, %v4822
        %v4824 = vpop.f32.mrb[0].mxu0
        %v4825 = vpop.f32.mrb[0].mxu0
        %v4826 = vadd.f32 0.0, %v4825
        %v4827 = vpop.f32.mrb[0].mxu0
        %4828 = vmatprep.mubr.bf16.mxu0 0
        %4829 = vmatmul.mubr.bf16.gmra.mrb[0].mxu0 %v4699
        %v4830 = vpop.f32.mrb[0].mxu0
        %v4831 = vadd.f32 0.0, %v4830
        %v4832 = vpop.f32.mrb[0].mxu0
        %v4833 = vpop.f32.mrb[0].mxu0
        %v4834 = vadd.f32 0.0, %v4833
        %v4835 = vpop.f32.mrb[0].mxu0
        %4836 = vmatprep.mubr.bf16.mxu0 0
        %4837 = vmatmul.mubr.bf16.gmra.mrb[0].mxu0 %v4702
        %v4838 = vpop.f32.mrb[0].mxu0
        %v4839 = vadd.f32 0.0, %v4838
        %v4840 = vpop.f32.mrb[0].mxu0
        %v4841 = vpop.f32.mrb[0].mxu0
        %v4842 = vadd.f32 0.0, %v4841
        %v4843 = vpop.f32.mrb[0].mxu0
        %4844 = vmatprep.mubr.bf16.mxu0 0
        %4845 = vmatmul.mubr.bf16.gmra.mrb[0].mxu0 %v4705
        %v4846 = vpop.f32.mrb[0].mxu0
        %v4847 = vadd.f32 0.0, %v4846
        %v4848 = vpop.f32.mrb[0].mxu0
        %v4849 = vpop.f32.mrb[0].mxu0
        %v4850 = vadd.f32 0.0, %v4849
        %v4851 = vpop.f32.mrb[0].mxu0
        %4852 = vmatprep.mubr.bf16.mxu0 0
        %4853 = vmatmul.mubr.bf16.gmra.mrb[0].mxu0 %v4708
        %v4854 = vpop.f32.mrb[0].mxu0
        %v4855 = vadd.f32 0.0, %v4854
        %v4856 = vpop.f32.mrb[0].mxu0
        %v4857 = vpop.f32.mrb[0].mxu0
        %v4858 = vadd.f32 0.0, %v4857
        %v4859 = vpop.f32.mrb[0].mxu0
        %4860 = vmatprep.mubr.bf16.mxu0 0
        %4861 = vmatmul.mubr.bf16.gmra.mrb[0].mxu0 %v4711
        %v4862 = vpop.f32.mrb[0].mxu0
        %v4863 = vadd.f32 0.0, %v4862
        %v4864 = vpop.f32.mrb[0].mxu0
        %v4865 = vpop.f32.mrb[0].mxu0
        %v4866 = vadd.f32 0.0, %v4865
        %v4867 = vpop.f32.mrb[0].mxu0
        %4868 = vmatprep.mubr.bf16.mxu0 0
        %4869 = vmatmul.mubr.bf16.gmra.mrb[0].mxu0 %v4714
        %v4870 = vpop.f32.mrb[0].mxu0
        %v4871 = vadd.f32 0.0, %v4870
        %v4872 = vpop.f32.mrb[0].mxu0
        %v4873 = vpop.f32.mrb[0].mxu0
        %v4874 = vadd.f32 0.0, %v4873
        %v4875 = vpop.f32.mrb[0].mxu0
        %4876 = vdwg.mxu0
        %v4877 = vadd.f32 %v4490, %v4751
        %v4878 = vadd.f32 %v4491, %v4754
        %v4879 = vadd.f32 %v4492, %v4759
        %v4880 = vadd.f32 %v4493, %v4762
        %v4881 = vadd.f32 %v4494, %v4767
        %v4882 = vadd.f32 %v4495, %v4770
        %v4883 = vadd.f32 %v4496, %v4775
        %v4884 = vadd.f32 %v4497, %v4778
        %v4885 = vadd.f32 %v4498, %v4783
        %v4886 = vadd.f32 %v4499, %v4786
        %v4887 = vadd.f32 %v4500, %v4791
        %v4888 = vadd.f32 %v4501, %v4794
        %v4889 = vadd.f32 %v4502, %v4799
        %v4890 = vadd.f32 %v4503, %v4802
        %v4891 = vadd.f32 %v4504, %v4807
        %v4892 = vadd.f32 %v4505, %v4810
        %v4893 = vadd.f32 %v4506, %v4815
        %v4894 = vadd.f32 %v4507, %v4818
        %v4895 = vadd.f32 %v4508, %v4823
        %v4896 = vadd.f32 %v4509, %v4826
        %v4897 = vadd.f32 %v4510, %v4831
        %v4898 = vadd.f32 %v4511, %v4834
        %v4899 = vadd.f32 %v4512, %v4839
        %v4900 = vadd.f32 %v4513, %v4842
        %v4901 = vadd.f32 %v4514, %v4847
        %v4902 = vadd.f32 %v4515, %v4850
        %v4903 = vadd.f32 %v4516, %v4855
        %v4904 = vadd.f32 %v4517, %v4858
        %v4905 = vadd.f32 %v4518, %v4863
        %v4906 = vadd.f32 %v4519, %v4866
        %v4907 = vadd.f32 %v4520, %v4871
        %v4908 = vadd.f32 %v4521, %v4874
        %s4909 = scalar_lea.vmem %s1147, 296 [#allocation2]
        %v4910 = vld [vmem:[%s4909] sm:$0xf]
        %v4911 = vld [vmem:[%s4909 + $0x4] sm:$0xf]
        %v4912 = vld [vmem:[%s4909 + $0x8] sm:$0xf]
        %v4913 = vld [vmem:[%s4909 + $0xc] sm:$0xf]
        %v4914 = vld [vmem:[%s4909 + $0x10] sm:$0xf]
        %v4915 = vld [vmem:[%s4909 + $0x14] sm:$0xf]
        %v4916 = vld [vmem:[%s4909 + $0x18] sm:$0xf]
        %v4917 = vld [vmem:[%s4909 + $0x1c] sm:$0xf]
        %v4918 = vld [vmem:[%s4909 + $0x20] sm:$0xf]
        %v4919 = vld [vmem:[%s4909 + $0x24] sm:$0xf]
        %v4920 = vld [vmem:[%s4909 + $0x28] sm:$0xf]
        %v4921 = vld [vmem:[%s4909 + $0x2c] sm:$0xf]
        %v4922 = vld [vmem:[%s4909 + $0x30] sm:$0xf]
        %v4923 = vld [vmem:[%s4909 + $0x34] sm:$0xf]
        %v4924 = vld [vmem:[%s4909 + $0x38] sm:$0xf]
        %v4925 = vld [vmem:[%s4909 + $0x3c] sm:$0xf]
        %v4926 = vld [vmem:[%s4909 + $0x40] sm:$0xf]
        %v4927 = vld [vmem:[%s4909 + $0x44] sm:$0xf]
        %v4928 = vld [vmem:[%s4909 + $0x48] sm:$0xf]
        %v4929 = vld [vmem:[%s4909 + $0x4c] sm:$0xf]
        %v4930 = vld [vmem:[%s4909 + $0x50] sm:$0xf]
        %v4931 = vld [vmem:[%s4909 + $0x54] sm:$0xf]
        %v4932 = vld [vmem:[%s4909 + $0x58] sm:$0xf]
        %v4933 = vld [vmem:[%s4909 + $0x5c] sm:$0xf]
        %v4934 = vld [vmem:[%s4909 + $0x60] sm:$0xf]
        %v4935 = vld [vmem:[%s4909 + $0x64] sm:$0xf]
        %v4936 = vld [vmem:[%s4909 + $0x68] sm:$0xf]
        %v4937 = vld [vmem:[%s4909 + $0x6c] sm:$0xf]
        %v4938 = vld [vmem:[%s4909 + $0x70] sm:$0xf]
        %v4939 = vld [vmem:[%s4909 + $0x74] sm:$0xf]
        %v4940 = vld [vmem:[%s4909 + $0x78] sm:$0xf]
        %v4941 = vld [vmem:[%s4909 + $0x7c] sm:$0xf]
        %s4942 = scalar_lea.vmem %s1, 80
        %v4943 = vld [vmem:[%s4942] sm:$0xf]
        %v4944 = vld [vmem:[%s4942 + $0x4] sm:$0xf]
        %v4945 = vld [vmem:[%s4942 + $0x8] sm:$0xf]
        %v4946 = vld [vmem:[%s4942 + $0xc] sm:$0xf]
        %v4979 = vunpack.c.l.b16 %v4910
        %v4980 = vunpack.c.l.b16 %v4911
        %v4981 = vunpack.c.l.b16 %v4912
        %v4982 = vunpack.c.l.b16 %v4913
        %v4983 = vunpack.c.l.b16 %v4914
        %v4984 = vunpack.c.l.b16 %v4915
        %v4985 = vunpack.c.l.b16 %v4916
        %v4986 = vunpack.c.l.b16 %v4917
        %v4987 = vunpack.c.l.b16 %v4918
        %v4988 = vunpack.c.l.b16 %v4919
        %v4989 = vunpack.c.l.b16 %v4920
        %v4990 = vunpack.c.l.b16 %v4921
        %v4991 = vunpack.c.l.b16 %v4922
        %v4992 = vunpack.c.l.b16 %v4923
        %v4993 = vunpack.c.l.b16 %v4924
        %v4994 = vunpack.c.l.b16 %v4925
        %v4995 = vunpack.c.l.b16 %v4926
        %v4996 = vunpack.c.l.b16 %v4927
        %v4997 = vunpack.c.l.b16 %v4928
        %v4998 = vunpack.c.l.b16 %v4929
        %v4999 = vunpack.c.l.b16 %v4930
        %v5000 = vunpack.c.l.b16 %v4931
        %v5001 = vunpack.c.l.b16 %v4932
        %v5002 = vunpack.c.l.b16 %v4933
        %v5003 = vunpack.c.l.b16 %v4934
        %v5004 = vunpack.c.l.b16 %v4935
        %v5005 = vunpack.c.l.b16 %v4936
        %v5006 = vunpack.c.l.b16 %v4937
        %v5007 = vunpack.c.l.b16 %v4938
        %v5008 = vunpack.c.l.b16 %v4939
        %v5009 = vunpack.c.l.b16 %v4940
        %v5010 = vunpack.c.l.b16 %v4941
        %v5011 = vpack.c.b16 %v4980, %v4979
        %v5012 = vpack.c.b16 %v4982, %v4981
        %v5013 = vpack.c.b16 %v4984, %v4983
        %v5014 = vpack.c.b16 %v4986, %v4985
        %v5015 = vpack.c.b16 %v4988, %v4987
        %v5016 = vpack.c.b16 %v4990, %v4989
        %v5017 = vpack.c.b16 %v4992, %v4991
        %v5018 = vpack.c.b16 %v4994, %v4993
        %v5019 = vpack.c.b16 %v4996, %v4995
        %v5020 = vpack.c.b16 %v4998, %v4997
        %v5021 = vpack.c.b16 %v5000, %v4999
        %v5022 = vpack.c.b16 %v5002, %v5001
        %v5023 = vpack.c.b16 %v5004, %v5003
        %v5024 = vpack.c.b16 %v5006, %v5005
        %v5025 = vpack.c.b16 %v5008, %v5007
        %v5026 = vpack.c.b16 %v5010, %v5009
        %v5031 = vunpack.c.l.b16 %v4943
        %v5032 = vunpack.c.l.b16 %v4944
        %v5033 = vunpack.c.l.b16 %v4945
        %v5034 = vunpack.c.l.b16 %v4946
        %v5035 = vpack.c.b16 %v5032, %v5031
        %v5036 = vpack.c.b16 %v5034, %v5033
        %v5040 = vsel %vm1667, %v5011, 0
        %v5043 = vsel %vm1667, %v5012, 0
        %v5046 = vsel %vm1667, %v5013, 0
        %v5049 = vsel %vm1667, %v5014, 0
        %v5052 = vsel %vm1667, %v5015, 0
        %v5055 = vsel %vm1667, %v5016, 0
        %v5058 = vsel %vm1667, %v5017, 0
        %v5061 = vsel %vm1667, %v5018, 0
        %v5064 = vsel %vm1667, %v5019, 0
        %v5067 = vsel %vm1667, %v5020, 0
        %v5070 = vsel %vm1667, %v5021, 0
        %v5073 = vsel %vm1667, %v5022, 0
        %v5076 = vsel %vm1667, %v5023, 0
        %v5079 = vsel %vm1667, %v5024, 0
        %v5082 = vsel %vm1667, %v5025, 0
        %v5085 = vsel %vm1667, %v5026, 0
        %5087 = vmatprep.subr.bf16.mxu0 0
        %5088 = vmatpush1.bf16.msra.mxu0 %v5035
        %5089 = vmatprep.subr.bf16.mxu0 0
        %5090 = vmatpush1.bf16.msra.mxu0 %v5036
        %5091 = vmatprep.subr.bf16.mxu0 0
        %5092 = vmatpush1.bf16.msra.mxu0 0
        %5093 = vmatprep.subr.bf16.mxu0 0
        %5094 = vmatpush1.bf16.msra.mxu0 0
        %5095 = vmatprep.subr.bf16.mxu0 0
        %5096 = vmatpush1.bf16.msra.mxu0 0
        %5097 = vmatprep.subr.bf16.mxu0 0
        %5098 = vmatpush1.bf16.msra.mxu0 0
        %5099 = vmatprep.subr.bf16.mxu0 0
        %5100 = vmatpush1.bf16.msra.mxu0 0
        %5101 = vmatprep.subr.bf16.mxu0 0
        %5102 = vmatpush1.bf16.msra.mxu0 0
        %5103 = vmatprep.subr.bf16.mxu0 0
        %5104 = vmatpush1.bf16.msra.mxu0 0
        %5105 = vmatprep.subr.bf16.mxu0 0
        %5106 = vmatpush1.bf16.msra.mxu0 0
        %5107 = vmatprep.subr.bf16.mxu0 0
        %5108 = vmatpush1.bf16.msra.mxu0 0
        %5109 = vmatprep.subr.bf16.mxu0 0
        %5110 = vmatpush1.bf16.msra.mxu0 0
        %5111 = vmatprep.subr.bf16.mxu0 0
        %5112 = vmatpush1.bf16.msra.mxu0 0
        %5113 = vmatprep.subr.bf16.mxu0 0
        %5114 = vmatpush1.bf16.msra.mxu0 0
        %5115 = vmatprep.subr.bf16.mxu0 0
        %5116 = vmatpush1.bf16.msra.mxu0 0
        %5117 = vmatprep.subr.bf16.mxu0 0
        %5118 = vmatpush1.bf16.msra.mxu0 0
        %5119 = vmatprep.mubr.bf16.mxu0 0
        %5120 = vmatmul.mubr.bf16.gmra.mrb[0].mxu0 %v5040
        %v5121 = vpop.f32.mrb[0].mxu0
        %v5122 = vadd.f32 0.0, %v5121
        %v5123 = vpop.f32.mrb[0].mxu0
        %v5124 = vpop.f32.mrb[0].mxu0
        %v5125 = vadd.f32 0.0, %v5124
        %v5126 = vpop.f32.mrb[0].mxu0
        %5127 = vmatprep.mubr.bf16.mxu0 0
        %5128 = vmatmul.mubr.bf16.gmra.mrb[0].mxu0 %v5043
        %v5129 = vpop.f32.mrb[0].mxu0
        %v5130 = vadd.f32 0.0, %v5129
        %v5131 = vpop.f32.mrb[0].mxu0
        %v5132 = vpop.f32.mrb[0].mxu0
        %v5133 = vadd.f32 0.0, %v5132
        %v5134 = vpop.f32.mrb[0].mxu0
        %5135 = vmatprep.mubr.bf16.mxu0 0
        %5136 = vmatmul.mubr.bf16.gmra.mrb[0].mxu0 %v5046
        %v5137 = vpop.f32.mrb[0].mxu0
        %v5138 = vadd.f32 0.0, %v5137
        %v5139 = vpop.f32.mrb[0].mxu0
        %v5140 = vpop.f32.mrb[0].mxu0
        %v5141 = vadd.f32 0.0, %v5140
        %v5142 = vpop.f32.mrb[0].mxu0
        %5143 = vmatprep.mubr.bf16.mxu0 0
        %5144 = vmatmul.mubr.bf16.gmra.mrb[0].mxu0 %v5049
        %v5145 = vpop.f32.mrb[0].mxu0
        %v5146 = vadd.f32 0.0, %v5145
        %v5147 = vpop.f32.mrb[0].mxu0
        %v5148 = vpop.f32.mrb[0].mxu0
        %v5149 = vadd.f32 0.0, %v5148
        %v5150 = vpop.f32.mrb[0].mxu0
        %5151 = vmatprep.mubr.bf16.mxu0 0
        %5152 = vmatmul.mubr.bf16.gmra.mrb[0].mxu0 %v5052
        %v5153 = vpop.f32.mrb[0].mxu0
        %v5154 = vadd.f32 0.0, %v5153
        %v5155 = vpop.f32.mrb[0].mxu0
        %v5156 = vpop.f32.mrb[0].mxu0
        %v5157 = vadd.f32 0.0, %v5156
        %v5158 = vpop.f32.mrb[0].mxu0
        %5159 = vmatprep.mubr.bf16.mxu0 0
        %5160 = vmatmul.mubr.bf16.gmra.mrb[0].mxu0 %v5055
        %v5161 = vpop.f32.mrb[0].mxu0
        %v5162 = vadd.f32 0.0, %v5161
        %v5163 = vpop.f32.mrb[0].mxu0
        %v5164 = vpop.f32.mrb[0].mxu0
        %v5165 = vadd.f32 0.0, %v5164
        %v5166 = vpop.f32.mrb[0].mxu0
        %5167 = vmatprep.mubr.bf16.mxu0 0
        %5168 = vmatmul.mubr.bf16.gmra.mrb[0].mxu0 %v5058
        %v5169 = vpop.f32.mrb[0].mxu0
        %v5170 = vadd.f32 0.0, %v5169
        %v5171 = vpop.f32.mrb[0].mxu0
        %v5172 = vpop.f32.mrb[0].mxu0
        %v5173 = vadd.f32 0.0, %v5172
        %v5174 = vpop.f32.mrb[0].mxu0
        %5175 = vmatprep.mubr.bf16.mxu0 0
        %5176 = vmatmul.mubr.bf16.gmra.mrb[0].mxu0 %v5061
        %v5177 = vpop.f32.mrb[0].mxu0
        %v5178 = vadd.f32 0.0, %v5177
        %v5179 = vpop.f32.mrb[0].mxu0
        %v5180 = vpop.f32.mrb[0].mxu0
        %v5181 = vadd.f32 0.0, %v5180
        %v5182 = vpop.f32.mrb[0].mxu0
        %5183 = vmatprep.mubr.bf16.mxu0 0
        %5184 = vmatmul.mubr.bf16.gmra.mrb[0].mxu0 %v5064
        %v5185 = vpop.f32.mrb[0].mxu0
        %v5186 = vadd.f32 0.0, %v5185
        %v5187 = vpop.f32.mrb[0].mxu0
        %v5188 = vpop.f32.mrb[0].mxu0
        %v5189 = vadd.f32 0.0, %v5188
        %v5190 = vpop.f32.mrb[0].mxu0
        %5191 = vmatprep.mubr.bf16.mxu0 0
        %5192 = vmatmul.mubr.bf16.gmra.mrb[0].mxu0 %v5067
        %v5193 = vpop.f32.mrb[0].mxu0
        %v5194 = vadd.f32 0.0, %v5193
        %v5195 = vpop.f32.mrb[0].mxu0
        %v5196 = vpop.f32.mrb[0].mxu0
        %v5197 = vadd.f32 0.0, %v5196
        %v5198 = vpop.f32.mrb[0].mxu0
        %5199 = vmatprep.mubr.bf16.mxu0 0
        %5200 = vmatmul.mubr.bf16.gmra.mrb[0].mxu0 %v5070
        %v5201 = vpop.f32.mrb[0].mxu0
        %v5202 = vadd.f32 0.0, %v5201
        %v5203 = vpop.f32.mrb[0].mxu0
        %v5204 = vpop.f32.mrb[0].mxu0
        %v5205 = vadd.f32 0.0, %v5204
        %v5206 = vpop.f32.mrb[0].mxu0
        %5207 = vmatprep.mubr.bf16.mxu0 0
        %5208 = vmatmul.mubr.bf16.gmra.mrb[0].mxu0 %v5073
        %v5209 = vpop.f32.mrb[0].mxu0
        %v5210 = vadd.f32 0.0, %v5209
        %v5211 = vpop.f32.mrb[0].mxu0
        %v5212 = vpop.f32.mrb[0].mxu0
        %v5213 = vadd.f32 0.0, %v5212
        %v5214 = vpop.f32.mrb[0].mxu0
        %5215 = vmatprep.mubr.bf16.mxu0 0
        %5216 = vmatmul.mubr.bf16.gmra.mrb[0].mxu0 %v5076
        %v5217 = vpop.f32.mrb[0].mxu0
        %v5218 = vadd.f32 0.0, %v5217
        %v5219 = vpop.f32.mrb[0].mxu0
        %v5220 = vpop.f32.mrb[0].mxu0
        %v5221 = vadd.f32 0.0, %v5220
        %v5222 = vpop.f32.mrb[0].mxu0
        %5223 = vmatprep.mubr.bf16.mxu0 0
        %5224 = vmatmul.mubr.bf16.gmra.mrb[0].mxu0 %v5079
        %v5225 = vpop.f32.mrb[0].mxu0
        %v5226 = vadd.f32 0.0, %v5225
        %v5227 = vpop.f32.mrb[0].mxu0
        %v5228 = vpop.f32.mrb[0].mxu0
        %v5229 = vadd.f32 0.0, %v5228
        %v5230 = vpop.f32.mrb[0].mxu0
        %5231 = vmatprep.mubr.bf16.mxu0 0
        %5232 = vmatmul.mubr.bf16.gmra.mrb[0].mxu0 %v5082
        %v5233 = vpop.f32.mrb[0].mxu0
        %v5234 = vadd.f32 0.0, %v5233
        %v5235 = vpop.f32.mrb[0].mxu0
        %v5236 = vpop.f32.mrb[0].mxu0
        %v5237 = vadd.f32 0.0, %v5236
        %v5238 = vpop.f32.mrb[0].mxu0
        %5239 = vmatprep.mubr.bf16.mxu0 0
        %5240 = vmatmul.mubr.bf16.gmra.mrb[0].mxu0 %v5085
        %v5241 = vpop.f32.mrb[0].mxu0
        %v5242 = vadd.f32 0.0, %v5241
        %v5243 = vpop.f32.mrb[0].mxu0
        %v5244 = vpop.f32.mrb[0].mxu0
        %v5245 = vadd.f32 0.0, %v5244
        %v5246 = vpop.f32.mrb[0].mxu0
        %5247 = vdwg.mxu0
        %v5248 = vadd.f32 %v4877, %v5122
        %v5249 = vadd.f32 %v4878, %v5125
        %v5250 = vadd.f32 %v4879, %v5130
        %v5251 = vadd.f32 %v4880, %v5133
        %v5252 = vadd.f32 %v4881, %v5138
        %v5253 = vadd.f32 %v4882, %v5141
        %v5254 = vadd.f32 %v4883, %v5146
        %v5255 = vadd.f32 %v4884, %v5149
        %v5256 = vadd.f32 %v4885, %v5154
        %v5257 = vadd.f32 %v4886, %v5157
        %v5258 = vadd.f32 %v4887, %v5162
        %v5259 = vadd.f32 %v4888, %v5165
        %v5260 = vadd.f32 %v4889, %v5170
        %v5261 = vadd.f32 %v4890, %v5173
        %v5262 = vadd.f32 %v4891, %v5178
        %v5263 = vadd.f32 %v4892, %v5181
        %v5264 = vadd.f32 %v4893, %v5186
        %v5265 = vadd.f32 %v4894, %v5189
        %v5266 = vadd.f32 %v4895, %v5194
        %v5267 = vadd.f32 %v4896, %v5197
        %v5268 = vadd.f32 %v4897, %v5202
        %v5269 = vadd.f32 %v4898, %v5205
        %v5270 = vadd.f32 %v4899, %v5210
        %v5271 = vadd.f32 %v4900, %v5213
        %v5272 = vadd.f32 %v4901, %v5218
        %v5273 = vadd.f32 %v4902, %v5221
        %v5274 = vadd.f32 %v4903, %v5226
        %v5275 = vadd.f32 %v4904, %v5229
        %v5276 = vadd.f32 %v4905, %v5234
        %v5277 = vadd.f32 %v4906, %v5237
        %v5278 = vadd.f32 %v4907, %v5242
        %v5279 = vadd.f32 %v4908, %v5245
        %s5280 = scalar_lea.vmem %s1154, 296 [#allocation3]
        %v5281 = vld [vmem:[%s5280] sm:$0xf]
        %v5282 = vld [vmem:[%s5280 + $0x4] sm:$0xf]
        %v5283 = vld [vmem:[%s5280 + $0x8] sm:$0xf]
        %v5284 = vld [vmem:[%s5280 + $0xc] sm:$0xf]
        %v5285 = vld [vmem:[%s5280 + $0x10] sm:$0xf]
        %v5286 = vld [vmem:[%s5280 + $0x14] sm:$0xf]
        %v5287 = vld [vmem:[%s5280 + $0x18] sm:$0xf]
        %v5288 = vld [vmem:[%s5280 + $0x1c] sm:$0xf]
        %v5289 = vld [vmem:[%s5280 + $0x20] sm:$0xf]
        %v5290 = vld [vmem:[%s5280 + $0x24] sm:$0xf]
        %v5291 = vld [vmem:[%s5280 + $0x28] sm:$0xf]
        %v5292 = vld [vmem:[%s5280 + $0x2c] sm:$0xf]
        %v5293 = vld [vmem:[%s5280 + $0x30] sm:$0xf]
        %v5294 = vld [vmem:[%s5280 + $0x34] sm:$0xf]
        %v5295 = vld [vmem:[%s5280 + $0x38] sm:$0xf]
        %v5296 = vld [vmem:[%s5280 + $0x3c] sm:$0xf]
        %v5297 = vld [vmem:[%s5280 + $0x40] sm:$0xf]
        %v5298 = vld [vmem:[%s5280 + $0x44] sm:$0xf]
        %v5299 = vld [vmem:[%s5280 + $0x48] sm:$0xf]
        %v5300 = vld [vmem:[%s5280 + $0x4c] sm:$0xf]
        %v5301 = vld [vmem:[%s5280 + $0x50] sm:$0xf]
        %v5302 = vld [vmem:[%s5280 + $0x54] sm:$0xf]
        %v5303 = vld [vmem:[%s5280 + $0x58] sm:$0xf]
        %v5304 = vld [vmem:[%s5280 + $0x5c] sm:$0xf]
        %v5305 = vld [vmem:[%s5280 + $0x60] sm:$0xf]
        %v5306 = vld [vmem:[%s5280 + $0x64] sm:$0xf]
        %v5307 = vld [vmem:[%s5280 + $0x68] sm:$0xf]
        %v5308 = vld [vmem:[%s5280 + $0x6c] sm:$0xf]
        %v5309 = vld [vmem:[%s5280 + $0x70] sm:$0xf]
        %v5310 = vld [vmem:[%s5280 + $0x74] sm:$0xf]
        %v5311 = vld [vmem:[%s5280 + $0x78] sm:$0xf]
        %v5312 = vld [vmem:[%s5280 + $0x7c] sm:$0xf]
        %s5313 = scalar_lea.vmem %s3, 160
        %v5314 = vld [vmem:[%s5313] sm:$0xf]
        %v5315 = vld [vmem:[%s5313 + $0x4] sm:$0xf]
        %v5316 = vld [vmem:[%s5313 + $0x8] sm:$0xf]
        %v5317 = vld [vmem:[%s5313 + $0xc] sm:$0xf]
        %v5318 = vld [vmem:[%s5313 + $0x10] sm:$0xf]
        %v5319 = vld [vmem:[%s5313 + $0x14] sm:$0xf]
        %v5320 = vld [vmem:[%s5313 + $0x18] sm:$0xf]
        %v5321 = vld [vmem:[%s5313 + $0x1c] sm:$0xf]
        %v5354 = vunpack.c.l.b16 %v5281
        %v5355 = vunpack.c.l.b16 %v5282
        %v5356 = vunpack.c.l.b16 %v5283
        %v5357 = vunpack.c.l.b16 %v5284
        %v5358 = vunpack.c.l.b16 %v5285
        %v5359 = vunpack.c.l.b16 %v5286
        %v5360 = vunpack.c.l.b16 %v5287
        %v5361 = vunpack.c.l.b16 %v5288
        %v5362 = vunpack.c.l.b16 %v5289
        %v5363 = vunpack.c.l.b16 %v5290
        %v5364 = vunpack.c.l.b16 %v5291
        %v5365 = vunpack.c.l.b16 %v5292
        %v5366 = vunpack.c.l.b16 %v5293
        %v5367 = vunpack.c.l.b16 %v5294
        %v5368 = vunpack.c.l.b16 %v5295
        %v5369 = vunpack.c.l.b16 %v5296
        %v5370 = vunpack.c.l.b16 %v5297
        %v5371 = vunpack.c.l.b16 %v5298
        %v5372 = vunpack.c.l.b16 %v5299
        %v5373 = vunpack.c.l.b16 %v5300
        %v5374 = vunpack.c.l.b16 %v5301
        %v5375 = vunpack.c.l.b16 %v5302
        %v5376 = vunpack.c.l.b16 %v5303
        %v5377 = vunpack.c.l.b16 %v5304
        %v5378 = vunpack.c.l.b16 %v5305
        %v5379 = vunpack.c.l.b16 %v5306
        %v5380 = vunpack.c.l.b16 %v5307
        %v5381 = vunpack.c.l.b16 %v5308
        %v5382 = vunpack.c.l.b16 %v5309
        %v5383 = vunpack.c.l.b16 %v5310
        %v5384 = vunpack.c.l.b16 %v5311
        %v5385 = vunpack.c.l.b16 %v5312
        %v5386 = vpack.c.b16 %v5355, %v5354
        %v5387 = vpack.c.b16 %v5357, %v5356
        %v5388 = vpack.c.b16 %v5359, %v5358
        %v5389 = vpack.c.b16 %v5361, %v5360
        %v5390 = vpack.c.b16 %v5363, %v5362
        %v5391 = vpack.c.b16 %v5365, %v5364
        %v5392 = vpack.c.b16 %v5367, %v5366
        %v5393 = vpack.c.b16 %v5369, %v5368
        %v5394 = vpack.c.b16 %v5371, %v5370
        %v5395 = vpack.c.b16 %v5373, %v5372
        %v5396 = vpack.c.b16 %v5375, %v5374
        %v5397 = vpack.c.b16 %v5377, %v5376
        %v5398 = vpack.c.b16 %v5379, %v5378
        %v5399 = vpack.c.b16 %v5381, %v5380
        %v5400 = vpack.c.b16 %v5383, %v5382
        %v5401 = vpack.c.b16 %v5385, %v5384
        %v5410 = vunpack.c.l.b16 %v5314
        %v5411 = vunpack.c.l.b16 %v5315
        %v5412 = vunpack.c.l.b16 %v5316
        %v5413 = vunpack.c.l.b16 %v5317
        %v5414 = vunpack.c.l.b16 %v5318
        %v5415 = vunpack.c.l.b16 %v5319
        %v5416 = vunpack.c.l.b16 %v5320
        %v5417 = vunpack.c.l.b16 %v5321
        %v5418 = vpack.c.b16 %v5411, %v5410
        %v5419 = vpack.c.b16 %v5413, %v5412
        %v5420 = vpack.c.b16 %v5415, %v5414
        %v5421 = vpack.c.b16 %v5417, %v5416
        %v5427 = vsel %vm1365, %v5386, 0
        %v5430 = vsel %vm1365, %v5387, 0
        %v5433 = vsel %vm1365, %v5388, 0
        %v5436 = vsel %vm1365, %v5389, 0
        %v5439 = vsel %vm1365, %v5390, 0
        %v5442 = vsel %vm1365, %v5391, 0
        %v5445 = vsel %vm1365, %v5392, 0
        %v5448 = vsel %vm1365, %v5393, 0
        %v5451 = vsel %vm1365, %v5394, 0
        %v5454 = vsel %vm1365, %v5395, 0
        %v5457 = vsel %vm1365, %v5396, 0
        %v5460 = vsel %vm1365, %v5397, 0
        %v5463 = vsel %vm1365, %v5398, 0
        %v5466 = vsel %vm1365, %v5399, 0
        %v5469 = vsel %vm1365, %v5400, 0
        %v5472 = vsel %vm1365, %v5401, 0
        %5474 = vmatprep.subr.bf16.mxu0 0
        %5475 = vmatpush1.bf16.msra.mxu0 %v5418
        %5476 = vmatprep.subr.bf16.mxu0 0
        %5477 = vmatpush1.bf16.msra.mxu0 %v5419
        %5478 = vmatprep.subr.bf16.mxu0 0
        %5479 = vmatpush1.bf16.msra.mxu0 %v5420
        %5480 = vmatprep.subr.bf16.mxu0 0
        %5481 = vmatpush1.bf16.msra.mxu0 %v5421
        %5482 = vmatprep.subr.bf16.mxu0 0
        %5483 = vmatpush1.bf16.msra.mxu0 0
        %5484 = vmatprep.subr.bf16.mxu0 0
        %5485 = vmatpush1.bf16.msra.mxu0 0
        %5486 = vmatprep.subr.bf16.mxu0 0
        %5487 = vmatpush1.bf16.msra.mxu0 0
        %5488 = vmatprep.subr.bf16.mxu0 0
        %5489 = vmatpush1.bf16.msra.mxu0 0
        %5490 = vmatprep.subr.bf16.mxu0 0
        %5491 = vmatpush1.bf16.msra.mxu0 0
        %5492 = vmatprep.subr.bf16.mxu0 0
        %5493 = vmatpush1.bf16.msra.mxu0 0
        %5494 = vmatprep.subr.bf16.mxu0 0
        %5495 = vmatpush1.bf16.msra.mxu0 0
        %5496 = vmatprep.subr.bf16.mxu0 0
        %5497 = vmatpush1.bf16.msra.mxu0 0
        %5498 = vmatprep.subr.bf16.mxu0 0
        %5499 = vmatpush1.bf16.msra.mxu0 0
        %5500 = vmatprep.subr.bf16.mxu0 0
        %5501 = vmatpush1.bf16.msra.mxu0 0
        %5502 = vmatprep.subr.bf16.mxu0 0
        %5503 = vmatpush1.bf16.msra.mxu0 0
        %5504 = vmatprep.subr.bf16.mxu0 0
        %5505 = vmatpush1.bf16.msra.mxu0 0
        %5506 = vmatprep.mubr.bf16.mxu0 0
        %5507 = vmatmul.mubr.bf16.gmra.mrb[0].mxu0 %v5427
        %v5508 = vpop.f32.mrb[0].mxu0
        %v5509 = vadd.f32 0.0, %v5508
        %v5510 = vpop.f32.mrb[0].mxu0
        %v5511 = vpop.f32.mrb[0].mxu0
        %v5512 = vadd.f32 0.0, %v5511
        %v5513 = vpop.f32.mrb[0].mxu0
        %5514 = vmatprep.mubr.bf16.mxu0 0
        %5515 = vmatmul.mubr.bf16.gmra.mrb[0].mxu0 %v5430
        %v5516 = vpop.f32.mrb[0].mxu0
        %v5517 = vadd.f32 0.0, %v5516
        %v5518 = vpop.f32.mrb[0].mxu0
        %v5519 = vpop.f32.mrb[0].mxu0
        %v5520 = vadd.f32 0.0, %v5519
        %v5521 = vpop.f32.mrb[0].mxu0
        %5522 = vmatprep.mubr.bf16.mxu0 0
        %5523 = vmatmul.mubr.bf16.gmra.mrb[0].mxu0 %v5433
        %v5524 = vpop.f32.mrb[0].mxu0
        %v5525 = vadd.f32 0.0, %v5524
        %v5526 = vpop.f32.mrb[0].mxu0
        %v5527 = vpop.f32.mrb[0].mxu0
        %v5528 = vadd.f32 0.0, %v5527
        %v5529 = vpop.f32.mrb[0].mxu0
        %5530 = vmatprep.mubr.bf16.mxu0 0
        %5531 = vmatmul.mubr.bf16.gmra.mrb[0].mxu0 %v5436
        %v5532 = vpop.f32.mrb[0].mxu0
        %v5533 = vadd.f32 0.0, %v5532
        %v5534 = vpop.f32.mrb[0].mxu0
        %v5535 = vpop.f32.mrb[0].mxu0
        %v5536 = vadd.f32 0.0, %v5535
        %v5537 = vpop.f32.mrb[0].mxu0
        %5538 = vmatprep.mubr.bf16.mxu0 0
        %5539 = vmatmul.mubr.bf16.gmra.mrb[0].mxu0 %v5439
        %v5540 = vpop.f32.mrb[0].mxu0
        %v5541 = vadd.f32 0.0, %v5540
        %v5542 = vpop.f32.mrb[0].mxu0
        %v5543 = vpop.f32.mrb[0].mxu0
        %v5544 = vadd.f32 0.0, %v5543
        %v5545 = vpop.f32.mrb[0].mxu0
        %5546 = vmatprep.mubr.bf16.mxu0 0
        %5547 = vmatmul.mubr.bf16.gmra.mrb[0].mxu0 %v5442
        %v5548 = vpop.f32.mrb[0].mxu0
        %v5549 = vadd.f32 0.0, %v5548
        %v5550 = vpop.f32.mrb[0].mxu0
        %v5551 = vpop.f32.mrb[0].mxu0
        %v5552 = vadd.f32 0.0, %v5551
        %v5553 = vpop.f32.mrb[0].mxu0
        %5554 = vmatprep.mubr.bf16.mxu0 0
        %5555 = vmatmul.mubr.bf16.gmra.mrb[0].mxu0 %v5445
        %v5556 = vpop.f32.mrb[0].mxu0
        %v5557 = vadd.f32 0.0, %v5556
        %v5558 = vpop.f32.mrb[0].mxu0
        %v5559 = vpop.f32.mrb[0].mxu0
        %v5560 = vadd.f32 0.0, %v5559
        %v5561 = vpop.f32.mrb[0].mxu0
        %5562 = vmatprep.mubr.bf16.mxu0 0
        %5563 = vmatmul.mubr.bf16.gmra.mrb[0].mxu0 %v5448
        %v5564 = vpop.f32.mrb[0].mxu0
        %v5565 = vadd.f32 0.0, %v5564
        %v5566 = vpop.f32.mrb[0].mxu0
        %v5567 = vpop.f32.mrb[0].mxu0
        %v5568 = vadd.f32 0.0, %v5567
        %v5569 = vpop.f32.mrb[0].mxu0
        %5570 = vmatprep.mubr.bf16.mxu0 0
        %5571 = vmatmul.mubr.bf16.gmra.mrb[0].mxu0 %v5451
        %v5572 = vpop.f32.mrb[0].mxu0
        %v5573 = vadd.f32 0.0, %v5572
        %v5574 = vpop.f32.mrb[0].mxu0
        %v5575 = vpop.f32.mrb[0].mxu0
        %v5576 = vadd.f32 0.0, %v5575
        %v5577 = vpop.f32.mrb[0].mxu0
        %5578 = vmatprep.mubr.bf16.mxu0 0
        %5579 = vmatmul.mubr.bf16.gmra.mrb[0].mxu0 %v5454
        %v5580 = vpop.f32.mrb[0].mxu0
        %v5581 = vadd.f32 0.0, %v5580
        %v5582 = vpop.f32.mrb[0].mxu0
        %v5583 = vpop.f32.mrb[0].mxu0
        %v5584 = vadd.f32 0.0, %v5583
        %v5585 = vpop.f32.mrb[0].mxu0
        %5586 = vmatprep.mubr.bf16.mxu0 0
        %5587 = vmatmul.mubr.bf16.gmra.mrb[0].mxu0 %v5457
        %v5588 = vpop.f32.mrb[0].mxu0
        %v5589 = vadd.f32 0.0, %v5588
        %v5590 = vpop.f32.mrb[0].mxu0
        %v5591 = vpop.f32.mrb[0].mxu0
        %v5592 = vadd.f32 0.0, %v5591
        %v5593 = vpop.f32.mrb[0].mxu0
        %5594 = vmatprep.mubr.bf16.mxu0 0
        %5595 = vmatmul.mubr.bf16.gmra.mrb[0].mxu0 %v5460
        %v5596 = vpop.f32.mrb[0].mxu0
        %v5597 = vadd.f32 0.0, %v5596
        %v5598 = vpop.f32.mrb[0].mxu0
        %v5599 = vpop.f32.mrb[0].mxu0
        %v5600 = vadd.f32 0.0, %v5599
        %v5601 = vpop.f32.mrb[0].mxu0
        %5602 = vmatprep.mubr.bf16.mxu0 0
        %5603 = vmatmul.mubr.bf16.gmra.mrb[0].mxu0 %v5463
        %v5604 = vpop.f32.mrb[0].mxu0
        %v5605 = vadd.f32 0.0, %v5604
        %v5606 = vpop.f32.mrb[0].mxu0
        %v5607 = vpop.f32.mrb[0].mxu0
        %v5608 = vadd.f32 0.0, %v5607
        %v5609 = vpop.f32.mrb[0].mxu0
        %5610 = vmatprep.mubr.bf16.mxu0 0
        %5611 = vmatmul.mubr.bf16.gmra.mrb[0].mxu0 %v5466
        %v5612 = vpop.f32.mrb[0].mxu0
        %v5613 = vadd.f32 0.0, %v5612
        %v5614 = vpop.f32.mrb[0].mxu0
        %v5615 = vpop.f32.mrb[0].mxu0
        %v5616 = vadd.f32 0.0, %v5615
        %v5617 = vpop.f32.mrb[0].mxu0
        %5618 = vmatprep.mubr.bf16.mxu0 0
        %5619 = vmatmul.mubr.bf16.gmra.mrb[0].mxu0 %v5469
        %v5620 = vpop.f32.mrb[0].mxu0
        %v5621 = vadd.f32 0.0, %v5620
        %v5622 = vpop.f32.mrb[0].mxu0
        %v5623 = vpop.f32.mrb[0].mxu0
        %v5624 = vadd.f32 0.0, %v5623
        %v5625 = vpop.f32.mrb[0].mxu0
        %5626 = vmatprep.mubr.bf16.mxu0 0
        %5627 = vmatmul.mubr.bf16.gmra.mrb[0].mxu0 %v5472
        %v5628 = vpop.f32.mrb[0].mxu0
        %v5629 = vadd.f32 0.0, %v5628
        %v5630 = vpop.f32.mrb[0].mxu0
        %v5631 = vpop.f32.mrb[0].mxu0
        %v5632 = vadd.f32 0.0, %v5631
        %v5633 = vpop.f32.mrb[0].mxu0
        %5634 = vdwg.mxu0
        %v5635 = vadd.f32 %v5248, %v5509
        %v5636 = vadd.f32 %v5249, %v5512
        %v5637 = vadd.f32 %v5250, %v5517
        %v5638 = vadd.f32 %v5251, %v5520
        %v5639 = vadd.f32 %v5252, %v5525
        %v5640 = vadd.f32 %v5253, %v5528
        %v5641 = vadd.f32 %v5254, %v5533
        %v5642 = vadd.f32 %v5255, %v5536
        %v5643 = vadd.f32 %v5256, %v5541
        %v5644 = vadd.f32 %v5257, %v5544
        %v5645 = vadd.f32 %v5258, %v5549
        %v5646 = vadd.f32 %v5259, %v5552
        %v5647 = vadd.f32 %v5260, %v5557
        %v5648 = vadd.f32 %v5261, %v5560
        %v5649 = vadd.f32 %v5262, %v5565
        %v5650 = vadd.f32 %v5263, %v5568
        %v5651 = vadd.f32 %v5264, %v5573
        %v5652 = vadd.f32 %v5265, %v5576
        %v5653 = vadd.f32 %v5266, %v5581
        %v5654 = vadd.f32 %v5267, %v5584
        %v5655 = vadd.f32 %v5268, %v5589
        %v5656 = vadd.f32 %v5269, %v5592
        %v5657 = vadd.f32 %v5270, %v5597
        %v5658 = vadd.f32 %v5271, %v5600
        %v5659 = vadd.f32 %v5272, %v5605
        %v5660 = vadd.f32 %v5273, %v5608
        %v5661 = vadd.f32 %v5274, %v5613
        %v5662 = vadd.f32 %v5275, %v5616
        %v5663 = vadd.f32 %v5276, %v5621
        %v5664 = vadd.f32 %v5277, %v5624
        %v5665 = vadd.f32 %v5278, %v5629
        %v5666 = vadd.f32 %v5279, %v5632
        %s5667 = scalar_lea.vmem %s1147, 16 [#allocation2]
        %v5668 = vld [vmem:[%s5667] sm:$0xf]
        %v5669 = vld [vmem:[%s5667 + $0x4] sm:$0xf]
        %v5670 = vld [vmem:[%s5667 + $0x8] sm:$0xf]
        %v5671 = vld [vmem:[%s5667 + $0xc] sm:$0xf]
        %v5672 = vld [vmem:[%s5667 + $0x10] sm:$0xf]
        %v5673 = vld [vmem:[%s5667 + $0x14] sm:$0xf]
        %v5674 = vld [vmem:[%s5667 + $0x18] sm:$0xf]
        %v5675 = vld [vmem:[%s5667 + $0x1c] sm:$0xf]
        %v5676 = vld [vmem:[%s5667 + $0x20] sm:$0xf]
        %v5677 = vld [vmem:[%s5667 + $0x24] sm:$0xf]
        %v5678 = vld [vmem:[%s5667 + $0x28] sm:$0xf]
        %v5679 = vld [vmem:[%s5667 + $0x2c] sm:$0xf]
        %v5680 = vld [vmem:[%s5667 + $0x30] sm:$0xf]
        %v5681 = vld [vmem:[%s5667 + $0x34] sm:$0xf]
        %v5682 = vld [vmem:[%s5667 + $0x38] sm:$0xf]
        %v5683 = vld [vmem:[%s5667 + $0x3c] sm:$0xf]
        %v5684 = vld [vmem:[%s5667 + $0x40] sm:$0xf]
        %v5685 = vld [vmem:[%s5667 + $0x44] sm:$0xf]
        %v5686 = vld [vmem:[%s5667 + $0x48] sm:$0xf]
        %v5687 = vld [vmem:[%s5667 + $0x4c] sm:$0xf]
        %v5688 = vld [vmem:[%s5667 + $0x50] sm:$0xf]
        %v5689 = vld [vmem:[%s5667 + $0x54] sm:$0xf]
        %v5690 = vld [vmem:[%s5667 + $0x58] sm:$0xf]
        %v5691 = vld [vmem:[%s5667 + $0x5c] sm:$0xf]
        %v5692 = vld [vmem:[%s5667 + $0x60] sm:$0xf]
        %v5693 = vld [vmem:[%s5667 + $0x64] sm:$0xf]
        %v5694 = vld [vmem:[%s5667 + $0x68] sm:$0xf]
        %v5695 = vld [vmem:[%s5667 + $0x6c] sm:$0xf]
        %v5696 = vld [vmem:[%s5667 + $0x70] sm:$0xf]
        %v5697 = vld [vmem:[%s5667 + $0x74] sm:$0xf]
        %v5698 = vld [vmem:[%s5667 + $0x78] sm:$0xf]
        %v5699 = vld [vmem:[%s5667 + $0x7c] sm:$0xf]
        %s5700 = scalar_lea.vmem %s1, 96
        %v5701 = vld [vmem:[%s5700] sm:$0xf]
        %v5702 = vld [vmem:[%s5700 + $0x4] sm:$0xf]
        %v5703 = vld [vmem:[%s5700 + $0x8] sm:$0xf]
        %v5704 = vld [vmem:[%s5700 + $0xc] sm:$0xf]
        %v5737 = vunpack.c.l.b16 %v5668
        %v5738 = vunpack.c.l.b16 %v5669
        %v5739 = vunpack.c.l.b16 %v5670
        %v5740 = vunpack.c.l.b16 %v5671
        %v5741 = vunpack.c.l.b16 %v5672
        %v5742 = vunpack.c.l.b16 %v5673
        %v5743 = vunpack.c.l.b16 %v5674
        %v5744 = vunpack.c.l.b16 %v5675
        %v5745 = vunpack.c.l.b16 %v5676
        %v5746 = vunpack.c.l.b16 %v5677
        %v5747 = vunpack.c.l.b16 %v5678
        %v5748 = vunpack.c.l.b16 %v5679
        %v5749 = vunpack.c.l.b16 %v5680
        %v5750 = vunpack.c.l.b16 %v5681
        %v5751 = vunpack.c.l.b16 %v5682
        %v5752 = vunpack.c.l.b16 %v5683
        %v5753 = vunpack.c.l.b16 %v5684
        %v5754 = vunpack.c.l.b16 %v5685
        %v5755 = vunpack.c.l.b16 %v5686
        %v5756 = vunpack.c.l.b16 %v5687
        %v5757 = vunpack.c.l.b16 %v5688
        %v5758 = vunpack.c.l.b16 %v5689
        %v5759 = vunpack.c.l.b16 %v5690
        %v5760 = vunpack.c.l.b16 %v5691
        %v5761 = vunpack.c.l.b16 %v5692
        %v5762 = vunpack.c.l.b16 %v5693
        %v5763 = vunpack.c.l.b16 %v5694
        %v5764 = vunpack.c.l.b16 %v5695
        %v5765 = vunpack.c.l.b16 %v5696
        %v5766 = vunpack.c.l.b16 %v5697
        %v5767 = vunpack.c.l.b16 %v5698
        %v5768 = vunpack.c.l.b16 %v5699
        %v5769 = vpack.c.b16 %v5738, %v5737
        %v5770 = vpack.c.b16 %v5740, %v5739
        %v5771 = vpack.c.b16 %v5742, %v5741
        %v5772 = vpack.c.b16 %v5744, %v5743
        %v5773 = vpack.c.b16 %v5746, %v5745
        %v5774 = vpack.c.b16 %v5748, %v5747
        %v5775 = vpack.c.b16 %v5750, %v5749
        %v5776 = vpack.c.b16 %v5752, %v5751
        %v5777 = vpack.c.b16 %v5754, %v5753
        %v5778 = vpack.c.b16 %v5756, %v5755
        %v5779 = vpack.c.b16 %v5758, %v5757
        %v5780 = vpack.c.b16 %v5760, %v5759
        %v5781 = vpack.c.b16 %v5762, %v5761
        %v5782 = vpack.c.b16 %v5764, %v5763
        %v5783 = vpack.c.b16 %v5766, %v5765
        %v5784 = vpack.c.b16 %v5768, %v5767
        %v5789 = vunpack.c.l.b16 %v5701
        %v5790 = vunpack.c.l.b16 %v5702
        %v5791 = vunpack.c.l.b16 %v5703
        %v5792 = vunpack.c.l.b16 %v5704
        %v5793 = vpack.c.b16 %v5790, %v5789
        %v5794 = vpack.c.b16 %v5792, %v5791
        %v5798 = vsel %vm1667, %v5769, 0
        %v5801 = vsel %vm1667, %v5770, 0
        %v5804 = vsel %vm1667, %v5771, 0
        %v5807 = vsel %vm1667, %v5772, 0
        %v5810 = vsel %vm1667, %v5773, 0
        %v5813 = vsel %vm1667, %v5774, 0
        %v5816 = vsel %vm1667, %v5775, 0
        %v5819 = vsel %vm1667, %v5776, 0
        %v5822 = vsel %vm1667, %v5777, 0
        %v5825 = vsel %vm1667, %v5778, 0
        %v5828 = vsel %vm1667, %v5779, 0
        %v5831 = vsel %vm1667, %v5780, 0
        %v5834 = vsel %vm1667, %v5781, 0
        %v5837 = vsel %vm1667, %v5782, 0
        %v5840 = vsel %vm1667, %v5783, 0
        %v5843 = vsel %vm1667, %v5784, 0
        %5845 = vmatprep.subr.bf16.mxu0 0
        %5846 = vmatpush1.bf16.msra.mxu0 %v5793
        %5847 = vmatprep.subr.bf16.mxu0 0
        %5848 = vmatpush1.bf16.msra.mxu0 %v5794
        %5849 = vmatprep.subr.bf16.mxu0 0
        %5850 = vmatpush1.bf16.msra.mxu0 0
        %5851 = vmatprep.subr.bf16.mxu0 0
        %5852 = vmatpush1.bf16.msra.mxu0 0
        %5853 = vmatprep.subr.bf16.mxu0 0
        %5854 = vmatpush1.bf16.msra.mxu0 0
        %5855 = vmatprep.subr.bf16.mxu0 0
        %5856 = vmatpush1.bf16.msra.mxu0 0
        %5857 = vmatprep.subr.bf16.mxu0 0
        %5858 = vmatpush1.bf16.msra.mxu0 0
        %5859 = vmatprep.subr.bf16.mxu0 0
        %5860 = vmatpush1.bf16.msra.mxu0 0
        %5861 = vmatprep.subr.bf16.mxu0 0
        %5862 = vmatpush1.bf16.msra.mxu0 0
        %5863 = vmatprep.subr.bf16.mxu0 0
        %5864 = vmatpush1.bf16.msra.mxu0 0
        %5865 = vmatprep.subr.bf16.mxu0 0
        %5866 = vmatpush1.bf16.msra.mxu0 0
        %5867 = vmatprep.subr.bf16.mxu0 0
        %5868 = vmatpush1.bf16.msra.mxu0 0
        %5869 = vmatprep.subr.bf16.mxu0 0
        %5870 = vmatpush1.bf16.msra.mxu0 0
        %5871 = vmatprep.subr.bf16.mxu0 0
        %5872 = vmatpush1.bf16.msra.mxu0 0
        %5873 = vmatprep.subr.bf16.mxu0 0
        %5874 = vmatpush1.bf16.msra.mxu0 0
        %5875 = vmatprep.subr.bf16.mxu0 0
        %5876 = vmatpush1.bf16.msra.mxu0 0
        %5877 = vmatprep.mubr.bf16.mxu0 0
        %5878 = vmatmul.mubr.bf16.gmra.mrb[0].mxu0 %v5798
        %v5879 = vpop.f32.mrb[0].mxu0
        %v5880 = vadd.f32 0.0, %v5879
        %v5881 = vpop.f32.mrb[0].mxu0
        %v5882 = vpop.f32.mrb[0].mxu0
        %v5883 = vadd.f32 0.0, %v5882
        %v5884 = vpop.f32.mrb[0].mxu0
        %5885 = vmatprep.mubr.bf16.mxu0 0
        %5886 = vmatmul.mubr.bf16.gmra.mrb[0].mxu0 %v5801
        %v5887 = vpop.f32.mrb[0].mxu0
        %v5888 = vadd.f32 0.0, %v5887
        %v5889 = vpop.f32.mrb[0].mxu0
        %v5890 = vpop.f32.mrb[0].mxu0
        %v5891 = vadd.f32 0.0, %v5890
        %v5892 = vpop.f32.mrb[0].mxu0
        %5893 = vmatprep.mubr.bf16.mxu0 0
        %5894 = vmatmul.mubr.bf16.gmra.mrb[0].mxu0 %v5804
        %v5895 = vpop.f32.mrb[0].mxu0
        %v5896 = vadd.f32 0.0, %v5895
        %v5897 = vpop.f32.mrb[0].mxu0
        %v5898 = vpop.f32.mrb[0].mxu0
        %v5899 = vadd.f32 0.0, %v5898
        %v5900 = vpop.f32.mrb[0].mxu0
        %5901 = vmatprep.mubr.bf16.mxu0 0
        %5902 = vmatmul.mubr.bf16.gmra.mrb[0].mxu0 %v5807
        %v5903 = vpop.f32.mrb[0].mxu0
        %v5904 = vadd.f32 0.0, %v5903
        %v5905 = vpop.f32.mrb[0].mxu0
        %v5906 = vpop.f32.mrb[0].mxu0
        %v5907 = vadd.f32 0.0, %v5906
        %v5908 = vpop.f32.mrb[0].mxu0
        %5909 = vmatprep.mubr.bf16.mxu0 0
        %5910 = vmatmul.mubr.bf16.gmra.mrb[0].mxu0 %v5810
        %v5911 = vpop.f32.mrb[0].mxu0
        %v5912 = vadd.f32 0.0, %v5911
        %v5913 = vpop.f32.mrb[0].mxu0
        %v5914 = vpop.f32.mrb[0].mxu0
        %v5915 = vadd.f32 0.0, %v5914
        %v5916 = vpop.f32.mrb[0].mxu0
        %5917 = vmatprep.mubr.bf16.mxu0 0
        %5918 = vmatmul.mubr.bf16.gmra.mrb[0].mxu0 %v5813
        %v5919 = vpop.f32.mrb[0].mxu0
        %v5920 = vadd.f32 0.0, %v5919
        %v5921 = vpop.f32.mrb[0].mxu0
        %v5922 = vpop.f32.mrb[0].mxu0
        %v5923 = vadd.f32 0.0, %v5922
        %v5924 = vpop.f32.mrb[0].mxu0
        %5925 = vmatprep.mubr.bf16.mxu0 0
        %5926 = vmatmul.mubr.bf16.gmra.mrb[0].mxu0 %v5816
        %v5927 = vpop.f32.mrb[0].mxu0
        %v5928 = vadd.f32 0.0, %v5927
        %v5929 = vpop.f32.mrb[0].mxu0
        %v5930 = vpop.f32.mrb[0].mxu0
        %v5931 = vadd.f32 0.0, %v5930
        %v5932 = vpop.f32.mrb[0].mxu0
        %5933 = vmatprep.mubr.bf16.mxu0 0
        %5934 = vmatmul.mubr.bf16.gmra.mrb[0].mxu0 %v5819
        %v5935 = vpop.f32.mrb[0].mxu0
        %v5936 = vadd.f32 0.0, %v5935
        %v5937 = vpop.f32.mrb[0].mxu0
        %v5938 = vpop.f32.mrb[0].mxu0
        %v5939 = vadd.f32 0.0, %v5938
        %v5940 = vpop.f32.mrb[0].mxu0
        %5941 = vmatprep.mubr.bf16.mxu0 0
        %5942 = vmatmul.mubr.bf16.gmra.mrb[0].mxu0 %v5822
        %v5943 = vpop.f32.mrb[0].mxu0
        %v5944 = vadd.f32 0.0, %v5943
        %v5945 = vpop.f32.mrb[0].mxu0
        %v5946 = vpop.f32.mrb[0].mxu0
        %v5947 = vadd.f32 0.0, %v5946
        %v5948 = vpop.f32.mrb[0].mxu0
        %5949 = vmatprep.mubr.bf16.mxu0 0
        %5950 = vmatmul.mubr.bf16.gmra.mrb[0].mxu0 %v5825
        %v5951 = vpop.f32.mrb[0].mxu0
        %v5952 = vadd.f32 0.0, %v5951
        %v5953 = vpop.f32.mrb[0].mxu0
        %v5954 = vpop.f32.mrb[0].mxu0
        %v5955 = vadd.f32 0.0, %v5954
        %v5956 = vpop.f32.mrb[0].mxu0
        %5957 = vmatprep.mubr.bf16.mxu0 0
        %5958 = vmatmul.mubr.bf16.gmra.mrb[0].mxu0 %v5828
        %v5959 = vpop.f32.mrb[0].mxu0
        %v5960 = vadd.f32 0.0, %v5959
        %v5961 = vpop.f32.mrb[0].mxu0
        %v5962 = vpop.f32.mrb[0].mxu0
        %v5963 = vadd.f32 0.0, %v5962
        %v5964 = vpop.f32.mrb[0].mxu0
        %5965 = vmatprep.mubr.bf16.mxu0 0
        %5966 = vmatmul.mubr.bf16.gmra.mrb[0].mxu0 %v5831
        %v5967 = vpop.f32.mrb[0].mxu0
        %v5968 = vadd.f32 0.0, %v5967
        %v5969 = vpop.f32.mrb[0].mxu0
        %v5970 = vpop.f32.mrb[0].mxu0
        %v5971 = vadd.f32 0.0, %v5970
        %v5972 = vpop.f32.mrb[0].mxu0
        %5973 = vmatprep.mubr.bf16.mxu0 0
        %5974 = vmatmul.mubr.bf16.gmra.mrb[0].mxu0 %v5834
        %v5975 = vpop.f32.mrb[0].mxu0
        %v5976 = vadd.f32 0.0, %v5975
        %v5977 = vpop.f32.mrb[0].mxu0
        %v5978 = vpop.f32.mrb[0].mxu0
        %v5979 = vadd.f32 0.0, %v5978
        %v5980 = vpop.f32.mrb[0].mxu0
        %5981 = vmatprep.mubr.bf16.mxu0 0
        %5982 = vmatmul.mubr.bf16.gmra.mrb[0].mxu0 %v5837
        %v5983 = vpop.f32.mrb[0].mxu0
        %v5984 = vadd.f32 0.0, %v5983
        %v5985 = vpop.f32.mrb[0].mxu0
        %v5986 = vpop.f32.mrb[0].mxu0
        %v5987 = vadd.f32 0.0, %v5986
        %v5988 = vpop.f32.mrb[0].mxu0
        %5989 = vmatprep.mubr.bf16.mxu0 0
        %5990 = vmatmul.mubr.bf16.gmra.mrb[0].mxu0 %v5840
        %v5991 = vpop.f32.mrb[0].mxu0
        %v5992 = vadd.f32 0.0, %v5991
        %v5993 = vpop.f32.mrb[0].mxu0
        %v5994 = vpop.f32.mrb[0].mxu0
        %v5995 = vadd.f32 0.0, %v5994
        %v5996 = vpop.f32.mrb[0].mxu0
        %5997 = vmatprep.mubr.bf16.mxu0 0
        %5998 = vmatmul.mubr.bf16.gmra.mrb[0].mxu0 %v5843
        %v5999 = vpop.f32.mrb[0].mxu0
        %v6000 = vadd.f32 0.0, %v5999
        %v6001 = vpop.f32.mrb[0].mxu0
        %v6002 = vpop.f32.mrb[0].mxu0
        %v6003 = vadd.f32 0.0, %v6002
        %v6004 = vpop.f32.mrb[0].mxu0
        %6005 = vdwg.mxu0
        %v6006 = vadd.f32 %v5635, %v5880
        %v6007 = vadd.f32 %v5636, %v5883
        %v6008 = vadd.f32 %v5637, %v5888
        %v6009 = vadd.f32 %v5638, %v5891
        %v6010 = vadd.f32 %v5639, %v5896
        %v6011 = vadd.f32 %v5640, %v5899
        %v6012 = vadd.f32 %v5641, %v5904
        %v6013 = vadd.f32 %v5642, %v5907
        %v6014 = vadd.f32 %v5643, %v5912
        %v6015 = vadd.f32 %v5644, %v5915
        %v6016 = vadd.f32 %v5645, %v5920
        %v6017 = vadd.f32 %v5646, %v5923
        %v6018 = vadd.f32 %v5647, %v5928
        %v6019 = vadd.f32 %v5648, %v5931
        %v6020 = vadd.f32 %v5649, %v5936
        %v6021 = vadd.f32 %v5650, %v5939
        %v6022 = vadd.f32 %v5651, %v5944
        %v6023 = vadd.f32 %v5652, %v5947
        %v6024 = vadd.f32 %v5653, %v5952
        %v6025 = vadd.f32 %v5654, %v5955
        %v6026 = vadd.f32 %v5655, %v5960
        %v6027 = vadd.f32 %v5656, %v5963
        %v6028 = vadd.f32 %v5657, %v5968
        %v6029 = vadd.f32 %v5658, %v5971
        %v6030 = vadd.f32 %v5659, %v5976
        %v6031 = vadd.f32 %v5660, %v5979
        %v6032 = vadd.f32 %v5661, %v5984
        %v6033 = vadd.f32 %v5662, %v5987
        %v6034 = vadd.f32 %v5663, %v5992
        %v6035 = vadd.f32 %v5664, %v5995
        %v6036 = vadd.f32 %v5665, %v6000
        %v6037 = vadd.f32 %v5666, %v6003
        %s6038 = scalar_lea.vmem %s1154, 16 [#allocation3]
        %v6039 = vld [vmem:[%s6038] sm:$0xf]
        %v6040 = vld [vmem:[%s6038 + $0x4] sm:$0xf]
        %v6041 = vld [vmem:[%s6038 + $0x8] sm:$0xf]
        %v6042 = vld [vmem:[%s6038 + $0xc] sm:$0xf]
        %v6043 = vld [vmem:[%s6038 + $0x10] sm:$0xf]
        %v6044 = vld [vmem:[%s6038 + $0x14] sm:$0xf]
        %v6045 = vld [vmem:[%s6038 + $0x18] sm:$0xf]
        %v6046 = vld [vmem:[%s6038 + $0x1c] sm:$0xf]
        %v6047 = vld [vmem:[%s6038 + $0x20] sm:$0xf]
        %v6048 = vld [vmem:[%s6038 + $0x24] sm:$0xf]
        %v6049 = vld [vmem:[%s6038 + $0x28] sm:$0xf]
        %v6050 = vld [vmem:[%s6038 + $0x2c] sm:$0xf]
        %v6051 = vld [vmem:[%s6038 + $0x30] sm:$0xf]
        %v6052 = vld [vmem:[%s6038 + $0x34] sm:$0xf]
        %v6053 = vld [vmem:[%s6038 + $0x38] sm:$0xf]
        %v6054 = vld [vmem:[%s6038 + $0x3c] sm:$0xf]
        %v6055 = vld [vmem:[%s6038 + $0x40] sm:$0xf]
        %v6056 = vld [vmem:[%s6038 + $0x44] sm:$0xf]
        %v6057 = vld [vmem:[%s6038 + $0x48] sm:$0xf]
        %v6058 = vld [vmem:[%s6038 + $0x4c] sm:$0xf]
        %v6059 = vld [vmem:[%s6038 + $0x50] sm:$0xf]
        %v6060 = vld [vmem:[%s6038 + $0x54] sm:$0xf]
        %v6061 = vld [vmem:[%s6038 + $0x58] sm:$0xf]
        %v6062 = vld [vmem:[%s6038 + $0x5c] sm:$0xf]
        %v6063 = vld [vmem:[%s6038 + $0x60] sm:$0xf]
        %v6064 = vld [vmem:[%s6038 + $0x64] sm:$0xf]
        %v6065 = vld [vmem:[%s6038 + $0x68] sm:$0xf]
        %v6066 = vld [vmem:[%s6038 + $0x6c] sm:$0xf]
        %v6067 = vld [vmem:[%s6038 + $0x70] sm:$0xf]
        %v6068 = vld [vmem:[%s6038 + $0x74] sm:$0xf]
        %v6069 = vld [vmem:[%s6038 + $0x78] sm:$0xf]
        %v6070 = vld [vmem:[%s6038 + $0x7c] sm:$0xf]
        %s6071 = scalar_lea.vmem %s3, 192
        %v6072 = vld [vmem:[%s6071] sm:$0xf]
        %v6073 = vld [vmem:[%s6071 + $0x4] sm:$0xf]
        %v6074 = vld [vmem:[%s6071 + $0x8] sm:$0xf]
        %v6075 = vld [vmem:[%s6071 + $0xc] sm:$0xf]
        %v6076 = vld [vmem:[%s6071 + $0x10] sm:$0xf]
        %v6077 = vld [vmem:[%s6071 + $0x14] sm:$0xf]
        %v6078 = vld [vmem:[%s6071 + $0x18] sm:$0xf]
        %v6079 = vld [vmem:[%s6071 + $0x1c] sm:$0xf]
        %v6112 = vunpack.c.l.b16 %v6039
        %v6113 = vunpack.c.l.b16 %v6040
        %v6114 = vunpack.c.l.b16 %v6041
        %v6115 = vunpack.c.l.b16 %v6042
        %v6116 = vunpack.c.l.b16 %v6043
        %v6117 = vunpack.c.l.b16 %v6044
        %v6118 = vunpack.c.l.b16 %v6045
        %v6119 = vunpack.c.l.b16 %v6046
        %v6120 = vunpack.c.l.b16 %v6047
        %v6121 = vunpack.c.l.b16 %v6048
        %v6122 = vunpack.c.l.b16 %v6049
        %v6123 = vunpack.c.l.b16 %v6050
        %v6124 = vunpack.c.l.b16 %v6051
        %v6125 = vunpack.c.l.b16 %v6052
        %v6126 = vunpack.c.l.b16 %v6053
        %v6127 = vunpack.c.l.b16 %v6054
        %v6128 = vunpack.c.l.b16 %v6055
        %v6129 = vunpack.c.l.b16 %v6056
        %v6130 = vunpack.c.l.b16 %v6057
        %v6131 = vunpack.c.l.b16 %v6058
        %v6132 = vunpack.c.l.b16 %v6059
        %v6133 = vunpack.c.l.b16 %v6060
        %v6134 = vunpack.c.l.b16 %v6061
        %v6135 = vunpack.c.l.b16 %v6062
        %v6136 = vunpack.c.l.b16 %v6063
        %v6137 = vunpack.c.l.b16 %v6064
        %v6138 = vunpack.c.l.b16 %v6065
        %v6139 = vunpack.c.l.b16 %v6066
        %v6140 = vunpack.c.l.b16 %v6067
        %v6141 = vunpack.c.l.b16 %v6068
        %v6142 = vunpack.c.l.b16 %v6069
        %v6143 = vunpack.c.l.b16 %v6070
        %v6144 = vpack.c.b16 %v6113, %v6112
        %v6145 = vpack.c.b16 %v6115, %v6114
        %v6146 = vpack.c.b16 %v6117, %v6116
        %v6147 = vpack.c.b16 %v6119, %v6118
        %v6148 = vpack.c.b16 %v6121, %v6120
        %v6149 = vpack.c.b16 %v6123, %v6122
        %v6150 = vpack.c.b16 %v6125, %v6124
        %v6151 = vpack.c.b16 %v6127, %v6126
        %v6152 = vpack.c.b16 %v6129, %v6128
        %v6153 = vpack.c.b16 %v6131, %v6130
        %v6154 = vpack.c.b16 %v6133, %v6132
        %v6155 = vpack.c.b16 %v6135, %v6134
        %v6156 = vpack.c.b16 %v6137, %v6136
        %v6157 = vpack.c.b16 %v6139, %v6138
        %v6158 = vpack.c.b16 %v6141, %v6140
        %v6159 = vpack.c.b16 %v6143, %v6142
        %v6168 = vunpack.c.l.b16 %v6072
        %v6169 = vunpack.c.l.b16 %v6073
        %v6170 = vunpack.c.l.b16 %v6074
        %v6171 = vunpack.c.l.b16 %v6075
        %v6172 = vunpack.c.l.b16 %v6076
        %v6173 = vunpack.c.l.b16 %v6077
        %v6174 = vunpack.c.l.b16 %v6078
        %v6175 = vunpack.c.l.b16 %v6079
        %v6176 = vpack.c.b16 %v6169, %v6168
        %v6177 = vpack.c.b16 %v6171, %v6170
        %v6178 = vpack.c.b16 %v6173, %v6172
        %v6179 = vpack.c.b16 %v6175, %v6174
        %v6185 = vsel %vm1365, %v6144, 0
        %v6188 = vsel %vm1365, %v6145, 0
        %v6191 = vsel %vm1365, %v6146, 0
        %v6194 = vsel %vm1365, %v6147, 0
        %v6197 = vsel %vm1365, %v6148, 0
        %v6200 = vsel %vm1365, %v6149, 0
        %v6203 = vsel %vm1365, %v6150, 0
        %v6206 = vsel %vm1365, %v6151, 0
        %v6209 = vsel %vm1365, %v6152, 0
        %v6212 = vsel %vm1365, %v6153, 0
        %v6215 = vsel %vm1365, %v6154, 0
        %v6218 = vsel %vm1365, %v6155, 0
        %v6221 = vsel %vm1365, %v6156, 0
        %v6224 = vsel %vm1365, %v6157, 0
        %v6227 = vsel %vm1365, %v6158, 0
        %v6230 = vsel %vm1365, %v6159, 0
        %6232 = vmatprep.subr.bf16.mxu0 0
        %6233 = vmatpush1.bf16.msra.mxu0 %v6176
        %6234 = vmatprep.subr.bf16.mxu0 0
        %6235 = vmatpush1.bf16.msra.mxu0 %v6177
        %6236 = vmatprep.subr.bf16.mxu0 0
        %6237 = vmatpush1.bf16.msra.mxu0 %v6178
        %6238 = vmatprep.subr.bf16.mxu0 0
        %6239 = vmatpush1.bf16.msra.mxu0 %v6179
        %6240 = vmatprep.subr.bf16.mxu0 0
        %6241 = vmatpush1.bf16.msra.mxu0 0
        %6242 = vmatprep.subr.bf16.mxu0 0
        %6243 = vmatpush1.bf16.msra.mxu0 0
        %6244 = vmatprep.subr.bf16.mxu0 0
        %6245 = vmatpush1.bf16.msra.mxu0 0
        %6246 = vmatprep.subr.bf16.mxu0 0
        %6247 = vmatpush1.bf16.msra.mxu0 0
        %6248 = vmatprep.subr.bf16.mxu0 0
        %6249 = vmatpush1.bf16.msra.mxu0 0
        %6250 = vmatprep.subr.bf16.mxu0 0
        %6251 = vmatpush1.bf16.msra.mxu0 0
        %6252 = vmatprep.subr.bf16.mxu0 0
        %6253 = vmatpush1.bf16.msra.mxu0 0
        %6254 = vmatprep.subr.bf16.mxu0 0
        %6255 = vmatpush1.bf16.msra.mxu0 0
        %6256 = vmatprep.subr.bf16.mxu0 0
        %6257 = vmatpush1.bf16.msra.mxu0 0
        %6258 = vmatprep.subr.bf16.mxu0 0
        %6259 = vmatpush1.bf16.msra.mxu0 0
        %6260 = vmatprep.subr.bf16.mxu0 0
        %6261 = vmatpush1.bf16.msra.mxu0 0
        %6262 = vmatprep.subr.bf16.mxu0 0
        %6263 = vmatpush1.bf16.msra.mxu0 0
        %6264 = vmatprep.mubr.bf16.mxu0 0
        %6265 = vmatmul.mubr.bf16.gmra.mrb[0].mxu0 %v6185
        %v6266 = vpop.f32.mrb[0].mxu0
        %v6267 = vadd.f32 0.0, %v6266
        %v6268 = vpop.f32.mrb[0].mxu0
        %v6269 = vpop.f32.mrb[0].mxu0
        %v6270 = vadd.f32 0.0, %v6269
        %v6271 = vpop.f32.mrb[0].mxu0
        %6272 = vmatprep.mubr.bf16.mxu0 0
        %6273 = vmatmul.mubr.bf16.gmra.mrb[0].mxu0 %v6188
        %v6274 = vpop.f32.mrb[0].mxu0
        %v6275 = vadd.f32 0.0, %v6274
        %v6276 = vpop.f32.mrb[0].mxu0
        %v6277 = vpop.f32.mrb[0].mxu0
        %v6278 = vadd.f32 0.0, %v6277
        %v6279 = vpop.f32.mrb[0].mxu0
        %6280 = vmatprep.mubr.bf16.mxu0 0
        %6281 = vmatmul.mubr.bf16.gmra.mrb[0].mxu0 %v6191
        %v6282 = vpop.f32.mrb[0].mxu0
        %v6283 = vadd.f32 0.0, %v6282
        %v6284 = vpop.f32.mrb[0].mxu0
        %v6285 = vpop.f32.mrb[0].mxu0
        %v6286 = vadd.f32 0.0, %v6285
        %v6287 = vpop.f32.mrb[0].mxu0
        %6288 = vmatprep.mubr.bf16.mxu0 0
        %6289 = vmatmul.mubr.bf16.gmra.mrb[0].mxu0 %v6194
        %v6290 = vpop.f32.mrb[0].mxu0
        %v6291 = vadd.f32 0.0, %v6290
        %v6292 = vpop.f32.mrb[0].mxu0
        %v6293 = vpop.f32.mrb[0].mxu0
        %v6294 = vadd.f32 0.0, %v6293
        %v6295 = vpop.f32.mrb[0].mxu0
        %6296 = vmatprep.mubr.bf16.mxu0 0
        %6297 = vmatmul.mubr.bf16.gmra.mrb[0].mxu0 %v6197
        %v6298 = vpop.f32.mrb[0].mxu0
        %v6299 = vadd.f32 0.0, %v6298
        %v6300 = vpop.f32.mrb[0].mxu0
        %v6301 = vpop.f32.mrb[0].mxu0
        %v6302 = vadd.f32 0.0, %v6301
        %v6303 = vpop.f32.mrb[0].mxu0
        %6304 = vmatprep.mubr.bf16.mxu0 0
        %6305 = vmatmul.mubr.bf16.gmra.mrb[0].mxu0 %v6200
        %v6306 = vpop.f32.mrb[0].mxu0
        %v6307 = vadd.f32 0.0, %v6306
        %v6308 = vpop.f32.mrb[0].mxu0
        %v6309 = vpop.f32.mrb[0].mxu0
        %v6310 = vadd.f32 0.0, %v6309
        %v6311 = vpop.f32.mrb[0].mxu0
        %6312 = vmatprep.mubr.bf16.mxu0 0
        %6313 = vmatmul.mubr.bf16.gmra.mrb[0].mxu0 %v6203
        %v6314 = vpop.f32.mrb[0].mxu0
        %v6315 = vadd.f32 0.0, %v6314
        %v6316 = vpop.f32.mrb[0].mxu0
        %v6317 = vpop.f32.mrb[0].mxu0
        %v6318 = vadd.f32 0.0, %v6317
        %v6319 = vpop.f32.mrb[0].mxu0
        %6320 = vmatprep.mubr.bf16.mxu0 0
        %6321 = vmatmul.mubr.bf16.gmra.mrb[0].mxu0 %v6206
        %v6322 = vpop.f32.mrb[0].mxu0
        %v6323 = vadd.f32 0.0, %v6322
        %v6324 = vpop.f32.mrb[0].mxu0
        %v6325 = vpop.f32.mrb[0].mxu0
        %v6326 = vadd.f32 0.0, %v6325
        %v6327 = vpop.f32.mrb[0].mxu0
        %6328 = vmatprep.mubr.bf16.mxu0 0
        %6329 = vmatmul.mubr.bf16.gmra.mrb[0].mxu0 %v6209
        %v6330 = vpop.f32.mrb[0].mxu0
        %v6331 = vadd.f32 0.0, %v6330
        %v6332 = vpop.f32.mrb[0].mxu0
        %v6333 = vpop.f32.mrb[0].mxu0
        %v6334 = vadd.f32 0.0, %v6333
        %v6335 = vpop.f32.mrb[0].mxu0
        %6336 = vmatprep.mubr.bf16.mxu0 0
        %6337 = vmatmul.mubr.bf16.gmra.mrb[0].mxu0 %v6212
        %v6338 = vpop.f32.mrb[0].mxu0
        %v6339 = vadd.f32 0.0, %v6338
        %v6340 = vpop.f32.mrb[0].mxu0
        %v6341 = vpop.f32.mrb[0].mxu0
        %v6342 = vadd.f32 0.0, %v6341
        %v6343 = vpop.f32.mrb[0].mxu0
        %6344 = vmatprep.mubr.bf16.mxu0 0
        %6345 = vmatmul.mubr.bf16.gmra.mrb[0].mxu0 %v6215
        %v6346 = vpop.f32.mrb[0].mxu0
        %v6347 = vadd.f32 0.0, %v6346
        %v6348 = vpop.f32.mrb[0].mxu0
        %v6349 = vpop.f32.mrb[0].mxu0
        %v6350 = vadd.f32 0.0, %v6349
        %v6351 = vpop.f32.mrb[0].mxu0
        %6352 = vmatprep.mubr.bf16.mxu0 0
        %6353 = vmatmul.mubr.bf16.gmra.mrb[0].mxu0 %v6218
        %v6354 = vpop.f32.mrb[0].mxu0
        %v6355 = vadd.f32 0.0, %v6354
        %v6356 = vpop.f32.mrb[0].mxu0
        %v6357 = vpop.f32.mrb[0].mxu0
        %v6358 = vadd.f32 0.0, %v6357
        %v6359 = vpop.f32.mrb[0].mxu0
        %6360 = vmatprep.mubr.bf16.mxu0 0
        %6361 = vmatmul.mubr.bf16.gmra.mrb[0].mxu0 %v6221
        %v6362 = vpop.f32.mrb[0].mxu0
        %v6363 = vadd.f32 0.0, %v6362
        %v6364 = vpop.f32.mrb[0].mxu0
        %v6365 = vpop.f32.mrb[0].mxu0
        %v6366 = vadd.f32 0.0, %v6365
        %v6367 = vpop.f32.mrb[0].mxu0
        %6368 = vmatprep.mubr.bf16.mxu0 0
        %6369 = vmatmul.mubr.bf16.gmra.mrb[0].mxu0 %v6224
        %v6370 = vpop.f32.mrb[0].mxu0
        %v6371 = vadd.f32 0.0, %v6370
        %v6372 = vpop.f32.mrb[0].mxu0
        %v6373 = vpop.f32.mrb[0].mxu0
        %v6374 = vadd.f32 0.0, %v6373
        %v6375 = vpop.f32.mrb[0].mxu0
        %6376 = vmatprep.mubr.bf16.mxu0 0
        %6377 = vmatmul.mubr.bf16.gmra.mrb[0].mxu0 %v6227
        %v6378 = vpop.f32.mrb[0].mxu0
        %v6379 = vadd.f32 0.0, %v6378
        %v6380 = vpop.f32.mrb[0].mxu0
        %v6381 = vpop.f32.mrb[0].mxu0
        %v6382 = vadd.f32 0.0, %v6381
        %v6383 = vpop.f32.mrb[0].mxu0
        %6384 = vmatprep.mubr.bf16.mxu0 0
        %6385 = vmatmul.mubr.bf16.gmra.mrb[0].mxu0 %v6230
        %v6386 = vpop.f32.mrb[0].mxu0
        %v6387 = vadd.f32 0.0, %v6386
        %v6388 = vpop.f32.mrb[0].mxu0
        %v6389 = vpop.f32.mrb[0].mxu0
        %v6390 = vadd.f32 0.0, %v6389
        %v6391 = vpop.f32.mrb[0].mxu0
        %6392 = vdwg.mxu0
        %v6393 = vadd.f32 %v6006, %v6267
        %v6394 = vadd.f32 %v6007, %v6270
        %v6395 = vadd.f32 %v6008, %v6275
        %v6396 = vadd.f32 %v6009, %v6278
        %v6397 = vadd.f32 %v6010, %v6283
        %v6398 = vadd.f32 %v6011, %v6286
        %v6399 = vadd.f32 %v6012, %v6291
        %v6400 = vadd.f32 %v6013, %v6294
        %v6401 = vadd.f32 %v6014, %v6299
        %v6402 = vadd.f32 %v6015, %v6302
        %v6403 = vadd.f32 %v6016, %v6307
        %v6404 = vadd.f32 %v6017, %v6310
        %v6405 = vadd.f32 %v6018, %v6315
        %v6406 = vadd.f32 %v6019, %v6318
        %v6407 = vadd.f32 %v6020, %v6323
        %v6408 = vadd.f32 %v6021, %v6326
        %v6409 = vadd.f32 %v6022, %v6331
        %v6410 = vadd.f32 %v6023, %v6334
        %v6411 = vadd.f32 %v6024, %v6339
        %v6412 = vadd.f32 %v6025, %v6342
        %v6413 = vadd.f32 %v6026, %v6347
        %v6414 = vadd.f32 %v6027, %v6350
        %v6415 = vadd.f32 %v6028, %v6355
        %v6416 = vadd.f32 %v6029, %v6358
        %v6417 = vadd.f32 %v6030, %v6363
        %v6418 = vadd.f32 %v6031, %v6366
        %v6419 = vadd.f32 %v6032, %v6371
        %v6420 = vadd.f32 %v6033, %v6374
        %v6421 = vadd.f32 %v6034, %v6379
        %v6422 = vadd.f32 %v6035, %v6382
        %v6423 = vadd.f32 %v6036, %v6387
        %v6424 = vadd.f32 %v6037, %v6390
        %s6425 = scalar_lea.vmem %s1147, 160 [#allocation2]
        %v6426 = vld [vmem:[%s6425] sm:$0xf]
        %v6427 = vld [vmem:[%s6425 + $0x4] sm:$0xf]
        %v6428 = vld [vmem:[%s6425 + $0x8] sm:$0xf]
        %v6429 = vld [vmem:[%s6425 + $0xc] sm:$0xf]
        %v6430 = vld [vmem:[%s6425 + $0x10] sm:$0xf]
        %v6431 = vld [vmem:[%s6425 + $0x14] sm:$0xf]
        %v6432 = vld [vmem:[%s6425 + $0x18] sm:$0xf]
        %v6433 = vld [vmem:[%s6425 + $0x1c] sm:$0xf]
        %v6434 = vld [vmem:[%s6425 + $0x20] sm:$0xf]
        %v6435 = vld [vmem:[%s6425 + $0x24] sm:$0xf]
        %v6436 = vld [vmem:[%s6425 + $0x28] sm:$0xf]
        %v6437 = vld [vmem:[%s6425 + $0x2c] sm:$0xf]
        %v6438 = vld [vmem:[%s6425 + $0x30] sm:$0xf]
        %v6439 = vld [vmem:[%s6425 + $0x34] sm:$0xf]
        %v6440 = vld [vmem:[%s6425 + $0x38] sm:$0xf]
        %v6441 = vld [vmem:[%s6425 + $0x3c] sm:$0xf]
        %v6442 = vld [vmem:[%s6425 + $0x40] sm:$0xf]
        %v6443 = vld [vmem:[%s6425 + $0x44] sm:$0xf]
        %v6444 = vld [vmem:[%s6425 + $0x48] sm:$0xf]
        %v6445 = vld [vmem:[%s6425 + $0x4c] sm:$0xf]
        %v6446 = vld [vmem:[%s6425 + $0x50] sm:$0xf]
        %v6447 = vld [vmem:[%s6425 + $0x54] sm:$0xf]
        %v6448 = vld [vmem:[%s6425 + $0x58] sm:$0xf]
        %v6449 = vld [vmem:[%s6425 + $0x5c] sm:$0xf]
        %v6450 = vld [vmem:[%s6425 + $0x60] sm:$0xf]
        %v6451 = vld [vmem:[%s6425 + $0x64] sm:$0xf]
        %v6452 = vld [vmem:[%s6425 + $0x68] sm:$0xf]
        %v6453 = vld [vmem:[%s6425 + $0x6c] sm:$0xf]
        %v6454 = vld [vmem:[%s6425 + $0x70] sm:$0xf]
        %v6455 = vld [vmem:[%s6425 + $0x74] sm:$0xf]
        %v6456 = vld [vmem:[%s6425 + $0x78] sm:$0xf]
        %v6457 = vld [vmem:[%s6425 + $0x7c] sm:$0xf]
        %s6458 = scalar_lea.vmem %s1, 112
        %v6459 = vld [vmem:[%s6458] sm:$0xf]
        %v6460 = vld [vmem:[%s6458 + $0x4] sm:$0xf]
        %v6461 = vld [vmem:[%s6458 + $0x8] sm:$0xf]
        %v6462 = vld [vmem:[%s6458 + $0xc] sm:$0xf]
        %v6495 = vunpack.c.l.b16 %v6426
        %v6496 = vunpack.c.l.b16 %v6427
        %v6497 = vunpack.c.l.b16 %v6428
        %v6498 = vunpack.c.l.b16 %v6429
        %v6499 = vunpack.c.l.b16 %v6430
        %v6500 = vunpack.c.l.b16 %v6431
        %v6501 = vunpack.c.l.b16 %v6432
        %v6502 = vunpack.c.l.b16 %v6433
        %v6503 = vunpack.c.l.b16 %v6434
        %v6504 = vunpack.c.l.b16 %v6435
        %v6505 = vunpack.c.l.b16 %v6436
        %v6506 = vunpack.c.l.b16 %v6437
        %v6507 = vunpack.c.l.b16 %v6438
        %v6508 = vunpack.c.l.b16 %v6439
        %v6509 = vunpack.c.l.b16 %v6440
        %v6510 = vunpack.c.l.b16 %v6441
        %v6511 = vunpack.c.l.b16 %v6442
        %v6512 = vunpack.c.l.b16 %v6443
        %v6513 = vunpack.c.l.b16 %v6444
        %v6514 = vunpack.c.l.b16 %v6445
        %v6515 = vunpack.c.l.b16 %v6446
        %v6516 = vunpack.c.l.b16 %v6447
        %v6517 = vunpack.c.l.b16 %v6448
        %v6518 = vunpack.c.l.b16 %v6449
        %v6519 = vunpack.c.l.b16 %v6450
        %v6520 = vunpack.c.l.b16 %v6451
        %v6521 = vunpack.c.l.b16 %v6452
        %v6522 = vunpack.c.l.b16 %v6453
        %v6523 = vunpack.c.l.b16 %v6454
        %v6524 = vunpack.c.l.b16 %v6455
        %v6525 = vunpack.c.l.b16 %v6456
        %v6526 = vunpack.c.l.b16 %v6457
        %v6527 = vpack.c.b16 %v6496, %v6495
        %v6528 = vpack.c.b16 %v6498, %v6497
        %v6529 = vpack.c.b16 %v6500, %v6499
        %v6530 = vpack.c.b16 %v6502, %v6501
        %v6531 = vpack.c.b16 %v6504, %v6503
        %v6532 = vpack.c.b16 %v6506, %v6505
        %v6533 = vpack.c.b16 %v6508, %v6507
        %v6534 = vpack.c.b16 %v6510, %v6509
        %v6535 = vpack.c.b16 %v6512, %v6511
        %v6536 = vpack.c.b16 %v6514, %v6513
        %v6537 = vpack.c.b16 %v6516, %v6515
        %v6538 = vpack.c.b16 %v6518, %v6517
        %v6539 = vpack.c.b16 %v6520, %v6519
        %v6540 = vpack.c.b16 %v6522, %v6521
        %v6541 = vpack.c.b16 %v6524, %v6523
        %v6542 = vpack.c.b16 %v6526, %v6525
        %v6547 = vunpack.c.l.b16 %v6459
        %v6548 = vunpack.c.l.b16 %v6460
        %v6549 = vunpack.c.l.b16 %v6461
        %v6550 = vunpack.c.l.b16 %v6462
        %v6551 = vpack.c.b16 %v6548, %v6547
        %v6552 = vpack.c.b16 %v6550, %v6549
        %v6556 = vsel %vm1667, %v6527, 0
        %v6559 = vsel %vm1667, %v6528, 0
        %v6562 = vsel %vm1667, %v6529, 0
        %v6565 = vsel %vm1667, %v6530, 0
        %v6568 = vsel %vm1667, %v6531, 0
        %v6571 = vsel %vm1667, %v6532, 0
        %v6574 = vsel %vm1667, %v6533, 0
        %v6577 = vsel %vm1667, %v6534, 0
        %v6580 = vsel %vm1667, %v6535, 0
        %v6583 = vsel %vm1667, %v6536, 0
        %v6586 = vsel %vm1667, %v6537, 0
        %v6589 = vsel %vm1667, %v6538, 0
        %v6592 = vsel %vm1667, %v6539, 0
        %v6595 = vsel %vm1667, %v6540, 0
        %v6598 = vsel %vm1667, %v6541, 0
        %v6601 = vsel %vm1667, %v6542, 0
        %6603 = vmatprep.subr.bf16.mxu0 0
        %6604 = vmatpush1.bf16.msra.mxu0 %v6551
        %6605 = vmatprep.subr.bf16.mxu0 0
        %6606 = vmatpush1.bf16.msra.mxu0 %v6552
        %6607 = vmatprep.subr.bf16.mxu0 0
        %6608 = vmatpush1.bf16.msra.mxu0 0
        %6609 = vmatprep.subr.bf16.mxu0 0
        %6610 = vmatpush1.bf16.msra.mxu0 0
        %6611 = vmatprep.subr.bf16.mxu0 0
        %6612 = vmatpush1.bf16.msra.mxu0 0
        %6613 = vmatprep.subr.bf16.mxu0 0
        %6614 = vmatpush1.bf16.msra.mxu0 0
        %6615 = vmatprep.subr.bf16.mxu0 0
        %6616 = vmatpush1.bf16.msra.mxu0 0
        %6617 = vmatprep.subr.bf16.mxu0 0
        %6618 = vmatpush1.bf16.msra.mxu0 0
        %6619 = vmatprep.subr.bf16.mxu0 0
        %6620 = vmatpush1.bf16.msra.mxu0 0
        %6621 = vmatprep.subr.bf16.mxu0 0
        %6622 = vmatpush1.bf16.msra.mxu0 0
        %6623 = vmatprep.subr.bf16.mxu0 0
        %6624 = vmatpush1.bf16.msra.mxu0 0
        %6625 = vmatprep.subr.bf16.mxu0 0
        %6626 = vmatpush1.bf16.msra.mxu0 0
        %6627 = vmatprep.subr.bf16.mxu0 0
        %6628 = vmatpush1.bf16.msra.mxu0 0
        %6629 = vmatprep.subr.bf16.mxu0 0
        %6630 = vmatpush1.bf16.msra.mxu0 0
        %6631 = vmatprep.subr.bf16.mxu0 0
        %6632 = vmatpush1.bf16.msra.mxu0 0
        %6633 = vmatprep.subr.bf16.mxu0 0
        %6634 = vmatpush1.bf16.msra.mxu0 0
        %6635 = vmatprep.mubr.bf16.mxu0 0
        %6636 = vmatmul.mubr.bf16.gmra.mrb[0].mxu0 %v6556
        %v6637 = vpop.f32.mrb[0].mxu0
        %v6638 = vadd.f32 0.0, %v6637
        %v6639 = vpop.f32.mrb[0].mxu0
        %v6640 = vpop.f32.mrb[0].mxu0
        %v6641 = vadd.f32 0.0, %v6640
        %v6642 = vpop.f32.mrb[0].mxu0
        %6643 = vmatprep.mubr.bf16.mxu0 0
        %6644 = vmatmul.mubr.bf16.gmra.mrb[0].mxu0 %v6559
        %v6645 = vpop.f32.mrb[0].mxu0
        %v6646 = vadd.f32 0.0, %v6645
        %v6647 = vpop.f32.mrb[0].mxu0
        %v6648 = vpop.f32.mrb[0].mxu0
        %v6649 = vadd.f32 0.0, %v6648
        %v6650 = vpop.f32.mrb[0].mxu0
        %6651 = vmatprep.mubr.bf16.mxu0 0
        %6652 = vmatmul.mubr.bf16.gmra.mrb[0].mxu0 %v6562
        %v6653 = vpop.f32.mrb[0].mxu0
        %v6654 = vadd.f32 0.0, %v6653
        %v6655 = vpop.f32.mrb[0].mxu0
        %v6656 = vpop.f32.mrb[0].mxu0
        %v6657 = vadd.f32 0.0, %v6656
        %v6658 = vpop.f32.mrb[0].mxu0
        %6659 = vmatprep.mubr.bf16.mxu0 0
        %6660 = vmatmul.mubr.bf16.gmra.mrb[0].mxu0 %v6565
        %v6661 = vpop.f32.mrb[0].mxu0
        %v6662 = vadd.f32 0.0, %v6661
        %v6663 = vpop.f32.mrb[0].mxu0
        %v6664 = vpop.f32.mrb[0].mxu0
        %v6665 = vadd.f32 0.0, %v6664
        %v6666 = vpop.f32.mrb[0].mxu0
        %6667 = vmatprep.mubr.bf16.mxu0 0
        %6668 = vmatmul.mubr.bf16.gmra.mrb[0].mxu0 %v6568
        %v6669 = vpop.f32.mrb[0].mxu0
        %v6670 = vadd.f32 0.0, %v6669
        %v6671 = vpop.f32.mrb[0].mxu0
        %v6672 = vpop.f32.mrb[0].mxu0
        %v6673 = vadd.f32 0.0, %v6672
        %v6674 = vpop.f32.mrb[0].mxu0
        %6675 = vmatprep.mubr.bf16.mxu0 0
        %6676 = vmatmul.mubr.bf16.gmra.mrb[0].mxu0 %v6571
        %v6677 = vpop.f32.mrb[0].mxu0
        %v6678 = vadd.f32 0.0, %v6677
        %v6679 = vpop.f32.mrb[0].mxu0
        %v6680 = vpop.f32.mrb[0].mxu0
        %v6681 = vadd.f32 0.0, %v6680
        %v6682 = vpop.f32.mrb[0].mxu0
        %6683 = vmatprep.mubr.bf16.mxu0 0
        %6684 = vmatmul.mubr.bf16.gmra.mrb[0].mxu0 %v6574
        %v6685 = vpop.f32.mrb[0].mxu0
        %v6686 = vadd.f32 0.0, %v6685
        %v6687 = vpop.f32.mrb[0].mxu0
        %v6688 = vpop.f32.mrb[0].mxu0
        %v6689 = vadd.f32 0.0, %v6688
        %v6690 = vpop.f32.mrb[0].mxu0
        %6691 = vmatprep.mubr.bf16.mxu0 0
        %6692 = vmatmul.mubr.bf16.gmra.mrb[0].mxu0 %v6577
        %v6693 = vpop.f32.mrb[0].mxu0
        %v6694 = vadd.f32 0.0, %v6693
        %v6695 = vpop.f32.mrb[0].mxu0
        %v6696 = vpop.f32.mrb[0].mxu0
        %v6697 = vadd.f32 0.0, %v6696
        %v6698 = vpop.f32.mrb[0].mxu0
        %6699 = vmatprep.mubr.bf16.mxu0 0
        %6700 = vmatmul.mubr.bf16.gmra.mrb[0].mxu0 %v6580
        %v6701 = vpop.f32.mrb[0].mxu0
        %v6702 = vadd.f32 0.0, %v6701
        %v6703 = vpop.f32.mrb[0].mxu0
        %v6704 = vpop.f32.mrb[0].mxu0
        %v6705 = vadd.f32 0.0, %v6704
        %v6706 = vpop.f32.mrb[0].mxu0
        %6707 = vmatprep.mubr.bf16.mxu0 0
        %6708 = vmatmul.mubr.bf16.gmra.mrb[0].mxu0 %v6583
        %v6709 = vpop.f32.mrb[0].mxu0
        %v6710 = vadd.f32 0.0, %v6709
        %v6711 = vpop.f32.mrb[0].mxu0
        %v6712 = vpop.f32.mrb[0].mxu0
        %v6713 = vadd.f32 0.0, %v6712
        %v6714 = vpop.f32.mrb[0].mxu0
        %6715 = vmatprep.mubr.bf16.mxu0 0
        %6716 = vmatmul.mubr.bf16.gmra.mrb[0].mxu0 %v6586
        %v6717 = vpop.f32.mrb[0].mxu0
        %v6718 = vadd.f32 0.0, %v6717
        %v6719 = vpop.f32.mrb[0].mxu0
        %v6720 = vpop.f32.mrb[0].mxu0
        %v6721 = vadd.f32 0.0, %v6720
        %v6722 = vpop.f32.mrb[0].mxu0
        %6723 = vmatprep.mubr.bf16.mxu0 0
        %6724 = vmatmul.mubr.bf16.gmra.mrb[0].mxu0 %v6589
        %v6725 = vpop.f32.mrb[0].mxu0
        %v6726 = vadd.f32 0.0, %v6725
        %v6727 = vpop.f32.mrb[0].mxu0
        %v6728 = vpop.f32.mrb[0].mxu0
        %v6729 = vadd.f32 0.0, %v6728
        %v6730 = vpop.f32.mrb[0].mxu0
        %6731 = vmatprep.mubr.bf16.mxu0 0
        %6732 = vmatmul.mubr.bf16.gmra.mrb[0].mxu0 %v6592
        %v6733 = vpop.f32.mrb[0].mxu0
        %v6734 = vadd.f32 0.0, %v6733
        %v6735 = vpop.f32.mrb[0].mxu0
        %v6736 = vpop.f32.mrb[0].mxu0
        %v6737 = vadd.f32 0.0, %v6736
        %v6738 = vpop.f32.mrb[0].mxu0
        %6739 = vmatprep.mubr.bf16.mxu0 0
        %6740 = vmatmul.mubr.bf16.gmra.mrb[0].mxu0 %v6595
        %v6741 = vpop.f32.mrb[0].mxu0
        %v6742 = vadd.f32 0.0, %v6741
        %v6743 = vpop.f32.mrb[0].mxu0
        %v6744 = vpop.f32.mrb[0].mxu0
        %v6745 = vadd.f32 0.0, %v6744
        %v6746 = vpop.f32.mrb[0].mxu0
        %6747 = vmatprep.mubr.bf16.mxu0 0
        %6748 = vmatmul.mubr.bf16.gmra.mrb[0].mxu0 %v6598
        %v6749 = vpop.f32.mrb[0].mxu0
        %v6750 = vadd.f32 0.0, %v6749
        %v6751 = vpop.f32.mrb[0].mxu0
        %v6752 = vpop.f32.mrb[0].mxu0
        %v6753 = vadd.f32 0.0, %v6752
        %v6754 = vpop.f32.mrb[0].mxu0
        %6755 = vmatprep.mubr.bf16.mxu0 0
        %6756 = vmatmul.mubr.bf16.gmra.mrb[0].mxu0 %v6601
        %v6757 = vpop.f32.mrb[0].mxu0
        %v6758 = vadd.f32 0.0, %v6757
        %v6759 = vpop.f32.mrb[0].mxu0
        %v6760 = vpop.f32.mrb[0].mxu0
        %v6761 = vadd.f32 0.0, %v6760
        %v6762 = vpop.f32.mrb[0].mxu0
        %6763 = vdwg.mxu0
        %v6764 = vadd.f32 %v6393, %v6638
        %v6765 = vadd.f32 %v6394, %v6641
        %v6766 = vadd.f32 %v6395, %v6646
        %v6767 = vadd.f32 %v6396, %v6649
        %v6768 = vadd.f32 %v6397, %v6654
        %v6769 = vadd.f32 %v6398, %v6657
        %v6770 = vadd.f32 %v6399, %v6662
        %v6771 = vadd.f32 %v6400, %v6665
        %v6772 = vadd.f32 %v6401, %v6670
        %v6773 = vadd.f32 %v6402, %v6673
        %v6774 = vadd.f32 %v6403, %v6678
        %v6775 = vadd.f32 %v6404, %v6681
        %v6776 = vadd.f32 %v6405, %v6686
        %v6777 = vadd.f32 %v6406, %v6689
        %v6778 = vadd.f32 %v6407, %v6694
        %v6779 = vadd.f32 %v6408, %v6697
        %v6780 = vadd.f32 %v6409, %v6702
        %v6781 = vadd.f32 %v6410, %v6705
        %v6782 = vadd.f32 %v6411, %v6710
        %v6783 = vadd.f32 %v6412, %v6713
        %v6784 = vadd.f32 %v6413, %v6718
        %v6785 = vadd.f32 %v6414, %v6721
        %v6786 = vadd.f32 %v6415, %v6726
        %v6787 = vadd.f32 %v6416, %v6729
        %v6788 = vadd.f32 %v6417, %v6734
        %v6789 = vadd.f32 %v6418, %v6737
        %v6790 = vadd.f32 %v6419, %v6742
        %v6791 = vadd.f32 %v6420, %v6745
        %v6792 = vadd.f32 %v6421, %v6750
        %v6793 = vadd.f32 %v6422, %v6753
        %v6794 = vadd.f32 %v6423, %v6758
        %v6795 = vadd.f32 %v6424, %v6761
        %s6796 = scalar_lea.vmem %s1154, 160 [#allocation3]
        %v6797 = vld [vmem:[%s6796] sm:$0xf]
        %v6798 = vld [vmem:[%s6796 + $0x4] sm:$0xf]
        %v6799 = vld [vmem:[%s6796 + $0x8] sm:$0xf]
        %v6800 = vld [vmem:[%s6796 + $0xc] sm:$0xf]
        %v6801 = vld [vmem:[%s6796 + $0x10] sm:$0xf]
        %v6802 = vld [vmem:[%s6796 + $0x14] sm:$0xf]
        %v6803 = vld [vmem:[%s6796 + $0x18] sm:$0xf]
        %v6804 = vld [vmem:[%s6796 + $0x1c] sm:$0xf]
        %v6805 = vld [vmem:[%s6796 + $0x20] sm:$0xf]
        %v6806 = vld [vmem:[%s6796 + $0x24] sm:$0xf]
        %v6807 = vld [vmem:[%s6796 + $0x28] sm:$0xf]
        %v6808 = vld [vmem:[%s6796 + $0x2c] sm:$0xf]
        %v6809 = vld [vmem:[%s6796 + $0x30] sm:$0xf]
        %v6810 = vld [vmem:[%s6796 + $0x34] sm:$0xf]
        %v6811 = vld [vmem:[%s6796 + $0x38] sm:$0xf]
        %v6812 = vld [vmem:[%s6796 + $0x3c] sm:$0xf]
        %v6813 = vld [vmem:[%s6796 + $0x40] sm:$0xf]
        %v6814 = vld [vmem:[%s6796 + $0x44] sm:$0xf]
        %v6815 = vld [vmem:[%s6796 + $0x48] sm:$0xf]
        %v6816 = vld [vmem:[%s6796 + $0x4c] sm:$0xf]
        %v6817 = vld [vmem:[%s6796 + $0x50] sm:$0xf]
        %v6818 = vld [vmem:[%s6796 + $0x54] sm:$0xf]
        %v6819 = vld [vmem:[%s6796 + $0x58] sm:$0xf]
        %v6820 = vld [vmem:[%s6796 + $0x5c] sm:$0xf]
        %v6821 = vld [vmem:[%s6796 + $0x60] sm:$0xf]
        %v6822 = vld [vmem:[%s6796 + $0x64] sm:$0xf]
        %v6823 = vld [vmem:[%s6796 + $0x68] sm:$0xf]
        %v6824 = vld [vmem:[%s6796 + $0x6c] sm:$0xf]
        %v6825 = vld [vmem:[%s6796 + $0x70] sm:$0xf]
        %v6826 = vld [vmem:[%s6796 + $0x74] sm:$0xf]
        %v6827 = vld [vmem:[%s6796 + $0x78] sm:$0xf]
        %v6828 = vld [vmem:[%s6796 + $0x7c] sm:$0xf]
        %s6829 = scalar_lea.vmem %s3, 224
        %v6830 = vld [vmem:[%s6829] sm:$0xf]
        %v6831 = vld [vmem:[%s6829 + $0x4] sm:$0xf]
        %v6832 = vld [vmem:[%s6829 + $0x8] sm:$0xf]
        %v6833 = vld [vmem:[%s6829 + $0xc] sm:$0xf]
        %v6834 = vld [vmem:[%s6829 + $0x10] sm:$0xf]
        %v6835 = vld [vmem:[%s6829 + $0x14] sm:$0xf]
        %v6836 = vld [vmem:[%s6829 + $0x18] sm:$0xf]
        %v6837 = vld [vmem:[%s6829 + $0x1c] sm:$0xf]
        %v6870 = vunpack.c.l.b16 %v6797
        %v6871 = vunpack.c.l.b16 %v6798
        %v6872 = vunpack.c.l.b16 %v6799
        %v6873 = vunpack.c.l.b16 %v6800
        %v6874 = vunpack.c.l.b16 %v6801
        %v6875 = vunpack.c.l.b16 %v6802
        %v6876 = vunpack.c.l.b16 %v6803
        %v6877 = vunpack.c.l.b16 %v6804
        %v6878 = vunpack.c.l.b16 %v6805
        %v6879 = vunpack.c.l.b16 %v6806
        %v6880 = vunpack.c.l.b16 %v6807
        %v6881 = vunpack.c.l.b16 %v6808
        %v6882 = vunpack.c.l.b16 %v6809
        %v6883 = vunpack.c.l.b16 %v6810
        %v6884 = vunpack.c.l.b16 %v6811
        %v6885 = vunpack.c.l.b16 %v6812
        %v6886 = vunpack.c.l.b16 %v6813
        %v6887 = vunpack.c.l.b16 %v6814
        %v6888 = vunpack.c.l.b16 %v6815
        %v6889 = vunpack.c.l.b16 %v6816
        %v6890 = vunpack.c.l.b16 %v6817
        %v6891 = vunpack.c.l.b16 %v6818
        %v6892 = vunpack.c.l.b16 %v6819
        %v6893 = vunpack.c.l.b16 %v6820
        %v6894 = vunpack.c.l.b16 %v6821
        %v6895 = vunpack.c.l.b16 %v6822
        %v6896 = vunpack.c.l.b16 %v6823
        %v6897 = vunpack.c.l.b16 %v6824
        %v6898 = vunpack.c.l.b16 %v6825
        %v6899 = vunpack.c.l.b16 %v6826
        %v6900 = vunpack.c.l.b16 %v6827
        %v6901 = vunpack.c.l.b16 %v6828
        %v6902 = vpack.c.b16 %v6871, %v6870
        %v6903 = vpack.c.b16 %v6873, %v6872
        %v6904 = vpack.c.b16 %v6875, %v6874
        %v6905 = vpack.c.b16 %v6877, %v6876
        %v6906 = vpack.c.b16 %v6879, %v6878
        %v6907 = vpack.c.b16 %v6881, %v6880
        %v6908 = vpack.c.b16 %v6883, %v6882
        %v6909 = vpack.c.b16 %v6885, %v6884
        %v6910 = vpack.c.b16 %v6887, %v6886
        %v6911 = vpack.c.b16 %v6889, %v6888
        %v6912 = vpack.c.b16 %v6891, %v6890
        %v6913 = vpack.c.b16 %v6893, %v6892
        %v6914 = vpack.c.b16 %v6895, %v6894
        %v6915 = vpack.c.b16 %v6897, %v6896
        %v6916 = vpack.c.b16 %v6899, %v6898
        %v6917 = vpack.c.b16 %v6901, %v6900
        %v6926 = vunpack.c.l.b16 %v6830
        %v6927 = vunpack.c.l.b16 %v6831
        %v6928 = vunpack.c.l.b16 %v6832
        %v6929 = vunpack.c.l.b16 %v6833
        %v6930 = vunpack.c.l.b16 %v6834
        %v6931 = vunpack.c.l.b16 %v6835
        %v6932 = vunpack.c.l.b16 %v6836
        %v6933 = vunpack.c.l.b16 %v6837
        %v6934 = vpack.c.b16 %v6927, %v6926
        %v6935 = vpack.c.b16 %v6929, %v6928
        %v6936 = vpack.c.b16 %v6931, %v6930
        %v6937 = vpack.c.b16 %v6933, %v6932
        %v6943 = vsel %vm1365, %v6902, 0
        %v6946 = vsel %vm1365, %v6903, 0
        %v6949 = vsel %vm1365, %v6904, 0
        %v6952 = vsel %vm1365, %v6905, 0
        %v6955 = vsel %vm1365, %v6906, 0
        %v6958 = vsel %vm1365, %v6907, 0
        %v6961 = vsel %vm1365, %v6908, 0
        %v6964 = vsel %vm1365, %v6909, 0
        %v6967 = vsel %vm1365, %v6910, 0
        %v6970 = vsel %vm1365, %v6911, 0
        %v6973 = vsel %vm1365, %v6912, 0
        %v6976 = vsel %vm1365, %v6913, 0
        %v6979 = vsel %vm1365, %v6914, 0
        %v6982 = vsel %vm1365, %v6915, 0
        %v6985 = vsel %vm1365, %v6916, 0
        %v6988 = vsel %vm1365, %v6917, 0
        %6990 = vmatprep.subr.bf16.mxu0 0
        %6991 = vmatpush1.bf16.msra.mxu0 %v6934
        %6992 = vmatprep.subr.bf16.mxu0 0
        %6993 = vmatpush1.bf16.msra.mxu0 %v6935
        %6994 = vmatprep.subr.bf16.mxu0 0
        %6995 = vmatpush1.bf16.msra.mxu0 %v6936
        %6996 = vmatprep.subr.bf16.mxu0 0
        %6997 = vmatpush1.bf16.msra.mxu0 %v6937
        %6998 = vmatprep.subr.bf16.mxu0 0
        %6999 = vmatpush1.bf16.msra.mxu0 0
        %7000 = vmatprep.subr.bf16.mxu0 0
        %7001 = vmatpush1.bf16.msra.mxu0 0
        %7002 = vmatprep.subr.bf16.mxu0 0
        %7003 = vmatpush1.bf16.msra.mxu0 0
        %7004 = vmatprep.subr.bf16.mxu0 0
        %7005 = vmatpush1.bf16.msra.mxu0 0
        %7006 = vmatprep.subr.bf16.mxu0 0
        %7007 = vmatpush1.bf16.msra.mxu0 0
        %7008 = vmatprep.subr.bf16.mxu0 0
        %7009 = vmatpush1.bf16.msra.mxu0 0
        %7010 = vmatprep.subr.bf16.mxu0 0
        %7011 = vmatpush1.bf16.msra.mxu0 0
        %7012 = vmatprep.subr.bf16.mxu0 0
        %7013 = vmatpush1.bf16.msra.mxu0 0
        %7014 = vmatprep.subr.bf16.mxu0 0
        %7015 = vmatpush1.bf16.msra.mxu0 0
        %7016 = vmatprep.subr.bf16.mxu0 0
        %7017 = vmatpush1.bf16.msra.mxu0 0
        %7018 = vmatprep.subr.bf16.mxu0 0
        %7019 = vmatpush1.bf16.msra.mxu0 0
        %7020 = vmatprep.subr.bf16.mxu0 0
        %7021 = vmatpush1.bf16.msra.mxu0 0
        %7022 = vmatprep.mubr.bf16.mxu0 0
        %7023 = vmatmul.mubr.bf16.gmra.mrb[0].mxu0 %v6943
        %v7024 = vpop.f32.mrb[0].mxu0
        %v7025 = vadd.f32 0.0, %v7024
        %v7026 = vpop.f32.mrb[0].mxu0
        %v7027 = vpop.f32.mrb[0].mxu0
        %v7028 = vadd.f32 0.0, %v7027
        %v7029 = vpop.f32.mrb[0].mxu0
        %7030 = vmatprep.mubr.bf16.mxu0 0
        %7031 = vmatmul.mubr.bf16.gmra.mrb[0].mxu0 %v6946
        %v7032 = vpop.f32.mrb[0].mxu0
        %v7033 = vadd.f32 0.0, %v7032
        %v7034 = vpop.f32.mrb[0].mxu0
        %v7035 = vpop.f32.mrb[0].mxu0
        %v7036 = vadd.f32 0.0, %v7035
        %v7037 = vpop.f32.mrb[0].mxu0
        %7038 = vmatprep.mubr.bf16.mxu0 0
        %7039 = vmatmul.mubr.bf16.gmra.mrb[0].mxu0 %v6949
        %v7040 = vpop.f32.mrb[0].mxu0
        %v7041 = vadd.f32 0.0, %v7040
        %v7042 = vpop.f32.mrb[0].mxu0
        %v7043 = vpop.f32.mrb[0].mxu0
        %v7044 = vadd.f32 0.0, %v7043
        %v7045 = vpop.f32.mrb[0].mxu0
        %7046 = vmatprep.mubr.bf16.mxu0 0
        %7047 = vmatmul.mubr.bf16.gmra.mrb[0].mxu0 %v6952
        %v7048 = vpop.f32.mrb[0].mxu0
        %v7049 = vadd.f32 0.0, %v7048
        %v7050 = vpop.f32.mrb[0].mxu0
        %v7051 = vpop.f32.mrb[0].mxu0
        %v7052 = vadd.f32 0.0, %v7051
        %v7053 = vpop.f32.mrb[0].mxu0
        %7054 = vmatprep.mubr.bf16.mxu0 0
        %7055 = vmatmul.mubr.bf16.gmra.mrb[0].mxu0 %v6955
        %v7056 = vpop.f32.mrb[0].mxu0
        %v7057 = vadd.f32 0.0, %v7056
        %v7058 = vpop.f32.mrb[0].mxu0
        %v7059 = vpop.f32.mrb[0].mxu0
        %v7060 = vadd.f32 0.0, %v7059
        %v7061 = vpop.f32.mrb[0].mxu0
        %7062 = vmatprep.mubr.bf16.mxu0 0
        %7063 = vmatmul.mubr.bf16.gmra.mrb[0].mxu0 %v6958
        %v7064 = vpop.f32.mrb[0].mxu0
        %v7065 = vadd.f32 0.0, %v7064
        %v7066 = vpop.f32.mrb[0].mxu0
        %v7067 = vpop.f32.mrb[0].mxu0
        %v7068 = vadd.f32 0.0, %v7067
        %v7069 = vpop.f32.mrb[0].mxu0
        %7070 = vmatprep.mubr.bf16.mxu0 0
        %7071 = vmatmul.mubr.bf16.gmra.mrb[0].mxu0 %v6961
        %v7072 = vpop.f32.mrb[0].mxu0
        %v7073 = vadd.f32 0.0, %v7072
        %v7074 = vpop.f32.mrb[0].mxu0
        %v7075 = vpop.f32.mrb[0].mxu0
        %v7076 = vadd.f32 0.0, %v7075
        %v7077 = vpop.f32.mrb[0].mxu0
        %7078 = vmatprep.mubr.bf16.mxu0 0
        %7079 = vmatmul.mubr.bf16.gmra.mrb[0].mxu0 %v6964
        %v7080 = vpop.f32.mrb[0].mxu0
        %v7081 = vadd.f32 0.0, %v7080
        %v7082 = vpop.f32.mrb[0].mxu0
        %v7083 = vpop.f32.mrb[0].mxu0
        %v7084 = vadd.f32 0.0, %v7083
        %v7085 = vpop.f32.mrb[0].mxu0
        %7086 = vmatprep.mubr.bf16.mxu0 0
        %7087 = vmatmul.mubr.bf16.gmra.mrb[0].mxu0 %v6967
        %v7088 = vpop.f32.mrb[0].mxu0
        %v7089 = vadd.f32 0.0, %v7088
        %v7090 = vpop.f32.mrb[0].mxu0
        %v7091 = vpop.f32.mrb[0].mxu0
        %v7092 = vadd.f32 0.0, %v7091
        %v7093 = vpop.f32.mrb[0].mxu0
        %7094 = vmatprep.mubr.bf16.mxu0 0
        %7095 = vmatmul.mubr.bf16.gmra.mrb[0].mxu0 %v6970
        %v7096 = vpop.f32.mrb[0].mxu0
        %v7097 = vadd.f32 0.0, %v7096
        %v7098 = vpop.f32.mrb[0].mxu0
        %v7099 = vpop.f32.mrb[0].mxu0
        %v7100 = vadd.f32 0.0, %v7099
        %v7101 = vpop.f32.mrb[0].mxu0
        %7102 = vmatprep.mubr.bf16.mxu0 0
        %7103 = vmatmul.mubr.bf16.gmra.mrb[0].mxu0 %v6973
        %v7104 = vpop.f32.mrb[0].mxu0
        %v7105 = vadd.f32 0.0, %v7104
        %v7106 = vpop.f32.mrb[0].mxu0
        %v7107 = vpop.f32.mrb[0].mxu0
        %v7108 = vadd.f32 0.0, %v7107
        %v7109 = vpop.f32.mrb[0].mxu0
        %7110 = vmatprep.mubr.bf16.mxu0 0
        %7111 = vmatmul.mubr.bf16.gmra.mrb[0].mxu0 %v6976
        %v7112 = vpop.f32.mrb[0].mxu0
        %v7113 = vadd.f32 0.0, %v7112
        %v7114 = vpop.f32.mrb[0].mxu0
        %v7115 = vpop.f32.mrb[0].mxu0
        %v7116 = vadd.f32 0.0, %v7115
        %v7117 = vpop.f32.mrb[0].mxu0
        %7118 = vmatprep.mubr.bf16.mxu0 0
        %7119 = vmatmul.mubr.bf16.gmra.mrb[0].mxu0 %v6979
        %v7120 = vpop.f32.mrb[0].mxu0
        %v7121 = vadd.f32 0.0, %v7120
        %v7122 = vpop.f32.mrb[0].mxu0
        %v7123 = vpop.f32.mrb[0].mxu0
        %v7124 = vadd.f32 0.0, %v7123
        %v7125 = vpop.f32.mrb[0].mxu0
        %7126 = vmatprep.mubr.bf16.mxu0 0
        %7127 = vmatmul.mubr.bf16.gmra.mrb[0].mxu0 %v6982
        %v7128 = vpop.f32.mrb[0].mxu0
        %v7129 = vadd.f32 0.0, %v7128
        %v7130 = vpop.f32.mrb[0].mxu0
        %v7131 = vpop.f32.mrb[0].mxu0
        %v7132 = vadd.f32 0.0, %v7131
        %v7133 = vpop.f32.mrb[0].mxu0
        %7134 = vmatprep.mubr.bf16.mxu0 0
        %7135 = vmatmul.mubr.bf16.gmra.mrb[0].mxu0 %v6985
        %v7136 = vpop.f32.mrb[0].mxu0
        %v7137 = vadd.f32 0.0, %v7136
        %v7138 = vpop.f32.mrb[0].mxu0
        %v7139 = vpop.f32.mrb[0].mxu0
        %v7140 = vadd.f32 0.0, %v7139
        %v7141 = vpop.f32.mrb[0].mxu0
        %7142 = vmatprep.mubr.bf16.mxu0 0
        %7143 = vmatmul.mubr.bf16.gmra.mrb[0].mxu0 %v6988
        %v7144 = vpop.f32.mrb[0].mxu0
        %v7145 = vadd.f32 0.0, %v7144
        %v7146 = vpop.f32.mrb[0].mxu0
        %v7147 = vpop.f32.mrb[0].mxu0
        %v7148 = vadd.f32 0.0, %v7147
        %v7149 = vpop.f32.mrb[0].mxu0
        %7150 = vdwg.mxu0
        %v7151 = vadd.f32 %v6764, %v7025
        %v7152 = vadd.f32 %v6765, %v7028
        %v7153 = vadd.f32 %v6766, %v7033
        %v7154 = vadd.f32 %v6767, %v7036
        %v7155 = vadd.f32 %v6768, %v7041
        %v7156 = vadd.f32 %v6769, %v7044
        %v7157 = vadd.f32 %v6770, %v7049
        %v7158 = vadd.f32 %v6771, %v7052
        %v7159 = vadd.f32 %v6772, %v7057
        %v7160 = vadd.f32 %v6773, %v7060
        %v7161 = vadd.f32 %v6774, %v7065
        %v7162 = vadd.f32 %v6775, %v7068
        %v7163 = vadd.f32 %v6776, %v7073
        %v7164 = vadd.f32 %v6777, %v7076
        %v7165 = vadd.f32 %v6778, %v7081
        %v7166 = vadd.f32 %v6779, %v7084
        %v7167 = vadd.f32 %v6780, %v7089
        %v7168 = vadd.f32 %v6781, %v7092
        %v7169 = vadd.f32 %v6782, %v7097
        %v7170 = vadd.f32 %v6783, %v7100
        %v7171 = vadd.f32 %v6784, %v7105
        %v7172 = vadd.f32 %v6785, %v7108
        %v7173 = vadd.f32 %v6786, %v7113
        %v7174 = vadd.f32 %v6787, %v7116
        %v7175 = vadd.f32 %v6788, %v7121
        %v7176 = vadd.f32 %v6789, %v7124
        %v7177 = vadd.f32 %v6790, %v7129
        %v7178 = vadd.f32 %v6791, %v7132
        %v7179 = vadd.f32 %v6792, %v7137
        %v7180 = vadd.f32 %v6793, %v7140
        %v7181 = vadd.f32 %v6794, %v7145
        %v7182 = vadd.f32 %v6795, %v7148
        %s7183 = scalar_lea.vmem %s1147, 304 [#allocation2]
        %v7184 = vld [vmem:[%s7183] sm:$0xf]
        %v7185 = vld [vmem:[%s7183 + $0x4] sm:$0xf]
        %v7186 = vld [vmem:[%s7183 + $0x8] sm:$0xf]
        %v7187 = vld [vmem:[%s7183 + $0xc] sm:$0xf]
        %v7188 = vld [vmem:[%s7183 + $0x10] sm:$0xf]
        %v7189 = vld [vmem:[%s7183 + $0x14] sm:$0xf]
        %v7190 = vld [vmem:[%s7183 + $0x18] sm:$0xf]
        %v7191 = vld [vmem:[%s7183 + $0x1c] sm:$0xf]
        %v7192 = vld [vmem:[%s7183 + $0x20] sm:$0xf]
        %v7193 = vld [vmem:[%s7183 + $0x24] sm:$0xf]
        %v7194 = vld [vmem:[%s7183 + $0x28] sm:$0xf]
        %v7195 = vld [vmem:[%s7183 + $0x2c] sm:$0xf]
        %v7196 = vld [vmem:[%s7183 + $0x30] sm:$0xf]
        %v7197 = vld [vmem:[%s7183 + $0x34] sm:$0xf]
        %v7198 = vld [vmem:[%s7183 + $0x38] sm:$0xf]
        %v7199 = vld [vmem:[%s7183 + $0x3c] sm:$0xf]
        %v7200 = vld [vmem:[%s7183 + $0x40] sm:$0xf]
        %v7201 = vld [vmem:[%s7183 + $0x44] sm:$0xf]
        %v7202 = vld [vmem:[%s7183 + $0x48] sm:$0xf]
        %v7203 = vld [vmem:[%s7183 + $0x4c] sm:$0xf]
        %v7204 = vld [vmem:[%s7183 + $0x50] sm:$0xf]
        %v7205 = vld [vmem:[%s7183 + $0x54] sm:$0xf]
        %v7206 = vld [vmem:[%s7183 + $0x58] sm:$0xf]
        %v7207 = vld [vmem:[%s7183 + $0x5c] sm:$0xf]
        %v7208 = vld [vmem:[%s7183 + $0x60] sm:$0xf]
        %v7209 = vld [vmem:[%s7183 + $0x64] sm:$0xf]
        %v7210 = vld [vmem:[%s7183 + $0x68] sm:$0xf]
        %v7211 = vld [vmem:[%s7183 + $0x6c] sm:$0xf]
        %v7212 = vld [vmem:[%s7183 + $0x70] sm:$0xf]
        %v7213 = vld [vmem:[%s7183 + $0x74] sm:$0xf]
        %v7214 = vld [vmem:[%s7183 + $0x78] sm:$0xf]
        %v7215 = vld [vmem:[%s7183 + $0x7c] sm:$0xf]
        %s7216 = scalar_lea.vmem %s1, 128
        %v7217 = vld [vmem:[%s7216] sm:$0xf]
        %v7218 = vld [vmem:[%s7216 + $0x4] sm:$0xf]
        %v7219 = vld [vmem:[%s7216 + $0x8] sm:$0xf]
        %v7220 = vld [vmem:[%s7216 + $0xc] sm:$0xf]
        %v7253 = vunpack.c.l.b16 %v7184
        %v7254 = vunpack.c.l.b16 %v7185
        %v7255 = vunpack.c.l.b16 %v7186
        %v7256 = vunpack.c.l.b16 %v7187
        %v7257 = vunpack.c.l.b16 %v7188
        %v7258 = vunpack.c.l.b16 %v7189
        %v7259 = vunpack.c.l.b16 %v7190
        %v7260 = vunpack.c.l.b16 %v7191
        %v7261 = vunpack.c.l.b16 %v7192
        %v7262 = vunpack.c.l.b16 %v7193
        %v7263 = vunpack.c.l.b16 %v7194
        %v7264 = vunpack.c.l.b16 %v7195
        %v7265 = vunpack.c.l.b16 %v7196
        %v7266 = vunpack.c.l.b16 %v7197
        %v7267 = vunpack.c.l.b16 %v7198
        %v7268 = vunpack.c.l.b16 %v7199
        %v7269 = vunpack.c.l.b16 %v7200
        %v7270 = vunpack.c.l.b16 %v7201
        %v7271 = vunpack.c.l.b16 %v7202
        %v7272 = vunpack.c.l.b16 %v7203
        %v7273 = vunpack.c.l.b16 %v7204
        %v7274 = vunpack.c.l.b16 %v7205
        %v7275 = vunpack.c.l.b16 %v7206
        %v7276 = vunpack.c.l.b16 %v7207
        %v7277 = vunpack.c.l.b16 %v7208
        %v7278 = vunpack.c.l.b16 %v7209
        %v7279 = vunpack.c.l.b16 %v7210
        %v7280 = vunpack.c.l.b16 %v7211
        %v7281 = vunpack.c.l.b16 %v7212
        %v7282 = vunpack.c.l.b16 %v7213
        %v7283 = vunpack.c.l.b16 %v7214
        %v7284 = vunpack.c.l.b16 %v7215
        %v7285 = vpack.c.b16 %v7254, %v7253
        %v7286 = vpack.c.b16 %v7256, %v7255
        %v7287 = vpack.c.b16 %v7258, %v7257
        %v7288 = vpack.c.b16 %v7260, %v7259
        %v7289 = vpack.c.b16 %v7262, %v7261
        %v7290 = vpack.c.b16 %v7264, %v7263
        %v7291 = vpack.c.b16 %v7266, %v7265
        %v7292 = vpack.c.b16 %v7268, %v7267
        %v7293 = vpack.c.b16 %v7270, %v7269
        %v7294 = vpack.c.b16 %v7272, %v7271
        %v7295 = vpack.c.b16 %v7274, %v7273
        %v7296 = vpack.c.b16 %v7276, %v7275
        %v7297 = vpack.c.b16 %v7278, %v7277
        %v7298 = vpack.c.b16 %v7280, %v7279
        %v7299 = vpack.c.b16 %v7282, %v7281
        %v7300 = vpack.c.b16 %v7284, %v7283
        %v7305 = vunpack.c.l.b16 %v7217
        %v7306 = vunpack.c.l.b16 %v7218
        %v7307 = vunpack.c.l.b16 %v7219
        %v7308 = vunpack.c.l.b16 %v7220
        %v7309 = vpack.c.b16 %v7306, %v7305
        %v7310 = vpack.c.b16 %v7308, %v7307
        %v7314 = vsel %vm1667, %v7285, 0
        %v7317 = vsel %vm1667, %v7286, 0
        %v7320 = vsel %vm1667, %v7287, 0
        %v7323 = vsel %vm1667, %v7288, 0
        %v7326 = vsel %vm1667, %v7289, 0
        %v7329 = vsel %vm1667, %v7290, 0
        %v7332 = vsel %vm1667, %v7291, 0
        %v7335 = vsel %vm1667, %v7292, 0
        %v7338 = vsel %vm1667, %v7293, 0
        %v7341 = vsel %vm1667, %v7294, 0
        %v7344 = vsel %vm1667, %v7295, 0
        %v7347 = vsel %vm1667, %v7296, 0
        %v7350 = vsel %vm1667, %v7297, 0
        %v7353 = vsel %vm1667, %v7298, 0
        %v7356 = vsel %vm1667, %v7299, 0
        %v7359 = vsel %vm1667, %v7300, 0
        %7361 = vmatprep.subr.bf16.mxu0 0
        %7362 = vmatpush1.bf16.msra.mxu0 %v7309
        %7363 = vmatprep.subr.bf16.mxu0 0
        %7364 = vmatpush1.bf16.msra.mxu0 %v7310
        %7365 = vmatprep.subr.bf16.mxu0 0
        %7366 = vmatpush1.bf16.msra.mxu0 0
        %7367 = vmatprep.subr.bf16.mxu0 0
        %7368 = vmatpush1.bf16.msra.mxu0 0
        %7369 = vmatprep.subr.bf16.mxu0 0
        %7370 = vmatpush1.bf16.msra.mxu0 0
        %7371 = vmatprep.subr.bf16.mxu0 0
        %7372 = vmatpush1.bf16.msra.mxu0 0
        %7373 = vmatprep.subr.bf16.mxu0 0
        %7374 = vmatpush1.bf16.msra.mxu0 0
        %7375 = vmatprep.subr.bf16.mxu0 0
        %7376 = vmatpush1.bf16.msra.mxu0 0
        %7377 = vmatprep.subr.bf16.mxu0 0
        %7378 = vmatpush1.bf16.msra.mxu0 0
        %7379 = vmatprep.subr.bf16.mxu0 0
        %7380 = vmatpush1.bf16.msra.mxu0 0
        %7381 = vmatprep.subr.bf16.mxu0 0
        %7382 = vmatpush1.bf16.msra.mxu0 0
        %7383 = vmatprep.subr.bf16.mxu0 0
        %7384 = vmatpush1.bf16.msra.mxu0 0
        %7385 = vmatprep.subr.bf16.mxu0 0
        %7386 = vmatpush1.bf16.msra.mxu0 0
        %7387 = vmatprep.subr.bf16.mxu0 0
        %7388 = vmatpush1.bf16.msra.mxu0 0
        %7389 = vmatprep.subr.bf16.mxu0 0
        %7390 = vmatpush1.bf16.msra.mxu0 0
        %7391 = vmatprep.subr.bf16.mxu0 0
        %7392 = vmatpush1.bf16.msra.mxu0 0
        %7393 = vmatprep.mubr.bf16.mxu0 0
        %7394 = vmatmul.mubr.bf16.gmra.mrb[0].mxu0 %v7314
        %v7395 = vpop.f32.mrb[0].mxu0
        %v7396 = vadd.f32 0.0, %v7395
        %v7397 = vpop.f32.mrb[0].mxu0
        %v7398 = vpop.f32.mrb[0].mxu0
        %v7399 = vadd.f32 0.0, %v7398
        %v7400 = vpop.f32.mrb[0].mxu0
        %7401 = vmatprep.mubr.bf16.mxu0 0
        %7402 = vmatmul.mubr.bf16.gmra.mrb[0].mxu0 %v7317
        %v7403 = vpop.f32.mrb[0].mxu0
        %v7404 = vadd.f32 0.0, %v7403
        %v7405 = vpop.f32.mrb[0].mxu0
        %v7406 = vpop.f32.mrb[0].mxu0
        %v7407 = vadd.f32 0.0, %v7406
        %v7408 = vpop.f32.mrb[0].mxu0
        %7409 = vmatprep.mubr.bf16.mxu0 0
        %7410 = vmatmul.mubr.bf16.gmra.mrb[0].mxu0 %v7320
        %v7411 = vpop.f32.mrb[0].mxu0
        %v7412 = vadd.f32 0.0, %v7411
        %v7413 = vpop.f32.mrb[0].mxu0
        %v7414 = vpop.f32.mrb[0].mxu0
        %v7415 = vadd.f32 0.0, %v7414
        %v7416 = vpop.f32.mrb[0].mxu0
        %7417 = vmatprep.mubr.bf16.mxu0 0
        %7418 = vmatmul.mubr.bf16.gmra.mrb[0].mxu0 %v7323
        %v7419 = vpop.f32.mrb[0].mxu0
        %v7420 = vadd.f32 0.0, %v7419
        %v7421 = vpop.f32.mrb[0].mxu0
        %v7422 = vpop.f32.mrb[0].mxu0
        %v7423 = vadd.f32 0.0, %v7422
        %v7424 = vpop.f32.mrb[0].mxu0
        %7425 = vmatprep.mubr.bf16.mxu0 0
        %7426 = vmatmul.mubr.bf16.gmra.mrb[0].mxu0 %v7326
        %v7427 = vpop.f32.mrb[0].mxu0
        %v7428 = vadd.f32 0.0, %v7427
        %v7429 = vpop.f32.mrb[0].mxu0
        %v7430 = vpop.f32.mrb[0].mxu0
        %v7431 = vadd.f32 0.0, %v7430
        %v7432 = vpop.f32.mrb[0].mxu0
        %7433 = vmatprep.mubr.bf16.mxu0 0
        %7434 = vmatmul.mubr.bf16.gmra.mrb[0].mxu0 %v7329
        %v7435 = vpop.f32.mrb[0].mxu0
        %v7436 = vadd.f32 0.0, %v7435
        %v7437 = vpop.f32.mrb[0].mxu0
        %v7438 = vpop.f32.mrb[0].mxu0
        %v7439 = vadd.f32 0.0, %v7438
        %v7440 = vpop.f32.mrb[0].mxu0
        %7441 = vmatprep.mubr.bf16.mxu0 0
        %7442 = vmatmul.mubr.bf16.gmra.mrb[0].mxu0 %v7332
        %v7443 = vpop.f32.mrb[0].mxu0
        %v7444 = vadd.f32 0.0, %v7443
        %v7445 = vpop.f32.mrb[0].mxu0
        %v7446 = vpop.f32.mrb[0].mxu0
        %v7447 = vadd.f32 0.0, %v7446
        %v7448 = vpop.f32.mrb[0].mxu0
        %7449 = vmatprep.mubr.bf16.mxu0 0
        %7450 = vmatmul.mubr.bf16.gmra.mrb[0].mxu0 %v7335
        %v7451 = vpop.f32.mrb[0].mxu0
        %v7452 = vadd.f32 0.0, %v7451
        %v7453 = vpop.f32.mrb[0].mxu0
        %v7454 = vpop.f32.mrb[0].mxu0
        %v7455 = vadd.f32 0.0, %v7454
        %v7456 = vpop.f32.mrb[0].mxu0
        %7457 = vmatprep.mubr.bf16.mxu0 0
        %7458 = vmatmul.mubr.bf16.gmra.mrb[0].mxu0 %v7338
        %v7459 = vpop.f32.mrb[0].mxu0
        %v7460 = vadd.f32 0.0, %v7459
        %v7461 = vpop.f32.mrb[0].mxu0
        %v7462 = vpop.f32.mrb[0].mxu0
        %v7463 = vadd.f32 0.0, %v7462
        %v7464 = vpop.f32.mrb[0].mxu0
        %7465 = vmatprep.mubr.bf16.mxu0 0
        %7466 = vmatmul.mubr.bf16.gmra.mrb[0].mxu0 %v7341
        %v7467 = vpop.f32.mrb[0].mxu0
        %v7468 = vadd.f32 0.0, %v7467
        %v7469 = vpop.f32.mrb[0].mxu0
        %v7470 = vpop.f32.mrb[0].mxu0
        %v7471 = vadd.f32 0.0, %v7470
        %v7472 = vpop.f32.mrb[0].mxu0
        %7473 = vmatprep.mubr.bf16.mxu0 0
        %7474 = vmatmul.mubr.bf16.gmra.mrb[0].mxu0 %v7344
        %v7475 = vpop.f32.mrb[0].mxu0
        %v7476 = vadd.f32 0.0, %v7475
        %v7477 = vpop.f32.mrb[0].mxu0
        %v7478 = vpop.f32.mrb[0].mxu0
        %v7479 = vadd.f32 0.0, %v7478
        %v7480 = vpop.f32.mrb[0].mxu0
        %7481 = vmatprep.mubr.bf16.mxu0 0
        %7482 = vmatmul.mubr.bf16.gmra.mrb[0].mxu0 %v7347
        %v7483 = vpop.f32.mrb[0].mxu0
        %v7484 = vadd.f32 0.0, %v7483
        %v7485 = vpop.f32.mrb[0].mxu0
        %v7486 = vpop.f32.mrb[0].mxu0
        %v7487 = vadd.f32 0.0, %v7486
        %v7488 = vpop.f32.mrb[0].mxu0
        %7489 = vmatprep.mubr.bf16.mxu0 0
        %7490 = vmatmul.mubr.bf16.gmra.mrb[0].mxu0 %v7350
        %v7491 = vpop.f32.mrb[0].mxu0
        %v7492 = vadd.f32 0.0, %v7491
        %v7493 = vpop.f32.mrb[0].mxu0
        %v7494 = vpop.f32.mrb[0].mxu0
        %v7495 = vadd.f32 0.0, %v7494
        %v7496 = vpop.f32.mrb[0].mxu0
        %7497 = vmatprep.mubr.bf16.mxu0 0
        %7498 = vmatmul.mubr.bf16.gmra.mrb[0].mxu0 %v7353
        %v7499 = vpop.f32.mrb[0].mxu0
        %v7500 = vadd.f32 0.0, %v7499
        %v7501 = vpop.f32.mrb[0].mxu0
        %v7502 = vpop.f32.mrb[0].mxu0
        %v7503 = vadd.f32 0.0, %v7502
        %v7504 = vpop.f32.mrb[0].mxu0
        %7505 = vmatprep.mubr.bf16.mxu0 0
        %7506 = vmatmul.mubr.bf16.gmra.mrb[0].mxu0 %v7356
        %v7507 = vpop.f32.mrb[0].mxu0
        %v7508 = vadd.f32 0.0, %v7507
        %v7509 = vpop.f32.mrb[0].mxu0
        %v7510 = vpop.f32.mrb[0].mxu0
        %v7511 = vadd.f32 0.0, %v7510
        %v7512 = vpop.f32.mrb[0].mxu0
        %7513 = vmatprep.mubr.bf16.mxu0 0
        %7514 = vmatmul.mubr.bf16.gmra.mrb[0].mxu0 %v7359
        %v7515 = vpop.f32.mrb[0].mxu0
        %v7516 = vadd.f32 0.0, %v7515
        %v7517 = vpop.f32.mrb[0].mxu0
        %v7518 = vpop.f32.mrb[0].mxu0
        %v7519 = vadd.f32 0.0, %v7518
        %v7520 = vpop.f32.mrb[0].mxu0
        %7521 = vdwg.mxu0
        %v7522 = vadd.f32 %v7151, %v7396
        %v7523 = vadd.f32 %v7152, %v7399
        %v7524 = vadd.f32 %v7153, %v7404
        %v7525 = vadd.f32 %v7154, %v7407
        %v7526 = vadd.f32 %v7155, %v7412
        %v7527 = vadd.f32 %v7156, %v7415
        %v7528 = vadd.f32 %v7157, %v7420
        %v7529 = vadd.f32 %v7158, %v7423
        %v7530 = vadd.f32 %v7159, %v7428
        %v7531 = vadd.f32 %v7160, %v7431
        %v7532 = vadd.f32 %v7161, %v7436
        %v7533 = vadd.f32 %v7162, %v7439
        %v7534 = vadd.f32 %v7163, %v7444
        %v7535 = vadd.f32 %v7164, %v7447
        %v7536 = vadd.f32 %v7165, %v7452
        %v7537 = vadd.f32 %v7166, %v7455
        %v7538 = vadd.f32 %v7167, %v7460
        %v7539 = vadd.f32 %v7168, %v7463
        %v7540 = vadd.f32 %v7169, %v7468
        %v7541 = vadd.f32 %v7170, %v7471
        %v7542 = vadd.f32 %v7171, %v7476
        %v7543 = vadd.f32 %v7172, %v7479
        %v7544 = vadd.f32 %v7173, %v7484
        %v7545 = vadd.f32 %v7174, %v7487
        %v7546 = vadd.f32 %v7175, %v7492
        %v7547 = vadd.f32 %v7176, %v7495
        %v7548 = vadd.f32 %v7177, %v7500
        %v7549 = vadd.f32 %v7178, %v7503
        %v7550 = vadd.f32 %v7179, %v7508
        %v7551 = vadd.f32 %v7180, %v7511
        %v7552 = vadd.f32 %v7181, %v7516
        %v7553 = vadd.f32 %v7182, %v7519
        %s7554 = scalar_lea.vmem %s1154, 304 [#allocation3]
        %v7555 = vld [vmem:[%s7554] sm:$0xf]
        %v7556 = vld [vmem:[%s7554 + $0x4] sm:$0xf]
        %v7557 = vld [vmem:[%s7554 + $0x8] sm:$0xf]
        %v7558 = vld [vmem:[%s7554 + $0xc] sm:$0xf]
        %v7559 = vld [vmem:[%s7554 + $0x10] sm:$0xf]
        %v7560 = vld [vmem:[%s7554 + $0x14] sm:$0xf]
        %v7561 = vld [vmem:[%s7554 + $0x18] sm:$0xf]
        %v7562 = vld [vmem:[%s7554 + $0x1c] sm:$0xf]
        %v7563 = vld [vmem:[%s7554 + $0x20] sm:$0xf]
        %v7564 = vld [vmem:[%s7554 + $0x24] sm:$0xf]
        %v7565 = vld [vmem:[%s7554 + $0x28] sm:$0xf]
        %v7566 = vld [vmem:[%s7554 + $0x2c] sm:$0xf]
        %v7567 = vld [vmem:[%s7554 + $0x30] sm:$0xf]
        %v7568 = vld [vmem:[%s7554 + $0x34] sm:$0xf]
        %v7569 = vld [vmem:[%s7554 + $0x38] sm:$0xf]
        %v7570 = vld [vmem:[%s7554 + $0x3c] sm:$0xf]
        %v7571 = vld [vmem:[%s7554 + $0x40] sm:$0xf]
        %v7572 = vld [vmem:[%s7554 + $0x44] sm:$0xf]
        %v7573 = vld [vmem:[%s7554 + $0x48] sm:$0xf]
        %v7574 = vld [vmem:[%s7554 + $0x4c] sm:$0xf]
        %v7575 = vld [vmem:[%s7554 + $0x50] sm:$0xf]
        %v7576 = vld [vmem:[%s7554 + $0x54] sm:$0xf]
        %v7577 = vld [vmem:[%s7554 + $0x58] sm:$0xf]
        %v7578 = vld [vmem:[%s7554 + $0x5c] sm:$0xf]
        %v7579 = vld [vmem:[%s7554 + $0x60] sm:$0xf]
        %v7580 = vld [vmem:[%s7554 + $0x64] sm:$0xf]
        %v7581 = vld [vmem:[%s7554 + $0x68] sm:$0xf]
        %v7582 = vld [vmem:[%s7554 + $0x6c] sm:$0xf]
        %v7583 = vld [vmem:[%s7554 + $0x70] sm:$0xf]
        %v7584 = vld [vmem:[%s7554 + $0x74] sm:$0xf]
        %v7585 = vld [vmem:[%s7554 + $0x78] sm:$0xf]
        %v7586 = vld [vmem:[%s7554 + $0x7c] sm:$0xf]
        %s7587 = scalar_lea.vmem %s3, 256
        %v7588 = vld [vmem:[%s7587] sm:$0xf]
        %v7589 = vld [vmem:[%s7587 + $0x4] sm:$0xf]
        %v7590 = vld [vmem:[%s7587 + $0x8] sm:$0xf]
        %v7591 = vld [vmem:[%s7587 + $0xc] sm:$0xf]
        %v7592 = vld [vmem:[%s7587 + $0x10] sm:$0xf]
        %v7593 = vld [vmem:[%s7587 + $0x14] sm:$0xf]
        %v7594 = vld [vmem:[%s7587 + $0x18] sm:$0xf]
        %v7595 = vld [vmem:[%s7587 + $0x1c] sm:$0xf]
        %v7628 = vunpack.c.l.b16 %v7555
        %v7629 = vunpack.c.l.b16 %v7556
        %v7630 = vunpack.c.l.b16 %v7557
        %v7631 = vunpack.c.l.b16 %v7558
        %v7632 = vunpack.c.l.b16 %v7559
        %v7633 = vunpack.c.l.b16 %v7560
        %v7634 = vunpack.c.l.b16 %v7561
        %v7635 = vunpack.c.l.b16 %v7562
        %v7636 = vunpack.c.l.b16 %v7563
        %v7637 = vunpack.c.l.b16 %v7564
        %v7638 = vunpack.c.l.b16 %v7565
        %v7639 = vunpack.c.l.b16 %v7566
        %v7640 = vunpack.c.l.b16 %v7567
        %v7641 = vunpack.c.l.b16 %v7568
        %v7642 = vunpack.c.l.b16 %v7569
        %v7643 = vunpack.c.l.b16 %v7570
        %v7644 = vunpack.c.l.b16 %v7571
        %v7645 = vunpack.c.l.b16 %v7572
        %v7646 = vunpack.c.l.b16 %v7573
        %v7647 = vunpack.c.l.b16 %v7574
        %v7648 = vunpack.c.l.b16 %v7575
        %v7649 = vunpack.c.l.b16 %v7576
        %v7650 = vunpack.c.l.b16 %v7577
        %v7651 = vunpack.c.l.b16 %v7578
        %v7652 = vunpack.c.l.b16 %v7579
        %v7653 = vunpack.c.l.b16 %v7580
        %v7654 = vunpack.c.l.b16 %v7581
        %v7655 = vunpack.c.l.b16 %v7582
        %v7656 = vunpack.c.l.b16 %v7583
        %v7657 = vunpack.c.l.b16 %v7584
        %v7658 = vunpack.c.l.b16 %v7585
        %v7659 = vunpack.c.l.b16 %v7586
        %v7660 = vpack.c.b16 %v7629, %v7628
        %v7661 = vpack.c.b16 %v7631, %v7630
        %v7662 = vpack.c.b16 %v7633, %v7632
        %v7663 = vpack.c.b16 %v7635, %v7634
        %v7664 = vpack.c.b16 %v7637, %v7636
        %v7665 = vpack.c.b16 %v7639, %v7638
        %v7666 = vpack.c.b16 %v7641, %v7640
        %v7667 = vpack.c.b16 %v7643, %v7642
        %v7668 = vpack.c.b16 %v7645, %v7644
        %v7669 = vpack.c.b16 %v7647, %v7646
        %v7670 = vpack.c.b16 %v7649, %v7648
        %v7671 = vpack.c.b16 %v7651, %v7650
        %v7672 = vpack.c.b16 %v7653, %v7652
        %v7673 = vpack.c.b16 %v7655, %v7654
        %v7674 = vpack.c.b16 %v7657, %v7656
        %v7675 = vpack.c.b16 %v7659, %v7658
        %v7684 = vunpack.c.l.b16 %v7588
        %v7685 = vunpack.c.l.b16 %v7589
        %v7686 = vunpack.c.l.b16 %v7590
        %v7687 = vunpack.c.l.b16 %v7591
        %v7688 = vunpack.c.l.b16 %v7592
        %v7689 = vunpack.c.l.b16 %v7593
        %v7690 = vunpack.c.l.b16 %v7594
        %v7691 = vunpack.c.l.b16 %v7595
        %v7692 = vpack.c.b16 %v7685, %v7684
        %v7693 = vpack.c.b16 %v7687, %v7686
        %v7694 = vpack.c.b16 %v7689, %v7688
        %v7695 = vpack.c.b16 %v7691, %v7690
        %v7701 = vsel %vm1365, %v7660, 0
        %v7704 = vsel %vm1365, %v7661, 0
        %v7707 = vsel %vm1365, %v7662, 0
        %v7710 = vsel %vm1365, %v7663, 0
        %v7713 = vsel %vm1365, %v7664, 0
        %v7716 = vsel %vm1365, %v7665, 0
        %v7719 = vsel %vm1365, %v7666, 0
        %v7722 = vsel %vm1365, %v7667, 0
        %v7725 = vsel %vm1365, %v7668, 0
        %v7728 = vsel %vm1365, %v7669, 0
        %v7731 = vsel %vm1365, %v7670, 0
        %v7734 = vsel %vm1365, %v7671, 0
        %v7737 = vsel %vm1365, %v7672, 0
        %v7740 = vsel %vm1365, %v7673, 0
        %v7743 = vsel %vm1365, %v7674, 0
        %v7746 = vsel %vm1365, %v7675, 0
        %7748 = vmatprep.subr.bf16.mxu0 0
        %7749 = vmatpush1.bf16.msra.mxu0 %v7692
        %7750 = vmatprep.subr.bf16.mxu0 0
        %7751 = vmatpush1.bf16.msra.mxu0 %v7693
        %7752 = vmatprep.subr.bf16.mxu0 0
        %7753 = vmatpush1.bf16.msra.mxu0 %v7694
        %7754 = vmatprep.subr.bf16.mxu0 0
        %7755 = vmatpush1.bf16.msra.mxu0 %v7695
        %7756 = vmatprep.subr.bf16.mxu0 0
        %7757 = vmatpush1.bf16.msra.mxu0 0
        %7758 = vmatprep.subr.bf16.mxu0 0
        %7759 = vmatpush1.bf16.msra.mxu0 0
        %7760 = vmatprep.subr.bf16.mxu0 0
        %7761 = vmatpush1.bf16.msra.mxu0 0
        %7762 = vmatprep.subr.bf16.mxu0 0
        %7763 = vmatpush1.bf16.msra.mxu0 0
        %7764 = vmatprep.subr.bf16.mxu0 0
        %7765 = vmatpush1.bf16.msra.mxu0 0
        %7766 = vmatprep.subr.bf16.mxu0 0
        %7767 = vmatpush1.bf16.msra.mxu0 0
        %7768 = vmatprep.subr.bf16.mxu0 0
        %7769 = vmatpush1.bf16.msra.mxu0 0
        %7770 = vmatprep.subr.bf16.mxu0 0
        %7771 = vmatpush1.bf16.msra.mxu0 0
        %7772 = vmatprep.subr.bf16.mxu0 0
        %7773 = vmatpush1.bf16.msra.mxu0 0
        %7774 = vmatprep.subr.bf16.mxu0 0
        %7775 = vmatpush1.bf16.msra.mxu0 0
        %7776 = vmatprep.subr.bf16.mxu0 0
        %7777 = vmatpush1.bf16.msra.mxu0 0
        %7778 = vmatprep.subr.bf16.mxu0 0
        %7779 = vmatpush1.bf16.msra.mxu0 0
        %7780 = vmatprep.mubr.bf16.mxu0 0
        %7781 = vmatmul.mubr.bf16.gmra.mrb[0].mxu0 %v7701
        %v7782 = vpop.f32.mrb[0].mxu0
        %v7783 = vadd.f32 0.0, %v7782
        %v7784 = vpop.f32.mrb[0].mxu0
        %v7785 = vpop.f32.mrb[0].mxu0
        %v7786 = vadd.f32 0.0, %v7785
        %v7787 = vpop.f32.mrb[0].mxu0
        %7788 = vmatprep.mubr.bf16.mxu0 0
        %7789 = vmatmul.mubr.bf16.gmra.mrb[0].mxu0 %v7704
        %v7790 = vpop.f32.mrb[0].mxu0
        %v7791 = vadd.f32 0.0, %v7790
        %v7792 = vpop.f32.mrb[0].mxu0
        %v7793 = vpop.f32.mrb[0].mxu0
        %v7794 = vadd.f32 0.0, %v7793
        %v7795 = vpop.f32.mrb[0].mxu0
        %7796 = vmatprep.mubr.bf16.mxu0 0
        %7797 = vmatmul.mubr.bf16.gmra.mrb[0].mxu0 %v7707
        %v7798 = vpop.f32.mrb[0].mxu0
        %v7799 = vadd.f32 0.0, %v7798
        %v7800 = vpop.f32.mrb[0].mxu0
        %v7801 = vpop.f32.mrb[0].mxu0
        %v7802 = vadd.f32 0.0, %v7801
        %v7803 = vpop.f32.mrb[0].mxu0
        %7804 = vmatprep.mubr.bf16.mxu0 0
        %7805 = vmatmul.mubr.bf16.gmra.mrb[0].mxu0 %v7710
        %v7806 = vpop.f32.mrb[0].mxu0
        %v7807 = vadd.f32 0.0, %v7806
        %v7808 = vpop.f32.mrb[0].mxu0
        %v7809 = vpop.f32.mrb[0].mxu0
        %v7810 = vadd.f32 0.0, %v7809
        %v7811 = vpop.f32.mrb[0].mxu0
        %7812 = vmatprep.mubr.bf16.mxu0 0
        %7813 = vmatmul.mubr.bf16.gmra.mrb[0].mxu0 %v7713
        %v7814 = vpop.f32.mrb[0].mxu0
        %v7815 = vadd.f32 0.0, %v7814
        %v7816 = vpop.f32.mrb[0].mxu0
        %v7817 = vpop.f32.mrb[0].mxu0
        %v7818 = vadd.f32 0.0, %v7817
        %v7819 = vpop.f32.mrb[0].mxu0
        %7820 = vmatprep.mubr.bf16.mxu0 0
        %7821 = vmatmul.mubr.bf16.gmra.mrb[0].mxu0 %v7716
        %v7822 = vpop.f32.mrb[0].mxu0
        %v7823 = vadd.f32 0.0, %v7822
        %v7824 = vpop.f32.mrb[0].mxu0
        %v7825 = vpop.f32.mrb[0].mxu0
        %v7826 = vadd.f32 0.0, %v7825
        %v7827 = vpop.f32.mrb[0].mxu0
        %7828 = vmatprep.mubr.bf16.mxu0 0
        %7829 = vmatmul.mubr.bf16.gmra.mrb[0].mxu0 %v7719
        %v7830 = vpop.f32.mrb[0].mxu0
        %v7831 = vadd.f32 0.0, %v7830
        %v7832 = vpop.f32.mrb[0].mxu0
        %v7833 = vpop.f32.mrb[0].mxu0
        %v7834 = vadd.f32 0.0, %v7833
        %v7835 = vpop.f32.mrb[0].mxu0
        %7836 = vmatprep.mubr.bf16.mxu0 0
        %7837 = vmatmul.mubr.bf16.gmra.mrb[0].mxu0 %v7722
        %v7838 = vpop.f32.mrb[0].mxu0
        %v7839 = vadd.f32 0.0, %v7838
        %v7840 = vpop.f32.mrb[0].mxu0
        %v7841 = vpop.f32.mrb[0].mxu0
        %v7842 = vadd.f32 0.0, %v7841
        %v7843 = vpop.f32.mrb[0].mxu0
        %7844 = vmatprep.mubr.bf16.mxu0 0
        %7845 = vmatmul.mubr.bf16.gmra.mrb[0].mxu0 %v7725
        %v7846 = vpop.f32.mrb[0].mxu0
        %v7847 = vadd.f32 0.0, %v7846
        %v7848 = vpop.f32.mrb[0].mxu0
        %v7849 = vpop.f32.mrb[0].mxu0
        %v7850 = vadd.f32 0.0, %v7849
        %v7851 = vpop.f32.mrb[0].mxu0
        %7852 = vmatprep.mubr.bf16.mxu0 0
        %7853 = vmatmul.mubr.bf16.gmra.mrb[0].mxu0 %v7728
        %v7854 = vpop.f32.mrb[0].mxu0
        %v7855 = vadd.f32 0.0, %v7854
        %v7856 = vpop.f32.mrb[0].mxu0
        %v7857 = vpop.f32.mrb[0].mxu0
        %v7858 = vadd.f32 0.0, %v7857
        %v7859 = vpop.f32.mrb[0].mxu0
        %7860 = vmatprep.mubr.bf16.mxu0 0
        %7861 = vmatmul.mubr.bf16.gmra.mrb[0].mxu0 %v7731
        %v7862 = vpop.f32.mrb[0].mxu0
        %v7863 = vadd.f32 0.0, %v7862
        %v7864 = vpop.f32.mrb[0].mxu0
        %v7865 = vpop.f32.mrb[0].mxu0
        %v7866 = vadd.f32 0.0, %v7865
        %v7867 = vpop.f32.mrb[0].mxu0
        %7868 = vmatprep.mubr.bf16.mxu0 0
        %7869 = vmatmul.mubr.bf16.gmra.mrb[0].mxu0 %v7734
        %v7870 = vpop.f32.mrb[0].mxu0
        %v7871 = vadd.f32 0.0, %v7870
        %v7872 = vpop.f32.mrb[0].mxu0
        %v7873 = vpop.f32.mrb[0].mxu0
        %v7874 = vadd.f32 0.0, %v7873
        %v7875 = vpop.f32.mrb[0].mxu0
        %7876 = vmatprep.mubr.bf16.mxu0 0
        %7877 = vmatmul.mubr.bf16.gmra.mrb[0].mxu0 %v7737
        %v7878 = vpop.f32.mrb[0].mxu0
        %v7879 = vadd.f32 0.0, %v7878
        %v7880 = vpop.f32.mrb[0].mxu0
        %v7881 = vpop.f32.mrb[0].mxu0
        %v7882 = vadd.f32 0.0, %v7881
        %v7883 = vpop.f32.mrb[0].mxu0
        %7884 = vmatprep.mubr.bf16.mxu0 0
        %7885 = vmatmul.mubr.bf16.gmra.mrb[0].mxu0 %v7740
        %v7886 = vpop.f32.mrb[0].mxu0
        %v7887 = vadd.f32 0.0, %v7886
        %v7888 = vpop.f32.mrb[0].mxu0
        %v7889 = vpop.f32.mrb[0].mxu0
        %v7890 = vadd.f32 0.0, %v7889
        %v7891 = vpop.f32.mrb[0].mxu0
        %7892 = vmatprep.mubr.bf16.mxu0 0
        %7893 = vmatmul.mubr.bf16.gmra.mrb[0].mxu0 %v7743
        %v7894 = vpop.f32.mrb[0].mxu0
        %v7895 = vadd.f32 0.0, %v7894
        %v7896 = vpop.f32.mrb[0].mxu0
        %v7897 = vpop.f32.mrb[0].mxu0
        %v7898 = vadd.f32 0.0, %v7897
        %v7899 = vpop.f32.mrb[0].mxu0
        %7900 = vmatprep.mubr.bf16.mxu0 0
        %7901 = vmatmul.mubr.bf16.gmra.mrb[0].mxu0 %v7746
        %v7902 = vpop.f32.mrb[0].mxu0
        %v7903 = vadd.f32 0.0, %v7902
        %v7904 = vpop.f32.mrb[0].mxu0
        %v7905 = vpop.f32.mrb[0].mxu0
        %v7906 = vadd.f32 0.0, %v7905
        %v7907 = vpop.f32.mrb[0].mxu0
        %7908 = vdwg.mxu0
        %v7909 = vadd.f32 %v7522, %v7783
        %v7910 = vadd.f32 %v7523, %v7786
        %v7911 = vadd.f32 %v7524, %v7791
        %v7912 = vadd.f32 %v7525, %v7794
        %v7913 = vadd.f32 %v7526, %v7799
        %v7914 = vadd.f32 %v7527, %v7802
        %v7915 = vadd.f32 %v7528, %v7807
        %v7916 = vadd.f32 %v7529, %v7810
        %v7917 = vadd.f32 %v7530, %v7815
        %v7918 = vadd.f32 %v7531, %v7818
        %v7919 = vadd.f32 %v7532, %v7823
        %v7920 = vadd.f32 %v7533, %v7826
        %v7921 = vadd.f32 %v7534, %v7831
        %v7922 = vadd.f32 %v7535, %v7834
        %v7923 = vadd.f32 %v7536, %v7839
        %v7924 = vadd.f32 %v7537, %v7842
        %v7925 = vadd.f32 %v7538, %v7847
        %v7926 = vadd.f32 %v7539, %v7850
        %v7927 = vadd.f32 %v7540, %v7855
        %v7928 = vadd.f32 %v7541, %v7858
        %v7929 = vadd.f32 %v7542, %v7863
        %v7930 = vadd.f32 %v7543, %v7866
        %v7931 = vadd.f32 %v7544, %v7871
        %v7932 = vadd.f32 %v7545, %v7874
        %v7933 = vadd.f32 %v7546, %v7879
        %v7934 = vadd.f32 %v7547, %v7882
        %v7935 = vadd.f32 %v7548, %v7887
        %v7936 = vadd.f32 %v7549, %v7890
        %v7937 = vadd.f32 %v7550, %v7895
        %v7938 = vadd.f32 %v7551, %v7898
        %v7939 = vadd.f32 %v7552, %v7903
        %v7940 = vadd.f32 %v7553, %v7906
        %v7941 = vld [vmem:[%s4] sm:$0x1]
        %v7943 = vlaneseq
        %v7944 = vshrl.u32 %v7943, 7
        %v7945 = vsub.s32 0, %v7944
        %v7946 = vrot.slane %v7941, %v7945
        %v7948 = vadd.f32 %v7909, %v7946
        %v7949 = vadd.f32 %v7910, %v7946
        %v7950 = vadd.f32 %v7911, %v7946
        %v7951 = vadd.f32 %v7912, %v7946
        %v7952 = vadd.f32 %v7913, %v7946
        %v7953 = vadd.f32 %v7914, %v7946
        %v7954 = vadd.f32 %v7915, %v7946
        %v7955 = vadd.f32 %v7916, %v7946
        %v7956 = vadd.f32 %v7917, %v7946
        %v7957 = vadd.f32 %v7918, %v7946
        %v7958 = vadd.f32 %v7919, %v7946
        %v7959 = vadd.f32 %v7920, %v7946
        %v7960 = vadd.f32 %v7921, %v7946
        %v7961 = vadd.f32 %v7922, %v7946
        %v7962 = vadd.f32 %v7923, %v7946
        %v7963 = vadd.f32 %v7924, %v7946
        %v7964 = vadd.f32 %v7925, %v7946
        %v7965 = vadd.f32 %v7926, %v7946
        %v7966 = vadd.f32 %v7927, %v7946
        %v7967 = vadd.f32 %v7928, %v7946
        %v7968 = vadd.f32 %v7929, %v7946
        %v7969 = vadd.f32 %v7930, %v7946
        %v7970 = vadd.f32 %v7931, %v7946
        %v7971 = vadd.f32 %v7932, %v7946
        %v7972 = vadd.f32 %v7933, %v7946
        %v7973 = vadd.f32 %v7934, %v7946
        %v7974 = vadd.f32 %v7935, %v7946
        %v7975 = vadd.f32 %v7936, %v7946
        %v7976 = vadd.f32 %v7937, %v7946
        %v7977 = vadd.f32 %v7938, %v7946
        %v7978 = vadd.f32 %v7939, %v7946
        %v7979 = vadd.f32 %v7940, %v7946
        %v7980 = vmax.f32 %v7948, 0.0
        %v7981 = vmax.f32 %v7949, 0.0
        %v7982 = vmax.f32 %v7950, 0.0
        %v7983 = vmax.f32 %v7951, 0.0
        %v7984 = vmax.f32 %v7952, 0.0
        %v7985 = vmax.f32 %v7953, 0.0
        %v7986 = vmax.f32 %v7954, 0.0
        %v7987 = vmax.f32 %v7955, 0.0
        %v7988 = vmax.f32 %v7956, 0.0
        %v7989 = vmax.f32 %v7957, 0.0
        %v7990 = vmax.f32 %v7958, 0.0
        %v7991 = vmax.f32 %v7959, 0.0
        %v7992 = vmax.f32 %v7960, 0.0
        %v7993 = vmax.f32 %v7961, 0.0
        %v7994 = vmax.f32 %v7962, 0.0
        %v7995 = vmax.f32 %v7963, 0.0
        %v7996 = vmax.f32 %v7964, 0.0
        %v7997 = vmax.f32 %v7965, 0.0
        %v7998 = vmax.f32 %v7966, 0.0
        %v7999 = vmax.f32 %v7967, 0.0
        %v8000 = vmax.f32 %v7968, 0.0
        %v8001 = vmax.f32 %v7969, 0.0
        %v8002 = vmax.f32 %v7970, 0.0
        %v8003 = vmax.f32 %v7971, 0.0
        %v8004 = vmax.f32 %v7972, 0.0
        %v8005 = vmax.f32 %v7973, 0.0
        %v8006 = vmax.f32 %v7974, 0.0
        %v8007 = vmax.f32 %v7975, 0.0
        %v8008 = vmax.f32 %v7976, 0.0
        %v8009 = vmax.f32 %v7977, 0.0
        %v8010 = vmax.f32 %v7978, 0.0
        %v8011 = vmax.f32 %v7979, 0.0
        %8012 = vst.msk [vmem:[%s1182] sm:$0xff] %vm1667, %v7980
        %8013 = vst.msk [vmem:[%s1182 + $0x8] sm:$0xff] %vm1667, %v7981
        %8014 = vst.msk [vmem:[%s1182 + $0x10] sm:$0xff] %vm1667, %v7982
        %8015 = vst.msk [vmem:[%s1182 + $0x18] sm:$0xff] %vm1667, %v7983
        %8016 = vst.msk [vmem:[%s1182 + $0x20] sm:$0xff] %vm1667, %v7984
        %8017 = vst.msk [vmem:[%s1182 + $0x28] sm:$0xff] %vm1667, %v7985
        %8018 = vst.msk [vmem:[%s1182 + $0x30] sm:$0xff] %vm1667, %v7986
        %8019 = vst.msk [vmem:[%s1182 + $0x38] sm:$0xff] %vm1667, %v7987
        %8020 = vst.msk [vmem:[%s1182 + $0x40] sm:$0xff] %vm1667, %v7988
        %8021 = vst.msk [vmem:[%s1182 + $0x48] sm:$0xff] %vm1667, %v7989
        %8022 = vst.msk [vmem:[%s1182 + $0x50] sm:$0xff] %vm1667, %v7990
        %8023 = vst.msk [vmem:[%s1182 + $0x58] sm:$0xff] %vm1667, %v7991
        %8024 = vst.msk [vmem:[%s1182 + $0x60] sm:$0xff] %vm1667, %v7992
        %8025 = vst.msk [vmem:[%s1182 + $0x68] sm:$0xff] %vm1667, %v7993
        %8026 = vst.msk [vmem:[%s1182 + $0x70] sm:$0xff] %vm1667, %v7994
        %8027 = vst.msk [vmem:[%s1182 + $0x78] sm:$0xff] %vm1667, %v7995
        %8028 = vst.msk [vmem:[%s1182 + $0x80] sm:$0xff] %vm1667, %v7996
        %8029 = vst.msk [vmem:[%s1182 + $0x88] sm:$0xff] %vm1667, %v7997
        %8030 = vst.msk [vmem:[%s1182 + $0x90] sm:$0xff] %vm1667, %v7998
        %8031 = vst.msk [vmem:[%s1182 + $0x98] sm:$0xff] %vm1667, %v7999
        %8032 = vst.msk [vmem:[%s1182 + $0xa0] sm:$0xff] %vm1667, %v8000
        %8033 = vst.msk [vmem:[%s1182 + $0xa8] sm:$0xff] %vm1667, %v8001
        %8034 = vst.msk [vmem:[%s1182 + $0xb0] sm:$0xff] %vm1667, %v8002
        %8035 = vst.msk [vmem:[%s1182 + $0xb8] sm:$0xff] %vm1667, %v8003
        %8036 = vst.msk [vmem:[%s1182 + $0xc0] sm:$0xff] %vm1667, %v8004
        %8037 = vst.msk [vmem:[%s1182 + $0xc8] sm:$0xff] %vm1667, %v8005
        %8038 = vst.msk [vmem:[%s1182 + $0xd0] sm:$0xff] %vm1667, %v8006
        %8039 = vst.msk [vmem:[%s1182 + $0xd8] sm:$0xff] %vm1667, %v8007
        %8040 = vst.msk [vmem:[%s1182 + $0xe0] sm:$0xff] %vm1667, %v8008
        %8041 = vst.msk [vmem:[%s1182 + $0xe8] sm:$0xff] %vm1667, %v8009
        %8042 = vst.msk [vmem:[%s1182 + $0xf0] sm:$0xff] %vm1667, %v8010
        %8043 = vst.msk [vmem:[%s1182 + $0xf8] sm:$0xff] %vm1667, %v8011
        %s8044 = sand.u32 %s142, 1
        %s8045 = scalar_lea.sflag [#allocation5], %s8044
        %s8046 = sand.u32 %s142, 1
        %s8047 = smul.addr %s8046, 256
        %s8048 = scalar_lea.vmem [#allocation4], %s8047
        // Predicated region
        $region123: #{decoder_forward.3} parent=113 // pred_check
          %p8049 = pneg %p152
        $region124: #{decoder_forward.3} parent=113 // pred_check_branch
          %8051 = sbr.rel (%p8049) target = $region126
        $region125: #{decoder_forward.3} parent=113 // pred_region
          %s8052 = smul.u32 32, %s19
          %s8054 = ssub.s32 4096, 4096
          %8055 = vsyncadd %s8045, %s8054
          %s8056 = smul.addr %s8052, 128
          %s8057 = scalar_lea.hbm %s5, %s8056
          %s8058 = sshll.u32 %s8048, 4
          %s8059 = int_to_ptr.vmem [resolvable:$true] %s8058
          %8064 = dma.vmem_to_hbm [thread:$0]  %s8059, 4096, %s8057, %s8045, 128, 128, 8
        $region126: #{decoder_forward.3} parent=113 // pred_fallthru
          _
      $region114: #{decoder_forward.3} parent=5 // pred_fallthru
        _
      %p8065 = scmp.le.s32.totalorder 2, %s14
      // Predicated region
      $region127: #{decoder_forward.3} parent=5 // pred_check
        %p8066 = pneg %p8065
      $region128: #{decoder_forward.3} parent=5 // pred_check_branch
        %8068 = sbr.rel (%p8066) target = $region130
      $region129: #{decoder_forward.3} parent=5 // pred_region
        %s8069 = ssub.s32 %s14, 2
        // Predicated region
        $region131: #{decoder_forward.3} parent=129 // pred_check
          %p8070 = pneg %p158
        $region132: #{decoder_forward.3} parent=129 // pred_check_branch
          %8072 = sbr.rel (%p8070) target = $region134
        $region133: #{decoder_forward.3} parent=129 // pred_region
          %s8073 = sand.u32 %s143, 1
          %s8074 = scalar_lea.sflag [#allocation5], %s8073
          %s8075 = sand.u32 %s143, 1
          %s8076 = smul.addr %s8075, 256
          %s8077 = scalar_lea.vmem [#allocation4], %s8076
          %8078 = dma.done %s8074, 4096
        $region134: #{decoder_forward.3} parent=129 // pred_fallthru
          _
      $region130: #{decoder_forward.3} parent=5 // pred_fallthru
        _
    $region6: #{decoder_forward.3} parent=1 // loop_footer
      %s18 = sadd.s32 1, %s14
    $region7: #{decoder_forward.3} parent=1 // loop_footer_branch
      %13 = sbr.rel target = $region3
    $region8: #{decoder_forward.3} parent=1 // loop_exit
      _
    %8079 = vsyncpa [#allocation5], 1
    %s8080 = scalar_lea.sflag [#allocation5], 1
    %8081 = vsyncpa %s8080, 1

</llo_original>
